<compile_context>
chip_gen: v7x
topology: tpu7x:2x2x1
jax: 0.10.0
libtpu: 0.0.40
codegen_flags: <defaults>
</compile_context>

<pallas_src>
import jax
import jax.numpy as jnp
from jax.experimental import pallas as pl
from jax.experimental.pallas import tpu as pltpu

EPS = 1e-5


def residual_block_kernel(xpad_ref, xres_ref, w1_ref, w2_ref,
                          g1_ref, b1_ref, g2_ref, b2_ref,
                          out_ref, h1pad_ref):
    # xpad_ref : (N, H+2, W+2, Ci)  bf16  zero-padded input (NHWC)
    # xres_ref : (N*H*W, Ci)        f32   unpadded input (identity shortcut)
    # w1_ref   : (9*Ci, Co)         bf16  conv1 weights, im2col layout
    # w2_ref   : (9*Co, Co)         bf16  conv2 weights, im2col layout
    # g*/b*    : (1, Co)            f32   BatchNorm affine params
    # out_ref  : (N*H*W, Co)        f32
    # h1pad_ref: (N, H+2, W+2, Co)  bf16  scratch: padded stage-1 activations
    N, Hp, Wp, Ci = xpad_ref.shape
    H, W = Hp - 2, Wp - 2
    Co = out_ref.shape[-1]
    NP = N * H * W
    inv_cnt = 1.0 / NP

    def im2col(src_ref, cin):
        # 3x3 "same" conv patches: 9 shifted (NP, cin) slabs concatenated
        # along the lane axis -> one K = 9*cin MXU matmul.
        slabs = [src_ref[:, dy:dy + H, dx:dx + W, :].reshape(NP, cin)
                 for dy in range(3) for dx in range(3)]
        return jnp.concatenate(slabs, axis=1)                  # (NP, 9*cin)

    def batchnorm(h, g_ref, b_ref):
        # Training-mode BatchNorm2d, single pass: biased batch variance via
        # E[x^2] - E[x]^2, affine folded into one scale/shift per channel.
        mean = jnp.sum(h, axis=0, keepdims=True) * inv_cnt      # (1, Co)
        msq = jnp.sum(h * h, axis=0, keepdims=True) * inv_cnt   # (1, Co)
        var = jnp.maximum(msq - mean * mean, 0.0)
        inv_std = jax.lax.rsqrt(var + EPS)
        scale = g_ref[...] * inv_std
        shift = b_ref[...] - mean * scale
        return h * scale + shift

    # ----- left branch, stage 1: conv1 -> BN1 -> ReLU -----
    h1 = jnp.dot(im2col(xpad_ref, Ci), w1_ref[...],
                 preferred_element_type=jnp.float32)            # (NP, Co) f32
    h1 = jnp.maximum(batchnorm(h1, g1_ref, b1_ref), 0.0)

    # Stage-1 activations go into a zero-halo bf16 scratch so stage 2 can read
    # shifted windows; only the 4 halo strips are zeroed (no full-buffer fill).
    h1pad_ref[:, 0:1, :, :] = jnp.zeros((N, 1, Wp, Co), h1pad_ref.dtype)
    h1pad_ref[:, Hp - 1:Hp, :, :] = jnp.zeros((N, 1, Wp, Co), h1pad_ref.dtype)
    h1pad_ref[:, :, 0:1, :] = jnp.zeros((N, Hp, 1, Co), h1pad_ref.dtype)
    h1pad_ref[:, :, Wp - 1:Wp, :] = jnp.zeros((N, Hp, 1, Co), h1pad_ref.dtype)
    h1pad_ref[:, 1:1 + H, 1:1 + W, :] = (
        h1.astype(h1pad_ref.dtype).reshape(N, H, W, Co))

    # ----- left branch, stage 2: conv2 -> BN2 -----
    h2 = jnp.dot(im2col(h1pad_ref, Co), w2_ref[...],
                 preferred_element_type=jnp.float32)            # (NP, Co) f32
    h2 = batchnorm(h2, g2_ref, b2_ref)

    # ----- identity shortcut + final ReLU -----
    out_ref[...] = jnp.maximum(h2 + xres_ref[...], 0.0)


def residual_block(x_nchw, w1_oihw, w2_oihw, g1, b1, g2, b2):
    """Wrapper: NCHW in / NCHW out (PyTorch convention)."""
    N, Ci, H, W = x_nchw.shape
    Co = w1_oihw.shape[0]
    assert Ci == Co, "identity shortcut requires inchannel == outchannel"

    x_nhwc = jnp.transpose(x_nchw, (0, 2, 3, 1)).astype(jnp.float32)
    xpad = jnp.pad(x_nhwc, ((0, 0), (1, 1), (1, 1), (0, 0))).astype(jnp.bfloat16)
    xres = x_nhwc.reshape(N * H * W, Ci)                                 # f32

    # OIHW -> HWIO -> (9*Cin, Cout) im2col weight layout, bf16 for the MXU.
    w1 = jnp.transpose(w1_oihw, (2, 3, 1, 0)).reshape(9 * Ci, Co).astype(jnp.bfloat16)
    w2 = jnp.transpose(w2_oihw, (2, 3, 1, 0)).reshape(9 * Co, Co).astype(jnp.bfloat16)

    vspec = pl.BlockSpec(memory_space=pltpu.MemorySpace.VMEM)
    out_flat = pl.pallas_call(
        residual_block_kernel,
        out_shape=jax.ShapeDtypeStruct((N * H * W, Co), jnp.float32),
        in_specs=[vspec] * 8,
        out_specs=vspec,
        scratch_shapes=[pltpu.VMEM((N, H + 2, W + 2, Co), jnp.bfloat16)],
    )(xpad, xres, w1, w2,
      g1.reshape(1, Co).astype(jnp.float32),
      b1.reshape(1, Co).astype(jnp.float32),
      g2.reshape(1, Co).astype(jnp.float32),
      b2.reshape(1, Co).astype(jnp.float32))

    out_nhwc = out_flat.reshape(N, H, W, Co)
    return jnp.transpose(out_nhwc, (0, 3, 1, 2))                         # NCHW


def residual_block_reference(x, w1, w2, g1, b1, g2, b2):
    """Pure-JAX reference of the PyTorch forward (training-mode BN)."""
    def conv(h, w):
        return jax.lax.conv_general_dilated(
            h, w, (1, 1), ((1, 1), (1, 1)),
            dimension_numbers=('NCHW', 'OIHW', 'NCHW'),
            precision=jax.lax.Precision.HIGHEST)

    def bn(h, g, b):
        mean = h.mean(axis=(0, 2, 3), keepdims=True)
        var = h.var(axis=(0, 2, 3), keepdims=True)   # biased, like PyTorch fwd
        hn = (h - mean) * jax.lax.rsqrt(var + EPS)
        return hn * g.reshape(1, -1, 1, 1) + b.reshape(1, -1, 1, 1)

    left = jax.nn.relu(bn(conv(x, w1), g1, b1))
    left = bn(conv(left, w2), g2, b2)
    return jax.nn.relu(left + x)


if __name__ == "__main__":
    key = jax.random.PRNGKey(0)
    k1, k2, k3, k4, k5, k6, k7 = jax.random.split(key, 7)

    N, C, H, W = 2, 32, 16, 16          # inchannel == outchannel, stride=1
    fan_in = C * 9

    x = jax.random.normal(k1, (N, C, H, W), jnp.float32)
    w1 = jax.random.normal(k2, (C, C, 3, 3), jnp.float32) / jnp.sqrt(fan_in)
    w2 = jax.random.normal(k3, (C, C, 3, 3), jnp.float32) / jnp.sqrt(fan_in)
    g1 = 1.0 + 0.1 * jax.random.normal(k4, (C,), jnp.float32)
    b1 = 0.1 * jax.random.normal(k5, (C,), jnp.float32)
    g2 = 1.0 + 0.1 * jax.random.normal(k6, (C,), jnp.float32)
    b2 = 0.1 * jax.random.normal(k7, (C,), jnp.float32)

    out = residual_block(x, w1, w2, g1, b1, g2, b2)
    out = jax.block_until_ready(out)

    ref = residual_block_reference(x, w1, w2, g1, b1, g2, b2)
    max_err = float(jnp.max(jnp.abs(out - ref)))
    assert out.shape == (N, C, H, W)
    # bf16 MXU inputs (f32 accumulation) vs. an f32-HIGHEST reference.
    assert max_err < 5e-2, f"mismatch vs reference, max abs err = {max_err}"

    print("KERNEL_OK")
</pallas_src>

<mosaic_0001>
module attributes {stable_mosaic.version = 11 : i64} {
  func.func @residual_block_kernel(%arg0: memref<2x18x18x32xbf16, #tpu.memory_space<vmem>>, %arg1: memref<512x32xf32, #tpu.memory_space<vmem>>, %arg2: memref<288x32xbf16, #tpu.memory_space<vmem>>, %arg3: memref<288x32xbf16, #tpu.memory_space<vmem>>, %arg4: memref<1x32xf32, #tpu.memory_space<vmem>>, %arg5: memref<1x32xf32, #tpu.memory_space<vmem>>, %arg6: memref<1x32xf32, #tpu.memory_space<vmem>>, %arg7: memref<1x32xf32, #tpu.memory_space<vmem>>, %arg8: memref<512x32xf32, #tpu.memory_space<vmem>>, %arg9: memref<2x18x18x32xbf16, #tpu.memory_space<vmem>>) attributes {dimension_semantics = [], scalar_prefetch = 0 : i64, scratch_operands = 1 : i64, tpu.core_type = #tpu.core_type<tc>} {
    %c0 = arith.constant 0 : index
    %c0_0 = arith.constant 0 : index
    %c0_1 = arith.constant 0 : index
    %c0_2 = arith.constant 0 : index
    %0 = vector.load %arg0[%c0, %c0_0, %c0_1, %c0_2] : memref<2x18x18x32xbf16, #tpu.memory_space<vmem>>, vector<2x16x16x32xbf16>
    %1 = vector.shape_cast %0 : vector<2x16x16x32xbf16> to vector<512x32xbf16>
    %c0_3 = arith.constant 0 : index
    %c0_4 = arith.constant 0 : index
    %c1 = arith.constant 1 : index
    %c0_5 = arith.constant 0 : index
    %2 = vector.load %arg0[%c0_3, %c0_4, %c1, %c0_5] : memref<2x18x18x32xbf16, #tpu.memory_space<vmem>>, vector<2x16x16x32xbf16>
    %3 = vector.shape_cast %2 : vector<2x16x16x32xbf16> to vector<512x32xbf16>
    %c0_6 = arith.constant 0 : index
    %c0_7 = arith.constant 0 : index
    %c2 = arith.constant 2 : index
    %c0_8 = arith.constant 0 : index
    %4 = vector.load %arg0[%c0_6, %c0_7, %c2, %c0_8] : memref<2x18x18x32xbf16, #tpu.memory_space<vmem>>, vector<2x16x16x32xbf16>
    %5 = vector.shape_cast %4 : vector<2x16x16x32xbf16> to vector<512x32xbf16>
    %c0_9 = arith.constant 0 : index
    %c1_10 = arith.constant 1 : index
    %c0_11 = arith.constant 0 : index
    %c0_12 = arith.constant 0 : index
    %6 = vector.load %arg0[%c0_9, %c1_10, %c0_11, %c0_12] : memref<2x18x18x32xbf16, #tpu.memory_space<vmem>>, vector<2x16x16x32xbf16>
    %7 = vector.shape_cast %6 : vector<2x16x16x32xbf16> to vector<512x32xbf16>
    %c0_13 = arith.constant 0 : index
    %c1_14 = arith.constant 1 : index
    %c1_15 = arith.constant 1 : index
    %c0_16 = arith.constant 0 : index
    %8 = vector.load %arg0[%c0_13, %c1_14, %c1_15, %c0_16] : memref<2x18x18x32xbf16, #tpu.memory_space<vmem>>, vector<2x16x16x32xbf16>
    %9 = vector.shape_cast %8 : vector<2x16x16x32xbf16> to vector<512x32xbf16>
    %c0_17 = arith.constant 0 : index
    %c1_18 = arith.constant 1 : index
    %c2_19 = arith.constant 2 : index
    %c0_20 = arith.constant 0 : index
    %10 = vector.load %arg0[%c0_17, %c1_18, %c2_19, %c0_20] : memref<2x18x18x32xbf16, #tpu.memory_space<vmem>>, vector<2x16x16x32xbf16>
    %11 = vector.shape_cast %10 : vector<2x16x16x32xbf16> to vector<512x32xbf16>
    %c0_21 = arith.constant 0 : index
    %c2_22 = arith.constant 2 : index
    %c0_23 = arith.constant 0 : index
    %c0_24 = arith.constant 0 : index
    %12 = vector.load %arg0[%c0_21, %c2_22, %c0_23, %c0_24] : memref<2x18x18x32xbf16, #tpu.memory_space<vmem>>, vector<2x16x16x32xbf16>
    %13 = vector.shape_cast %12 : vector<2x16x16x32xbf16> to vector<512x32xbf16>
    %c0_25 = arith.constant 0 : index
    %c2_26 = arith.constant 2 : index
    %c1_27 = arith.constant 1 : index
    %c0_28 = arith.constant 0 : index
    %14 = vector.load %arg0[%c0_25, %c2_26, %c1_27, %c0_28] : memref<2x18x18x32xbf16, #tpu.memory_space<vmem>>, vector<2x16x16x32xbf16>
    %15 = vector.shape_cast %14 : vector<2x16x16x32xbf16> to vector<512x32xbf16>
    %c0_29 = arith.constant 0 : index
    %c2_30 = arith.constant 2 : index
    %c2_31 = arith.constant 2 : index
    %c0_32 = arith.constant 0 : index
    %16 = vector.load %arg0[%c0_29, %c2_30, %c2_31, %c0_32] : memref<2x18x18x32xbf16, #tpu.memory_space<vmem>>, vector<2x16x16x32xbf16>
    %17 = vector.shape_cast %16 : vector<2x16x16x32xbf16> to vector<512x32xbf16>
    %18 = tpu.concatenate %1, %3, %5, %7, %9, %11, %13, %15, %17 in 1 : vector<512x32xbf16>, vector<512x32xbf16>, vector<512x32xbf16>, vector<512x32xbf16>, vector<512x32xbf16>, vector<512x32xbf16>, vector<512x32xbf16>, vector<512x32xbf16>, vector<512x32xbf16> -> vector<512x288xbf16>
    %c0_33 = arith.constant 0 : index
    %c0_34 = arith.constant 0 : index
    %19 = vector.load %arg2[%c0_33, %c0_34] : memref<288x32xbf16, #tpu.memory_space<vmem>>, vector<288x32xbf16>
    %cst = arith.constant dense<0.000000e+00> : vector<512x32xf32>
    %20 = tpu.matmul %18, %19, %cst {dimension_numbers = #tpu.dot_dimension_numbers<[1], [0], [0], [1], [0, 0, 1, 1], [], []>} : vector<512x288xbf16>, vector<288x32xbf16>, vector<512x32xf32> -> vector<512x32xf32>
    %cst_35 = arith.constant dense<0.000000e+00> : vector<32xf32>
    %21 = vector.multi_reduction <add>, %20, %cst_35 [0] : vector<512x32xf32> to vector<32xf32>
    %22 = vector.shape_cast %21 : vector<32xf32> to vector<1x32xf32>
    %cst_36 = arith.constant 0.001953125 : f32
    %23 = vector.broadcast %cst_36 : f32 to vector<1x32xf32>
    %24 = arith.mulf %22, %23 : vector<1x32xf32>
    %25 = arith.mulf %20, %20 : vector<512x32xf32>
    %cst_37 = arith.constant dense<0.000000e+00> : vector<32xf32>
    %26 = vector.multi_reduction <add>, %25, %cst_37 [0] : vector<512x32xf32> to vector<32xf32>
    %27 = vector.shape_cast %26 : vector<32xf32> to vector<1x32xf32>
    %cst_38 = arith.constant 0.001953125 : f32
    %28 = vector.broadcast %cst_38 : f32 to vector<1x32xf32>
    %29 = arith.mulf %27, %28 : vector<1x32xf32>
    %30 = arith.mulf %24, %24 : vector<1x32xf32>
    %31 = arith.subf %29, %30 : vector<1x32xf32>
    %cst_39 = arith.constant 0.000000e+00 : f32
    %32 = vector.broadcast %cst_39 : f32 to vector<1x32xf32>
    %33 = arith.maximumf %31, %32 : vector<1x32xf32>
    %cst_40 = arith.constant 9.99999974E-6 : f32
    %34 = vector.broadcast %cst_40 : f32 to vector<1x32xf32>
    %35 = arith.addf %33, %34 : vector<1x32xf32>
    %36 = math.rsqrt %35 : vector<1x32xf32>
    %c0_41 = arith.constant 0 : index
    %c0_42 = arith.constant 0 : index
    %37 = vector.load %arg4[%c0_41, %c0_42] : memref<1x32xf32, #tpu.memory_space<vmem>>, vector<1x32xf32>
    %38 = arith.mulf %37, %36 : vector<1x32xf32>
    %c0_43 = arith.constant 0 : index
    %c0_44 = arith.constant 0 : index
    %39 = vector.load %arg5[%c0_43, %c0_44] : memref<1x32xf32, #tpu.memory_space<vmem>>, vector<1x32xf32>
    %40 = arith.mulf %24, %38 : vector<1x32xf32>
    %41 = arith.subf %39, %40 : vector<1x32xf32>
    %42 = vector.broadcast %38 : vector<1x32xf32> to vector<512x32xf32>
    %43 = arith.mulf %20, %42 : vector<512x32xf32>
    %44 = vector.broadcast %41 : vector<1x32xf32> to vector<512x32xf32>
    %45 = arith.addf %43, %44 : vector<512x32xf32>
    %cst_45 = arith.constant 0.000000e+00 : f32
    %46 = vector.broadcast %cst_45 : f32 to vector<512x32xf32>
    %47 = arith.maximumf %45, %46 : vector<512x32xf32>
    %cst_46 = arith.constant 0.000000e+00 : bf16
    %48 = vector.broadcast %cst_46 : bf16 to vector<2x1x18x32xbf16>
    %c0_47 = arith.constant 0 : index
    %c0_48 = arith.constant 0 : index
    %c0_49 = arith.constant 0 : index
    %c0_50 = arith.constant 0 : index
    %49 = vector.load %arg9[%c0_47, %c0_48, %c0_49, %c0_50] : memref<2x18x18x32xbf16, #tpu.memory_space<vmem>>, vector<2x1x18x32xbf16>
    tpu.vector_store %arg9[%c0_47, %c0_48, %c0_49, %c0_50], %48 {strides = array<i32>} : memref<2x18x18x32xbf16, #tpu.memory_space<vmem>>, vector<2x1x18x32xbf16>,
    %cst_51 = arith.constant 0.000000e+00 : bf16
    %50 = vector.broadcast %cst_51 : bf16 to vector<2x1x18x32xbf16>
    %c0_52 = arith.constant 0 : index
    %c17 = arith.constant 17 : index
    %c0_53 = arith.constant 0 : index
    %c0_54 = arith.constant 0 : index
    %51 = vector.load %arg9[%c0_52, %c17, %c0_53, %c0_54] : memref<2x18x18x32xbf16, #tpu.memory_space<vmem>>, vector<2x1x18x32xbf16>
    tpu.vector_store %arg9[%c0_52, %c17, %c0_53, %c0_54], %50 {strides = array<i32>} : memref<2x18x18x32xbf16, #tpu.memory_space<vmem>>, vector<2x1x18x32xbf16>,
    %cst_55 = arith.constant 0.000000e+00 : bf16
    %52 = vector.broadcast %cst_55 : bf16 to vector<2x18x1x32xbf16>
    %c0_56 = arith.constant 0 : index
    %c0_57 = arith.constant 0 : index
    %c0_58 = arith.constant 0 : index
    %c0_59 = arith.constant 0 : index
    %53 = vector.load %arg9[%c0_56, %c0_57, %c0_58, %c0_59] : memref<2x18x18x32xbf16, #tpu.memory_space<vmem>>, vector<2x18x1x32xbf16>
    tpu.vector_store %arg9[%c0_56, %c0_57, %c0_58, %c0_59], %52 {strides = array<i32>} : memref<2x18x18x32xbf16, #tpu.memory_space<vmem>>, vector<2x18x1x32xbf16>,
    %cst_60 = arith.constant 0.000000e+00 : bf16
    %54 = vector.broadcast %cst_60 : bf16 to vector<2x18x1x32xbf16>
    %c0_61 = arith.constant 0 : index
    %c0_62 = arith.constant 0 : index
    %c17_63 = arith.constant 17 : index
    %c0_64 = arith.constant 0 : index
    %55 = vector.load %arg9[%c0_61, %c0_62, %c17_63, %c0_64] : memref<2x18x18x32xbf16, #tpu.memory_space<vmem>>, vector<2x18x1x32xbf16>
    tpu.vector_store %arg9[%c0_61, %c0_62, %c17_63, %c0_64], %54 {strides = array<i32>} : memref<2x18x18x32xbf16, #tpu.memory_space<vmem>>, vector<2x18x1x32xbf16>,
    %56 = arith.truncf %47 : vector<512x32xf32> to vector<512x32xbf16>
    %57 = vector.shape_cast %56 : vector<512x32xbf16> to vector<2x16x16x32xbf16>
    %c0_65 = arith.constant 0 : index
    %c1_66 = arith.constant 1 : index
    %c1_67 = arith.constant 1 : index
    %c0_68 = arith.constant 0 : index
    %58 = vector.load %arg9[%c0_65, %c1_66, %c1_67, %c0_68] : memref<2x18x18x32xbf16, #tpu.memory_space<vmem>>, vector<2x16x16x32xbf16>
    tpu.vector_store %arg9[%c0_65, %c1_66, %c1_67, %c0_68], %57 {strides = array<i32>} : memref<2x18x18x32xbf16, #tpu.memory_space<vmem>>, vector<2x16x16x32xbf16>,
    %c0_69 = arith.constant 0 : index
    %c0_70 = arith.constant 0 : index
    %c0_71 = arith.constant 0 : index
    %c0_72 = arith.constant 0 : index
    %59 = vector.load %arg9[%c0_69, %c0_70, %c0_71, %c0_72] : memref<2x18x18x32xbf16, #tpu.memory_space<vmem>>, vector<2x16x16x32xbf16>
    %60 = vector.shape_cast %59 : vector<2x16x16x32xbf16> to vector<512x32xbf16>
    %c0_73 = arith.constant 0 : index
    %c0_74 = arith.constant 0 : index
    %c1_75 = arith.constant 1 : index
    %c0_76 = arith.constant 0 : index
    %61 = vector.load %arg9[%c0_73, %c0_74, %c1_75, %c0_76] : memref<2x18x18x32xbf16, #tpu.memory_space<vmem>>, vector<2x16x16x32xbf16>
    %62 = vector.shape_cast %61 : vector<2x16x16x32xbf16> to vector<512x32xbf16>
    %c0_77 = arith.constant 0 : index
    %c0_78 = arith.constant 0 : index
    %c2_79 = arith.constant 2 : index
    %c0_80 = arith.constant 0 : index
    %63 = vector.load %arg9[%c0_77, %c0_78, %c2_79, %c0_80] : memref<2x18x18x32xbf16, #tpu.memory_space<vmem>>, vector<2x16x16x32xbf16>
    %64 = vector.shape_cast %63 : vector<2x16x16x32xbf16> to vector<512x32xbf16>
    %c0_81 = arith.constant 0 : index
    %c1_82 = arith.constant 1 : index
    %c0_83 = arith.constant 0 : index
    %c0_84 = arith.constant 0 : index
    %65 = vector.load %arg9[%c0_81, %c1_82, %c0_83, %c0_84] : memref<2x18x18x32xbf16, #tpu.memory_space<vmem>>, vector<2x16x16x32xbf16>
    %66 = vector.shape_cast %65 : vector<2x16x16x32xbf16> to vector<512x32xbf16>
    %c0_85 = arith.constant 0 : index
    %c1_86 = arith.constant 1 : index
    %c1_87 = arith.constant 1 : index
    %c0_88 = arith.constant 0 : index
    %67 = vector.load %arg9[%c0_85, %c1_86, %c1_87, %c0_88] : memref<2x18x18x32xbf16, #tpu.memory_space<vmem>>, vector<2x16x16x32xbf16>
    %68 = vector.shape_cast %67 : vector<2x16x16x32xbf16> to vector<512x32xbf16>
    %c0_89 = arith.constant 0 : index
    %c1_90 = arith.constant 1 : index
    %c2_91 = arith.constant 2 : index
    %c0_92 = arith.constant 0 : index
    %69 = vector.load %arg9[%c0_89, %c1_90, %c2_91, %c0_92] : memref<2x18x18x32xbf16, #tpu.memory_space<vmem>>, vector<2x16x16x32xbf16>
    %70 = vector.shape_cast %69 : vector<2x16x16x32xbf16> to vector<512x32xbf16>
    %c0_93 = arith.constant 0 : index
    %c2_94 = arith.constant 2 : index
    %c0_95 = arith.constant 0 : index
    %c0_96 = arith.constant 0 : index
    %71 = vector.load %arg9[%c0_93, %c2_94, %c0_95, %c0_96] : memref<2x18x18x32xbf16, #tpu.memory_space<vmem>>, vector<2x16x16x32xbf16>
    %72 = vector.shape_cast %71 : vector<2x16x16x32xbf16> to vector<512x32xbf16>
    %c0_97 = arith.constant 0 : index
    %c2_98 = arith.constant 2 : index
    %c1_99 = arith.constant 1 : index
    %c0_100 = arith.constant 0 : index
    %73 = vector.load %arg9[%c0_97, %c2_98, %c1_99, %c0_100] : memref<2x18x18x32xbf16, #tpu.memory_space<vmem>>, vector<2x16x16x32xbf16>
    %74 = vector.shape_cast %73 : vector<2x16x16x32xbf16> to vector<512x32xbf16>
    %c0_101 = arith.constant 0 : index
    %c2_102 = arith.constant 2 : index
    %c2_103 = arith.constant 2 : index
    %c0_104 = arith.constant 0 : index
    %75 = vector.load %arg9[%c0_101, %c2_102, %c2_103, %c0_104] : memref<2x18x18x32xbf16, #tpu.memory_space<vmem>>, vector<2x16x16x32xbf16>
    %76 = vector.shape_cast %75 : vector<2x16x16x32xbf16> to vector<512x32xbf16>
    %77 = tpu.concatenate %60, %62, %64, %66, %68, %70, %72, %74, %76 in 1 : vector<512x32xbf16>, vector<512x32xbf16>, vector<512x32xbf16>, vector<512x32xbf16>, vector<512x32xbf16>, vector<512x32xbf16>, vector<512x32xbf16>, vector<512x32xbf16>, vector<512x32xbf16> -> vector<512x288xbf16>
    %c0_105 = arith.constant 0 : index
    %c0_106 = arith.constant 0 : index
    %78 = vector.load %arg3[%c0_105, %c0_106] : memref<288x32xbf16, #tpu.memory_space<vmem>>, vector<288x32xbf16>
    %cst_107 = arith.constant dense<0.000000e+00> : vector<512x32xf32>
    %79 = tpu.matmul %77, %78, %cst_107 {dimension_numbers = #tpu.dot_dimension_numbers<[1], [0], [0], [1], [0, 0, 1, 1], [], []>} : vector<512x288xbf16>, vector<288x32xbf16>, vector<512x32xf32> -> vector<512x32xf32>
    %cst_108 = arith.constant dense<0.000000e+00> : vector<32xf32>
    %80 = vector.multi_reduction <add>, %79, %cst_108 [0] : vector<512x32xf32> to vector<32xf32>
    %81 = vector.shape_cast %80 : vector<32xf32> to vector<1x32xf32>
    %cst_109 = arith.constant 0.001953125 : f32
    %82 = vector.broadcast %cst_109 : f32 to vector<1x32xf32>
    %83 = arith.mulf %81, %82 : vector<1x32xf32>
    %84 = arith.mulf %79, %79 : vector<512x32xf32>
    %cst_110 = arith.constant dense<0.000000e+00> : vector<32xf32>
    %85 = vector.multi_reduction <add>, %84, %cst_110 [0] : vector<512x32xf32> to vector<32xf32>
    %86 = vector.shape_cast %85 : vector<32xf32> to vector<1x32xf32>
    %cst_111 = arith.constant 0.001953125 : f32
    %87 = vector.broadcast %cst_111 : f32 to vector<1x32xf32>
    %88 = arith.mulf %86, %87 : vector<1x32xf32>
    %89 = arith.mulf %83, %83 : vector<1x32xf32>
    %90 = arith.subf %88, %89 : vector<1x32xf32>
    %cst_112 = arith.constant 0.000000e+00 : f32
    %91 = vector.broadcast %cst_112 : f32 to vector<1x32xf32>
    %92 = arith.maximumf %90, %91 : vector<1x32xf32>
    %cst_113 = arith.constant 9.99999974E-6 : f32
    %93 = vector.broadcast %cst_113 : f32 to vector<1x32xf32>
    %94 = arith.addf %92, %93 : vector<1x32xf32>
    %95 = math.rsqrt %94 : vector<1x32xf32>
    %c0_114 = arith.constant 0 : index
    %c0_115 = arith.constant 0 : index
    %96 = vector.load %arg6[%c0_114, %c0_115] : memref<1x32xf32, #tpu.memory_space<vmem>>, vector<1x32xf32>
    %97 = arith.mulf %96, %95 : vector<1x32xf32>
    %c0_116 = arith.constant 0 : index
    %c0_117 = arith.constant 0 : index
    %98 = vector.load %arg7[%c0_116, %c0_117] : memref<1x32xf32, #tpu.memory_space<vmem>>, vector<1x32xf32>
    %99 = arith.mulf %83, %97 : vector<1x32xf32>
    %100 = arith.subf %98, %99 : vector<1x32xf32>
    %101 = vector.broadcast %97 : vector<1x32xf32> to vector<512x32xf32>
    %102 = arith.mulf %79, %101 : vector<512x32xf32>
    %103 = vector.broadcast %100 : vector<1x32xf32> to vector<512x32xf32>
    %104 = arith.addf %102, %103 : vector<512x32xf32>
    %c0_118 = arith.constant 0 : index
    %c0_119 = arith.constant 0 : index
    %105 = vector.load %arg1[%c0_118, %c0_119] : memref<512x32xf32, #tpu.memory_space<vmem>>, vector<512x32xf32>
    %106 = arith.addf %104, %105 : vector<512x32xf32>
    %cst_120 = arith.constant 0.000000e+00 : f32
    %107 = vector.broadcast %cst_120 : f32 to vector<512x32xf32>
    %108 = arith.maximumf %106, %107 : vector<512x32xf32>
    %c0_121 = arith.constant 0 : index
    %c0_122 = arith.constant 0 : index
    %109 = vector.load %arg8[%c0_121, %c0_122] : memref<512x32xf32, #tpu.memory_space<vmem>>, vector<512x32xf32>
    tpu.vector_store %arg8[%c0_121, %c0_122], %108 {strides = array<i32>} : memref<512x32xf32, #tpu.memory_space<vmem>>, vector<512x32xf32>,
    return
  }
}

</mosaic_0001>

<llo_original>
// kernel: tpu_custom_call.1
$region0: #{tpu_custom_call.1}
  #allocation0 [shape = 'u32[]', space=smem, size = 0x4, offset = 0x4, fixed_abs, tag = 'smem constant byte address 0x4 - core index']
  #allocation1 [shape = 'u32[144,128]{1,0:T(1,128)}', space=vmem, size = 0x12000, scoped, tag = 'internal scratch']
  #allocation2 [shape = 'bf16[2,18,18,32]{3,2,1,0:T(8,128)(2,1)}', space=vmem, size = 0x36000, scoped, tag = 'scratch operand']
  %s0 = inlined_call_operand.vmem [shape: bf16[2,18,18,32], index: 0, kind: input, shape index: {}]
  %s1 = inlined_call_operand.vmem [shape: f32[512,32], index: 1, kind: input, shape index: {}]
  %s2 = inlined_call_operand.vmem [shape: bf16[288,32], index: 2, kind: input, shape index: {}]
  %s3 = inlined_call_operand.vmem [shape: bf16[288,32], index: 3, kind: input, shape index: {}]
  %s4 = inlined_call_operand.vmem [shape: f32[1,32], index: 4, kind: input, shape index: {}]
  %s5 = inlined_call_operand.vmem [shape: f32[1,32], index: 5, kind: input, shape index: {}]
  %s6 = inlined_call_operand.vmem [shape: f32[1,32], index: 6, kind: input, shape index: {}]
  %s7 = inlined_call_operand.vmem [shape: f32[1,32], index: 7, kind: input, shape index: {}]
  %s8 = inlined_call_operand.vmem [shape: f32[512,32], index: 8, kind: output, shape index: {}]
  %s9 = sld [smem:[#allocation0]]
  $region42: #{tpu_custom_call.1} parent=0
    _
  %s11 = ssub.s32 1, %s9
  %s12 = scalar_select 0, %s11, %s9
  // Predicated region
  $region2: #{tpu_custom_call.1} parent=0 // pred_check
    _
  $region3: #{tpu_custom_call.1} parent=0 // pred_check_branch
    %14 = sbr.rel (0) target = $region5
  $region4: #{tpu_custom_call.1} parent=0 // pred_region
    _
  $region5: #{tpu_custom_call.1} parent=0 // pred_fallthru
    _
  // Predicated region
  $region6: #{tpu_custom_call.1} parent=0 // pred_check
    _
  $region7: #{tpu_custom_call.1} parent=0 // pred_check_branch
    %16 = sbr.rel (0) target = $region9
  $region8: #{tpu_custom_call.1} parent=0 // pred_region
    _
  $region9: #{tpu_custom_call.1} parent=0 // pred_fallthru
    _
  // Predicated region
  $region10: #{tpu_custom_call.1} parent=0 // pred_check
    _
  $region11: #{tpu_custom_call.1} parent=0 // pred_check_branch
    %18 = sbr.rel (0) target = $region13
  $region12: #{tpu_custom_call.1} parent=0 // pred_region
    _
  $region13: #{tpu_custom_call.1} parent=0 // pred_fallthru
    _
  // Predicated region
  $region14: #{tpu_custom_call.1} parent=0 // pred_check
    _
  $region15: #{tpu_custom_call.1} parent=0 // pred_check_branch
    %20 = sbr.rel (0) target = $region17
  $region16: #{tpu_custom_call.1} parent=0 // pred_region
    _
  $region17: #{tpu_custom_call.1} parent=0 // pred_fallthru
    _
  // Predicated region
  $region18: #{tpu_custom_call.1} parent=0 // pred_check
    _
  $region19: #{tpu_custom_call.1} parent=0 // pred_check_branch
    %22 = sbr.rel (0) target = $region21
  $region20: #{tpu_custom_call.1} parent=0 // pred_region
    _
  $region21: #{tpu_custom_call.1} parent=0 // pred_fallthru
    _
  // Predicated region
  $region22: #{tpu_custom_call.1} parent=0 // pred_check
    _
  $region23: #{tpu_custom_call.1} parent=0 // pred_check_branch
    %24 = sbr.rel (0) target = $region25
  $region24: #{tpu_custom_call.1} parent=0 // pred_region
    _
  $region25: #{tpu_custom_call.1} parent=0 // pred_fallthru
    _
  // Predicated region
  $region26: #{tpu_custom_call.1} parent=0 // pred_check
    _
  $region27: #{tpu_custom_call.1} parent=0 // pred_check_branch
    %26 = sbr.rel (0) target = $region29
  $region28: #{tpu_custom_call.1} parent=0 // pred_region
    _
  $region29: #{tpu_custom_call.1} parent=0 // pred_fallthru
    _
  // Predicated region
  $region30: #{tpu_custom_call.1} parent=0 // pred_check
    _
  $region31: #{tpu_custom_call.1} parent=0 // pred_check_branch
    %28 = sbr.rel (0) target = $region33
  $region32: #{tpu_custom_call.1} parent=0 // pred_region
    _
  $region33: #{tpu_custom_call.1} parent=0 // pred_fallthru
    _
  %v30 = vld [vmem:[%s0] sm:$0xf]
  %v31 = vld [vmem:[%s0 + $0x4] sm:$0xf]
  %v32 = vld [vmem:[%s0 + $0xc] sm:$0xf]
  %v33 = vld [vmem:[%s0 + $0x10] sm:$0xf]
  %v34 = vld [vmem:[%s0 + $0x18] sm:$0xf]
  %v35 = vld [vmem:[%s0 + $0x1c] sm:$0xf]
  %v36 = vld [vmem:[%s0 + $0x24] sm:$0xf]
  %v37 = vld [vmem:[%s0 + $0x28] sm:$0xf]
  %v38 = vld [vmem:[%s0 + $0x30] sm:$0xf]
  %v39 = vld [vmem:[%s0 + $0x34] sm:$0xf]
  %v40 = vld [vmem:[%s0 + $0x3c] sm:$0xf]
  %v41 = vld [vmem:[%s0 + $0x40] sm:$0xf]
  %v42 = vld [vmem:[%s0 + $0x48] sm:$0xf]
  %v43 = vld [vmem:[%s0 + $0x4c] sm:$0xf]
  %v44 = vld [vmem:[%s0 + $0x54] sm:$0xf]
  %v45 = vld [vmem:[%s0 + $0x58] sm:$0xf]
  %v46 = vld [vmem:[%s0 + $0x60] sm:$0xf]
  %v47 = vld [vmem:[%s0 + $0x64] sm:$0xf]
  %v48 = vld [vmem:[%s0 + $0x6c] sm:$0xf]
  %v49 = vld [vmem:[%s0 + $0x70] sm:$0xf]
  %v50 = vld [vmem:[%s0 + $0x78] sm:$0xf]
  %v51 = vld [vmem:[%s0 + $0x7c] sm:$0xf]
  %v52 = vld [vmem:[%s0 + $0x84] sm:$0xf]
  %v53 = vld [vmem:[%s0 + $0x88] sm:$0xf]
  %v54 = vld [vmem:[%s0 + $0x90] sm:$0xf]
  %v55 = vld [vmem:[%s0 + $0x94] sm:$0xf]
  %v56 = vld [vmem:[%s0 + $0x9c] sm:$0xf]
  %v57 = vld [vmem:[%s0 + $0xa0] sm:$0xf]
  %v58 = vld [vmem:[%s0 + $0xa8] sm:$0xf]
  %v59 = vld [vmem:[%s0 + $0xac] sm:$0xf]
  %v60 = vld [vmem:[%s0 + $0xb4] sm:$0xf]
  %v61 = vld [vmem:[%s0 + $0xb8] sm:$0xf]
  %v62 = vld [vmem:[%s0 + $0xd8] sm:$0xf]
  %v63 = vld [vmem:[%s0 + $0xdc] sm:$0xf]
  %v64 = vld [vmem:[%s0 + $0xe4] sm:$0xf]
  %v65 = vld [vmem:[%s0 + $0xe8] sm:$0xf]
  %v66 = vld [vmem:[%s0 + $0xf0] sm:$0xf]
  %v67 = vld [vmem:[%s0 + $0xf4] sm:$0xf]
  %v68 = vld [vmem:[%s0 + $0xfc] sm:$0xf]
  %v69 = vld [vmem:[%s0 + $0x100] sm:$0xf]
  %v70 = vld [vmem:[%s0 + $0x108] sm:$0xf]
  %v71 = vld [vmem:[%s0 + $0x10c] sm:$0xf]
  %v72 = vld [vmem:[%s0 + $0x114] sm:$0xf]
  %v73 = vld [vmem:[%s0 + $0x118] sm:$0xf]
  %v74 = vld [vmem:[%s0 + $0x120] sm:$0xf]
  %v75 = vld [vmem:[%s0 + $0x124] sm:$0xf]
  %v76 = vld [vmem:[%s0 + $0x12c] sm:$0xf]
  %v77 = vld [vmem:[%s0 + $0x130] sm:$0xf]
  %v78 = vld [vmem:[%s0 + $0x138] sm:$0xf]
  %v79 = vld [vmem:[%s0 + $0x13c] sm:$0xf]
  %v80 = vld [vmem:[%s0 + $0x144] sm:$0xf]
  %v81 = vld [vmem:[%s0 + $0x148] sm:$0xf]
  %v82 = vld [vmem:[%s0 + $0x150] sm:$0xf]
  %v83 = vld [vmem:[%s0 + $0x154] sm:$0xf]
  %v84 = vld [vmem:[%s0 + $0x15c] sm:$0xf]
  %v85 = vld [vmem:[%s0 + $0x160] sm:$0xf]
  %v86 = vld [vmem:[%s0 + $0x168] sm:$0xf]
  %v87 = vld [vmem:[%s0 + $0x16c] sm:$0xf]
  %v88 = vld [vmem:[%s0 + $0x174] sm:$0xf]
  %v89 = vld [vmem:[%s0 + $0x178] sm:$0xf]
  %v90 = vld [vmem:[%s0 + $0x180] sm:$0xf]
  %v91 = vld [vmem:[%s0 + $0x184] sm:$0xf]
  %v92 = vld [vmem:[%s0 + $0x18c] sm:$0xf]
  %v93 = vld [vmem:[%s0 + $0x190] sm:$0xf]
  %v94 = vld [vmem:[%s0 + $0x8] sm:$0x1]
  %v95 = vld [vmem:[%s0 + $0x14] sm:$0x1]
  %v96 = vld [vmem:[%s0 + $0x20] sm:$0x1]
  %v97 = vld [vmem:[%s0 + $0x2c] sm:$0x1]
  %v98 = vld [vmem:[%s0 + $0x38] sm:$0x1]
  %v99 = vld [vmem:[%s0 + $0x44] sm:$0x1]
  %v100 = vld [vmem:[%s0 + $0x50] sm:$0x1]
  %v101 = vld [vmem:[%s0 + $0x5c] sm:$0x1]
  %v102 = vld [vmem:[%s0 + $0x68] sm:$0x1]
  %v103 = vld [vmem:[%s0 + $0x74] sm:$0x1]
  %v104 = vld [vmem:[%s0 + $0x80] sm:$0x1]
  %v105 = vld [vmem:[%s0 + $0x8c] sm:$0x1]
  %v106 = vld [vmem:[%s0 + $0x98] sm:$0x1]
  %v107 = vld [vmem:[%s0 + $0xa4] sm:$0x1]
  %v108 = vld [vmem:[%s0 + $0xb0] sm:$0x1]
  %v109 = vld [vmem:[%s0 + $0xbc] sm:$0x1]
  %v110 = vld [vmem:[%s0 + $0xe0] sm:$0x1]
  %v111 = vld [vmem:[%s0 + $0xec] sm:$0x1]
  %v112 = vld [vmem:[%s0 + $0xf8] sm:$0x1]
  %v113 = vld [vmem:[%s0 + $0x104] sm:$0x1]
  %v114 = vld [vmem:[%s0 + $0x110] sm:$0x1]
  %v115 = vld [vmem:[%s0 + $0x11c] sm:$0x1]
  %v116 = vld [vmem:[%s0 + $0x128] sm:$0x1]
  %v117 = vld [vmem:[%s0 + $0x134] sm:$0x1]
  %v118 = vld [vmem:[%s0 + $0x140] sm:$0x1]
  %v119 = vld [vmem:[%s0 + $0x14c] sm:$0x1]
  %v120 = vld [vmem:[%s0 + $0x158] sm:$0x1]
  %v121 = vld [vmem:[%s0 + $0x164] sm:$0x1]
  %v122 = vld [vmem:[%s0 + $0x170] sm:$0x1]
  %v123 = vld [vmem:[%s0 + $0x17c] sm:$0x1]
  %v124 = vld [vmem:[%s0 + $0x188] sm:$0x1]
  %v125 = vld [vmem:[%s0 + $0x194] sm:$0x1]
  %vm126 = vsmask.f32 3328
  %vm127 = vsmask.f32 7440
  %vm128 = vmor %vm126, %vm127
  %v130 = vshrl.u32 %v30, 16
  %v132 = vrot.slane %v130, 4
  %v133 = vshll.u32 %v30, 16
  %v135 = vrot.slane %v133, 5
  %v136 = vor.u32 %v132, %v135
  %v137 = vrot.slane %v136, 4
  %v139 = vshll.u32 %v31, 16
  %v141 = vrot.slane %v139, 5
  %v142 = vsel %vm128, %v137, %v141
  %v143 = vshrl.u32 %v31, 16
  %v145 = vrot.slane %v143, 4
  %v146 = vor.u32 %v145, %v141
  %v147 = vrot.slane %v146, 4
  %v149 = vshll.u32 %v94, 16
  %v151 = vrot.slane %v149, 5
  %v152 = vsel %vm128, %v147, %v151
  %v154 = vshrl.u32 %v32, 16
  %v156 = vrot.slane %v154, 4
  %v157 = vshll.u32 %v32, 16
  %v159 = vrot.slane %v157, 5
  %v160 = vor.u32 %v156, %v159
  %v161 = vrot.slane %v160, 4
  %v163 = vshll.u32 %v33, 16
  %v165 = vrot.slane %v163, 5
  %v166 = vsel %vm128, %v161, %v165
  %v167 = vshrl.u32 %v33, 16
  %v169 = vrot.slane %v167, 4
  %v170 = vor.u32 %v169, %v165
  %v171 = vrot.slane %v170, 4
  %v173 = vshll.u32 %v95, 16
  %v175 = vrot.slane %v173, 5
  %v176 = vsel %vm128, %v171, %v175
  %v178 = vshrl.u32 %v34, 16
  %v180 = vrot.slane %v178, 4
  %v181 = vshll.u32 %v34, 16
  %v183 = vrot.slane %v181, 5
  %v184 = vor.u32 %v180, %v183
  %v185 = vrot.slane %v184, 4
  %v187 = vshll.u32 %v35, 16
  %v189 = vrot.slane %v187, 5
  %v190 = vsel %vm128, %v185, %v189
  %v191 = vshrl.u32 %v35, 16
  %v193 = vrot.slane %v191, 4
  %v194 = vor.u32 %v193, %v189
  %v195 = vrot.slane %v194, 4
  %v197 = vshll.u32 %v96, 16
  %v199 = vrot.slane %v197, 5
  %v200 = vsel %vm128, %v195, %v199
  %v202 = vshrl.u32 %v36, 16
  %v204 = vrot.slane %v202, 4
  %v205 = vshll.u32 %v36, 16
  %v207 = vrot.slane %v205, 5
  %v208 = vor.u32 %v204, %v207
  %v209 = vrot.slane %v208, 4
  %v211 = vshll.u32 %v37, 16
  %v213 = vrot.slane %v211, 5
  %v214 = vsel %vm128, %v209, %v213
  %v215 = vshrl.u32 %v37, 16
  %v217 = vrot.slane %v215, 4
  %v218 = vor.u32 %v217, %v213
  %v219 = vrot.slane %v218, 4
  %v221 = vshll.u32 %v97, 16
  %v223 = vrot.slane %v221, 5
  %v224 = vsel %vm128, %v219, %v223
  %v226 = vshrl.u32 %v38, 16
  %v228 = vrot.slane %v226, 4
  %v229 = vshll.u32 %v38, 16
  %v231 = vrot.slane %v229, 5
  %v232 = vor.u32 %v228, %v231
  %v233 = vrot.slane %v232, 4
  %v235 = vshll.u32 %v39, 16
  %v237 = vrot.slane %v235, 5
  %v238 = vsel %vm128, %v233, %v237
  %v239 = vshrl.u32 %v39, 16
  %v241 = vrot.slane %v239, 4
  %v242 = vor.u32 %v241, %v237
  %v243 = vrot.slane %v242, 4
  %v245 = vshll.u32 %v98, 16
  %v247 = vrot.slane %v245, 5
  %v248 = vsel %vm128, %v243, %v247
  %v250 = vshrl.u32 %v40, 16
  %v252 = vrot.slane %v250, 4
  %v253 = vshll.u32 %v40, 16
  %v255 = vrot.slane %v253, 5
  %v256 = vor.u32 %v252, %v255
  %v257 = vrot.slane %v256, 4
  %v259 = vshll.u32 %v41, 16
  %v261 = vrot.slane %v259, 5
  %v262 = vsel %vm128, %v257, %v261
  %v263 = vshrl.u32 %v41, 16
  %v265 = vrot.slane %v263, 4
  %v266 = vor.u32 %v265, %v261
  %v267 = vrot.slane %v266, 4
  %v269 = vshll.u32 %v99, 16
  %v271 = vrot.slane %v269, 5
  %v272 = vsel %vm128, %v267, %v271
  %v274 = vshrl.u32 %v42, 16
  %v276 = vrot.slane %v274, 4
  %v277 = vshll.u32 %v42, 16
  %v279 = vrot.slane %v277, 5
  %v280 = vor.u32 %v276, %v279
  %v281 = vrot.slane %v280, 4
  %v283 = vshll.u32 %v43, 16
  %v285 = vrot.slane %v283, 5
  %v286 = vsel %vm128, %v281, %v285
  %v287 = vshrl.u32 %v43, 16
  %v289 = vrot.slane %v287, 4
  %v290 = vor.u32 %v289, %v285
  %v291 = vrot.slane %v290, 4
  %v293 = vshll.u32 %v100, 16
  %v295 = vrot.slane %v293, 5
  %v296 = vsel %vm128, %v291, %v295
  %v298 = vshrl.u32 %v44, 16
  %v300 = vrot.slane %v298, 4
  %v301 = vshll.u32 %v44, 16
  %v303 = vrot.slane %v301, 5
  %v304 = vor.u32 %v300, %v303
  %v305 = vrot.slane %v304, 4
  %v307 = vshll.u32 %v45, 16
  %v309 = vrot.slane %v307, 5
  %v310 = vsel %vm128, %v305, %v309
  %v311 = vshrl.u32 %v45, 16
  %v313 = vrot.slane %v311, 4
  %v314 = vor.u32 %v313, %v309
  %v315 = vrot.slane %v314, 4
  %v317 = vshll.u32 %v101, 16
  %v319 = vrot.slane %v317, 5
  %v320 = vsel %vm128, %v315, %v319
  %v322 = vshrl.u32 %v46, 16
  %v324 = vrot.slane %v322, 4
  %v325 = vshll.u32 %v46, 16
  %v327 = vrot.slane %v325, 5
  %v328 = vor.u32 %v324, %v327
  %v329 = vrot.slane %v328, 4
  %v331 = vshll.u32 %v47, 16
  %v333 = vrot.slane %v331, 5
  %v334 = vsel %vm128, %v329, %v333
  %v335 = vshrl.u32 %v47, 16
  %v337 = vrot.slane %v335, 4
  %v338 = vor.u32 %v337, %v333
  %v339 = vrot.slane %v338, 4
  %v341 = vshll.u32 %v102, 16
  %v343 = vrot.slane %v341, 5
  %v344 = vsel %vm128, %v339, %v343
  %v346 = vshrl.u32 %v48, 16
  %v348 = vrot.slane %v346, 4
  %v349 = vshll.u32 %v48, 16
  %v351 = vrot.slane %v349, 5
  %v352 = vor.u32 %v348, %v351
  %v353 = vrot.slane %v352, 4
  %v355 = vshll.u32 %v49, 16
  %v357 = vrot.slane %v355, 5
  %v358 = vsel %vm128, %v353, %v357
  %v359 = vshrl.u32 %v49, 16
  %v361 = vrot.slane %v359, 4
  %v362 = vor.u32 %v361, %v357
  %v363 = vrot.slane %v362, 4
  %v365 = vshll.u32 %v103, 16
  %v367 = vrot.slane %v365, 5
  %v368 = vsel %vm128, %v363, %v367
  %v370 = vshrl.u32 %v50, 16
  %v372 = vrot.slane %v370, 4
  %v373 = vshll.u32 %v50, 16
  %v375 = vrot.slane %v373, 5
  %v376 = vor.u32 %v372, %v375
  %v377 = vrot.slane %v376, 4
  %v379 = vshll.u32 %v51, 16
  %v381 = vrot.slane %v379, 5
  %v382 = vsel %vm128, %v377, %v381
  %v383 = vshrl.u32 %v51, 16
  %v385 = vrot.slane %v383, 4
  %v386 = vor.u32 %v385, %v381
  %v387 = vrot.slane %v386, 4
  %v389 = vshll.u32 %v104, 16
  %v391 = vrot.slane %v389, 5
  %v392 = vsel %vm128, %v387, %v391
  %v394 = vshrl.u32 %v52, 16
  %v396 = vrot.slane %v394, 4
  %v397 = vshll.u32 %v52, 16
  %v399 = vrot.slane %v397, 5
  %v400 = vor.u32 %v396, %v399
  %v401 = vrot.slane %v400, 4
  %v403 = vshll.u32 %v53, 16
  %v405 = vrot.slane %v403, 5
  %v406 = vsel %vm128, %v401, %v405
  %v407 = vshrl.u32 %v53, 16
  %v409 = vrot.slane %v407, 4
  %v410 = vor.u32 %v409, %v405
  %v411 = vrot.slane %v410, 4
  %v413 = vshll.u32 %v105, 16
  %v415 = vrot.slane %v413, 5
  %v416 = vsel %vm128, %v411, %v415
  %v418 = vshrl.u32 %v54, 16
  %v420 = vrot.slane %v418, 4
  %v421 = vshll.u32 %v54, 16
  %v423 = vrot.slane %v421, 5
  %v424 = vor.u32 %v420, %v423
  %v425 = vrot.slane %v424, 4
  %v427 = vshll.u32 %v55, 16
  %v429 = vrot.slane %v427, 5
  %v430 = vsel %vm128, %v425, %v429
  %v431 = vshrl.u32 %v55, 16
  %v433 = vrot.slane %v431, 4
  %v434 = vor.u32 %v433, %v429
  %v435 = vrot.slane %v434, 4
  %v437 = vshll.u32 %v106, 16
  %v439 = vrot.slane %v437, 5
  %v440 = vsel %vm128, %v435, %v439
  %v442 = vshrl.u32 %v56, 16
  %v444 = vrot.slane %v442, 4
  %v445 = vshll.u32 %v56, 16
  %v447 = vrot.slane %v445, 5
  %v448 = vor.u32 %v444, %v447
  %v449 = vrot.slane %v448, 4
  %v451 = vshll.u32 %v57, 16
  %v453 = vrot.slane %v451, 5
  %v454 = vsel %vm128, %v449, %v453
  %v455 = vshrl.u32 %v57, 16
  %v457 = vrot.slane %v455, 4
  %v458 = vor.u32 %v457, %v453
  %v459 = vrot.slane %v458, 4
  %v461 = vshll.u32 %v107, 16
  %v463 = vrot.slane %v461, 5
  %v464 = vsel %vm128, %v459, %v463
  %v466 = vshrl.u32 %v58, 16
  %v468 = vrot.slane %v466, 4
  %v469 = vshll.u32 %v58, 16
  %v471 = vrot.slane %v469, 5
  %v472 = vor.u32 %v468, %v471
  %v473 = vrot.slane %v472, 4
  %v475 = vshll.u32 %v59, 16
  %v477 = vrot.slane %v475, 5
  %v478 = vsel %vm128, %v473, %v477
  %v479 = vshrl.u32 %v59, 16
  %v481 = vrot.slane %v479, 4
  %v482 = vor.u32 %v481, %v477
  %v483 = vrot.slane %v482, 4
  %v485 = vshll.u32 %v108, 16
  %v487 = vrot.slane %v485, 5
  %v488 = vsel %vm128, %v483, %v487
  %v490 = vshrl.u32 %v60, 16
  %v492 = vrot.slane %v490, 4
  %v493 = vshll.u32 %v60, 16
  %v495 = vrot.slane %v493, 5
  %v496 = vor.u32 %v492, %v495
  %v497 = vrot.slane %v496, 4
  %v499 = vshll.u32 %v61, 16
  %v501 = vrot.slane %v499, 5
  %v502 = vsel %vm128, %v497, %v501
  %v503 = vshrl.u32 %v61, 16
  %v505 = vrot.slane %v503, 4
  %v506 = vor.u32 %v505, %v501
  %v507 = vrot.slane %v506, 4
  %v509 = vshll.u32 %v109, 16
  %v511 = vrot.slane %v509, 5
  %v512 = vsel %vm128, %v507, %v511
  %v514 = vshrl.u32 %v62, 16
  %v516 = vrot.slane %v514, 4
  %v517 = vshll.u32 %v62, 16
  %v519 = vrot.slane %v517, 5
  %v520 = vor.u32 %v516, %v519
  %v521 = vrot.slane %v520, 4
  %v523 = vshll.u32 %v63, 16
  %v525 = vrot.slane %v523, 5
  %v526 = vsel %vm128, %v521, %v525
  %v527 = vshrl.u32 %v63, 16
  %v529 = vrot.slane %v527, 4
  %v530 = vor.u32 %v529, %v525
  %v531 = vrot.slane %v530, 4
  %v533 = vshll.u32 %v110, 16
  %v535 = vrot.slane %v533, 5
  %v536 = vsel %vm128, %v531, %v535
  %v538 = vshrl.u32 %v64, 16
  %v540 = vrot.slane %v538, 4
  %v541 = vshll.u32 %v64, 16
  %v543 = vrot.slane %v541, 5
  %v544 = vor.u32 %v540, %v543
  %v545 = vrot.slane %v544, 4
  %v547 = vshll.u32 %v65, 16
  %v549 = vrot.slane %v547, 5
  %v550 = vsel %vm128, %v545, %v549
  %v551 = vshrl.u32 %v65, 16
  %v553 = vrot.slane %v551, 4
  %v554 = vor.u32 %v553, %v549
  %v555 = vrot.slane %v554, 4
  %v557 = vshll.u32 %v111, 16
  %v559 = vrot.slane %v557, 5
  %v560 = vsel %vm128, %v555, %v559
  %v562 = vshrl.u32 %v66, 16
  %v564 = vrot.slane %v562, 4
  %v565 = vshll.u32 %v66, 16
  %v567 = vrot.slane %v565, 5
  %v568 = vor.u32 %v564, %v567
  %v569 = vrot.slane %v568, 4
  %v571 = vshll.u32 %v67, 16
  %v573 = vrot.slane %v571, 5
  %v574 = vsel %vm128, %v569, %v573
  %v575 = vshrl.u32 %v67, 16
  %v577 = vrot.slane %v575, 4
  %v578 = vor.u32 %v577, %v573
  %v579 = vrot.slane %v578, 4
  %v581 = vshll.u32 %v112, 16
  %v583 = vrot.slane %v581, 5
  %v584 = vsel %vm128, %v579, %v583
  %v586 = vshrl.u32 %v68, 16
  %v588 = vrot.slane %v586, 4
  %v589 = vshll.u32 %v68, 16
  %v591 = vrot.slane %v589, 5
  %v592 = vor.u32 %v588, %v591
  %v593 = vrot.slane %v592, 4
  %v595 = vshll.u32 %v69, 16
  %v597 = vrot.slane %v595, 5
  %v598 = vsel %vm128, %v593, %v597
  %v599 = vshrl.u32 %v69, 16
  %v601 = vrot.slane %v599, 4
  %v602 = vor.u32 %v601, %v597
  %v603 = vrot.slane %v602, 4
  %v605 = vshll.u32 %v113, 16
  %v607 = vrot.slane %v605, 5
  %v608 = vsel %vm128, %v603, %v607
  %v610 = vshrl.u32 %v70, 16
  %v612 = vrot.slane %v610, 4
  %v613 = vshll.u32 %v70, 16
  %v615 = vrot.slane %v613, 5
  %v616 = vor.u32 %v612, %v615
  %v617 = vrot.slane %v616, 4
  %v619 = vshll.u32 %v71, 16
  %v621 = vrot.slane %v619, 5
  %v622 = vsel %vm128, %v617, %v621
  %v623 = vshrl.u32 %v71, 16
  %v625 = vrot.slane %v623, 4
  %v626 = vor.u32 %v625, %v621
  %v627 = vrot.slane %v626, 4
  %v629 = vshll.u32 %v114, 16
  %v631 = vrot.slane %v629, 5
  %v632 = vsel %vm128, %v627, %v631
  %v634 = vshrl.u32 %v72, 16
  %v636 = vrot.slane %v634, 4
  %v637 = vshll.u32 %v72, 16
  %v639 = vrot.slane %v637, 5
  %v640 = vor.u32 %v636, %v639
  %v641 = vrot.slane %v640, 4
  %v643 = vshll.u32 %v73, 16
  %v645 = vrot.slane %v643, 5
  %v646 = vsel %vm128, %v641, %v645
  %v647 = vshrl.u32 %v73, 16
  %v649 = vrot.slane %v647, 4
  %v650 = vor.u32 %v649, %v645
  %v651 = vrot.slane %v650, 4
  %v653 = vshll.u32 %v115, 16
  %v655 = vrot.slane %v653, 5
  %v656 = vsel %vm128, %v651, %v655
  %v658 = vshrl.u32 %v74, 16
  %v660 = vrot.slane %v658, 4
  %v661 = vshll.u32 %v74, 16
  %v663 = vrot.slane %v661, 5
  %v664 = vor.u32 %v660, %v663
  %v665 = vrot.slane %v664, 4
  %v667 = vshll.u32 %v75, 16
  %v669 = vrot.slane %v667, 5
  %v670 = vsel %vm128, %v665, %v669
  %v671 = vshrl.u32 %v75, 16
  %v673 = vrot.slane %v671, 4
  %v674 = vor.u32 %v673, %v669
  %v675 = vrot.slane %v674, 4
  %v677 = vshll.u32 %v116, 16
  %v679 = vrot.slane %v677, 5
  %v680 = vsel %vm128, %v675, %v679
  %v682 = vshrl.u32 %v76, 16
  %v684 = vrot.slane %v682, 4
  %v685 = vshll.u32 %v76, 16
  %v687 = vrot.slane %v685, 5
  %v688 = vor.u32 %v684, %v687
  %v689 = vrot.slane %v688, 4
  %v691 = vshll.u32 %v77, 16
  %v693 = vrot.slane %v691, 5
  %v694 = vsel %vm128, %v689, %v693
  %v695 = vshrl.u32 %v77, 16
  %v697 = vrot.slane %v695, 4
  %v698 = vor.u32 %v697, %v693
  %v699 = vrot.slane %v698, 4
  %v701 = vshll.u32 %v117, 16
  %v703 = vrot.slane %v701, 5
  %v704 = vsel %vm128, %v699, %v703
  %v706 = vshrl.u32 %v78, 16
  %v708 = vrot.slane %v706, 4
  %v709 = vshll.u32 %v78, 16
  %v711 = vrot.slane %v709, 5
  %v712 = vor.u32 %v708, %v711
  %v713 = vrot.slane %v712, 4
  %v715 = vshll.u32 %v79, 16
  %v717 = vrot.slane %v715, 5
  %v718 = vsel %vm128, %v713, %v717
  %v719 = vshrl.u32 %v79, 16
  %v721 = vrot.slane %v719, 4
  %v722 = vor.u32 %v721, %v717
  %v723 = vrot.slane %v722, 4
  %v725 = vshll.u32 %v118, 16
  %v727 = vrot.slane %v725, 5
  %v728 = vsel %vm128, %v723, %v727
  %v730 = vshrl.u32 %v80, 16
  %v732 = vrot.slane %v730, 4
  %v733 = vshll.u32 %v80, 16
  %v735 = vrot.slane %v733, 5
  %v736 = vor.u32 %v732, %v735
  %v737 = vrot.slane %v736, 4
  %v739 = vshll.u32 %v81, 16
  %v741 = vrot.slane %v739, 5
  %v742 = vsel %vm128, %v737, %v741
  %v743 = vshrl.u32 %v81, 16
  %v745 = vrot.slane %v743, 4
  %v746 = vor.u32 %v745, %v741
  %v747 = vrot.slane %v746, 4
  %v749 = vshll.u32 %v119, 16
  %v751 = vrot.slane %v749, 5
  %v752 = vsel %vm128, %v747, %v751
  %v754 = vshrl.u32 %v82, 16
  %v756 = vrot.slane %v754, 4
  %v757 = vshll.u32 %v82, 16
  %v759 = vrot.slane %v757, 5
  %v760 = vor.u32 %v756, %v759
  %v761 = vrot.slane %v760, 4
  %v763 = vshll.u32 %v83, 16
  %v765 = vrot.slane %v763, 5
  %v766 = vsel %vm128, %v761, %v765
  %v767 = vshrl.u32 %v83, 16
  %v769 = vrot.slane %v767, 4
  %v770 = vor.u32 %v769, %v765
  %v771 = vrot.slane %v770, 4
  %v773 = vshll.u32 %v120, 16
  %v775 = vrot.slane %v773, 5
  %v776 = vsel %vm128, %v771, %v775
  %v778 = vshrl.u32 %v84, 16
  %v780 = vrot.slane %v778, 4
  %v781 = vshll.u32 %v84, 16
  %v783 = vrot.slane %v781, 5
  %v784 = vor.u32 %v780, %v783
  %v785 = vrot.slane %v784, 4
  %v787 = vshll.u32 %v85, 16
  %v789 = vrot.slane %v787, 5
  %v790 = vsel %vm128, %v785, %v789
  %v791 = vshrl.u32 %v85, 16
  %v793 = vrot.slane %v791, 4
  %v794 = vor.u32 %v793, %v789
  %v795 = vrot.slane %v794, 4
  %v797 = vshll.u32 %v121, 16
  %v799 = vrot.slane %v797, 5
  %v800 = vsel %vm128, %v795, %v799
  %v802 = vshrl.u32 %v86, 16
  %v804 = vrot.slane %v802, 4
  %v805 = vshll.u32 %v86, 16
  %v807 = vrot.slane %v805, 5
  %v808 = vor.u32 %v804, %v807
  %v809 = vrot.slane %v808, 4
  %v811 = vshll.u32 %v87, 16
  %v813 = vrot.slane %v811, 5
  %v814 = vsel %vm128, %v809, %v813
  %v815 = vshrl.u32 %v87, 16
  %v817 = vrot.slane %v815, 4
  %v818 = vor.u32 %v817, %v813
  %v819 = vrot.slane %v818, 4
  %v821 = vshll.u32 %v122, 16
  %v823 = vrot.slane %v821, 5
  %v824 = vsel %vm128, %v819, %v823
  %v826 = vshrl.u32 %v88, 16
  %v828 = vrot.slane %v826, 4
  %v829 = vshll.u32 %v88, 16
  %v831 = vrot.slane %v829, 5
  %v832 = vor.u32 %v828, %v831
  %v833 = vrot.slane %v832, 4
  %v835 = vshll.u32 %v89, 16
  %v837 = vrot.slane %v835, 5
  %v838 = vsel %vm128, %v833, %v837
  %v839 = vshrl.u32 %v89, 16
  %v841 = vrot.slane %v839, 4
  %v842 = vor.u32 %v841, %v837
  %v843 = vrot.slane %v842, 4
  %v845 = vshll.u32 %v123, 16
  %v847 = vrot.slane %v845, 5
  %v848 = vsel %vm128, %v843, %v847
  %v850 = vshrl.u32 %v90, 16
  %v852 = vrot.slane %v850, 4
  %v853 = vshll.u32 %v90, 16
  %v855 = vrot.slane %v853, 5
  %v856 = vor.u32 %v852, %v855
  %v857 = vrot.slane %v856, 4
  %v859 = vshll.u32 %v91, 16
  %v861 = vrot.slane %v859, 5
  %v862 = vsel %vm128, %v857, %v861
  %v863 = vshrl.u32 %v91, 16
  %v865 = vrot.slane %v863, 4
  %v866 = vor.u32 %v865, %v861
  %v867 = vrot.slane %v866, 4
  %v869 = vshll.u32 %v124, 16
  %v871 = vrot.slane %v869, 5
  %v872 = vsel %vm128, %v867, %v871
  %v874 = vshrl.u32 %v92, 16
  %v876 = vrot.slane %v874, 4
  %v877 = vshll.u32 %v92, 16
  %v879 = vrot.slane %v877, 5
  %v880 = vor.u32 %v876, %v879
  %v881 = vrot.slane %v880, 4
  %v883 = vshll.u32 %v93, 16
  %v885 = vrot.slane %v883, 5
  %v886 = vsel %vm128, %v881, %v885
  %v887 = vshrl.u32 %v93, 16
  %v889 = vrot.slane %v887, 4
  %v890 = vor.u32 %v889, %v885
  %v891 = vrot.slane %v890, 4
  %v893 = vshll.u32 %v125, 16
  %v895 = vrot.slane %v893, 5
  %v896 = vsel %vm128, %v891, %v895
  %v897 = vld [vmem:[%s0] sm:$0xe]
  %v898 = vld [vmem:[%s0 + $0xc] sm:$0xe]
  %v899 = vld [vmem:[%s0 + $0x18] sm:$0xe]
  %v900 = vld [vmem:[%s0 + $0x24] sm:$0xe]
  %v901 = vld [vmem:[%s0 + $0x30] sm:$0xe]
  %v902 = vld [vmem:[%s0 + $0x3c] sm:$0xe]
  %v903 = vld [vmem:[%s0 + $0x48] sm:$0xe]
  %v904 = vld [vmem:[%s0 + $0x54] sm:$0xe]
  %v905 = vld [vmem:[%s0 + $0x60] sm:$0xe]
  %v906 = vld [vmem:[%s0 + $0x6c] sm:$0xe]
  %v907 = vld [vmem:[%s0 + $0x78] sm:$0xe]
  %v908 = vld [vmem:[%s0 + $0x84] sm:$0xe]
  %v909 = vld [vmem:[%s0 + $0x90] sm:$0xe]
  %v910 = vld [vmem:[%s0 + $0x9c] sm:$0xe]
  %v911 = vld [vmem:[%s0 + $0xa8] sm:$0xe]
  %v912 = vld [vmem:[%s0 + $0xb4] sm:$0xe]
  %v913 = vld [vmem:[%s0 + $0xd8] sm:$0xe]
  %v914 = vld [vmem:[%s0 + $0xe4] sm:$0xe]
  %v915 = vld [vmem:[%s0 + $0xf0] sm:$0xe]
  %v916 = vld [vmem:[%s0 + $0xfc] sm:$0xe]
  %v917 = vld [vmem:[%s0 + $0x108] sm:$0xe]
  %v918 = vld [vmem:[%s0 + $0x114] sm:$0xe]
  %v919 = vld [vmem:[%s0 + $0x120] sm:$0xe]
  %v920 = vld [vmem:[%s0 + $0x12c] sm:$0xe]
  %v921 = vld [vmem:[%s0 + $0x138] sm:$0xe]
  %v922 = vld [vmem:[%s0 + $0x144] sm:$0xe]
  %v923 = vld [vmem:[%s0 + $0x150] sm:$0xe]
  %v924 = vld [vmem:[%s0 + $0x15c] sm:$0xe]
  %v925 = vld [vmem:[%s0 + $0x168] sm:$0xe]
  %v926 = vld [vmem:[%s0 + $0x174] sm:$0xe]
  %v927 = vld [vmem:[%s0 + $0x180] sm:$0xe]
  %v928 = vld [vmem:[%s0 + $0x18c] sm:$0xe]
  %vm1025 = vcmask 1042432
  %vm1026 = vcmask 1046532
  %vm1027 = vmor %vm1025, %vm1026
  %v1028 = vrot.slane %v897, 5
  %v1029 = vrot.slane %v1028, 4
  %v1030 = vrot.slane %v31, 5
  %v1031 = vsel %vm1027, %v1029, %v1030
  %v1032 = vrot.slane %v1030, 4
  %v1033 = vrot.slane %v94, 5
  %v1034 = vsel %vm1027, %v1032, %v1033
  %v1035 = vrot.slane %v898, 5
  %v1036 = vrot.slane %v1035, 4
  %v1037 = vrot.slane %v33, 5
  %v1038 = vsel %vm1027, %v1036, %v1037
  %v1039 = vrot.slane %v1037, 4
  %v1040 = vrot.slane %v95, 5
  %v1041 = vsel %vm1027, %v1039, %v1040
  %v1042 = vrot.slane %v899, 5
  %v1043 = vrot.slane %v1042, 4
  %v1044 = vrot.slane %v35, 5
  %v1045 = vsel %vm1027, %v1043, %v1044
  %v1046 = vrot.slane %v1044, 4
  %v1047 = vrot.slane %v96, 5
  %v1048 = vsel %vm1027, %v1046, %v1047
  %v1049 = vrot.slane %v900, 5
  %v1050 = vrot.slane %v1049, 4
  %v1051 = vrot.slane %v37, 5
  %v1052 = vsel %vm1027, %v1050, %v1051
  %v1053 = vrot.slane %v1051, 4
  %v1054 = vrot.slane %v97, 5
  %v1055 = vsel %vm1027, %v1053, %v1054
  %v1056 = vrot.slane %v901, 5
  %v1057 = vrot.slane %v1056, 4
  %v1058 = vrot.slane %v39, 5
  %v1059 = vsel %vm1027, %v1057, %v1058
  %v1060 = vrot.slane %v1058, 4
  %v1061 = vrot.slane %v98, 5
  %v1062 = vsel %vm1027, %v1060, %v1061
  %v1063 = vrot.slane %v902, 5
  %v1064 = vrot.slane %v1063, 4
  %v1065 = vrot.slane %v41, 5
  %v1066 = vsel %vm1027, %v1064, %v1065
  %v1067 = vrot.slane %v1065, 4
  %v1068 = vrot.slane %v99, 5
  %v1069 = vsel %vm1027, %v1067, %v1068
  %v1070 = vrot.slane %v903, 5
  %v1071 = vrot.slane %v1070, 4
  %v1072 = vrot.slane %v43, 5
  %v1073 = vsel %vm1027, %v1071, %v1072
  %v1074 = vrot.slane %v1072, 4
  %v1075 = vrot.slane %v100, 5
  %v1076 = vsel %vm1027, %v1074, %v1075
  %v1077 = vrot.slane %v904, 5
  %v1078 = vrot.slane %v1077, 4
  %v1079 = vrot.slane %v45, 5
  %v1080 = vsel %vm1027, %v1078, %v1079
  %v1081 = vrot.slane %v1079, 4
  %v1082 = vrot.slane %v101, 5
  %v1083 = vsel %vm1027, %v1081, %v1082
  %v1084 = vrot.slane %v905, 5
  %v1085 = vrot.slane %v1084, 4
  %v1086 = vrot.slane %v47, 5
  %v1087 = vsel %vm1027, %v1085, %v1086
  %v1088 = vrot.slane %v1086, 4
  %v1089 = vrot.slane %v102, 5
  %v1090 = vsel %vm1027, %v1088, %v1089
  %v1091 = vrot.slane %v906, 5
  %v1092 = vrot.slane %v1091, 4
  %v1093 = vrot.slane %v49, 5
  %v1094 = vsel %vm1027, %v1092, %v1093
  %v1095 = vrot.slane %v1093, 4
  %v1096 = vrot.slane %v103, 5
  %v1097 = vsel %vm1027, %v1095, %v1096
  %v1098 = vrot.slane %v907, 5
  %v1099 = vrot.slane %v1098, 4
  %v1100 = vrot.slane %v51, 5
  %v1101 = vsel %vm1027, %v1099, %v1100
  %v1102 = vrot.slane %v1100, 4
  %v1103 = vrot.slane %v104, 5
  %v1104 = vsel %vm1027, %v1102, %v1103
  %v1105 = vrot.slane %v908, 5
  %v1106 = vrot.slane %v1105, 4
  %v1107 = vrot.slane %v53, 5
  %v1108 = vsel %vm1027, %v1106, %v1107
  %v1109 = vrot.slane %v1107, 4
  %v1110 = vrot.slane %v105, 5
  %v1111 = vsel %vm1027, %v1109, %v1110
  %v1112 = vrot.slane %v909, 5
  %v1113 = vrot.slane %v1112, 4
  %v1114 = vrot.slane %v55, 5
  %v1115 = vsel %vm1027, %v1113, %v1114
  %v1116 = vrot.slane %v1114, 4
  %v1117 = vrot.slane %v106, 5
  %v1118 = vsel %vm1027, %v1116, %v1117
  %v1119 = vrot.slane %v910, 5
  %v1120 = vrot.slane %v1119, 4
  %v1121 = vrot.slane %v57, 5
  %v1122 = vsel %vm1027, %v1120, %v1121
  %v1123 = vrot.slane %v1121, 4
  %v1124 = vrot.slane %v107, 5
  %v1125 = vsel %vm1027, %v1123, %v1124
  %v1126 = vrot.slane %v911, 5
  %v1127 = vrot.slane %v1126, 4
  %v1128 = vrot.slane %v59, 5
  %v1129 = vsel %vm1027, %v1127, %v1128
  %v1130 = vrot.slane %v1128, 4
  %v1131 = vrot.slane %v108, 5
  %v1132 = vsel %vm1027, %v1130, %v1131
  %v1133 = vrot.slane %v912, 5
  %v1134 = vrot.slane %v1133, 4
  %v1135 = vrot.slane %v61, 5
  %v1136 = vsel %vm1027, %v1134, %v1135
  %v1137 = vrot.slane %v1135, 4
  %v1138 = vrot.slane %v109, 5
  %v1139 = vsel %vm1027, %v1137, %v1138
  %v1140 = vrot.slane %v913, 5
  %v1141 = vrot.slane %v1140, 4
  %v1142 = vrot.slane %v63, 5
  %v1143 = vsel %vm1027, %v1141, %v1142
  %v1144 = vrot.slane %v1142, 4
  %v1145 = vrot.slane %v110, 5
  %v1146 = vsel %vm1027, %v1144, %v1145
  %v1147 = vrot.slane %v914, 5
  %v1148 = vrot.slane %v1147, 4
  %v1149 = vrot.slane %v65, 5
  %v1150 = vsel %vm1027, %v1148, %v1149
  %v1151 = vrot.slane %v1149, 4
  %v1152 = vrot.slane %v111, 5
  %v1153 = vsel %vm1027, %v1151, %v1152
  %v1154 = vrot.slane %v915, 5
  %v1155 = vrot.slane %v1154, 4
  %v1156 = vrot.slane %v67, 5
  %v1157 = vsel %vm1027, %v1155, %v1156
  %v1158 = vrot.slane %v1156, 4
  %v1159 = vrot.slane %v112, 5
  %v1160 = vsel %vm1027, %v1158, %v1159
  %v1161 = vrot.slane %v916, 5
  %v1162 = vrot.slane %v1161, 4
  %v1163 = vrot.slane %v69, 5
  %v1164 = vsel %vm1027, %v1162, %v1163
  %v1165 = vrot.slane %v1163, 4
  %v1166 = vrot.slane %v113, 5
  %v1167 = vsel %vm1027, %v1165, %v1166
  %v1168 = vrot.slane %v917, 5
  %v1169 = vrot.slane %v1168, 4
  %v1170 = vrot.slane %v71, 5
  %v1171 = vsel %vm1027, %v1169, %v1170
  %v1172 = vrot.slane %v1170, 4
  %v1173 = vrot.slane %v114, 5
  %v1174 = vsel %vm1027, %v1172, %v1173
  %v1175 = vrot.slane %v918, 5
  %v1176 = vrot.slane %v1175, 4
  %v1177 = vrot.slane %v73, 5
  %v1178 = vsel %vm1027, %v1176, %v1177
  %v1179 = vrot.slane %v1177, 4
  %v1180 = vrot.slane %v115, 5
  %v1181 = vsel %vm1027, %v1179, %v1180
  %v1182 = vrot.slane %v919, 5
  %v1183 = vrot.slane %v1182, 4
  %v1184 = vrot.slane %v75, 5
  %v1185 = vsel %vm1027, %v1183, %v1184
  %v1186 = vrot.slane %v1184, 4
  %v1187 = vrot.slane %v116, 5
  %v1188 = vsel %vm1027, %v1186, %v1187
  %v1189 = vrot.slane %v920, 5
  %v1190 = vrot.slane %v1189, 4
  %v1191 = vrot.slane %v77, 5
  %v1192 = vsel %vm1027, %v1190, %v1191
  %v1193 = vrot.slane %v1191, 4
  %v1194 = vrot.slane %v117, 5
  %v1195 = vsel %vm1027, %v1193, %v1194
  %v1196 = vrot.slane %v921, 5
  %v1197 = vrot.slane %v1196, 4
  %v1198 = vrot.slane %v79, 5
  %v1199 = vsel %vm1027, %v1197, %v1198
  %v1200 = vrot.slane %v1198, 4
  %v1201 = vrot.slane %v118, 5
  %v1202 = vsel %vm1027, %v1200, %v1201
  %v1203 = vrot.slane %v922, 5
  %v1204 = vrot.slane %v1203, 4
  %v1205 = vrot.slane %v81, 5
  %v1206 = vsel %vm1027, %v1204, %v1205
  %v1207 = vrot.slane %v1205, 4
  %v1208 = vrot.slane %v119, 5
  %v1209 = vsel %vm1027, %v1207, %v1208
  %v1210 = vrot.slane %v923, 5
  %v1211 = vrot.slane %v1210, 4
  %v1212 = vrot.slane %v83, 5
  %v1213 = vsel %vm1027, %v1211, %v1212
  %v1214 = vrot.slane %v1212, 4
  %v1215 = vrot.slane %v120, 5
  %v1216 = vsel %vm1027, %v1214, %v1215
  %v1217 = vrot.slane %v924, 5
  %v1218 = vrot.slane %v1217, 4
  %v1219 = vrot.slane %v85, 5
  %v1220 = vsel %vm1027, %v1218, %v1219
  %v1221 = vrot.slane %v1219, 4
  %v1222 = vrot.slane %v121, 5
  %v1223 = vsel %vm1027, %v1221, %v1222
  %v1224 = vrot.slane %v925, 5
  %v1225 = vrot.slane %v1224, 4
  %v1226 = vrot.slane %v87, 5
  %v1227 = vsel %vm1027, %v1225, %v1226
  %v1228 = vrot.slane %v1226, 4
  %v1229 = vrot.slane %v122, 5
  %v1230 = vsel %vm1027, %v1228, %v1229
  %v1231 = vrot.slane %v926, 5
  %v1232 = vrot.slane %v1231, 4
  %v1233 = vrot.slane %v89, 5
  %v1234 = vsel %vm1027, %v1232, %v1233
  %v1235 = vrot.slane %v1233, 4
  %v1236 = vrot.slane %v123, 5
  %v1237 = vsel %vm1027, %v1235, %v1236
  %v1238 = vrot.slane %v927, 5
  %v1239 = vrot.slane %v1238, 4
  %v1240 = vrot.slane %v91, 5
  %v1241 = vsel %vm1027, %v1239, %v1240
  %v1242 = vrot.slane %v1240, 4
  %v1243 = vrot.slane %v124, 5
  %v1244 = vsel %vm1027, %v1242, %v1243
  %v1245 = vrot.slane %v928, 5
  %v1246 = vrot.slane %v1245, 4
  %v1247 = vrot.slane %v93, 5
  %v1248 = vsel %vm1027, %v1246, %v1247
  %v1249 = vrot.slane %v1247, 4
  %v1250 = vrot.slane %v125, 5
  %v1251 = vsel %vm1027, %v1249, %v1250
  %s1252 = scalar_lea.vmem %s0, 12
  %v1253 = vld [vmem:[%s1252] sm:$0xf]
  %v1254 = vld [vmem:[%s1252 + $0x4] sm:$0xf]
  %v1255 = vld [vmem:[%s1252 + $0xc] sm:$0xf]
  %v1256 = vld [vmem:[%s1252 + $0x10] sm:$0xf]
  %v1257 = vld [vmem:[%s1252 + $0x18] sm:$0xf]
  %v1258 = vld [vmem:[%s1252 + $0x1c] sm:$0xf]
  %v1259 = vld [vmem:[%s1252 + $0x24] sm:$0xf]
  %v1260 = vld [vmem:[%s1252 + $0x28] sm:$0xf]
  %v1261 = vld [vmem:[%s1252 + $0x30] sm:$0xf]
  %v1262 = vld [vmem:[%s1252 + $0x34] sm:$0xf]
  %v1263 = vld [vmem:[%s1252 + $0x3c] sm:$0xf]
  %v1264 = vld [vmem:[%s1252 + $0x40] sm:$0xf]
  %v1265 = vld [vmem:[%s1252 + $0x48] sm:$0xf]
  %v1266 = vld [vmem:[%s1252 + $0x4c] sm:$0xf]
  %v1267 = vld [vmem:[%s1252 + $0x54] sm:$0xf]
  %v1268 = vld [vmem:[%s1252 + $0x58] sm:$0xf]
  %v1269 = vld [vmem:[%s1252 + $0x60] sm:$0xf]
  %v1270 = vld [vmem:[%s1252 + $0x64] sm:$0xf]
  %v1271 = vld [vmem:[%s1252 + $0x6c] sm:$0xf]
  %v1272 = vld [vmem:[%s1252 + $0x70] sm:$0xf]
  %v1273 = vld [vmem:[%s1252 + $0x78] sm:$0xf]
  %v1274 = vld [vmem:[%s1252 + $0x7c] sm:$0xf]
  %v1275 = vld [vmem:[%s1252 + $0x84] sm:$0xf]
  %v1276 = vld [vmem:[%s1252 + $0x88] sm:$0xf]
  %v1277 = vld [vmem:[%s1252 + $0x90] sm:$0xf]
  %v1278 = vld [vmem:[%s1252 + $0x94] sm:$0xf]
  %v1279 = vld [vmem:[%s1252 + $0x9c] sm:$0xf]
  %v1280 = vld [vmem:[%s1252 + $0xa0] sm:$0xf]
  %v1281 = vld [vmem:[%s1252 + $0xa8] sm:$0xf]
  %v1282 = vld [vmem:[%s1252 + $0xac] sm:$0xf]
  %v1283 = vld [vmem:[%s1252 + $0xb4] sm:$0xf]
  %v1284 = vld [vmem:[%s1252 + $0xb8] sm:$0xf]
  %v1285 = vld [vmem:[%s1252 + $0xd8] sm:$0xf]
  %v1286 = vld [vmem:[%s1252 + $0xdc] sm:$0xf]
  %v1287 = vld [vmem:[%s1252 + $0xe4] sm:$0xf]
  %v1288 = vld [vmem:[%s1252 + $0xe8] sm:$0xf]
  %v1289 = vld [vmem:[%s1252 + $0xf0] sm:$0xf]
  %v1290 = vld [vmem:[%s1252 + $0xf4] sm:$0xf]
  %v1291 = vld [vmem:[%s1252 + $0xfc] sm:$0xf]
  %v1292 = vld [vmem:[%s1252 + $0x100] sm:$0xf]
  %v1293 = vld [vmem:[%s1252 + $0x108] sm:$0xf]
  %v1294 = vld [vmem:[%s1252 + $0x10c] sm:$0xf]
  %v1295 = vld [vmem:[%s1252 + $0x114] sm:$0xf]
  %v1296 = vld [vmem:[%s1252 + $0x118] sm:$0xf]
  %v1297 = vld [vmem:[%s1252 + $0x120] sm:$0xf]
  %v1298 = vld [vmem:[%s1252 + $0x124] sm:$0xf]
  %v1299 = vld [vmem:[%s1252 + $0x12c] sm:$0xf]
  %v1300 = vld [vmem:[%s1252 + $0x130] sm:$0xf]
  %v1301 = vld [vmem:[%s1252 + $0x138] sm:$0xf]
  %v1302 = vld [vmem:[%s1252 + $0x13c] sm:$0xf]
  %v1303 = vld [vmem:[%s1252 + $0x144] sm:$0xf]
  %v1304 = vld [vmem:[%s1252 + $0x148] sm:$0xf]
  %v1305 = vld [vmem:[%s1252 + $0x150] sm:$0xf]
  %v1306 = vld [vmem:[%s1252 + $0x154] sm:$0xf]
  %v1307 = vld [vmem:[%s1252 + $0x15c] sm:$0xf]
  %v1308 = vld [vmem:[%s1252 + $0x160] sm:$0xf]
  %v1309 = vld [vmem:[%s1252 + $0x168] sm:$0xf]
  %v1310 = vld [vmem:[%s1252 + $0x16c] sm:$0xf]
  %v1311 = vld [vmem:[%s1252 + $0x174] sm:$0xf]
  %v1312 = vld [vmem:[%s1252 + $0x178] sm:$0xf]
  %v1313 = vld [vmem:[%s1252 + $0x180] sm:$0xf]
  %v1314 = vld [vmem:[%s1252 + $0x184] sm:$0xf]
  %v1315 = vld [vmem:[%s1252 + $0x18c] sm:$0xf]
  %v1316 = vld [vmem:[%s1252 + $0x190] sm:$0xf]
  %v1317 = vld [vmem:[%s1252 + $0x8] sm:$0x1]
  %v1318 = vld [vmem:[%s1252 + $0x14] sm:$0x1]
  %v1319 = vld [vmem:[%s1252 + $0x20] sm:$0x1]
  %v1320 = vld [vmem:[%s1252 + $0x2c] sm:$0x1]
  %v1321 = vld [vmem:[%s1252 + $0x38] sm:$0x1]
  %v1322 = vld [vmem:[%s1252 + $0x44] sm:$0x1]
  %v1323 = vld [vmem:[%s1252 + $0x50] sm:$0x1]
  %v1324 = vld [vmem:[%s1252 + $0x5c] sm:$0x1]
  %v1325 = vld [vmem:[%s1252 + $0x68] sm:$0x1]
  %v1326 = vld [vmem:[%s1252 + $0x74] sm:$0x1]
  %v1327 = vld [vmem:[%s1252 + $0x80] sm:$0x1]
  %v1328 = vld [vmem:[%s1252 + $0x8c] sm:$0x1]
  %v1329 = vld [vmem:[%s1252 + $0x98] sm:$0x1]
  %v1330 = vld [vmem:[%s1252 + $0xa4] sm:$0x1]
  %v1331 = vld [vmem:[%s1252 + $0xb0] sm:$0x1]
  %v1332 = vld [vmem:[%s1252 + $0xbc] sm:$0x1]
  %v1333 = vld [vmem:[%s1252 + $0xe0] sm:$0x1]
  %v1334 = vld [vmem:[%s1252 + $0xec] sm:$0x1]
  %v1335 = vld [vmem:[%s1252 + $0xf8] sm:$0x1]
  %v1336 = vld [vmem:[%s1252 + $0x104] sm:$0x1]
  %v1337 = vld [vmem:[%s1252 + $0x110] sm:$0x1]
  %v1338 = vld [vmem:[%s1252 + $0x11c] sm:$0x1]
  %v1339 = vld [vmem:[%s1252 + $0x128] sm:$0x1]
  %v1340 = vld [vmem:[%s1252 + $0x134] sm:$0x1]
  %v1341 = vld [vmem:[%s1252 + $0x140] sm:$0x1]
  %v1342 = vld [vmem:[%s1252 + $0x14c] sm:$0x1]
  %v1343 = vld [vmem:[%s1252 + $0x158] sm:$0x1]
  %v1344 = vld [vmem:[%s1252 + $0x164] sm:$0x1]
  %v1345 = vld [vmem:[%s1252 + $0x170] sm:$0x1]
  %v1346 = vld [vmem:[%s1252 + $0x17c] sm:$0x1]
  %v1347 = vld [vmem:[%s1252 + $0x188] sm:$0x1]
  %v1348 = vld [vmem:[%s1252 + $0x194] sm:$0x1]
  %v1350 = vshrl.u32 %v1253, 16
  %v1352 = vrot.slane %v1350, 4
  %v1353 = vshll.u32 %v1253, 16
  %v1355 = vrot.slane %v1353, 5
  %v1356 = vor.u32 %v1352, %v1355
  %v1357 = vrot.slane %v1356, 4
  %v1359 = vshll.u32 %v1254, 16
  %v1361 = vrot.slane %v1359, 5
  %v1362 = vsel %vm128, %v1357, %v1361
  %v1363 = vshrl.u32 %v1254, 16
  %v1365 = vrot.slane %v1363, 4
  %v1366 = vor.u32 %v1365, %v1361
  %v1367 = vrot.slane %v1366, 4
  %v1369 = vshll.u32 %v1317, 16
  %v1371 = vrot.slane %v1369, 5
  %v1372 = vsel %vm128, %v1367, %v1371
  %v1374 = vshrl.u32 %v1255, 16
  %v1376 = vrot.slane %v1374, 4
  %v1377 = vshll.u32 %v1255, 16
  %v1379 = vrot.slane %v1377, 5
  %v1380 = vor.u32 %v1376, %v1379
  %v1381 = vrot.slane %v1380, 4
  %v1383 = vshll.u32 %v1256, 16
  %v1385 = vrot.slane %v1383, 5
  %v1386 = vsel %vm128, %v1381, %v1385
  %v1387 = vshrl.u32 %v1256, 16
  %v1389 = vrot.slane %v1387, 4
  %v1390 = vor.u32 %v1389, %v1385
  %v1391 = vrot.slane %v1390, 4
  %v1393 = vshll.u32 %v1318, 16
  %v1395 = vrot.slane %v1393, 5
  %v1396 = vsel %vm128, %v1391, %v1395
  %v1398 = vshrl.u32 %v1257, 16
  %v1400 = vrot.slane %v1398, 4
  %v1401 = vshll.u32 %v1257, 16
  %v1403 = vrot.slane %v1401, 5
  %v1404 = vor.u32 %v1400, %v1403
  %v1405 = vrot.slane %v1404, 4
  %v1407 = vshll.u32 %v1258, 16
  %v1409 = vrot.slane %v1407, 5
  %v1410 = vsel %vm128, %v1405, %v1409
  %v1411 = vshrl.u32 %v1258, 16
  %v1413 = vrot.slane %v1411, 4
  %v1414 = vor.u32 %v1413, %v1409
  %v1415 = vrot.slane %v1414, 4
  %v1417 = vshll.u32 %v1319, 16
  %v1419 = vrot.slane %v1417, 5
  %v1420 = vsel %vm128, %v1415, %v1419
  %v1422 = vshrl.u32 %v1259, 16
  %v1424 = vrot.slane %v1422, 4
  %v1425 = vshll.u32 %v1259, 16
  %v1427 = vrot.slane %v1425, 5
  %v1428 = vor.u32 %v1424, %v1427
  %v1429 = vrot.slane %v1428, 4
  %v1431 = vshll.u32 %v1260, 16
  %v1433 = vrot.slane %v1431, 5
  %v1434 = vsel %vm128, %v1429, %v1433
  %v1435 = vshrl.u32 %v1260, 16
  %v1437 = vrot.slane %v1435, 4
  %v1438 = vor.u32 %v1437, %v1433
  %v1439 = vrot.slane %v1438, 4
  %v1441 = vshll.u32 %v1320, 16
  %v1443 = vrot.slane %v1441, 5
  %v1444 = vsel %vm128, %v1439, %v1443
  %v1446 = vshrl.u32 %v1261, 16
  %v1448 = vrot.slane %v1446, 4
  %v1449 = vshll.u32 %v1261, 16
  %v1451 = vrot.slane %v1449, 5
  %v1452 = vor.u32 %v1448, %v1451
  %v1453 = vrot.slane %v1452, 4
  %v1455 = vshll.u32 %v1262, 16
  %v1457 = vrot.slane %v1455, 5
  %v1458 = vsel %vm128, %v1453, %v1457
  %v1459 = vshrl.u32 %v1262, 16
  %v1461 = vrot.slane %v1459, 4
  %v1462 = vor.u32 %v1461, %v1457
  %v1463 = vrot.slane %v1462, 4
  %v1465 = vshll.u32 %v1321, 16
  %v1467 = vrot.slane %v1465, 5
  %v1468 = vsel %vm128, %v1463, %v1467
  %v1470 = vshrl.u32 %v1263, 16
  %v1472 = vrot.slane %v1470, 4
  %v1473 = vshll.u32 %v1263, 16
  %v1475 = vrot.slane %v1473, 5
  %v1476 = vor.u32 %v1472, %v1475
  %v1477 = vrot.slane %v1476, 4
  %v1479 = vshll.u32 %v1264, 16
  %v1481 = vrot.slane %v1479, 5
  %v1482 = vsel %vm128, %v1477, %v1481
  %v1483 = vshrl.u32 %v1264, 16
  %v1485 = vrot.slane %v1483, 4
  %v1486 = vor.u32 %v1485, %v1481
  %v1487 = vrot.slane %v1486, 4
  %v1489 = vshll.u32 %v1322, 16
  %v1491 = vrot.slane %v1489, 5
  %v1492 = vsel %vm128, %v1487, %v1491
  %v1494 = vshrl.u32 %v1265, 16
  %v1496 = vrot.slane %v1494, 4
  %v1497 = vshll.u32 %v1265, 16
  %v1499 = vrot.slane %v1497, 5
  %v1500 = vor.u32 %v1496, %v1499
  %v1501 = vrot.slane %v1500, 4
  %v1503 = vshll.u32 %v1266, 16
  %v1505 = vrot.slane %v1503, 5
  %v1506 = vsel %vm128, %v1501, %v1505
  %v1507 = vshrl.u32 %v1266, 16
  %v1509 = vrot.slane %v1507, 4
  %v1510 = vor.u32 %v1509, %v1505
  %v1511 = vrot.slane %v1510, 4
  %v1513 = vshll.u32 %v1323, 16
  %v1515 = vrot.slane %v1513, 5
  %v1516 = vsel %vm128, %v1511, %v1515
  %v1518 = vshrl.u32 %v1267, 16
  %v1520 = vrot.slane %v1518, 4
  %v1521 = vshll.u32 %v1267, 16
  %v1523 = vrot.slane %v1521, 5
  %v1524 = vor.u32 %v1520, %v1523
  %v1525 = vrot.slane %v1524, 4
  %v1527 = vshll.u32 %v1268, 16
  %v1529 = vrot.slane %v1527, 5
  %v1530 = vsel %vm128, %v1525, %v1529
  %v1531 = vshrl.u32 %v1268, 16
  %v1533 = vrot.slane %v1531, 4
  %v1534 = vor.u32 %v1533, %v1529
  %v1535 = vrot.slane %v1534, 4
  %v1537 = vshll.u32 %v1324, 16
  %v1539 = vrot.slane %v1537, 5
  %v1540 = vsel %vm128, %v1535, %v1539
  %v1542 = vshrl.u32 %v1269, 16
  %v1544 = vrot.slane %v1542, 4
  %v1545 = vshll.u32 %v1269, 16
  %v1547 = vrot.slane %v1545, 5
  %v1548 = vor.u32 %v1544, %v1547
  %v1549 = vrot.slane %v1548, 4
  %v1551 = vshll.u32 %v1270, 16
  %v1553 = vrot.slane %v1551, 5
  %v1554 = vsel %vm128, %v1549, %v1553
  %v1555 = vshrl.u32 %v1270, 16
  %v1557 = vrot.slane %v1555, 4
  %v1558 = vor.u32 %v1557, %v1553
  %v1559 = vrot.slane %v1558, 4
  %v1561 = vshll.u32 %v1325, 16
  %v1563 = vrot.slane %v1561, 5
  %v1564 = vsel %vm128, %v1559, %v1563
  %v1566 = vshrl.u32 %v1271, 16
  %v1568 = vrot.slane %v1566, 4
  %v1569 = vshll.u32 %v1271, 16
  %v1571 = vrot.slane %v1569, 5
  %v1572 = vor.u32 %v1568, %v1571
  %v1573 = vrot.slane %v1572, 4
  %v1575 = vshll.u32 %v1272, 16
  %v1577 = vrot.slane %v1575, 5
  %v1578 = vsel %vm128, %v1573, %v1577
  %v1579 = vshrl.u32 %v1272, 16
  %v1581 = vrot.slane %v1579, 4
  %v1582 = vor.u32 %v1581, %v1577
  %v1583 = vrot.slane %v1582, 4
  %v1585 = vshll.u32 %v1326, 16
  %v1587 = vrot.slane %v1585, 5
  %v1588 = vsel %vm128, %v1583, %v1587
  %v1590 = vshrl.u32 %v1273, 16
  %v1592 = vrot.slane %v1590, 4
  %v1593 = vshll.u32 %v1273, 16
  %v1595 = vrot.slane %v1593, 5
  %v1596 = vor.u32 %v1592, %v1595
  %v1597 = vrot.slane %v1596, 4
  %v1599 = vshll.u32 %v1274, 16
  %v1601 = vrot.slane %v1599, 5
  %v1602 = vsel %vm128, %v1597, %v1601
  %v1603 = vshrl.u32 %v1274, 16
  %v1605 = vrot.slane %v1603, 4
  %v1606 = vor.u32 %v1605, %v1601
  %v1607 = vrot.slane %v1606, 4
  %v1609 = vshll.u32 %v1327, 16
  %v1611 = vrot.slane %v1609, 5
  %v1612 = vsel %vm128, %v1607, %v1611
  %v1614 = vshrl.u32 %v1275, 16
  %v1616 = vrot.slane %v1614, 4
  %v1617 = vshll.u32 %v1275, 16
  %v1619 = vrot.slane %v1617, 5
  %v1620 = vor.u32 %v1616, %v1619
  %v1621 = vrot.slane %v1620, 4
  %v1623 = vshll.u32 %v1276, 16
  %v1625 = vrot.slane %v1623, 5
  %v1626 = vsel %vm128, %v1621, %v1625
  %v1627 = vshrl.u32 %v1276, 16
  %v1629 = vrot.slane %v1627, 4
  %v1630 = vor.u32 %v1629, %v1625
  %v1631 = vrot.slane %v1630, 4
  %v1633 = vshll.u32 %v1328, 16
  %v1635 = vrot.slane %v1633, 5
  %v1636 = vsel %vm128, %v1631, %v1635
  %v1638 = vshrl.u32 %v1277, 16
  %v1640 = vrot.slane %v1638, 4
  %v1641 = vshll.u32 %v1277, 16
  %v1643 = vrot.slane %v1641, 5
  %v1644 = vor.u32 %v1640, %v1643
  %v1645 = vrot.slane %v1644, 4
  %v1647 = vshll.u32 %v1278, 16
  %v1649 = vrot.slane %v1647, 5
  %v1650 = vsel %vm128, %v1645, %v1649
  %v1651 = vshrl.u32 %v1278, 16
  %v1653 = vrot.slane %v1651, 4
  %v1654 = vor.u32 %v1653, %v1649
  %v1655 = vrot.slane %v1654, 4
  %v1657 = vshll.u32 %v1329, 16
  %v1659 = vrot.slane %v1657, 5
  %v1660 = vsel %vm128, %v1655, %v1659
  %v1662 = vshrl.u32 %v1279, 16
  %v1664 = vrot.slane %v1662, 4
  %v1665 = vshll.u32 %v1279, 16
  %v1667 = vrot.slane %v1665, 5
  %v1668 = vor.u32 %v1664, %v1667
  %v1669 = vrot.slane %v1668, 4
  %v1671 = vshll.u32 %v1280, 16
  %v1673 = vrot.slane %v1671, 5
  %v1674 = vsel %vm128, %v1669, %v1673
  %v1675 = vshrl.u32 %v1280, 16
  %v1677 = vrot.slane %v1675, 4
  %v1678 = vor.u32 %v1677, %v1673
  %v1679 = vrot.slane %v1678, 4
  %v1681 = vshll.u32 %v1330, 16
  %v1683 = vrot.slane %v1681, 5
  %v1684 = vsel %vm128, %v1679, %v1683
  %v1686 = vshrl.u32 %v1281, 16
  %v1688 = vrot.slane %v1686, 4
  %v1689 = vshll.u32 %v1281, 16
  %v1691 = vrot.slane %v1689, 5
  %v1692 = vor.u32 %v1688, %v1691
  %v1693 = vrot.slane %v1692, 4
  %v1695 = vshll.u32 %v1282, 16
  %v1697 = vrot.slane %v1695, 5
  %v1698 = vsel %vm128, %v1693, %v1697
  %v1699 = vshrl.u32 %v1282, 16
  %v1701 = vrot.slane %v1699, 4
  %v1702 = vor.u32 %v1701, %v1697
  %v1703 = vrot.slane %v1702, 4
  %v1705 = vshll.u32 %v1331, 16
  %v1707 = vrot.slane %v1705, 5
  %v1708 = vsel %vm128, %v1703, %v1707
  %v1710 = vshrl.u32 %v1283, 16
  %v1712 = vrot.slane %v1710, 4
  %v1713 = vshll.u32 %v1283, 16
  %v1715 = vrot.slane %v1713, 5
  %v1716 = vor.u32 %v1712, %v1715
  %v1717 = vrot.slane %v1716, 4
  %v1719 = vshll.u32 %v1284, 16
  %v1721 = vrot.slane %v1719, 5
  %v1722 = vsel %vm128, %v1717, %v1721
  %v1723 = vshrl.u32 %v1284, 16
  %v1725 = vrot.slane %v1723, 4
  %v1726 = vor.u32 %v1725, %v1721
  %v1727 = vrot.slane %v1726, 4
  %v1729 = vshll.u32 %v1332, 16
  %v1731 = vrot.slane %v1729, 5
  %v1732 = vsel %vm128, %v1727, %v1731
  %v1734 = vshrl.u32 %v1285, 16
  %v1736 = vrot.slane %v1734, 4
  %v1737 = vshll.u32 %v1285, 16
  %v1739 = vrot.slane %v1737, 5
  %v1740 = vor.u32 %v1736, %v1739
  %v1741 = vrot.slane %v1740, 4
  %v1743 = vshll.u32 %v1286, 16
  %v1745 = vrot.slane %v1743, 5
  %v1746 = vsel %vm128, %v1741, %v1745
  %v1747 = vshrl.u32 %v1286, 16
  %v1749 = vrot.slane %v1747, 4
  %v1750 = vor.u32 %v1749, %v1745
  %v1751 = vrot.slane %v1750, 4
  %v1753 = vshll.u32 %v1333, 16
  %v1755 = vrot.slane %v1753, 5
  %v1756 = vsel %vm128, %v1751, %v1755
  %v1758 = vshrl.u32 %v1287, 16
  %v1760 = vrot.slane %v1758, 4
  %v1761 = vshll.u32 %v1287, 16
  %v1763 = vrot.slane %v1761, 5
  %v1764 = vor.u32 %v1760, %v1763
  %v1765 = vrot.slane %v1764, 4
  %v1767 = vshll.u32 %v1288, 16
  %v1769 = vrot.slane %v1767, 5
  %v1770 = vsel %vm128, %v1765, %v1769
  %v1771 = vshrl.u32 %v1288, 16
  %v1773 = vrot.slane %v1771, 4
  %v1774 = vor.u32 %v1773, %v1769
  %v1775 = vrot.slane %v1774, 4
  %v1777 = vshll.u32 %v1334, 16
  %v1779 = vrot.slane %v1777, 5
  %v1780 = vsel %vm128, %v1775, %v1779
  %v1782 = vshrl.u32 %v1289, 16
  %v1784 = vrot.slane %v1782, 4
  %v1785 = vshll.u32 %v1289, 16
  %v1787 = vrot.slane %v1785, 5
  %v1788 = vor.u32 %v1784, %v1787
  %v1789 = vrot.slane %v1788, 4
  %v1791 = vshll.u32 %v1290, 16
  %v1793 = vrot.slane %v1791, 5
  %v1794 = vsel %vm128, %v1789, %v1793
  %v1795 = vshrl.u32 %v1290, 16
  %v1797 = vrot.slane %v1795, 4
  %v1798 = vor.u32 %v1797, %v1793
  %v1799 = vrot.slane %v1798, 4
  %v1801 = vshll.u32 %v1335, 16
  %v1803 = vrot.slane %v1801, 5
  %v1804 = vsel %vm128, %v1799, %v1803
  %v1806 = vshrl.u32 %v1291, 16
  %v1808 = vrot.slane %v1806, 4
  %v1809 = vshll.u32 %v1291, 16
  %v1811 = vrot.slane %v1809, 5
  %v1812 = vor.u32 %v1808, %v1811
  %v1813 = vrot.slane %v1812, 4
  %v1815 = vshll.u32 %v1292, 16
  %v1817 = vrot.slane %v1815, 5
  %v1818 = vsel %vm128, %v1813, %v1817
  %v1819 = vshrl.u32 %v1292, 16
  %v1821 = vrot.slane %v1819, 4
  %v1822 = vor.u32 %v1821, %v1817
  %v1823 = vrot.slane %v1822, 4
  %v1825 = vshll.u32 %v1336, 16
  %v1827 = vrot.slane %v1825, 5
  %v1828 = vsel %vm128, %v1823, %v1827
  %v1830 = vshrl.u32 %v1293, 16
  %v1832 = vrot.slane %v1830, 4
  %v1833 = vshll.u32 %v1293, 16
  %v1835 = vrot.slane %v1833, 5
  %v1836 = vor.u32 %v1832, %v1835
  %v1837 = vrot.slane %v1836, 4
  %v1839 = vshll.u32 %v1294, 16
  %v1841 = vrot.slane %v1839, 5
  %v1842 = vsel %vm128, %v1837, %v1841
  %v1843 = vshrl.u32 %v1294, 16
  %v1845 = vrot.slane %v1843, 4
  %v1846 = vor.u32 %v1845, %v1841
  %v1847 = vrot.slane %v1846, 4
  %v1849 = vshll.u32 %v1337, 16
  %v1851 = vrot.slane %v1849, 5
  %v1852 = vsel %vm128, %v1847, %v1851
  %v1854 = vshrl.u32 %v1295, 16
  %v1856 = vrot.slane %v1854, 4
  %v1857 = vshll.u32 %v1295, 16
  %v1859 = vrot.slane %v1857, 5
  %v1860 = vor.u32 %v1856, %v1859
  %v1861 = vrot.slane %v1860, 4
  %v1863 = vshll.u32 %v1296, 16
  %v1865 = vrot.slane %v1863, 5
  %v1866 = vsel %vm128, %v1861, %v1865
  %v1867 = vshrl.u32 %v1296, 16
  %v1869 = vrot.slane %v1867, 4
  %v1870 = vor.u32 %v1869, %v1865
  %v1871 = vrot.slane %v1870, 4
  %v1873 = vshll.u32 %v1338, 16
  %v1875 = vrot.slane %v1873, 5
  %v1876 = vsel %vm128, %v1871, %v1875
  %v1878 = vshrl.u32 %v1297, 16
  %v1880 = vrot.slane %v1878, 4
  %v1881 = vshll.u32 %v1297, 16
  %v1883 = vrot.slane %v1881, 5
  %v1884 = vor.u32 %v1880, %v1883
  %v1885 = vrot.slane %v1884, 4
  %v1887 = vshll.u32 %v1298, 16
  %v1889 = vrot.slane %v1887, 5
  %v1890 = vsel %vm128, %v1885, %v1889
  %v1891 = vshrl.u32 %v1298, 16
  %v1893 = vrot.slane %v1891, 4
  %v1894 = vor.u32 %v1893, %v1889
  %v1895 = vrot.slane %v1894, 4
  %v1897 = vshll.u32 %v1339, 16
  %v1899 = vrot.slane %v1897, 5
  %v1900 = vsel %vm128, %v1895, %v1899
  %v1902 = vshrl.u32 %v1299, 16
  %v1904 = vrot.slane %v1902, 4
  %v1905 = vshll.u32 %v1299, 16
  %v1907 = vrot.slane %v1905, 5
  %v1908 = vor.u32 %v1904, %v1907
  %v1909 = vrot.slane %v1908, 4
  %v1911 = vshll.u32 %v1300, 16
  %v1913 = vrot.slane %v1911, 5
  %v1914 = vsel %vm128, %v1909, %v1913
  %v1915 = vshrl.u32 %v1300, 16
  %v1917 = vrot.slane %v1915, 4
  %v1918 = vor.u32 %v1917, %v1913
  %v1919 = vrot.slane %v1918, 4
  %v1921 = vshll.u32 %v1340, 16
  %v1923 = vrot.slane %v1921, 5
  %v1924 = vsel %vm128, %v1919, %v1923
  %v1926 = vshrl.u32 %v1301, 16
  %v1928 = vrot.slane %v1926, 4
  %v1929 = vshll.u32 %v1301, 16
  %v1931 = vrot.slane %v1929, 5
  %v1932 = vor.u32 %v1928, %v1931
  %v1933 = vrot.slane %v1932, 4
  %v1935 = vshll.u32 %v1302, 16
  %v1937 = vrot.slane %v1935, 5
  %v1938 = vsel %vm128, %v1933, %v1937
  %v1939 = vshrl.u32 %v1302, 16
  %v1941 = vrot.slane %v1939, 4
  %v1942 = vor.u32 %v1941, %v1937
  %v1943 = vrot.slane %v1942, 4
  %v1945 = vshll.u32 %v1341, 16
  %v1947 = vrot.slane %v1945, 5
  %v1948 = vsel %vm128, %v1943, %v1947
  %v1950 = vshrl.u32 %v1303, 16
  %v1952 = vrot.slane %v1950, 4
  %v1953 = vshll.u32 %v1303, 16
  %v1955 = vrot.slane %v1953, 5
  %v1956 = vor.u32 %v1952, %v1955
  %v1957 = vrot.slane %v1956, 4
  %v1959 = vshll.u32 %v1304, 16
  %v1961 = vrot.slane %v1959, 5
  %v1962 = vsel %vm128, %v1957, %v1961
  %v1963 = vshrl.u32 %v1304, 16
  %v1965 = vrot.slane %v1963, 4
  %v1966 = vor.u32 %v1965, %v1961
  %v1967 = vrot.slane %v1966, 4
  %v1969 = vshll.u32 %v1342, 16
  %v1971 = vrot.slane %v1969, 5
  %v1972 = vsel %vm128, %v1967, %v1971
  %v1974 = vshrl.u32 %v1305, 16
  %v1976 = vrot.slane %v1974, 4
  %v1977 = vshll.u32 %v1305, 16
  %v1979 = vrot.slane %v1977, 5
  %v1980 = vor.u32 %v1976, %v1979
  %v1981 = vrot.slane %v1980, 4
  %v1983 = vshll.u32 %v1306, 16
  %v1985 = vrot.slane %v1983, 5
  %v1986 = vsel %vm128, %v1981, %v1985
  %v1987 = vshrl.u32 %v1306, 16
  %v1989 = vrot.slane %v1987, 4
  %v1990 = vor.u32 %v1989, %v1985
  %v1991 = vrot.slane %v1990, 4
  %v1993 = vshll.u32 %v1343, 16
  %v1995 = vrot.slane %v1993, 5
  %v1996 = vsel %vm128, %v1991, %v1995
  %v1998 = vshrl.u32 %v1307, 16
  %v2000 = vrot.slane %v1998, 4
  %v2001 = vshll.u32 %v1307, 16
  %v2003 = vrot.slane %v2001, 5
  %v2004 = vor.u32 %v2000, %v2003
  %v2005 = vrot.slane %v2004, 4
  %v2007 = vshll.u32 %v1308, 16
  %v2009 = vrot.slane %v2007, 5
  %v2010 = vsel %vm128, %v2005, %v2009
  %v2011 = vshrl.u32 %v1308, 16
  %v2013 = vrot.slane %v2011, 4
  %v2014 = vor.u32 %v2013, %v2009
  %v2015 = vrot.slane %v2014, 4
  %v2017 = vshll.u32 %v1344, 16
  %v2019 = vrot.slane %v2017, 5
  %v2020 = vsel %vm128, %v2015, %v2019
  %v2022 = vshrl.u32 %v1309, 16
  %v2024 = vrot.slane %v2022, 4
  %v2025 = vshll.u32 %v1309, 16
  %v2027 = vrot.slane %v2025, 5
  %v2028 = vor.u32 %v2024, %v2027
  %v2029 = vrot.slane %v2028, 4
  %v2031 = vshll.u32 %v1310, 16
  %v2033 = vrot.slane %v2031, 5
  %v2034 = vsel %vm128, %v2029, %v2033
  %v2035 = vshrl.u32 %v1310, 16
  %v2037 = vrot.slane %v2035, 4
  %v2038 = vor.u32 %v2037, %v2033
  %v2039 = vrot.slane %v2038, 4
  %v2041 = vshll.u32 %v1345, 16
  %v2043 = vrot.slane %v2041, 5
  %v2044 = vsel %vm128, %v2039, %v2043
  %v2046 = vshrl.u32 %v1311, 16
  %v2048 = vrot.slane %v2046, 4
  %v2049 = vshll.u32 %v1311, 16
  %v2051 = vrot.slane %v2049, 5
  %v2052 = vor.u32 %v2048, %v2051
  %v2053 = vrot.slane %v2052, 4
  %v2055 = vshll.u32 %v1312, 16
  %v2057 = vrot.slane %v2055, 5
  %v2058 = vsel %vm128, %v2053, %v2057
  %v2059 = vshrl.u32 %v1312, 16
  %v2061 = vrot.slane %v2059, 4
  %v2062 = vor.u32 %v2061, %v2057
  %v2063 = vrot.slane %v2062, 4
  %v2065 = vshll.u32 %v1346, 16
  %v2067 = vrot.slane %v2065, 5
  %v2068 = vsel %vm128, %v2063, %v2067
  %v2070 = vshrl.u32 %v1313, 16
  %v2072 = vrot.slane %v2070, 4
  %v2073 = vshll.u32 %v1313, 16
  %v2075 = vrot.slane %v2073, 5
  %v2076 = vor.u32 %v2072, %v2075
  %v2077 = vrot.slane %v2076, 4
  %v2079 = vshll.u32 %v1314, 16
  %v2081 = vrot.slane %v2079, 5
  %v2082 = vsel %vm128, %v2077, %v2081
  %v2083 = vshrl.u32 %v1314, 16
  %v2085 = vrot.slane %v2083, 4
  %v2086 = vor.u32 %v2085, %v2081
  %v2087 = vrot.slane %v2086, 4
  %v2089 = vshll.u32 %v1347, 16
  %v2091 = vrot.slane %v2089, 5
  %v2092 = vsel %vm128, %v2087, %v2091
  %v2094 = vshrl.u32 %v1315, 16
  %v2096 = vrot.slane %v2094, 4
  %v2097 = vshll.u32 %v1315, 16
  %v2099 = vrot.slane %v2097, 5
  %v2100 = vor.u32 %v2096, %v2099
  %v2101 = vrot.slane %v2100, 4
  %v2103 = vshll.u32 %v1316, 16
  %v2105 = vrot.slane %v2103, 5
  %v2106 = vsel %vm128, %v2101, %v2105
  %v2107 = vshrl.u32 %v1316, 16
  %v2109 = vrot.slane %v2107, 4
  %v2110 = vor.u32 %v2109, %v2105
  %v2111 = vrot.slane %v2110, 4
  %v2113 = vshll.u32 %v1348, 16
  %v2115 = vrot.slane %v2113, 5
  %v2116 = vsel %vm128, %v2111, %v2115
  %v2117 = vld [vmem:[%s1252] sm:$0xe]
  %v2118 = vld [vmem:[%s1252 + $0xc] sm:$0xe]
  %v2119 = vld [vmem:[%s1252 + $0x18] sm:$0xe]
  %v2120 = vld [vmem:[%s1252 + $0x24] sm:$0xe]
  %v2121 = vld [vmem:[%s1252 + $0x30] sm:$0xe]
  %v2122 = vld [vmem:[%s1252 + $0x3c] sm:$0xe]
  %v2123 = vld [vmem:[%s1252 + $0x48] sm:$0xe]
  %v2124 = vld [vmem:[%s1252 + $0x54] sm:$0xe]
  %v2125 = vld [vmem:[%s1252 + $0x60] sm:$0xe]
  %v2126 = vld [vmem:[%s1252 + $0x6c] sm:$0xe]
  %v2127 = vld [vmem:[%s1252 + $0x78] sm:$0xe]
  %v2128 = vld [vmem:[%s1252 + $0x84] sm:$0xe]
  %v2129 = vld [vmem:[%s1252 + $0x90] sm:$0xe]
  %v2130 = vld [vmem:[%s1252 + $0x9c] sm:$0xe]
  %v2131 = vld [vmem:[%s1252 + $0xa8] sm:$0xe]
  %v2132 = vld [vmem:[%s1252 + $0xb4] sm:$0xe]
  %v2133 = vld [vmem:[%s1252 + $0xd8] sm:$0xe]
  %v2134 = vld [vmem:[%s1252 + $0xe4] sm:$0xe]
  %v2135 = vld [vmem:[%s1252 + $0xf0] sm:$0xe]
  %v2136 = vld [vmem:[%s1252 + $0xfc] sm:$0xe]
  %v2137 = vld [vmem:[%s1252 + $0x108] sm:$0xe]
  %v2138 = vld [vmem:[%s1252 + $0x114] sm:$0xe]
  %v2139 = vld [vmem:[%s1252 + $0x120] sm:$0xe]
  %v2140 = vld [vmem:[%s1252 + $0x12c] sm:$0xe]
  %v2141 = vld [vmem:[%s1252 + $0x138] sm:$0xe]
  %v2142 = vld [vmem:[%s1252 + $0x144] sm:$0xe]
  %v2143 = vld [vmem:[%s1252 + $0x150] sm:$0xe]
  %v2144 = vld [vmem:[%s1252 + $0x15c] sm:$0xe]
  %v2145 = vld [vmem:[%s1252 + $0x168] sm:$0xe]
  %v2146 = vld [vmem:[%s1252 + $0x174] sm:$0xe]
  %v2147 = vld [vmem:[%s1252 + $0x180] sm:$0xe]
  %v2148 = vld [vmem:[%s1252 + $0x18c] sm:$0xe]
  %v2245 = vrot.slane %v2117, 5
  %v2246 = vrot.slane %v2245, 4
  %v2247 = vrot.slane %v1254, 5
  %v2248 = vsel %vm1027, %v2246, %v2247
  %v2249 = vrot.slane %v2247, 4
  %v2250 = vrot.slane %v1317, 5
  %v2251 = vsel %vm1027, %v2249, %v2250
  %v2252 = vrot.slane %v2118, 5
  %v2253 = vrot.slane %v2252, 4
  %v2254 = vrot.slane %v1256, 5
  %v2255 = vsel %vm1027, %v2253, %v2254
  %v2256 = vrot.slane %v2254, 4
  %v2257 = vrot.slane %v1318, 5
  %v2258 = vsel %vm1027, %v2256, %v2257
  %v2259 = vrot.slane %v2119, 5
  %v2260 = vrot.slane %v2259, 4
  %v2261 = vrot.slane %v1258, 5
  %v2262 = vsel %vm1027, %v2260, %v2261
  %v2263 = vrot.slane %v2261, 4
  %v2264 = vrot.slane %v1319, 5
  %v2265 = vsel %vm1027, %v2263, %v2264
  %v2266 = vrot.slane %v2120, 5
  %v2267 = vrot.slane %v2266, 4
  %v2268 = vrot.slane %v1260, 5
  %v2269 = vsel %vm1027, %v2267, %v2268
  %v2270 = vrot.slane %v2268, 4
  %v2271 = vrot.slane %v1320, 5
  %v2272 = vsel %vm1027, %v2270, %v2271
  %v2273 = vrot.slane %v2121, 5
  %v2274 = vrot.slane %v2273, 4
  %v2275 = vrot.slane %v1262, 5
  %v2276 = vsel %vm1027, %v2274, %v2275
  %v2277 = vrot.slane %v2275, 4
  %v2278 = vrot.slane %v1321, 5
  %v2279 = vsel %vm1027, %v2277, %v2278
  %v2280 = vrot.slane %v2122, 5
  %v2281 = vrot.slane %v2280, 4
  %v2282 = vrot.slane %v1264, 5
  %v2283 = vsel %vm1027, %v2281, %v2282
  %v2284 = vrot.slane %v2282, 4
  %v2285 = vrot.slane %v1322, 5
  %v2286 = vsel %vm1027, %v2284, %v2285
  %v2287 = vrot.slane %v2123, 5
  %v2288 = vrot.slane %v2287, 4
  %v2289 = vrot.slane %v1266, 5
  %v2290 = vsel %vm1027, %v2288, %v2289
  %v2291 = vrot.slane %v2289, 4
  %v2292 = vrot.slane %v1323, 5
  %v2293 = vsel %vm1027, %v2291, %v2292
  %v2294 = vrot.slane %v2124, 5
  %v2295 = vrot.slane %v2294, 4
  %v2296 = vrot.slane %v1268, 5
  %v2297 = vsel %vm1027, %v2295, %v2296
  %v2298 = vrot.slane %v2296, 4
  %v2299 = vrot.slane %v1324, 5
  %v2300 = vsel %vm1027, %v2298, %v2299
  %v2301 = vrot.slane %v2125, 5
  %v2302 = vrot.slane %v2301, 4
  %v2303 = vrot.slane %v1270, 5
  %v2304 = vsel %vm1027, %v2302, %v2303
  %v2305 = vrot.slane %v2303, 4
  %v2306 = vrot.slane %v1325, 5
  %v2307 = vsel %vm1027, %v2305, %v2306
  %v2308 = vrot.slane %v2126, 5
  %v2309 = vrot.slane %v2308, 4
  %v2310 = vrot.slane %v1272, 5
  %v2311 = vsel %vm1027, %v2309, %v2310
  %v2312 = vrot.slane %v2310, 4
  %v2313 = vrot.slane %v1326, 5
  %v2314 = vsel %vm1027, %v2312, %v2313
  %v2315 = vrot.slane %v2127, 5
  %v2316 = vrot.slane %v2315, 4
  %v2317 = vrot.slane %v1274, 5
  %v2318 = vsel %vm1027, %v2316, %v2317
  %v2319 = vrot.slane %v2317, 4
  %v2320 = vrot.slane %v1327, 5
  %v2321 = vsel %vm1027, %v2319, %v2320
  %v2322 = vrot.slane %v2128, 5
  %v2323 = vrot.slane %v2322, 4
  %v2324 = vrot.slane %v1276, 5
  %v2325 = vsel %vm1027, %v2323, %v2324
  %v2326 = vrot.slane %v2324, 4
  %v2327 = vrot.slane %v1328, 5
  %v2328 = vsel %vm1027, %v2326, %v2327
  %v2329 = vrot.slane %v2129, 5
  %v2330 = vrot.slane %v2329, 4
  %v2331 = vrot.slane %v1278, 5
  %v2332 = vsel %vm1027, %v2330, %v2331
  %v2333 = vrot.slane %v2331, 4
  %v2334 = vrot.slane %v1329, 5
  %v2335 = vsel %vm1027, %v2333, %v2334
  %v2336 = vrot.slane %v2130, 5
  %v2337 = vrot.slane %v2336, 4
  %v2338 = vrot.slane %v1280, 5
  %v2339 = vsel %vm1027, %v2337, %v2338
  %v2340 = vrot.slane %v2338, 4
  %v2341 = vrot.slane %v1330, 5
  %v2342 = vsel %vm1027, %v2340, %v2341
  %v2343 = vrot.slane %v2131, 5
  %v2344 = vrot.slane %v2343, 4
  %v2345 = vrot.slane %v1282, 5
  %v2346 = vsel %vm1027, %v2344, %v2345
  %v2347 = vrot.slane %v2345, 4
  %v2348 = vrot.slane %v1331, 5
  %v2349 = vsel %vm1027, %v2347, %v2348
  %v2350 = vrot.slane %v2132, 5
  %v2351 = vrot.slane %v2350, 4
  %v2352 = vrot.slane %v1284, 5
  %v2353 = vsel %vm1027, %v2351, %v2352
  %v2354 = vrot.slane %v2352, 4
  %v2355 = vrot.slane %v1332, 5
  %v2356 = vsel %vm1027, %v2354, %v2355
  %v2357 = vrot.slane %v2133, 5
  %v2358 = vrot.slane %v2357, 4
  %v2359 = vrot.slane %v1286, 5
  %v2360 = vsel %vm1027, %v2358, %v2359
  %v2361 = vrot.slane %v2359, 4
  %v2362 = vrot.slane %v1333, 5
  %v2363 = vsel %vm1027, %v2361, %v2362
  %v2364 = vrot.slane %v2134, 5
  %v2365 = vrot.slane %v2364, 4
  %v2366 = vrot.slane %v1288, 5
  %v2367 = vsel %vm1027, %v2365, %v2366
  %v2368 = vrot.slane %v2366, 4
  %v2369 = vrot.slane %v1334, 5
  %v2370 = vsel %vm1027, %v2368, %v2369
  %v2371 = vrot.slane %v2135, 5
  %v2372 = vrot.slane %v2371, 4
  %v2373 = vrot.slane %v1290, 5
  %v2374 = vsel %vm1027, %v2372, %v2373
  %v2375 = vrot.slane %v2373, 4
  %v2376 = vrot.slane %v1335, 5
  %v2377 = vsel %vm1027, %v2375, %v2376
  %v2378 = vrot.slane %v2136, 5
  %v2379 = vrot.slane %v2378, 4
  %v2380 = vrot.slane %v1292, 5
  %v2381 = vsel %vm1027, %v2379, %v2380
  %v2382 = vrot.slane %v2380, 4
  %v2383 = vrot.slane %v1336, 5
  %v2384 = vsel %vm1027, %v2382, %v2383
  %v2385 = vrot.slane %v2137, 5
  %v2386 = vrot.slane %v2385, 4
  %v2387 = vrot.slane %v1294, 5
  %v2388 = vsel %vm1027, %v2386, %v2387
  %v2389 = vrot.slane %v2387, 4
  %v2390 = vrot.slane %v1337, 5
  %v2391 = vsel %vm1027, %v2389, %v2390
  %v2392 = vrot.slane %v2138, 5
  %v2393 = vrot.slane %v2392, 4
  %v2394 = vrot.slane %v1296, 5
  %v2395 = vsel %vm1027, %v2393, %v2394
  %v2396 = vrot.slane %v2394, 4
  %v2397 = vrot.slane %v1338, 5
  %v2398 = vsel %vm1027, %v2396, %v2397
  %v2399 = vrot.slane %v2139, 5
  %v2400 = vrot.slane %v2399, 4
  %v2401 = vrot.slane %v1298, 5
  %v2402 = vsel %vm1027, %v2400, %v2401
  %v2403 = vrot.slane %v2401, 4
  %v2404 = vrot.slane %v1339, 5
  %v2405 = vsel %vm1027, %v2403, %v2404
  %v2406 = vrot.slane %v2140, 5
  %v2407 = vrot.slane %v2406, 4
  %v2408 = vrot.slane %v1300, 5
  %v2409 = vsel %vm1027, %v2407, %v2408
  %v2410 = vrot.slane %v2408, 4
  %v2411 = vrot.slane %v1340, 5
  %v2412 = vsel %vm1027, %v2410, %v2411
  %v2413 = vrot.slane %v2141, 5
  %v2414 = vrot.slane %v2413, 4
  %v2415 = vrot.slane %v1302, 5
  %v2416 = vsel %vm1027, %v2414, %v2415
  %v2417 = vrot.slane %v2415, 4
  %v2418 = vrot.slane %v1341, 5
  %v2419 = vsel %vm1027, %v2417, %v2418
  %v2420 = vrot.slane %v2142, 5
  %v2421 = vrot.slane %v2420, 4
  %v2422 = vrot.slane %v1304, 5
  %v2423 = vsel %vm1027, %v2421, %v2422
  %v2424 = vrot.slane %v2422, 4
  %v2425 = vrot.slane %v1342, 5
  %v2426 = vsel %vm1027, %v2424, %v2425
  %v2427 = vrot.slane %v2143, 5
  %v2428 = vrot.slane %v2427, 4
  %v2429 = vrot.slane %v1306, 5
  %v2430 = vsel %vm1027, %v2428, %v2429
  %v2431 = vrot.slane %v2429, 4
  %v2432 = vrot.slane %v1343, 5
  %v2433 = vsel %vm1027, %v2431, %v2432
  %v2434 = vrot.slane %v2144, 5
  %v2435 = vrot.slane %v2434, 4
  %v2436 = vrot.slane %v1308, 5
  %v2437 = vsel %vm1027, %v2435, %v2436
  %v2438 = vrot.slane %v2436, 4
  %v2439 = vrot.slane %v1344, 5
  %v2440 = vsel %vm1027, %v2438, %v2439
  %v2441 = vrot.slane %v2145, 5
  %v2442 = vrot.slane %v2441, 4
  %v2443 = vrot.slane %v1310, 5
  %v2444 = vsel %vm1027, %v2442, %v2443
  %v2445 = vrot.slane %v2443, 4
  %v2446 = vrot.slane %v1345, 5
  %v2447 = vsel %vm1027, %v2445, %v2446
  %v2448 = vrot.slane %v2146, 5
  %v2449 = vrot.slane %v2448, 4
  %v2450 = vrot.slane %v1312, 5
  %v2451 = vsel %vm1027, %v2449, %v2450
  %v2452 = vrot.slane %v2450, 4
  %v2453 = vrot.slane %v1346, 5
  %v2454 = vsel %vm1027, %v2452, %v2453
  %v2455 = vrot.slane %v2147, 5
  %v2456 = vrot.slane %v2455, 4
  %v2457 = vrot.slane %v1314, 5
  %v2458 = vsel %vm1027, %v2456, %v2457
  %v2459 = vrot.slane %v2457, 4
  %v2460 = vrot.slane %v1347, 5
  %v2461 = vsel %vm1027, %v2459, %v2460
  %v2462 = vrot.slane %v2148, 5
  %v2463 = vrot.slane %v2462, 4
  %v2464 = vrot.slane %v1316, 5
  %v2465 = vsel %vm1027, %v2463, %v2464
  %v2466 = vrot.slane %v2464, 4
  %v2467 = vrot.slane %v1348, 5
  %v2468 = vsel %vm1027, %v2466, %v2467
  %s2469 = scalar_lea.vmem %s0, 24
  %v2470 = vld [vmem:[%s2469] sm:$0xf]
  %v2471 = vld [vmem:[%s2469 + $0x4] sm:$0xf]
  %v2472 = vld [vmem:[%s2469 + $0xc] sm:$0xf]
  %v2473 = vld [vmem:[%s2469 + $0x10] sm:$0xf]
  %v2474 = vld [vmem:[%s2469 + $0x18] sm:$0xf]
  %v2475 = vld [vmem:[%s2469 + $0x1c] sm:$0xf]
  %v2476 = vld [vmem:[%s2469 + $0x24] sm:$0xf]
  %v2477 = vld [vmem:[%s2469 + $0x28] sm:$0xf]
  %v2478 = vld [vmem:[%s2469 + $0x30] sm:$0xf]
  %v2479 = vld [vmem:[%s2469 + $0x34] sm:$0xf]
  %v2480 = vld [vmem:[%s2469 + $0x3c] sm:$0xf]
  %v2481 = vld [vmem:[%s2469 + $0x40] sm:$0xf]
  %v2482 = vld [vmem:[%s2469 + $0x48] sm:$0xf]
  %v2483 = vld [vmem:[%s2469 + $0x4c] sm:$0xf]
  %v2484 = vld [vmem:[%s2469 + $0x54] sm:$0xf]
  %v2485 = vld [vmem:[%s2469 + $0x58] sm:$0xf]
  %v2486 = vld [vmem:[%s2469 + $0x60] sm:$0xf]
  %v2487 = vld [vmem:[%s2469 + $0x64] sm:$0xf]
  %v2488 = vld [vmem:[%s2469 + $0x6c] sm:$0xf]
  %v2489 = vld [vmem:[%s2469 + $0x70] sm:$0xf]
  %v2490 = vld [vmem:[%s2469 + $0x78] sm:$0xf]
  %v2491 = vld [vmem:[%s2469 + $0x7c] sm:$0xf]
  %v2492 = vld [vmem:[%s2469 + $0x84] sm:$0xf]
  %v2493 = vld [vmem:[%s2469 + $0x88] sm:$0xf]
  %v2494 = vld [vmem:[%s2469 + $0x90] sm:$0xf]
  %v2495 = vld [vmem:[%s2469 + $0x94] sm:$0xf]
  %v2496 = vld [vmem:[%s2469 + $0x9c] sm:$0xf]
  %v2497 = vld [vmem:[%s2469 + $0xa0] sm:$0xf]
  %v2498 = vld [vmem:[%s2469 + $0xa8] sm:$0xf]
  %v2499 = vld [vmem:[%s2469 + $0xac] sm:$0xf]
  %v2500 = vld [vmem:[%s2469 + $0xb4] sm:$0xf]
  %v2501 = vld [vmem:[%s2469 + $0xb8] sm:$0xf]
  %v2502 = vld [vmem:[%s2469 + $0xd8] sm:$0xf]
  %v2503 = vld [vmem:[%s2469 + $0xdc] sm:$0xf]
  %v2504 = vld [vmem:[%s2469 + $0xe4] sm:$0xf]
  %v2505 = vld [vmem:[%s2469 + $0xe8] sm:$0xf]
  %v2506 = vld [vmem:[%s2469 + $0xf0] sm:$0xf]
  %v2507 = vld [vmem:[%s2469 + $0xf4] sm:$0xf]
  %v2508 = vld [vmem:[%s2469 + $0xfc] sm:$0xf]
  %v2509 = vld [vmem:[%s2469 + $0x100] sm:$0xf]
  %v2510 = vld [vmem:[%s2469 + $0x108] sm:$0xf]
  %v2511 = vld [vmem:[%s2469 + $0x10c] sm:$0xf]
  %v2512 = vld [vmem:[%s2469 + $0x114] sm:$0xf]
  %v2513 = vld [vmem:[%s2469 + $0x118] sm:$0xf]
  %v2514 = vld [vmem:[%s2469 + $0x120] sm:$0xf]
  %v2515 = vld [vmem:[%s2469 + $0x124] sm:$0xf]
  %v2516 = vld [vmem:[%s2469 + $0x12c] sm:$0xf]
  %v2517 = vld [vmem:[%s2469 + $0x130] sm:$0xf]
  %v2518 = vld [vmem:[%s2469 + $0x138] sm:$0xf]
  %v2519 = vld [vmem:[%s2469 + $0x13c] sm:$0xf]
  %v2520 = vld [vmem:[%s2469 + $0x144] sm:$0xf]
  %v2521 = vld [vmem:[%s2469 + $0x148] sm:$0xf]
  %v2522 = vld [vmem:[%s2469 + $0x150] sm:$0xf]
  %v2523 = vld [vmem:[%s2469 + $0x154] sm:$0xf]
  %v2524 = vld [vmem:[%s2469 + $0x15c] sm:$0xf]
  %v2525 = vld [vmem:[%s2469 + $0x160] sm:$0xf]
  %v2526 = vld [vmem:[%s2469 + $0x168] sm:$0xf]
  %v2527 = vld [vmem:[%s2469 + $0x16c] sm:$0xf]
  %v2528 = vld [vmem:[%s2469 + $0x174] sm:$0xf]
  %v2529 = vld [vmem:[%s2469 + $0x178] sm:$0xf]
  %v2530 = vld [vmem:[%s2469 + $0x180] sm:$0xf]
  %v2531 = vld [vmem:[%s2469 + $0x184] sm:$0xf]
  %v2532 = vld [vmem:[%s2469 + $0x18c] sm:$0xf]
  %v2533 = vld [vmem:[%s2469 + $0x190] sm:$0xf]
  %v2534 = vld [vmem:[%s2469 + $0x8] sm:$0x1]
  %v2535 = vld [vmem:[%s2469 + $0x14] sm:$0x1]
  %v2536 = vld [vmem:[%s2469 + $0x20] sm:$0x1]
  %v2537 = vld [vmem:[%s2469 + $0x2c] sm:$0x1]
  %v2538 = vld [vmem:[%s2469 + $0x38] sm:$0x1]
  %v2539 = vld [vmem:[%s2469 + $0x44] sm:$0x1]
  %v2540 = vld [vmem:[%s2469 + $0x50] sm:$0x1]
  %v2541 = vld [vmem:[%s2469 + $0x5c] sm:$0x1]
  %v2542 = vld [vmem:[%s2469 + $0x68] sm:$0x1]
  %v2543 = vld [vmem:[%s2469 + $0x74] sm:$0x1]
  %v2544 = vld [vmem:[%s2469 + $0x80] sm:$0x1]
  %v2545 = vld [vmem:[%s2469 + $0x8c] sm:$0x1]
  %v2546 = vld [vmem:[%s2469 + $0x98] sm:$0x1]
  %v2547 = vld [vmem:[%s2469 + $0xa4] sm:$0x1]
  %v2548 = vld [vmem:[%s2469 + $0xb0] sm:$0x1]
  %v2549 = vld [vmem:[%s2469 + $0xbc] sm:$0x1]
  %v2550 = vld [vmem:[%s2469 + $0xe0] sm:$0x1]
  %v2551 = vld [vmem:[%s2469 + $0xec] sm:$0x1]
  %v2552 = vld [vmem:[%s2469 + $0xf8] sm:$0x1]
  %v2553 = vld [vmem:[%s2469 + $0x104] sm:$0x1]
  %v2554 = vld [vmem:[%s2469 + $0x110] sm:$0x1]
  %v2555 = vld [vmem:[%s2469 + $0x11c] sm:$0x1]
  %v2556 = vld [vmem:[%s2469 + $0x128] sm:$0x1]
  %v2557 = vld [vmem:[%s2469 + $0x134] sm:$0x1]
  %v2558 = vld [vmem:[%s2469 + $0x140] sm:$0x1]
  %v2559 = vld [vmem:[%s2469 + $0x14c] sm:$0x1]
  %v2560 = vld [vmem:[%s2469 + $0x158] sm:$0x1]
  %v2561 = vld [vmem:[%s2469 + $0x164] sm:$0x1]
  %v2562 = vld [vmem:[%s2469 + $0x170] sm:$0x1]
  %v2563 = vld [vmem:[%s2469 + $0x17c] sm:$0x1]
  %v2564 = vld [vmem:[%s2469 + $0x188] sm:$0x1]
  %v2565 = vld [vmem:[%s2469 + $0x194] sm:$0x1]
  %v2567 = vshrl.u32 %v2470, 16
  %v2569 = vrot.slane %v2567, 4
  %v2570 = vshll.u32 %v2470, 16
  %v2572 = vrot.slane %v2570, 5
  %v2573 = vor.u32 %v2569, %v2572
  %v2574 = vrot.slane %v2573, 4
  %v2576 = vshll.u32 %v2471, 16
  %v2578 = vrot.slane %v2576, 5
  %v2579 = vsel %vm128, %v2574, %v2578
  %v2580 = vshrl.u32 %v2471, 16
  %v2582 = vrot.slane %v2580, 4
  %v2583 = vor.u32 %v2582, %v2578
  %v2584 = vrot.slane %v2583, 4
  %v2586 = vshll.u32 %v2534, 16
  %v2588 = vrot.slane %v2586, 5
  %v2589 = vsel %vm128, %v2584, %v2588
  %v2591 = vshrl.u32 %v2472, 16
  %v2593 = vrot.slane %v2591, 4
  %v2594 = vshll.u32 %v2472, 16
  %v2596 = vrot.slane %v2594, 5
  %v2597 = vor.u32 %v2593, %v2596
  %v2598 = vrot.slane %v2597, 4
  %v2600 = vshll.u32 %v2473, 16
  %v2602 = vrot.slane %v2600, 5
  %v2603 = vsel %vm128, %v2598, %v2602
  %v2604 = vshrl.u32 %v2473, 16
  %v2606 = vrot.slane %v2604, 4
  %v2607 = vor.u32 %v2606, %v2602
  %v2608 = vrot.slane %v2607, 4
  %v2610 = vshll.u32 %v2535, 16
  %v2612 = vrot.slane %v2610, 5
  %v2613 = vsel %vm128, %v2608, %v2612
  %v2615 = vshrl.u32 %v2474, 16
  %v2617 = vrot.slane %v2615, 4
  %v2618 = vshll.u32 %v2474, 16
  %v2620 = vrot.slane %v2618, 5
  %v2621 = vor.u32 %v2617, %v2620
  %v2622 = vrot.slane %v2621, 4
  %v2624 = vshll.u32 %v2475, 16
  %v2626 = vrot.slane %v2624, 5
  %v2627 = vsel %vm128, %v2622, %v2626
  %v2628 = vshrl.u32 %v2475, 16
  %v2630 = vrot.slane %v2628, 4
  %v2631 = vor.u32 %v2630, %v2626
  %v2632 = vrot.slane %v2631, 4
  %v2634 = vshll.u32 %v2536, 16
  %v2636 = vrot.slane %v2634, 5
  %v2637 = vsel %vm128, %v2632, %v2636
  %v2639 = vshrl.u32 %v2476, 16
  %v2641 = vrot.slane %v2639, 4
  %v2642 = vshll.u32 %v2476, 16
  %v2644 = vrot.slane %v2642, 5
  %v2645 = vor.u32 %v2641, %v2644
  %v2646 = vrot.slane %v2645, 4
  %v2648 = vshll.u32 %v2477, 16
  %v2650 = vrot.slane %v2648, 5
  %v2651 = vsel %vm128, %v2646, %v2650
  %v2652 = vshrl.u32 %v2477, 16
  %v2654 = vrot.slane %v2652, 4
  %v2655 = vor.u32 %v2654, %v2650
  %v2656 = vrot.slane %v2655, 4
  %v2658 = vshll.u32 %v2537, 16
  %v2660 = vrot.slane %v2658, 5
  %v2661 = vsel %vm128, %v2656, %v2660
  %v2663 = vshrl.u32 %v2478, 16
  %v2665 = vrot.slane %v2663, 4
  %v2666 = vshll.u32 %v2478, 16
  %v2668 = vrot.slane %v2666, 5
  %v2669 = vor.u32 %v2665, %v2668
  %v2670 = vrot.slane %v2669, 4
  %v2672 = vshll.u32 %v2479, 16
  %v2674 = vrot.slane %v2672, 5
  %v2675 = vsel %vm128, %v2670, %v2674
  %v2676 = vshrl.u32 %v2479, 16
  %v2678 = vrot.slane %v2676, 4
  %v2679 = vor.u32 %v2678, %v2674
  %v2680 = vrot.slane %v2679, 4
  %v2682 = vshll.u32 %v2538, 16
  %v2684 = vrot.slane %v2682, 5
  %v2685 = vsel %vm128, %v2680, %v2684
  %v2687 = vshrl.u32 %v2480, 16
  %v2689 = vrot.slane %v2687, 4
  %v2690 = vshll.u32 %v2480, 16
  %v2692 = vrot.slane %v2690, 5
  %v2693 = vor.u32 %v2689, %v2692
  %v2694 = vrot.slane %v2693, 4
  %v2696 = vshll.u32 %v2481, 16
  %v2698 = vrot.slane %v2696, 5
  %v2699 = vsel %vm128, %v2694, %v2698
  %v2700 = vshrl.u32 %v2481, 16
  %v2702 = vrot.slane %v2700, 4
  %v2703 = vor.u32 %v2702, %v2698
  %v2704 = vrot.slane %v2703, 4
  %v2706 = vshll.u32 %v2539, 16
  %v2708 = vrot.slane %v2706, 5
  %v2709 = vsel %vm128, %v2704, %v2708
  %v2711 = vshrl.u32 %v2482, 16
  %v2713 = vrot.slane %v2711, 4
  %v2714 = vshll.u32 %v2482, 16
  %v2716 = vrot.slane %v2714, 5
  %v2717 = vor.u32 %v2713, %v2716
  %v2718 = vrot.slane %v2717, 4
  %v2720 = vshll.u32 %v2483, 16
  %v2722 = vrot.slane %v2720, 5
  %v2723 = vsel %vm128, %v2718, %v2722
  %v2724 = vshrl.u32 %v2483, 16
  %v2726 = vrot.slane %v2724, 4
  %v2727 = vor.u32 %v2726, %v2722
  %v2728 = vrot.slane %v2727, 4
  %v2730 = vshll.u32 %v2540, 16
  %v2732 = vrot.slane %v2730, 5
  %v2733 = vsel %vm128, %v2728, %v2732
  %v2735 = vshrl.u32 %v2484, 16
  %v2737 = vrot.slane %v2735, 4
  %v2738 = vshll.u32 %v2484, 16
  %v2740 = vrot.slane %v2738, 5
  %v2741 = vor.u32 %v2737, %v2740
  %v2742 = vrot.slane %v2741, 4
  %v2744 = vshll.u32 %v2485, 16
  %v2746 = vrot.slane %v2744, 5
  %v2747 = vsel %vm128, %v2742, %v2746
  %v2748 = vshrl.u32 %v2485, 16
  %v2750 = vrot.slane %v2748, 4
  %v2751 = vor.u32 %v2750, %v2746
  %v2752 = vrot.slane %v2751, 4
  %v2754 = vshll.u32 %v2541, 16
  %v2756 = vrot.slane %v2754, 5
  %v2757 = vsel %vm128, %v2752, %v2756
  %v2759 = vshrl.u32 %v2486, 16
  %v2761 = vrot.slane %v2759, 4
  %v2762 = vshll.u32 %v2486, 16
  %v2764 = vrot.slane %v2762, 5
  %v2765 = vor.u32 %v2761, %v2764
  %v2766 = vrot.slane %v2765, 4
  %v2768 = vshll.u32 %v2487, 16
  %v2770 = vrot.slane %v2768, 5
  %v2771 = vsel %vm128, %v2766, %v2770
  %v2772 = vshrl.u32 %v2487, 16
  %v2774 = vrot.slane %v2772, 4
  %v2775 = vor.u32 %v2774, %v2770
  %v2776 = vrot.slane %v2775, 4
  %v2778 = vshll.u32 %v2542, 16
  %v2780 = vrot.slane %v2778, 5
  %v2781 = vsel %vm128, %v2776, %v2780
  %v2783 = vshrl.u32 %v2488, 16
  %v2785 = vrot.slane %v2783, 4
  %v2786 = vshll.u32 %v2488, 16
  %v2788 = vrot.slane %v2786, 5
  %v2789 = vor.u32 %v2785, %v2788
  %v2790 = vrot.slane %v2789, 4
  %v2792 = vshll.u32 %v2489, 16
  %v2794 = vrot.slane %v2792, 5
  %v2795 = vsel %vm128, %v2790, %v2794
  %v2796 = vshrl.u32 %v2489, 16
  %v2798 = vrot.slane %v2796, 4
  %v2799 = vor.u32 %v2798, %v2794
  %v2800 = vrot.slane %v2799, 4
  %v2802 = vshll.u32 %v2543, 16
  %v2804 = vrot.slane %v2802, 5
  %v2805 = vsel %vm128, %v2800, %v2804
  %v2807 = vshrl.u32 %v2490, 16
  %v2809 = vrot.slane %v2807, 4
  %v2810 = vshll.u32 %v2490, 16
  %v2812 = vrot.slane %v2810, 5
  %v2813 = vor.u32 %v2809, %v2812
  %v2814 = vrot.slane %v2813, 4
  %v2816 = vshll.u32 %v2491, 16
  %v2818 = vrot.slane %v2816, 5
  %v2819 = vsel %vm128, %v2814, %v2818
  %v2820 = vshrl.u32 %v2491, 16
  %v2822 = vrot.slane %v2820, 4
  %v2823 = vor.u32 %v2822, %v2818
  %v2824 = vrot.slane %v2823, 4
  %v2826 = vshll.u32 %v2544, 16
  %v2828 = vrot.slane %v2826, 5
  %v2829 = vsel %vm128, %v2824, %v2828
  %v2831 = vshrl.u32 %v2492, 16
  %v2833 = vrot.slane %v2831, 4
  %v2834 = vshll.u32 %v2492, 16
  %v2836 = vrot.slane %v2834, 5
  %v2837 = vor.u32 %v2833, %v2836
  %v2838 = vrot.slane %v2837, 4
  %v2840 = vshll.u32 %v2493, 16
  %v2842 = vrot.slane %v2840, 5
  %v2843 = vsel %vm128, %v2838, %v2842
  %v2844 = vshrl.u32 %v2493, 16
  %v2846 = vrot.slane %v2844, 4
  %v2847 = vor.u32 %v2846, %v2842
  %v2848 = vrot.slane %v2847, 4
  %v2850 = vshll.u32 %v2545, 16
  %v2852 = vrot.slane %v2850, 5
  %v2853 = vsel %vm128, %v2848, %v2852
  %v2855 = vshrl.u32 %v2494, 16
  %v2857 = vrot.slane %v2855, 4
  %v2858 = vshll.u32 %v2494, 16
  %v2860 = vrot.slane %v2858, 5
  %v2861 = vor.u32 %v2857, %v2860
  %v2862 = vrot.slane %v2861, 4
  %v2864 = vshll.u32 %v2495, 16
  %v2866 = vrot.slane %v2864, 5
  %v2867 = vsel %vm128, %v2862, %v2866
  %v2868 = vshrl.u32 %v2495, 16
  %v2870 = vrot.slane %v2868, 4
  %v2871 = vor.u32 %v2870, %v2866
  %v2872 = vrot.slane %v2871, 4
  %v2874 = vshll.u32 %v2546, 16
  %v2876 = vrot.slane %v2874, 5
  %v2877 = vsel %vm128, %v2872, %v2876
  %v2879 = vshrl.u32 %v2496, 16
  %v2881 = vrot.slane %v2879, 4
  %v2882 = vshll.u32 %v2496, 16
  %v2884 = vrot.slane %v2882, 5
  %v2885 = vor.u32 %v2881, %v2884
  %v2886 = vrot.slane %v2885, 4
  %v2888 = vshll.u32 %v2497, 16
  %v2890 = vrot.slane %v2888, 5
  %v2891 = vsel %vm128, %v2886, %v2890
  %v2892 = vshrl.u32 %v2497, 16
  %v2894 = vrot.slane %v2892, 4
  %v2895 = vor.u32 %v2894, %v2890
  %v2896 = vrot.slane %v2895, 4
  %v2898 = vshll.u32 %v2547, 16
  %v2900 = vrot.slane %v2898, 5
  %v2901 = vsel %vm128, %v2896, %v2900
  %v2903 = vshrl.u32 %v2498, 16
  %v2905 = vrot.slane %v2903, 4
  %v2906 = vshll.u32 %v2498, 16
  %v2908 = vrot.slane %v2906, 5
  %v2909 = vor.u32 %v2905, %v2908
  %v2910 = vrot.slane %v2909, 4
  %v2912 = vshll.u32 %v2499, 16
  %v2914 = vrot.slane %v2912, 5
  %v2915 = vsel %vm128, %v2910, %v2914
  %v2916 = vshrl.u32 %v2499, 16
  %v2918 = vrot.slane %v2916, 4
  %v2919 = vor.u32 %v2918, %v2914
  %v2920 = vrot.slane %v2919, 4
  %v2922 = vshll.u32 %v2548, 16
  %v2924 = vrot.slane %v2922, 5
  %v2925 = vsel %vm128, %v2920, %v2924
  %v2927 = vshrl.u32 %v2500, 16
  %v2929 = vrot.slane %v2927, 4
  %v2930 = vshll.u32 %v2500, 16
  %v2932 = vrot.slane %v2930, 5
  %v2933 = vor.u32 %v2929, %v2932
  %v2934 = vrot.slane %v2933, 4
  %v2936 = vshll.u32 %v2501, 16
  %v2938 = vrot.slane %v2936, 5
  %v2939 = vsel %vm128, %v2934, %v2938
  %v2940 = vshrl.u32 %v2501, 16
  %v2942 = vrot.slane %v2940, 4
  %v2943 = vor.u32 %v2942, %v2938
  %v2944 = vrot.slane %v2943, 4
  %v2946 = vshll.u32 %v2549, 16
  %v2948 = vrot.slane %v2946, 5
  %v2949 = vsel %vm128, %v2944, %v2948
  %v2951 = vshrl.u32 %v2502, 16
  %v2953 = vrot.slane %v2951, 4
  %v2954 = vshll.u32 %v2502, 16
  %v2956 = vrot.slane %v2954, 5
  %v2957 = vor.u32 %v2953, %v2956
  %v2958 = vrot.slane %v2957, 4
  %v2960 = vshll.u32 %v2503, 16
  %v2962 = vrot.slane %v2960, 5
  %v2963 = vsel %vm128, %v2958, %v2962
  %v2964 = vshrl.u32 %v2503, 16
  %v2966 = vrot.slane %v2964, 4
  %v2967 = vor.u32 %v2966, %v2962
  %v2968 = vrot.slane %v2967, 4
  %v2970 = vshll.u32 %v2550, 16
  %v2972 = vrot.slane %v2970, 5
  %v2973 = vsel %vm128, %v2968, %v2972
  %v2975 = vshrl.u32 %v2504, 16
  %v2977 = vrot.slane %v2975, 4
  %v2978 = vshll.u32 %v2504, 16
  %v2980 = vrot.slane %v2978, 5
  %v2981 = vor.u32 %v2977, %v2980
  %v2982 = vrot.slane %v2981, 4
  %v2984 = vshll.u32 %v2505, 16
  %v2986 = vrot.slane %v2984, 5
  %v2987 = vsel %vm128, %v2982, %v2986
  %v2988 = vshrl.u32 %v2505, 16
  %v2990 = vrot.slane %v2988, 4
  %v2991 = vor.u32 %v2990, %v2986
  %v2992 = vrot.slane %v2991, 4
  %v2994 = vshll.u32 %v2551, 16
  %v2996 = vrot.slane %v2994, 5
  %v2997 = vsel %vm128, %v2992, %v2996
  %v2999 = vshrl.u32 %v2506, 16
  %v3001 = vrot.slane %v2999, 4
  %v3002 = vshll.u32 %v2506, 16
  %v3004 = vrot.slane %v3002, 5
  %v3005 = vor.u32 %v3001, %v3004
  %v3006 = vrot.slane %v3005, 4
  %v3008 = vshll.u32 %v2507, 16
  %v3010 = vrot.slane %v3008, 5
  %v3011 = vsel %vm128, %v3006, %v3010
  %v3012 = vshrl.u32 %v2507, 16
  %v3014 = vrot.slane %v3012, 4
  %v3015 = vor.u32 %v3014, %v3010
  %v3016 = vrot.slane %v3015, 4
  %v3018 = vshll.u32 %v2552, 16
  %v3020 = vrot.slane %v3018, 5
  %v3021 = vsel %vm128, %v3016, %v3020
  %v3023 = vshrl.u32 %v2508, 16
  %v3025 = vrot.slane %v3023, 4
  %v3026 = vshll.u32 %v2508, 16
  %v3028 = vrot.slane %v3026, 5
  %v3029 = vor.u32 %v3025, %v3028
  %v3030 = vrot.slane %v3029, 4
  %v3032 = vshll.u32 %v2509, 16
  %v3034 = vrot.slane %v3032, 5
  %v3035 = vsel %vm128, %v3030, %v3034
  %v3036 = vshrl.u32 %v2509, 16
  %v3038 = vrot.slane %v3036, 4
  %v3039 = vor.u32 %v3038, %v3034
  %v3040 = vrot.slane %v3039, 4
  %v3042 = vshll.u32 %v2553, 16
  %v3044 = vrot.slane %v3042, 5
  %v3045 = vsel %vm128, %v3040, %v3044
  %v3047 = vshrl.u32 %v2510, 16
  %v3049 = vrot.slane %v3047, 4
  %v3050 = vshll.u32 %v2510, 16
  %v3052 = vrot.slane %v3050, 5
  %v3053 = vor.u32 %v3049, %v3052
  %v3054 = vrot.slane %v3053, 4
  %v3056 = vshll.u32 %v2511, 16
  %v3058 = vrot.slane %v3056, 5
  %v3059 = vsel %vm128, %v3054, %v3058
  %v3060 = vshrl.u32 %v2511, 16
  %v3062 = vrot.slane %v3060, 4
  %v3063 = vor.u32 %v3062, %v3058
  %v3064 = vrot.slane %v3063, 4
  %v3066 = vshll.u32 %v2554, 16
  %v3068 = vrot.slane %v3066, 5
  %v3069 = vsel %vm128, %v3064, %v3068
  %v3071 = vshrl.u32 %v2512, 16
  %v3073 = vrot.slane %v3071, 4
  %v3074 = vshll.u32 %v2512, 16
  %v3076 = vrot.slane %v3074, 5
  %v3077 = vor.u32 %v3073, %v3076
  %v3078 = vrot.slane %v3077, 4
  %v3080 = vshll.u32 %v2513, 16
  %v3082 = vrot.slane %v3080, 5
  %v3083 = vsel %vm128, %v3078, %v3082
  %v3084 = vshrl.u32 %v2513, 16
  %v3086 = vrot.slane %v3084, 4
  %v3087 = vor.u32 %v3086, %v3082
  %v3088 = vrot.slane %v3087, 4
  %v3090 = vshll.u32 %v2555, 16
  %v3092 = vrot.slane %v3090, 5
  %v3093 = vsel %vm128, %v3088, %v3092
  %v3095 = vshrl.u32 %v2514, 16
  %v3097 = vrot.slane %v3095, 4
  %v3098 = vshll.u32 %v2514, 16
  %v3100 = vrot.slane %v3098, 5
  %v3101 = vor.u32 %v3097, %v3100
  %v3102 = vrot.slane %v3101, 4
  %v3104 = vshll.u32 %v2515, 16
  %v3106 = vrot.slane %v3104, 5
  %v3107 = vsel %vm128, %v3102, %v3106
  %v3108 = vshrl.u32 %v2515, 16
  %v3110 = vrot.slane %v3108, 4
  %v3111 = vor.u32 %v3110, %v3106
  %v3112 = vrot.slane %v3111, 4
  %v3114 = vshll.u32 %v2556, 16
  %v3116 = vrot.slane %v3114, 5
  %v3117 = vsel %vm128, %v3112, %v3116
  %v3119 = vshrl.u32 %v2516, 16
  %v3121 = vrot.slane %v3119, 4
  %v3122 = vshll.u32 %v2516, 16
  %v3124 = vrot.slane %v3122, 5
  %v3125 = vor.u32 %v3121, %v3124
  %v3126 = vrot.slane %v3125, 4
  %v3128 = vshll.u32 %v2517, 16
  %v3130 = vrot.slane %v3128, 5
  %v3131 = vsel %vm128, %v3126, %v3130
  %v3132 = vshrl.u32 %v2517, 16
  %v3134 = vrot.slane %v3132, 4
  %v3135 = vor.u32 %v3134, %v3130
  %v3136 = vrot.slane %v3135, 4
  %v3138 = vshll.u32 %v2557, 16
  %v3140 = vrot.slane %v3138, 5
  %v3141 = vsel %vm128, %v3136, %v3140
  %v3143 = vshrl.u32 %v2518, 16
  %v3145 = vrot.slane %v3143, 4
  %v3146 = vshll.u32 %v2518, 16
  %v3148 = vrot.slane %v3146, 5
  %v3149 = vor.u32 %v3145, %v3148
  %v3150 = vrot.slane %v3149, 4
  %v3152 = vshll.u32 %v2519, 16
  %v3154 = vrot.slane %v3152, 5
  %v3155 = vsel %vm128, %v3150, %v3154
  %v3156 = vshrl.u32 %v2519, 16
  %v3158 = vrot.slane %v3156, 4
  %v3159 = vor.u32 %v3158, %v3154
  %v3160 = vrot.slane %v3159, 4
  %v3162 = vshll.u32 %v2558, 16
  %v3164 = vrot.slane %v3162, 5
  %v3165 = vsel %vm128, %v3160, %v3164
  %v3167 = vshrl.u32 %v2520, 16
  %v3169 = vrot.slane %v3167, 4
  %v3170 = vshll.u32 %v2520, 16
  %v3172 = vrot.slane %v3170, 5
  %v3173 = vor.u32 %v3169, %v3172
  %v3174 = vrot.slane %v3173, 4
  %v3176 = vshll.u32 %v2521, 16
  %v3178 = vrot.slane %v3176, 5
  %v3179 = vsel %vm128, %v3174, %v3178
  %v3180 = vshrl.u32 %v2521, 16
  %v3182 = vrot.slane %v3180, 4
  %v3183 = vor.u32 %v3182, %v3178
  %v3184 = vrot.slane %v3183, 4
  %v3186 = vshll.u32 %v2559, 16
  %v3188 = vrot.slane %v3186, 5
  %v3189 = vsel %vm128, %v3184, %v3188
  %v3191 = vshrl.u32 %v2522, 16
  %v3193 = vrot.slane %v3191, 4
  %v3194 = vshll.u32 %v2522, 16
  %v3196 = vrot.slane %v3194, 5
  %v3197 = vor.u32 %v3193, %v3196
  %v3198 = vrot.slane %v3197, 4
  %v3200 = vshll.u32 %v2523, 16
  %v3202 = vrot.slane %v3200, 5
  %v3203 = vsel %vm128, %v3198, %v3202
  %v3204 = vshrl.u32 %v2523, 16
  %v3206 = vrot.slane %v3204, 4
  %v3207 = vor.u32 %v3206, %v3202
  %v3208 = vrot.slane %v3207, 4
  %v3210 = vshll.u32 %v2560, 16
  %v3212 = vrot.slane %v3210, 5
  %v3213 = vsel %vm128, %v3208, %v3212
  %v3215 = vshrl.u32 %v2524, 16
  %v3217 = vrot.slane %v3215, 4
  %v3218 = vshll.u32 %v2524, 16
  %v3220 = vrot.slane %v3218, 5
  %v3221 = vor.u32 %v3217, %v3220
  %v3222 = vrot.slane %v3221, 4
  %v3224 = vshll.u32 %v2525, 16
  %v3226 = vrot.slane %v3224, 5
  %v3227 = vsel %vm128, %v3222, %v3226
  %v3228 = vshrl.u32 %v2525, 16
  %v3230 = vrot.slane %v3228, 4
  %v3231 = vor.u32 %v3230, %v3226
  %v3232 = vrot.slane %v3231, 4
  %v3234 = vshll.u32 %v2561, 16
  %v3236 = vrot.slane %v3234, 5
  %v3237 = vsel %vm128, %v3232, %v3236
  %v3239 = vshrl.u32 %v2526, 16
  %v3241 = vrot.slane %v3239, 4
  %v3242 = vshll.u32 %v2526, 16
  %v3244 = vrot.slane %v3242, 5
  %v3245 = vor.u32 %v3241, %v3244
  %v3246 = vrot.slane %v3245, 4
  %v3248 = vshll.u32 %v2527, 16
  %v3250 = vrot.slane %v3248, 5
  %v3251 = vsel %vm128, %v3246, %v3250
  %v3252 = vshrl.u32 %v2527, 16
  %v3254 = vrot.slane %v3252, 4
  %v3255 = vor.u32 %v3254, %v3250
  %v3256 = vrot.slane %v3255, 4
  %v3258 = vshll.u32 %v2562, 16
  %v3260 = vrot.slane %v3258, 5
  %v3261 = vsel %vm128, %v3256, %v3260
  %v3263 = vshrl.u32 %v2528, 16
  %v3265 = vrot.slane %v3263, 4
  %v3266 = vshll.u32 %v2528, 16
  %v3268 = vrot.slane %v3266, 5
  %v3269 = vor.u32 %v3265, %v3268
  %v3270 = vrot.slane %v3269, 4
  %v3272 = vshll.u32 %v2529, 16
  %v3274 = vrot.slane %v3272, 5
  %v3275 = vsel %vm128, %v3270, %v3274
  %v3276 = vshrl.u32 %v2529, 16
  %v3278 = vrot.slane %v3276, 4
  %v3279 = vor.u32 %v3278, %v3274
  %v3280 = vrot.slane %v3279, 4
  %v3282 = vshll.u32 %v2563, 16
  %v3284 = vrot.slane %v3282, 5
  %v3285 = vsel %vm128, %v3280, %v3284
  %v3287 = vshrl.u32 %v2530, 16
  %v3289 = vrot.slane %v3287, 4
  %v3290 = vshll.u32 %v2530, 16
  %v3292 = vrot.slane %v3290, 5
  %v3293 = vor.u32 %v3289, %v3292
  %v3294 = vrot.slane %v3293, 4
  %v3296 = vshll.u32 %v2531, 16
  %v3298 = vrot.slane %v3296, 5
  %v3299 = vsel %vm128, %v3294, %v3298
  %v3300 = vshrl.u32 %v2531, 16
  %v3302 = vrot.slane %v3300, 4
  %v3303 = vor.u32 %v3302, %v3298
  %v3304 = vrot.slane %v3303, 4
  %v3306 = vshll.u32 %v2564, 16
  %v3308 = vrot.slane %v3306, 5
  %v3309 = vsel %vm128, %v3304, %v3308
  %v3311 = vshrl.u32 %v2532, 16
  %v3313 = vrot.slane %v3311, 4
  %v3314 = vshll.u32 %v2532, 16
  %v3316 = vrot.slane %v3314, 5
  %v3317 = vor.u32 %v3313, %v3316
  %v3318 = vrot.slane %v3317, 4
  %v3320 = vshll.u32 %v2533, 16
  %v3322 = vrot.slane %v3320, 5
  %v3323 = vsel %vm128, %v3318, %v3322
  %v3324 = vshrl.u32 %v2533, 16
  %v3326 = vrot.slane %v3324, 4
  %v3327 = vor.u32 %v3326, %v3322
  %v3328 = vrot.slane %v3327, 4
  %v3330 = vshll.u32 %v2565, 16
  %v3332 = vrot.slane %v3330, 5
  %v3333 = vsel %vm128, %v3328, %v3332
  %v3334 = vld [vmem:[%s2469] sm:$0xe]
  %v3335 = vld [vmem:[%s2469 + $0xc] sm:$0xe]
  %v3336 = vld [vmem:[%s2469 + $0x18] sm:$0xe]
  %v3337 = vld [vmem:[%s2469 + $0x24] sm:$0xe]
  %v3338 = vld [vmem:[%s2469 + $0x30] sm:$0xe]
  %v3339 = vld [vmem:[%s2469 + $0x3c] sm:$0xe]
  %v3340 = vld [vmem:[%s2469 + $0x48] sm:$0xe]
  %v3341 = vld [vmem:[%s2469 + $0x54] sm:$0xe]
  %v3342 = vld [vmem:[%s2469 + $0x60] sm:$0xe]
  %v3343 = vld [vmem:[%s2469 + $0x6c] sm:$0xe]
  %v3344 = vld [vmem:[%s2469 + $0x78] sm:$0xe]
  %v3345 = vld [vmem:[%s2469 + $0x84] sm:$0xe]
  %v3346 = vld [vmem:[%s2469 + $0x90] sm:$0xe]
  %v3347 = vld [vmem:[%s2469 + $0x9c] sm:$0xe]
  %v3348 = vld [vmem:[%s2469 + $0xa8] sm:$0xe]
  %v3349 = vld [vmem:[%s2469 + $0xb4] sm:$0xe]
  %v3350 = vld [vmem:[%s2469 + $0xd8] sm:$0xe]
  %v3351 = vld [vmem:[%s2469 + $0xe4] sm:$0xe]
  %v3352 = vld [vmem:[%s2469 + $0xf0] sm:$0xe]
  %v3353 = vld [vmem:[%s2469 + $0xfc] sm:$0xe]
  %v3354 = vld [vmem:[%s2469 + $0x108] sm:$0xe]
  %v3355 = vld [vmem:[%s2469 + $0x114] sm:$0xe]
  %v3356 = vld [vmem:[%s2469 + $0x120] sm:$0xe]
  %v3357 = vld [vmem:[%s2469 + $0x12c] sm:$0xe]
  %v3358 = vld [vmem:[%s2469 + $0x138] sm:$0xe]
  %v3359 = vld [vmem:[%s2469 + $0x144] sm:$0xe]
  %v3360 = vld [vmem:[%s2469 + $0x150] sm:$0xe]
  %v3361 = vld [vmem:[%s2469 + $0x15c] sm:$0xe]
  %v3362 = vld [vmem:[%s2469 + $0x168] sm:$0xe]
  %v3363 = vld [vmem:[%s2469 + $0x174] sm:$0xe]
  %v3364 = vld [vmem:[%s2469 + $0x180] sm:$0xe]
  %v3365 = vld [vmem:[%s2469 + $0x18c] sm:$0xe]
  %v3462 = vrot.slane %v3334, 5
  %v3463 = vrot.slane %v3462, 4
  %v3464 = vrot.slane %v2471, 5
  %v3465 = vsel %vm1027, %v3463, %v3464
  %v3466 = vrot.slane %v3464, 4
  %v3467 = vrot.slane %v2534, 5
  %v3468 = vsel %vm1027, %v3466, %v3467
  %v3469 = vrot.slane %v3335, 5
  %v3470 = vrot.slane %v3469, 4
  %v3471 = vrot.slane %v2473, 5
  %v3472 = vsel %vm1027, %v3470, %v3471
  %v3473 = vrot.slane %v3471, 4
  %v3474 = vrot.slane %v2535, 5
  %v3475 = vsel %vm1027, %v3473, %v3474
  %v3476 = vrot.slane %v3336, 5
  %v3477 = vrot.slane %v3476, 4
  %v3478 = vrot.slane %v2475, 5
  %v3479 = vsel %vm1027, %v3477, %v3478
  %v3480 = vrot.slane %v3478, 4
  %v3481 = vrot.slane %v2536, 5
  %v3482 = vsel %vm1027, %v3480, %v3481
  %v3483 = vrot.slane %v3337, 5
  %v3484 = vrot.slane %v3483, 4
  %v3485 = vrot.slane %v2477, 5
  %v3486 = vsel %vm1027, %v3484, %v3485
  %v3487 = vrot.slane %v3485, 4
  %v3488 = vrot.slane %v2537, 5
  %v3489 = vsel %vm1027, %v3487, %v3488
  %v3490 = vrot.slane %v3338, 5
  %v3491 = vrot.slane %v3490, 4
  %v3492 = vrot.slane %v2479, 5
  %v3493 = vsel %vm1027, %v3491, %v3492
  %v3494 = vrot.slane %v3492, 4
  %v3495 = vrot.slane %v2538, 5
  %v3496 = vsel %vm1027, %v3494, %v3495
  %v3497 = vrot.slane %v3339, 5
  %v3498 = vrot.slane %v3497, 4
  %v3499 = vrot.slane %v2481, 5
  %v3500 = vsel %vm1027, %v3498, %v3499
  %v3501 = vrot.slane %v3499, 4
  %v3502 = vrot.slane %v2539, 5
  %v3503 = vsel %vm1027, %v3501, %v3502
  %v3504 = vrot.slane %v3340, 5
  %v3505 = vrot.slane %v3504, 4
  %v3506 = vrot.slane %v2483, 5
  %v3507 = vsel %vm1027, %v3505, %v3506
  %v3508 = vrot.slane %v3506, 4
  %v3509 = vrot.slane %v2540, 5
  %v3510 = vsel %vm1027, %v3508, %v3509
  %v3511 = vrot.slane %v3341, 5
  %v3512 = vrot.slane %v3511, 4
  %v3513 = vrot.slane %v2485, 5
  %v3514 = vsel %vm1027, %v3512, %v3513
  %v3515 = vrot.slane %v3513, 4
  %v3516 = vrot.slane %v2541, 5
  %v3517 = vsel %vm1027, %v3515, %v3516
  %v3518 = vrot.slane %v3342, 5
  %v3519 = vrot.slane %v3518, 4
  %v3520 = vrot.slane %v2487, 5
  %v3521 = vsel %vm1027, %v3519, %v3520
  %v3522 = vrot.slane %v3520, 4
  %v3523 = vrot.slane %v2542, 5
  %v3524 = vsel %vm1027, %v3522, %v3523
  %v3525 = vrot.slane %v3343, 5
  %v3526 = vrot.slane %v3525, 4
  %v3527 = vrot.slane %v2489, 5
  %v3528 = vsel %vm1027, %v3526, %v3527
  %v3529 = vrot.slane %v3527, 4
  %v3530 = vrot.slane %v2543, 5
  %v3531 = vsel %vm1027, %v3529, %v3530
  %v3532 = vrot.slane %v3344, 5
  %v3533 = vrot.slane %v3532, 4
  %v3534 = vrot.slane %v2491, 5
  %v3535 = vsel %vm1027, %v3533, %v3534
  %v3536 = vrot.slane %v3534, 4
  %v3537 = vrot.slane %v2544, 5
  %v3538 = vsel %vm1027, %v3536, %v3537
  %v3539 = vrot.slane %v3345, 5
  %v3540 = vrot.slane %v3539, 4
  %v3541 = vrot.slane %v2493, 5
  %v3542 = vsel %vm1027, %v3540, %v3541
  %v3543 = vrot.slane %v3541, 4
  %v3544 = vrot.slane %v2545, 5
  %v3545 = vsel %vm1027, %v3543, %v3544
  %v3546 = vrot.slane %v3346, 5
  %v3547 = vrot.slane %v3546, 4
  %v3548 = vrot.slane %v2495, 5
  %v3549 = vsel %vm1027, %v3547, %v3548
  %v3550 = vrot.slane %v3548, 4
  %v3551 = vrot.slane %v2546, 5
  %v3552 = vsel %vm1027, %v3550, %v3551
  %v3553 = vrot.slane %v3347, 5
  %v3554 = vrot.slane %v3553, 4
  %v3555 = vrot.slane %v2497, 5
  %v3556 = vsel %vm1027, %v3554, %v3555
  %v3557 = vrot.slane %v3555, 4
  %v3558 = vrot.slane %v2547, 5
  %v3559 = vsel %vm1027, %v3557, %v3558
  %v3560 = vrot.slane %v3348, 5
  %v3561 = vrot.slane %v3560, 4
  %v3562 = vrot.slane %v2499, 5
  %v3563 = vsel %vm1027, %v3561, %v3562
  %v3564 = vrot.slane %v3562, 4
  %v3565 = vrot.slane %v2548, 5
  %v3566 = vsel %vm1027, %v3564, %v3565
  %v3567 = vrot.slane %v3349, 5
  %v3568 = vrot.slane %v3567, 4
  %v3569 = vrot.slane %v2501, 5
  %v3570 = vsel %vm1027, %v3568, %v3569
  %v3571 = vrot.slane %v3569, 4
  %v3572 = vrot.slane %v2549, 5
  %v3573 = vsel %vm1027, %v3571, %v3572
  %v3574 = vrot.slane %v3350, 5
  %v3575 = vrot.slane %v3574, 4
  %v3576 = vrot.slane %v2503, 5
  %v3577 = vsel %vm1027, %v3575, %v3576
  %v3578 = vrot.slane %v3576, 4
  %v3579 = vrot.slane %v2550, 5
  %v3580 = vsel %vm1027, %v3578, %v3579
  %v3581 = vrot.slane %v3351, 5
  %v3582 = vrot.slane %v3581, 4
  %v3583 = vrot.slane %v2505, 5
  %v3584 = vsel %vm1027, %v3582, %v3583
  %v3585 = vrot.slane %v3583, 4
  %v3586 = vrot.slane %v2551, 5
  %v3587 = vsel %vm1027, %v3585, %v3586
  %v3588 = vrot.slane %v3352, 5
  %v3589 = vrot.slane %v3588, 4
  %v3590 = vrot.slane %v2507, 5
  %v3591 = vsel %vm1027, %v3589, %v3590
  %v3592 = vrot.slane %v3590, 4
  %v3593 = vrot.slane %v2552, 5
  %v3594 = vsel %vm1027, %v3592, %v3593
  %v3595 = vrot.slane %v3353, 5
  %v3596 = vrot.slane %v3595, 4
  %v3597 = vrot.slane %v2509, 5
  %v3598 = vsel %vm1027, %v3596, %v3597
  %v3599 = vrot.slane %v3597, 4
  %v3600 = vrot.slane %v2553, 5
  %v3601 = vsel %vm1027, %v3599, %v3600
  %v3602 = vrot.slane %v3354, 5
  %v3603 = vrot.slane %v3602, 4
  %v3604 = vrot.slane %v2511, 5
  %v3605 = vsel %vm1027, %v3603, %v3604
  %v3606 = vrot.slane %v3604, 4
  %v3607 = vrot.slane %v2554, 5
  %v3608 = vsel %vm1027, %v3606, %v3607
  %v3609 = vrot.slane %v3355, 5
  %v3610 = vrot.slane %v3609, 4
  %v3611 = vrot.slane %v2513, 5
  %v3612 = vsel %vm1027, %v3610, %v3611
  %v3613 = vrot.slane %v3611, 4
  %v3614 = vrot.slane %v2555, 5
  %v3615 = vsel %vm1027, %v3613, %v3614
  %v3616 = vrot.slane %v3356, 5
  %v3617 = vrot.slane %v3616, 4
  %v3618 = vrot.slane %v2515, 5
  %v3619 = vsel %vm1027, %v3617, %v3618
  %v3620 = vrot.slane %v3618, 4
  %v3621 = vrot.slane %v2556, 5
  %v3622 = vsel %vm1027, %v3620, %v3621
  %v3623 = vrot.slane %v3357, 5
  %v3624 = vrot.slane %v3623, 4
  %v3625 = vrot.slane %v2517, 5
  %v3626 = vsel %vm1027, %v3624, %v3625
  %v3627 = vrot.slane %v3625, 4
  %v3628 = vrot.slane %v2557, 5
  %v3629 = vsel %vm1027, %v3627, %v3628
  %v3630 = vrot.slane %v3358, 5
  %v3631 = vrot.slane %v3630, 4
  %v3632 = vrot.slane %v2519, 5
  %v3633 = vsel %vm1027, %v3631, %v3632
  %v3634 = vrot.slane %v3632, 4
  %v3635 = vrot.slane %v2558, 5
  %v3636 = vsel %vm1027, %v3634, %v3635
  %v3637 = vrot.slane %v3359, 5
  %v3638 = vrot.slane %v3637, 4
  %v3639 = vrot.slane %v2521, 5
  %v3640 = vsel %vm1027, %v3638, %v3639
  %v3641 = vrot.slane %v3639, 4
  %v3642 = vrot.slane %v2559, 5
  %v3643 = vsel %vm1027, %v3641, %v3642
  %v3644 = vrot.slane %v3360, 5
  %v3645 = vrot.slane %v3644, 4
  %v3646 = vrot.slane %v2523, 5
  %v3647 = vsel %vm1027, %v3645, %v3646
  %v3648 = vrot.slane %v3646, 4
  %v3649 = vrot.slane %v2560, 5
  %v3650 = vsel %vm1027, %v3648, %v3649
  %v3651 = vrot.slane %v3361, 5
  %v3652 = vrot.slane %v3651, 4
  %v3653 = vrot.slane %v2525, 5
  %v3654 = vsel %vm1027, %v3652, %v3653
  %v3655 = vrot.slane %v3653, 4
  %v3656 = vrot.slane %v2561, 5
  %v3657 = vsel %vm1027, %v3655, %v3656
  %v3658 = vrot.slane %v3362, 5
  %v3659 = vrot.slane %v3658, 4
  %v3660 = vrot.slane %v2527, 5
  %v3661 = vsel %vm1027, %v3659, %v3660
  %v3662 = vrot.slane %v3660, 4
  %v3663 = vrot.slane %v2562, 5
  %v3664 = vsel %vm1027, %v3662, %v3663
  %v3665 = vrot.slane %v3363, 5
  %v3666 = vrot.slane %v3665, 4
  %v3667 = vrot.slane %v2529, 5
  %v3668 = vsel %vm1027, %v3666, %v3667
  %v3669 = vrot.slane %v3667, 4
  %v3670 = vrot.slane %v2563, 5
  %v3671 = vsel %vm1027, %v3669, %v3670
  %v3672 = vrot.slane %v3364, 5
  %v3673 = vrot.slane %v3672, 4
  %v3674 = vrot.slane %v2531, 5
  %v3675 = vsel %vm1027, %v3673, %v3674
  %v3676 = vrot.slane %v3674, 4
  %v3677 = vrot.slane %v2564, 5
  %v3678 = vsel %vm1027, %v3676, %v3677
  %v3679 = vrot.slane %v3365, 5
  %v3680 = vrot.slane %v3679, 4
  %v3681 = vrot.slane %v2533, 5
  %v3682 = vsel %vm1027, %v3680, %v3681
  %v3683 = vrot.slane %v3681, 4
  %v3684 = vrot.slane %v2565, 5
  %v3685 = vsel %vm1027, %v3683, %v3684
  %v3718 = vunpack.c.l.b16 %v30
  %v3719 = vunpack.c.l.b16 %v31
  %v3720 = vunpack.c.l.b16 %v32
  %v3721 = vunpack.c.l.b16 %v33
  %v3722 = vunpack.c.l.b16 %v34
  %v3723 = vunpack.c.l.b16 %v35
  %v3724 = vunpack.c.l.b16 %v36
  %v3725 = vunpack.c.l.b16 %v37
  %v3726 = vunpack.c.l.b16 %v38
  %v3727 = vunpack.c.l.b16 %v39
  %v3728 = vunpack.c.l.b16 %v40
  %v3729 = vunpack.c.l.b16 %v41
  %v3730 = vunpack.c.l.b16 %v42
  %v3731 = vunpack.c.l.b16 %v43
  %v3732 = vunpack.c.l.b16 %v44
  %v3733 = vunpack.c.l.b16 %v45
  %v3734 = vunpack.c.l.b16 %v46
  %v3735 = vunpack.c.l.b16 %v47
  %v3736 = vunpack.c.l.b16 %v48
  %v3737 = vunpack.c.l.b16 %v49
  %v3738 = vunpack.c.l.b16 %v50
  %v3739 = vunpack.c.l.b16 %v51
  %v3740 = vunpack.c.l.b16 %v52
  %v3741 = vunpack.c.l.b16 %v53
  %v3742 = vunpack.c.l.b16 %v54
  %v3743 = vunpack.c.l.b16 %v55
  %v3744 = vunpack.c.l.b16 %v56
  %v3745 = vunpack.c.l.b16 %v57
  %v3746 = vunpack.c.l.b16 %v58
  %v3747 = vunpack.c.l.b16 %v59
  %v3748 = vunpack.c.l.b16 %v60
  %v3749 = vunpack.c.l.b16 %v61
  %v3750 = vunpack.c.l.b16 %v62
  %v3751 = vunpack.c.l.b16 %v63
  %v3752 = vunpack.c.l.b16 %v64
  %v3753 = vunpack.c.l.b16 %v65
  %v3754 = vunpack.c.l.b16 %v66
  %v3755 = vunpack.c.l.b16 %v67
  %v3756 = vunpack.c.l.b16 %v68
  %v3757 = vunpack.c.l.b16 %v69
  %v3758 = vunpack.c.l.b16 %v70
  %v3759 = vunpack.c.l.b16 %v71
  %v3760 = vunpack.c.l.b16 %v72
  %v3761 = vunpack.c.l.b16 %v73
  %v3762 = vunpack.c.l.b16 %v74
  %v3763 = vunpack.c.l.b16 %v75
  %v3764 = vunpack.c.l.b16 %v76
  %v3765 = vunpack.c.l.b16 %v77
  %v3766 = vunpack.c.l.b16 %v78
  %v3767 = vunpack.c.l.b16 %v79
  %v3768 = vunpack.c.l.b16 %v80
  %v3769 = vunpack.c.l.b16 %v81
  %v3770 = vunpack.c.l.b16 %v82
  %v3771 = vunpack.c.l.b16 %v83
  %v3772 = vunpack.c.l.b16 %v84
  %v3773 = vunpack.c.l.b16 %v85
  %v3774 = vunpack.c.l.b16 %v86
  %v3775 = vunpack.c.l.b16 %v87
  %v3776 = vunpack.c.l.b16 %v88
  %v3777 = vunpack.c.l.b16 %v89
  %v3778 = vunpack.c.l.b16 %v90
  %v3779 = vunpack.c.l.b16 %v91
  %v3780 = vunpack.c.l.b16 %v92
  %v3781 = vunpack.c.l.b16 %v93
  %v3782 = vpack.c.b16 %v3719, %v3718
  %v3783 = vpack.c.b16 %v3721, %v3720
  %v3784 = vpack.c.b16 %v3723, %v3722
  %v3785 = vpack.c.b16 %v3725, %v3724
  %v3786 = vpack.c.b16 %v3727, %v3726
  %v3787 = vpack.c.b16 %v3729, %v3728
  %v3788 = vpack.c.b16 %v3731, %v3730
  %v3789 = vpack.c.b16 %v3733, %v3732
  %v3790 = vpack.c.b16 %v3735, %v3734
  %v3791 = vpack.c.b16 %v3737, %v3736
  %v3792 = vpack.c.b16 %v3739, %v3738
  %v3793 = vpack.c.b16 %v3741, %v3740
  %v3794 = vpack.c.b16 %v3743, %v3742
  %v3795 = vpack.c.b16 %v3745, %v3744
  %v3796 = vpack.c.b16 %v3747, %v3746
  %v3797 = vpack.c.b16 %v3749, %v3748
  %v3798 = vpack.c.b16 %v3751, %v3750
  %v3799 = vpack.c.b16 %v3753, %v3752
  %v3800 = vpack.c.b16 %v3755, %v3754
  %v3801 = vpack.c.b16 %v3757, %v3756
  %v3802 = vpack.c.b16 %v3759, %v3758
  %v3803 = vpack.c.b16 %v3761, %v3760
  %v3804 = vpack.c.b16 %v3763, %v3762
  %v3805 = vpack.c.b16 %v3765, %v3764
  %v3806 = vpack.c.b16 %v3767, %v3766
  %v3807 = vpack.c.b16 %v3769, %v3768
  %v3808 = vpack.c.b16 %v3771, %v3770
  %v3809 = vpack.c.b16 %v3773, %v3772
  %v3810 = vpack.c.b16 %v3775, %v3774
  %v3811 = vpack.c.b16 %v3777, %v3776
  %v3812 = vpack.c.b16 %v3779, %v3778
  %v3813 = vpack.c.b16 %v3781, %v3780
  %v3814 = vunpack.c.l.b16 %v142
  %v3815 = vunpack.c.l.b16 %v152
  %v3816 = vunpack.c.l.b16 %v166
  %v3817 = vunpack.c.l.b16 %v176
  %v3818 = vunpack.c.l.b16 %v190
  %v3819 = vunpack.c.l.b16 %v200
  %v3820 = vunpack.c.l.b16 %v214
  %v3821 = vunpack.c.l.b16 %v224
  %v3822 = vunpack.c.l.b16 %v238
  %v3823 = vunpack.c.l.b16 %v248
  %v3824 = vunpack.c.l.b16 %v262
  %v3825 = vunpack.c.l.b16 %v272
  %v3826 = vunpack.c.l.b16 %v286
  %v3827 = vunpack.c.l.b16 %v296
  %v3828 = vunpack.c.l.b16 %v310
  %v3829 = vunpack.c.l.b16 %v320
  %v3830 = vunpack.c.l.b16 %v334
  %v3831 = vunpack.c.l.b16 %v344
  %v3832 = vunpack.c.l.b16 %v358
  %v3833 = vunpack.c.l.b16 %v368
  %v3834 = vunpack.c.l.b16 %v382
  %v3835 = vunpack.c.l.b16 %v392
  %v3836 = vunpack.c.l.b16 %v406
  %v3837 = vunpack.c.l.b16 %v416
  %v3838 = vunpack.c.l.b16 %v430
  %v3839 = vunpack.c.l.b16 %v440
  %v3840 = vunpack.c.l.b16 %v454
  %v3841 = vunpack.c.l.b16 %v464
  %v3842 = vunpack.c.l.b16 %v478
  %v3843 = vunpack.c.l.b16 %v488
  %v3844 = vunpack.c.l.b16 %v502
  %v3845 = vunpack.c.l.b16 %v512
  %v3846 = vunpack.c.l.b16 %v526
  %v3847 = vunpack.c.l.b16 %v536
  %v3848 = vunpack.c.l.b16 %v550
  %v3849 = vunpack.c.l.b16 %v560
  %v3850 = vunpack.c.l.b16 %v574
  %v3851 = vunpack.c.l.b16 %v584
  %v3852 = vunpack.c.l.b16 %v598
  %v3853 = vunpack.c.l.b16 %v608
  %v3854 = vunpack.c.l.b16 %v622
  %v3855 = vunpack.c.l.b16 %v632
  %v3856 = vunpack.c.l.b16 %v646
  %v3857 = vunpack.c.l.b16 %v656
  %v3858 = vunpack.c.l.b16 %v670
  %v3859 = vunpack.c.l.b16 %v680
  %v3860 = vunpack.c.l.b16 %v694
  %v3861 = vunpack.c.l.b16 %v704
  %v3862 = vunpack.c.l.b16 %v718
  %v3863 = vunpack.c.l.b16 %v728
  %v3864 = vunpack.c.l.b16 %v742
  %v3865 = vunpack.c.l.b16 %v752
  %v3866 = vunpack.c.l.b16 %v766
  %v3867 = vunpack.c.l.b16 %v776
  %v3868 = vunpack.c.l.b16 %v790
  %v3869 = vunpack.c.l.b16 %v800
  %v3870 = vunpack.c.l.b16 %v814
  %v3871 = vunpack.c.l.b16 %v824
  %v3872 = vunpack.c.l.b16 %v838
  %v3873 = vunpack.c.l.b16 %v848
  %v3874 = vunpack.c.l.b16 %v862
  %v3875 = vunpack.c.l.b16 %v872
  %v3876 = vunpack.c.l.b16 %v886
  %v3877 = vunpack.c.l.b16 %v896
  %v3878 = vpack.c.b16 %v3815, %v3814
  %v3879 = vpack.c.b16 %v3817, %v3816
  %v3880 = vpack.c.b16 %v3819, %v3818
  %v3881 = vpack.c.b16 %v3821, %v3820
  %v3882 = vpack.c.b16 %v3823, %v3822
  %v3883 = vpack.c.b16 %v3825, %v3824
  %v3884 = vpack.c.b16 %v3827, %v3826
  %v3885 = vpack.c.b16 %v3829, %v3828
  %v3886 = vpack.c.b16 %v3831, %v3830
  %v3887 = vpack.c.b16 %v3833, %v3832
  %v3888 = vpack.c.b16 %v3835, %v3834
  %v3889 = vpack.c.b16 %v3837, %v3836
  %v3890 = vpack.c.b16 %v3839, %v3838
  %v3891 = vpack.c.b16 %v3841, %v3840
  %v3892 = vpack.c.b16 %v3843, %v3842
  %v3893 = vpack.c.b16 %v3845, %v3844
  %v3894 = vpack.c.b16 %v3847, %v3846
  %v3895 = vpack.c.b16 %v3849, %v3848
  %v3896 = vpack.c.b16 %v3851, %v3850
  %v3897 = vpack.c.b16 %v3853, %v3852
  %v3898 = vpack.c.b16 %v3855, %v3854
  %v3899 = vpack.c.b16 %v3857, %v3856
  %v3900 = vpack.c.b16 %v3859, %v3858
  %v3901 = vpack.c.b16 %v3861, %v3860
  %v3902 = vpack.c.b16 %v3863, %v3862
  %v3903 = vpack.c.b16 %v3865, %v3864
  %v3904 = vpack.c.b16 %v3867, %v3866
  %v3905 = vpack.c.b16 %v3869, %v3868
  %v3906 = vpack.c.b16 %v3871, %v3870
  %v3907 = vpack.c.b16 %v3873, %v3872
  %v3908 = vpack.c.b16 %v3875, %v3874
  %v3909 = vpack.c.b16 %v3877, %v3876
  %3910 = vrot.lane.b32.xlu0 %v3878, 32
  %v3911 = vpop.permute.xlu0 %3910
  %3912 = vrot.lane.b32.xlu0 %v3879, 32
  %v3913 = vpop.permute.xlu0 %3912
  %3914 = vrot.lane.b32.xlu0 %v3880, 32
  %v3915 = vpop.permute.xlu0 %3914
  %3916 = vrot.lane.b32.xlu0 %v3881, 32
  %v3917 = vpop.permute.xlu0 %3916
  %3918 = vrot.lane.b32.xlu0 %v3882, 32
  %v3919 = vpop.permute.xlu0 %3918
  %3920 = vrot.lane.b32.xlu0 %v3883, 32
  %v3921 = vpop.permute.xlu0 %3920
  %3922 = vrot.lane.b32.xlu0 %v3884, 32
  %v3923 = vpop.permute.xlu0 %3922
  %3924 = vrot.lane.b32.xlu0 %v3885, 32
  %v3925 = vpop.permute.xlu0 %3924
  %3926 = vrot.lane.b32.xlu0 %v3886, 32
  %v3927 = vpop.permute.xlu0 %3926
  %3928 = vrot.lane.b32.xlu0 %v3887, 32
  %v3929 = vpop.permute.xlu0 %3928
  %3930 = vrot.lane.b32.xlu0 %v3888, 32
  %v3931 = vpop.permute.xlu0 %3930
  %3932 = vrot.lane.b32.xlu0 %v3889, 32
  %v3933 = vpop.permute.xlu0 %3932
  %3934 = vrot.lane.b32.xlu0 %v3890, 32
  %v3935 = vpop.permute.xlu0 %3934
  %3936 = vrot.lane.b32.xlu0 %v3891, 32
  %v3937 = vpop.permute.xlu0 %3936
  %3938 = vrot.lane.b32.xlu0 %v3892, 32
  %v3939 = vpop.permute.xlu0 %3938
  %3940 = vrot.lane.b32.xlu0 %v3893, 32
  %v3941 = vpop.permute.xlu0 %3940
  %3942 = vrot.lane.b32.xlu0 %v3894, 32
  %v3943 = vpop.permute.xlu0 %3942
  %3944 = vrot.lane.b32.xlu0 %v3895, 32
  %v3945 = vpop.permute.xlu0 %3944
  %3946 = vrot.lane.b32.xlu0 %v3896, 32
  %v3947 = vpop.permute.xlu0 %3946
  %3948 = vrot.lane.b32.xlu0 %v3897, 32
  %v3949 = vpop.permute.xlu0 %3948
  %3950 = vrot.lane.b32.xlu0 %v3898, 32
  %v3951 = vpop.permute.xlu0 %3950
  %3952 = vrot.lane.b32.xlu0 %v3899, 32
  %v3953 = vpop.permute.xlu0 %3952
  %3954 = vrot.lane.b32.xlu0 %v3900, 32
  %v3955 = vpop.permute.xlu0 %3954
  %3956 = vrot.lane.b32.xlu0 %v3901, 32
  %v3957 = vpop.permute.xlu0 %3956
  %3958 = vrot.lane.b32.xlu0 %v3902, 32
  %v3959 = vpop.permute.xlu0 %3958
  %3960 = vrot.lane.b32.xlu0 %v3903, 32
  %v3961 = vpop.permute.xlu0 %3960
  %3962 = vrot.lane.b32.xlu0 %v3904, 32
  %v3963 = vpop.permute.xlu0 %3962
  %3964 = vrot.lane.b32.xlu0 %v3905, 32
  %v3965 = vpop.permute.xlu0 %3964
  %3966 = vrot.lane.b32.xlu0 %v3906, 32
  %v3967 = vpop.permute.xlu0 %3966
  %3968 = vrot.lane.b32.xlu0 %v3907, 32
  %v3969 = vpop.permute.xlu0 %3968
  %3970 = vrot.lane.b32.xlu0 %v3908, 32
  %v3971 = vpop.permute.xlu0 %3970
  %3972 = vrot.lane.b32.xlu0 %v3909, 32
  %v3973 = vpop.permute.xlu0 %3972
  %v3974 = vunpack.c.l.b16 %v1031
  %v3975 = vunpack.c.l.b16 %v1034
  %v3976 = vunpack.c.l.b16 %v1038
  %v3977 = vunpack.c.l.b16 %v1041
  %v3978 = vunpack.c.l.b16 %v1045
  %v3979 = vunpack.c.l.b16 %v1048
  %v3980 = vunpack.c.l.b16 %v1052
  %v3981 = vunpack.c.l.b16 %v1055
  %v3982 = vunpack.c.l.b16 %v1059
  %v3983 = vunpack.c.l.b16 %v1062
  %v3984 = vunpack.c.l.b16 %v1066
  %v3985 = vunpack.c.l.b16 %v1069
  %v3986 = vunpack.c.l.b16 %v1073
  %v3987 = vunpack.c.l.b16 %v1076
  %v3988 = vunpack.c.l.b16 %v1080
  %v3989 = vunpack.c.l.b16 %v1083
  %v3990 = vunpack.c.l.b16 %v1087
  %v3991 = vunpack.c.l.b16 %v1090
  %v3992 = vunpack.c.l.b16 %v1094
  %v3993 = vunpack.c.l.b16 %v1097
  %v3994 = vunpack.c.l.b16 %v1101
  %v3995 = vunpack.c.l.b16 %v1104
  %v3996 = vunpack.c.l.b16 %v1108
  %v3997 = vunpack.c.l.b16 %v1111
  %v3998 = vunpack.c.l.b16 %v1115
  %v3999 = vunpack.c.l.b16 %v1118
  %v4000 = vunpack.c.l.b16 %v1122
  %v4001 = vunpack.c.l.b16 %v1125
  %v4002 = vunpack.c.l.b16 %v1129
  %v4003 = vunpack.c.l.b16 %v1132
  %v4004 = vunpack.c.l.b16 %v1136
  %v4005 = vunpack.c.l.b16 %v1139
  %v4006 = vunpack.c.l.b16 %v1143
  %v4007 = vunpack.c.l.b16 %v1146
  %v4008 = vunpack.c.l.b16 %v1150
  %v4009 = vunpack.c.l.b16 %v1153
  %v4010 = vunpack.c.l.b16 %v1157
  %v4011 = vunpack.c.l.b16 %v1160
  %v4012 = vunpack.c.l.b16 %v1164
  %v4013 = vunpack.c.l.b16 %v1167
  %v4014 = vunpack.c.l.b16 %v1171
  %v4015 = vunpack.c.l.b16 %v1174
  %v4016 = vunpack.c.l.b16 %v1178
  %v4017 = vunpack.c.l.b16 %v1181
  %v4018 = vunpack.c.l.b16 %v1185
  %v4019 = vunpack.c.l.b16 %v1188
  %v4020 = vunpack.c.l.b16 %v1192
  %v4021 = vunpack.c.l.b16 %v1195
  %v4022 = vunpack.c.l.b16 %v1199
  %v4023 = vunpack.c.l.b16 %v1202
  %v4024 = vunpack.c.l.b16 %v1206
  %v4025 = vunpack.c.l.b16 %v1209
  %v4026 = vunpack.c.l.b16 %v1213
  %v4027 = vunpack.c.l.b16 %v1216
  %v4028 = vunpack.c.l.b16 %v1220
  %v4029 = vunpack.c.l.b16 %v1223
  %v4030 = vunpack.c.l.b16 %v1227
  %v4031 = vunpack.c.l.b16 %v1230
  %v4032 = vunpack.c.l.b16 %v1234
  %v4033 = vunpack.c.l.b16 %v1237
  %v4034 = vunpack.c.l.b16 %v1241
  %v4035 = vunpack.c.l.b16 %v1244
  %v4036 = vunpack.c.l.b16 %v1248
  %v4037 = vunpack.c.l.b16 %v1251
  %v4038 = vpack.c.b16 %v3975, %v3974
  %v4039 = vpack.c.b16 %v3977, %v3976
  %v4040 = vpack.c.b16 %v3979, %v3978
  %v4041 = vpack.c.b16 %v3981, %v3980
  %v4042 = vpack.c.b16 %v3983, %v3982
  %v4043 = vpack.c.b16 %v3985, %v3984
  %v4044 = vpack.c.b16 %v3987, %v3986
  %v4045 = vpack.c.b16 %v3989, %v3988
  %v4046 = vpack.c.b16 %v3991, %v3990
  %v4047 = vpack.c.b16 %v3993, %v3992
  %v4048 = vpack.c.b16 %v3995, %v3994
  %v4049 = vpack.c.b16 %v3997, %v3996
  %v4050 = vpack.c.b16 %v3999, %v3998
  %v4051 = vpack.c.b16 %v4001, %v4000
  %v4052 = vpack.c.b16 %v4003, %v4002
  %v4053 = vpack.c.b16 %v4005, %v4004
  %v4054 = vpack.c.b16 %v4007, %v4006
  %v4055 = vpack.c.b16 %v4009, %v4008
  %v4056 = vpack.c.b16 %v4011, %v4010
  %v4057 = vpack.c.b16 %v4013, %v4012
  %v4058 = vpack.c.b16 %v4015, %v4014
  %v4059 = vpack.c.b16 %v4017, %v4016
  %v4060 = vpack.c.b16 %v4019, %v4018
  %v4061 = vpack.c.b16 %v4021, %v4020
  %v4062 = vpack.c.b16 %v4023, %v4022
  %v4063 = vpack.c.b16 %v4025, %v4024
  %v4064 = vpack.c.b16 %v4027, %v4026
  %v4065 = vpack.c.b16 %v4029, %v4028
  %v4066 = vpack.c.b16 %v4031, %v4030
  %v4067 = vpack.c.b16 %v4033, %v4032
  %v4068 = vpack.c.b16 %v4035, %v4034
  %v4069 = vpack.c.b16 %v4037, %v4036
  %4070 = vrot.lane.b32.xlu0 %v4038, 64
  %v4071 = vpop.permute.xlu0 %4070
  %4072 = vrot.lane.b32.xlu0 %v4039, 64
  %v4073 = vpop.permute.xlu0 %4072
  %4074 = vrot.lane.b32.xlu0 %v4040, 64
  %v4075 = vpop.permute.xlu0 %4074
  %4076 = vrot.lane.b32.xlu0 %v4041, 64
  %v4077 = vpop.permute.xlu0 %4076
  %4078 = vrot.lane.b32.xlu0 %v4042, 64
  %v4079 = vpop.permute.xlu0 %4078
  %4080 = vrot.lane.b32.xlu0 %v4043, 64
  %v4081 = vpop.permute.xlu0 %4080
  %4082 = vrot.lane.b32.xlu0 %v4044, 64
  %v4083 = vpop.permute.xlu0 %4082
  %4084 = vrot.lane.b32.xlu0 %v4045, 64
  %v4085 = vpop.permute.xlu0 %4084
  %4086 = vrot.lane.b32.xlu0 %v4046, 64
  %v4087 = vpop.permute.xlu0 %4086
  %4088 = vrot.lane.b32.xlu0 %v4047, 64
  %v4089 = vpop.permute.xlu0 %4088
  %4090 = vrot.lane.b32.xlu0 %v4048, 64
  %v4091 = vpop.permute.xlu0 %4090
  %4092 = vrot.lane.b32.xlu0 %v4049, 64
  %v4093 = vpop.permute.xlu0 %4092
  %4094 = vrot.lane.b32.xlu0 %v4050, 64
  %v4095 = vpop.permute.xlu0 %4094
  %4096 = vrot.lane.b32.xlu0 %v4051, 64
  %v4097 = vpop.permute.xlu0 %4096
  %4098 = vrot.lane.b32.xlu0 %v4052, 64
  %v4099 = vpop.permute.xlu0 %4098
  %4100 = vrot.lane.b32.xlu0 %v4053, 64
  %v4101 = vpop.permute.xlu0 %4100
  %4102 = vrot.lane.b32.xlu0 %v4054, 64
  %v4103 = vpop.permute.xlu0 %4102
  %4104 = vrot.lane.b32.xlu0 %v4055, 64
  %v4105 = vpop.permute.xlu0 %4104
  %4106 = vrot.lane.b32.xlu0 %v4056, 64
  %v4107 = vpop.permute.xlu0 %4106
  %4108 = vrot.lane.b32.xlu0 %v4057, 64
  %v4109 = vpop.permute.xlu0 %4108
  %4110 = vrot.lane.b32.xlu0 %v4058, 64
  %v4111 = vpop.permute.xlu0 %4110
  %4112 = vrot.lane.b32.xlu0 %v4059, 64
  %v4113 = vpop.permute.xlu0 %4112
  %4114 = vrot.lane.b32.xlu0 %v4060, 64
  %v4115 = vpop.permute.xlu0 %4114
  %4116 = vrot.lane.b32.xlu0 %v4061, 64
  %v4117 = vpop.permute.xlu0 %4116
  %4118 = vrot.lane.b32.xlu0 %v4062, 64
  %v4119 = vpop.permute.xlu0 %4118
  %4120 = vrot.lane.b32.xlu0 %v4063, 64
  %v4121 = vpop.permute.xlu0 %4120
  %4122 = vrot.lane.b32.xlu0 %v4064, 64
  %v4123 = vpop.permute.xlu0 %4122
  %4124 = vrot.lane.b32.xlu0 %v4065, 64
  %v4125 = vpop.permute.xlu0 %4124
  %4126 = vrot.lane.b32.xlu0 %v4066, 64
  %v4127 = vpop.permute.xlu0 %4126
  %4128 = vrot.lane.b32.xlu0 %v4067, 64
  %v4129 = vpop.permute.xlu0 %4128
  %4130 = vrot.lane.b32.xlu0 %v4068, 64
  %v4131 = vpop.permute.xlu0 %4130
  %4132 = vrot.lane.b32.xlu0 %v4069, 64
  %v4133 = vpop.permute.xlu0 %4132
  %v4166 = vunpack.c.l.b16 %v1253
  %v4167 = vunpack.c.l.b16 %v1254
  %v4168 = vunpack.c.l.b16 %v1255
  %v4169 = vunpack.c.l.b16 %v1256
  %v4170 = vunpack.c.l.b16 %v1257
  %v4171 = vunpack.c.l.b16 %v1258
  %v4172 = vunpack.c.l.b16 %v1259
  %v4173 = vunpack.c.l.b16 %v1260
  %v4174 = vunpack.c.l.b16 %v1261
  %v4175 = vunpack.c.l.b16 %v1262
  %v4176 = vunpack.c.l.b16 %v1263
  %v4177 = vunpack.c.l.b16 %v1264
  %v4178 = vunpack.c.l.b16 %v1265
  %v4179 = vunpack.c.l.b16 %v1266
  %v4180 = vunpack.c.l.b16 %v1267
  %v4181 = vunpack.c.l.b16 %v1268
  %v4182 = vunpack.c.l.b16 %v1269
  %v4183 = vunpack.c.l.b16 %v1270
  %v4184 = vunpack.c.l.b16 %v1271
  %v4185 = vunpack.c.l.b16 %v1272
  %v4186 = vunpack.c.l.b16 %v1273
  %v4187 = vunpack.c.l.b16 %v1274
  %v4188 = vunpack.c.l.b16 %v1275
  %v4189 = vunpack.c.l.b16 %v1276
  %v4190 = vunpack.c.l.b16 %v1277
  %v4191 = vunpack.c.l.b16 %v1278
  %v4192 = vunpack.c.l.b16 %v1279
  %v4193 = vunpack.c.l.b16 %v1280
  %v4194 = vunpack.c.l.b16 %v1281
  %v4195 = vunpack.c.l.b16 %v1282
  %v4196 = vunpack.c.l.b16 %v1283
  %v4197 = vunpack.c.l.b16 %v1284
  %v4198 = vunpack.c.l.b16 %v1285
  %v4199 = vunpack.c.l.b16 %v1286
  %v4200 = vunpack.c.l.b16 %v1287
  %v4201 = vunpack.c.l.b16 %v1288
  %v4202 = vunpack.c.l.b16 %v1289
  %v4203 = vunpack.c.l.b16 %v1290
  %v4204 = vunpack.c.l.b16 %v1291
  %v4205 = vunpack.c.l.b16 %v1292
  %v4206 = vunpack.c.l.b16 %v1293
  %v4207 = vunpack.c.l.b16 %v1294
  %v4208 = vunpack.c.l.b16 %v1295
  %v4209 = vunpack.c.l.b16 %v1296
  %v4210 = vunpack.c.l.b16 %v1297
  %v4211 = vunpack.c.l.b16 %v1298
  %v4212 = vunpack.c.l.b16 %v1299
  %v4213 = vunpack.c.l.b16 %v1300
  %v4214 = vunpack.c.l.b16 %v1301
  %v4215 = vunpack.c.l.b16 %v1302
  %v4216 = vunpack.c.l.b16 %v1303
  %v4217 = vunpack.c.l.b16 %v1304
  %v4218 = vunpack.c.l.b16 %v1305
  %v4219 = vunpack.c.l.b16 %v1306
  %v4220 = vunpack.c.l.b16 %v1307
  %v4221 = vunpack.c.l.b16 %v1308
  %v4222 = vunpack.c.l.b16 %v1309
  %v4223 = vunpack.c.l.b16 %v1310
  %v4224 = vunpack.c.l.b16 %v1311
  %v4225 = vunpack.c.l.b16 %v1312
  %v4226 = vunpack.c.l.b16 %v1313
  %v4227 = vunpack.c.l.b16 %v1314
  %v4228 = vunpack.c.l.b16 %v1315
  %v4229 = vunpack.c.l.b16 %v1316
  %v4230 = vpack.c.b16 %v4167, %v4166
  %v4231 = vpack.c.b16 %v4169, %v4168
  %v4232 = vpack.c.b16 %v4171, %v4170
  %v4233 = vpack.c.b16 %v4173, %v4172
  %v4234 = vpack.c.b16 %v4175, %v4174
  %v4235 = vpack.c.b16 %v4177, %v4176
  %v4236 = vpack.c.b16 %v4179, %v4178
  %v4237 = vpack.c.b16 %v4181, %v4180
  %v4238 = vpack.c.b16 %v4183, %v4182
  %v4239 = vpack.c.b16 %v4185, %v4184
  %v4240 = vpack.c.b16 %v4187, %v4186
  %v4241 = vpack.c.b16 %v4189, %v4188
  %v4242 = vpack.c.b16 %v4191, %v4190
  %v4243 = vpack.c.b16 %v4193, %v4192
  %v4244 = vpack.c.b16 %v4195, %v4194
  %v4245 = vpack.c.b16 %v4197, %v4196
  %v4246 = vpack.c.b16 %v4199, %v4198
  %v4247 = vpack.c.b16 %v4201, %v4200
  %v4248 = vpack.c.b16 %v4203, %v4202
  %v4249 = vpack.c.b16 %v4205, %v4204
  %v4250 = vpack.c.b16 %v4207, %v4206
  %v4251 = vpack.c.b16 %v4209, %v4208
  %v4252 = vpack.c.b16 %v4211, %v4210
  %v4253 = vpack.c.b16 %v4213, %v4212
  %v4254 = vpack.c.b16 %v4215, %v4214
  %v4255 = vpack.c.b16 %v4217, %v4216
  %v4256 = vpack.c.b16 %v4219, %v4218
  %v4257 = vpack.c.b16 %v4221, %v4220
  %v4258 = vpack.c.b16 %v4223, %v4222
  %v4259 = vpack.c.b16 %v4225, %v4224
  %v4260 = vpack.c.b16 %v4227, %v4226
  %v4261 = vpack.c.b16 %v4229, %v4228
  %4262 = vrot.lane.b32.xlu0 %v4230, 96
  %v4263 = vpop.permute.xlu0 %4262
  %4264 = vrot.lane.b32.xlu0 %v4231, 96
  %v4265 = vpop.permute.xlu0 %4264
  %4266 = vrot.lane.b32.xlu0 %v4232, 96
  %v4267 = vpop.permute.xlu0 %4266
  %4268 = vrot.lane.b32.xlu0 %v4233, 96
  %v4269 = vpop.permute.xlu0 %4268
  %4270 = vrot.lane.b32.xlu0 %v4234, 96
  %v4271 = vpop.permute.xlu0 %4270
  %4272 = vrot.lane.b32.xlu0 %v4235, 96
  %v4273 = vpop.permute.xlu0 %4272
  %4274 = vrot.lane.b32.xlu0 %v4236, 96
  %v4275 = vpop.permute.xlu0 %4274
  %4276 = vrot.lane.b32.xlu0 %v4237, 96
  %v4277 = vpop.permute.xlu0 %4276
  %4278 = vrot.lane.b32.xlu0 %v4238, 96
  %v4279 = vpop.permute.xlu0 %4278
  %4280 = vrot.lane.b32.xlu0 %v4239, 96
  %v4281 = vpop.permute.xlu0 %4280
  %4282 = vrot.lane.b32.xlu0 %v4240, 96
  %v4283 = vpop.permute.xlu0 %4282
  %4284 = vrot.lane.b32.xlu0 %v4241, 96
  %v4285 = vpop.permute.xlu0 %4284
  %4286 = vrot.lane.b32.xlu0 %v4242, 96
  %v4287 = vpop.permute.xlu0 %4286
  %4288 = vrot.lane.b32.xlu0 %v4243, 96
  %v4289 = vpop.permute.xlu0 %4288
  %4290 = vrot.lane.b32.xlu0 %v4244, 96
  %v4291 = vpop.permute.xlu0 %4290
  %4292 = vrot.lane.b32.xlu0 %v4245, 96
  %v4293 = vpop.permute.xlu0 %4292
  %4294 = vrot.lane.b32.xlu0 %v4246, 96
  %v4295 = vpop.permute.xlu0 %4294
  %4296 = vrot.lane.b32.xlu0 %v4247, 96
  %v4297 = vpop.permute.xlu0 %4296
  %4298 = vrot.lane.b32.xlu0 %v4248, 96
  %v4299 = vpop.permute.xlu0 %4298
  %4300 = vrot.lane.b32.xlu0 %v4249, 96
  %v4301 = vpop.permute.xlu0 %4300
  %4302 = vrot.lane.b32.xlu0 %v4250, 96
  %v4303 = vpop.permute.xlu0 %4302
  %4304 = vrot.lane.b32.xlu0 %v4251, 96
  %v4305 = vpop.permute.xlu0 %4304
  %4306 = vrot.lane.b32.xlu0 %v4252, 96
  %v4307 = vpop.permute.xlu0 %4306
  %4308 = vrot.lane.b32.xlu0 %v4253, 96
  %v4309 = vpop.permute.xlu0 %4308
  %4310 = vrot.lane.b32.xlu0 %v4254, 96
  %v4311 = vpop.permute.xlu0 %4310
  %4312 = vrot.lane.b32.xlu0 %v4255, 96
  %v4313 = vpop.permute.xlu0 %4312
  %4314 = vrot.lane.b32.xlu0 %v4256, 96
  %v4315 = vpop.permute.xlu0 %4314
  %4316 = vrot.lane.b32.xlu0 %v4257, 96
  %v4317 = vpop.permute.xlu0 %4316
  %4318 = vrot.lane.b32.xlu0 %v4258, 96
  %v4319 = vpop.permute.xlu0 %4318
  %4320 = vrot.lane.b32.xlu0 %v4259, 96
  %v4321 = vpop.permute.xlu0 %4320
  %4322 = vrot.lane.b32.xlu0 %v4260, 96
  %v4323 = vpop.permute.xlu0 %4322
  %4324 = vrot.lane.b32.xlu0 %v4261, 96
  %v4325 = vpop.permute.xlu0 %4324
  %v4326 = vunpack.c.l.b16 %v1362
  %v4327 = vunpack.c.l.b16 %v1372
  %v4328 = vunpack.c.l.b16 %v1386
  %v4329 = vunpack.c.l.b16 %v1396
  %v4330 = vunpack.c.l.b16 %v1410
  %v4331 = vunpack.c.l.b16 %v1420
  %v4332 = vunpack.c.l.b16 %v1434
  %v4333 = vunpack.c.l.b16 %v1444
  %v4334 = vunpack.c.l.b16 %v1458
  %v4335 = vunpack.c.l.b16 %v1468
  %v4336 = vunpack.c.l.b16 %v1482
  %v4337 = vunpack.c.l.b16 %v1492
  %v4338 = vunpack.c.l.b16 %v1506
  %v4339 = vunpack.c.l.b16 %v1516
  %v4340 = vunpack.c.l.b16 %v1530
  %v4341 = vunpack.c.l.b16 %v1540
  %v4342 = vunpack.c.l.b16 %v1554
  %v4343 = vunpack.c.l.b16 %v1564
  %v4344 = vunpack.c.l.b16 %v1578
  %v4345 = vunpack.c.l.b16 %v1588
  %v4346 = vunpack.c.l.b16 %v1602
  %v4347 = vunpack.c.l.b16 %v1612
  %v4348 = vunpack.c.l.b16 %v1626
  %v4349 = vunpack.c.l.b16 %v1636
  %v4350 = vunpack.c.l.b16 %v1650
  %v4351 = vunpack.c.l.b16 %v1660
  %v4352 = vunpack.c.l.b16 %v1674
  %v4353 = vunpack.c.l.b16 %v1684
  %v4354 = vunpack.c.l.b16 %v1698
  %v4355 = vunpack.c.l.b16 %v1708
  %v4356 = vunpack.c.l.b16 %v1722
  %v4357 = vunpack.c.l.b16 %v1732
  %v4358 = vunpack.c.l.b16 %v1746
  %v4359 = vunpack.c.l.b16 %v1756
  %v4360 = vunpack.c.l.b16 %v1770
  %v4361 = vunpack.c.l.b16 %v1780
  %v4362 = vunpack.c.l.b16 %v1794
  %v4363 = vunpack.c.l.b16 %v1804
  %v4364 = vunpack.c.l.b16 %v1818
  %v4365 = vunpack.c.l.b16 %v1828
  %v4366 = vunpack.c.l.b16 %v1842
  %v4367 = vunpack.c.l.b16 %v1852
  %v4368 = vunpack.c.l.b16 %v1866
  %v4369 = vunpack.c.l.b16 %v1876
  %v4370 = vunpack.c.l.b16 %v1890
  %v4371 = vunpack.c.l.b16 %v1900
  %v4372 = vunpack.c.l.b16 %v1914
  %v4373 = vunpack.c.l.b16 %v1924
  %v4374 = vunpack.c.l.b16 %v1938
  %v4375 = vunpack.c.l.b16 %v1948
  %v4376 = vunpack.c.l.b16 %v1962
  %v4377 = vunpack.c.l.b16 %v1972
  %v4378 = vunpack.c.l.b16 %v1986
  %v4379 = vunpack.c.l.b16 %v1996
  %v4380 = vunpack.c.l.b16 %v2010
  %v4381 = vunpack.c.l.b16 %v2020
  %v4382 = vunpack.c.l.b16 %v2034
  %v4383 = vunpack.c.l.b16 %v2044
  %v4384 = vunpack.c.l.b16 %v2058
  %v4385 = vunpack.c.l.b16 %v2068
  %v4386 = vunpack.c.l.b16 %v2082
  %v4387 = vunpack.c.l.b16 %v2092
  %v4388 = vunpack.c.l.b16 %v2106
  %v4389 = vunpack.c.l.b16 %v2116
  %v4390 = vpack.c.b16 %v4327, %v4326
  %v4391 = vpack.c.b16 %v4329, %v4328
  %v4392 = vpack.c.b16 %v4331, %v4330
  %v4393 = vpack.c.b16 %v4333, %v4332
  %v4394 = vpack.c.b16 %v4335, %v4334
  %v4395 = vpack.c.b16 %v4337, %v4336
  %v4396 = vpack.c.b16 %v4339, %v4338
  %v4397 = vpack.c.b16 %v4341, %v4340
  %v4398 = vpack.c.b16 %v4343, %v4342
  %v4399 = vpack.c.b16 %v4345, %v4344
  %v4400 = vpack.c.b16 %v4347, %v4346
  %v4401 = vpack.c.b16 %v4349, %v4348
  %v4402 = vpack.c.b16 %v4351, %v4350
  %v4403 = vpack.c.b16 %v4353, %v4352
  %v4404 = vpack.c.b16 %v4355, %v4354
  %v4405 = vpack.c.b16 %v4357, %v4356
  %v4406 = vpack.c.b16 %v4359, %v4358
  %v4407 = vpack.c.b16 %v4361, %v4360
  %v4408 = vpack.c.b16 %v4363, %v4362
  %v4409 = vpack.c.b16 %v4365, %v4364
  %v4410 = vpack.c.b16 %v4367, %v4366
  %v4411 = vpack.c.b16 %v4369, %v4368
  %v4412 = vpack.c.b16 %v4371, %v4370
  %v4413 = vpack.c.b16 %v4373, %v4372
  %v4414 = vpack.c.b16 %v4375, %v4374
  %v4415 = vpack.c.b16 %v4377, %v4376
  %v4416 = vpack.c.b16 %v4379, %v4378
  %v4417 = vpack.c.b16 %v4381, %v4380
  %v4418 = vpack.c.b16 %v4383, %v4382
  %v4419 = vpack.c.b16 %v4385, %v4384
  %v4420 = vpack.c.b16 %v4387, %v4386
  %v4421 = vpack.c.b16 %v4389, %v4388
  %v4422 = vunpack.c.l.b16 %v2248
  %v4423 = vunpack.c.l.b16 %v2251
  %v4424 = vunpack.c.l.b16 %v2255
  %v4425 = vunpack.c.l.b16 %v2258
  %v4426 = vunpack.c.l.b16 %v2262
  %v4427 = vunpack.c.l.b16 %v2265
  %v4428 = vunpack.c.l.b16 %v2269
  %v4429 = vunpack.c.l.b16 %v2272
  %v4430 = vunpack.c.l.b16 %v2276
  %v4431 = vunpack.c.l.b16 %v2279
  %v4432 = vunpack.c.l.b16 %v2283
  %v4433 = vunpack.c.l.b16 %v2286
  %v4434 = vunpack.c.l.b16 %v2290
  %v4435 = vunpack.c.l.b16 %v2293
  %v4436 = vunpack.c.l.b16 %v2297
  %v4437 = vunpack.c.l.b16 %v2300
  %v4438 = vunpack.c.l.b16 %v2304
  %v4439 = vunpack.c.l.b16 %v2307
  %v4440 = vunpack.c.l.b16 %v2311
  %v4441 = vunpack.c.l.b16 %v2314
  %v4442 = vunpack.c.l.b16 %v2318
  %v4443 = vunpack.c.l.b16 %v2321
  %v4444 = vunpack.c.l.b16 %v2325
  %v4445 = vunpack.c.l.b16 %v2328
  %v4446 = vunpack.c.l.b16 %v2332
  %v4447 = vunpack.c.l.b16 %v2335
  %v4448 = vunpack.c.l.b16 %v2339
  %v4449 = vunpack.c.l.b16 %v2342
  %v4450 = vunpack.c.l.b16 %v2346
  %v4451 = vunpack.c.l.b16 %v2349
  %v4452 = vunpack.c.l.b16 %v2353
  %v4453 = vunpack.c.l.b16 %v2356
  %v4454 = vunpack.c.l.b16 %v2360
  %v4455 = vunpack.c.l.b16 %v2363
  %v4456 = vunpack.c.l.b16 %v2367
  %v4457 = vunpack.c.l.b16 %v2370
  %v4458 = vunpack.c.l.b16 %v2374
  %v4459 = vunpack.c.l.b16 %v2377
  %v4460 = vunpack.c.l.b16 %v2381
  %v4461 = vunpack.c.l.b16 %v2384
  %v4462 = vunpack.c.l.b16 %v2388
  %v4463 = vunpack.c.l.b16 %v2391
  %v4464 = vunpack.c.l.b16 %v2395
  %v4465 = vunpack.c.l.b16 %v2398
  %v4466 = vunpack.c.l.b16 %v2402
  %v4467 = vunpack.c.l.b16 %v2405
  %v4468 = vunpack.c.l.b16 %v2409
  %v4469 = vunpack.c.l.b16 %v2412
  %v4470 = vunpack.c.l.b16 %v2416
  %v4471 = vunpack.c.l.b16 %v2419
  %v4472 = vunpack.c.l.b16 %v2423
  %v4473 = vunpack.c.l.b16 %v2426
  %v4474 = vunpack.c.l.b16 %v2430
  %v4475 = vunpack.c.l.b16 %v2433
  %v4476 = vunpack.c.l.b16 %v2437
  %v4477 = vunpack.c.l.b16 %v2440
  %v4478 = vunpack.c.l.b16 %v2444
  %v4479 = vunpack.c.l.b16 %v2447
  %v4480 = vunpack.c.l.b16 %v2451
  %v4481 = vunpack.c.l.b16 %v2454
  %v4482 = vunpack.c.l.b16 %v2458
  %v4483 = vunpack.c.l.b16 %v2461
  %v4484 = vunpack.c.l.b16 %v2465
  %v4485 = vunpack.c.l.b16 %v2468
  %v4486 = vpack.c.b16 %v4423, %v4422
  %v4487 = vpack.c.b16 %v4425, %v4424
  %v4488 = vpack.c.b16 %v4427, %v4426
  %v4489 = vpack.c.b16 %v4429, %v4428
  %v4490 = vpack.c.b16 %v4431, %v4430
  %v4491 = vpack.c.b16 %v4433, %v4432
  %v4492 = vpack.c.b16 %v4435, %v4434
  %v4493 = vpack.c.b16 %v4437, %v4436
  %v4494 = vpack.c.b16 %v4439, %v4438
  %v4495 = vpack.c.b16 %v4441, %v4440
  %v4496 = vpack.c.b16 %v4443, %v4442
  %v4497 = vpack.c.b16 %v4445, %v4444
  %v4498 = vpack.c.b16 %v4447, %v4446
  %v4499 = vpack.c.b16 %v4449, %v4448
  %v4500 = vpack.c.b16 %v4451, %v4450
  %v4501 = vpack.c.b16 %v4453, %v4452
  %v4502 = vpack.c.b16 %v4455, %v4454
  %v4503 = vpack.c.b16 %v4457, %v4456
  %v4504 = vpack.c.b16 %v4459, %v4458
  %v4505 = vpack.c.b16 %v4461, %v4460
  %v4506 = vpack.c.b16 %v4463, %v4462
  %v4507 = vpack.c.b16 %v4465, %v4464
  %v4508 = vpack.c.b16 %v4467, %v4466
  %v4509 = vpack.c.b16 %v4469, %v4468
  %v4510 = vpack.c.b16 %v4471, %v4470
  %v4511 = vpack.c.b16 %v4473, %v4472
  %v4512 = vpack.c.b16 %v4475, %v4474
  %v4513 = vpack.c.b16 %v4477, %v4476
  %v4514 = vpack.c.b16 %v4479, %v4478
  %v4515 = vpack.c.b16 %v4481, %v4480
  %v4516 = vpack.c.b16 %v4483, %v4482
  %v4517 = vpack.c.b16 %v4485, %v4484
  %4518 = vrot.lane.b32.xlu0 %v4486, 32
  %v4519 = vpop.permute.xlu0 %4518
  %4520 = vrot.lane.b32.xlu0 %v4487, 32
  %v4521 = vpop.permute.xlu0 %4520
  %4522 = vrot.lane.b32.xlu0 %v4488, 32
  %v4523 = vpop.permute.xlu0 %4522
  %4524 = vrot.lane.b32.xlu0 %v4489, 32
  %v4525 = vpop.permute.xlu0 %4524
  %4526 = vrot.lane.b32.xlu0 %v4490, 32
  %v4527 = vpop.permute.xlu0 %4526
  %4528 = vrot.lane.b32.xlu0 %v4491, 32
  %v4529 = vpop.permute.xlu0 %4528
  %4530 = vrot.lane.b32.xlu0 %v4492, 32
  %v4531 = vpop.permute.xlu0 %4530
  %4532 = vrot.lane.b32.xlu0 %v4493, 32
  %v4533 = vpop.permute.xlu0 %4532
  %4534 = vrot.lane.b32.xlu0 %v4494, 32
  %v4535 = vpop.permute.xlu0 %4534
  %4536 = vrot.lane.b32.xlu0 %v4495, 32
  %v4537 = vpop.permute.xlu0 %4536
  %4538 = vrot.lane.b32.xlu0 %v4496, 32
  %v4539 = vpop.permute.xlu0 %4538
  %4540 = vrot.lane.b32.xlu0 %v4497, 32
  %v4541 = vpop.permute.xlu0 %4540
  %4542 = vrot.lane.b32.xlu0 %v4498, 32
  %v4543 = vpop.permute.xlu0 %4542
  %4544 = vrot.lane.b32.xlu0 %v4499, 32
  %v4545 = vpop.permute.xlu0 %4544
  %4546 = vrot.lane.b32.xlu0 %v4500, 32
  %v4547 = vpop.permute.xlu0 %4546
  %4548 = vrot.lane.b32.xlu0 %v4501, 32
  %v4549 = vpop.permute.xlu0 %4548
  %4550 = vrot.lane.b32.xlu0 %v4502, 32
  %v4551 = vpop.permute.xlu0 %4550
  %4552 = vrot.lane.b32.xlu0 %v4503, 32
  %v4553 = vpop.permute.xlu0 %4552
  %4554 = vrot.lane.b32.xlu0 %v4504, 32
  %v4555 = vpop.permute.xlu0 %4554
  %4556 = vrot.lane.b32.xlu0 %v4505, 32
  %v4557 = vpop.permute.xlu0 %4556
  %4558 = vrot.lane.b32.xlu0 %v4506, 32
  %v4559 = vpop.permute.xlu0 %4558
  %4560 = vrot.lane.b32.xlu0 %v4507, 32
  %v4561 = vpop.permute.xlu0 %4560
  %4562 = vrot.lane.b32.xlu0 %v4508, 32
  %v4563 = vpop.permute.xlu0 %4562
  %4564 = vrot.lane.b32.xlu0 %v4509, 32
  %v4565 = vpop.permute.xlu0 %4564
  %4566 = vrot.lane.b32.xlu0 %v4510, 32
  %v4567 = vpop.permute.xlu0 %4566
  %4568 = vrot.lane.b32.xlu0 %v4511, 32
  %v4569 = vpop.permute.xlu0 %4568
  %4570 = vrot.lane.b32.xlu0 %v4512, 32
  %v4571 = vpop.permute.xlu0 %4570
  %4572 = vrot.lane.b32.xlu0 %v4513, 32
  %v4573 = vpop.permute.xlu0 %4572
  %4574 = vrot.lane.b32.xlu0 %v4514, 32
  %v4575 = vpop.permute.xlu0 %4574
  %4576 = vrot.lane.b32.xlu0 %v4515, 32
  %v4577 = vpop.permute.xlu0 %4576
  %4578 = vrot.lane.b32.xlu0 %v4516, 32
  %v4579 = vpop.permute.xlu0 %4578
  %4580 = vrot.lane.b32.xlu0 %v4517, 32
  %v4581 = vpop.permute.xlu0 %4580
  %v4614 = vunpack.c.l.b16 %v2470
  %v4615 = vunpack.c.l.b16 %v2471
  %v4616 = vunpack.c.l.b16 %v2472
  %v4617 = vunpack.c.l.b16 %v2473
  %v4618 = vunpack.c.l.b16 %v2474
  %v4619 = vunpack.c.l.b16 %v2475
  %v4620 = vunpack.c.l.b16 %v2476
  %v4621 = vunpack.c.l.b16 %v2477
  %v4622 = vunpack.c.l.b16 %v2478
  %v4623 = vunpack.c.l.b16 %v2479
  %v4624 = vunpack.c.l.b16 %v2480
  %v4625 = vunpack.c.l.b16 %v2481
  %v4626 = vunpack.c.l.b16 %v2482
  %v4627 = vunpack.c.l.b16 %v2483
  %v4628 = vunpack.c.l.b16 %v2484
  %v4629 = vunpack.c.l.b16 %v2485
  %v4630 = vunpack.c.l.b16 %v2486
  %v4631 = vunpack.c.l.b16 %v2487
  %v4632 = vunpack.c.l.b16 %v2488
  %v4633 = vunpack.c.l.b16 %v2489
  %v4634 = vunpack.c.l.b16 %v2490
  %v4635 = vunpack.c.l.b16 %v2491
  %v4636 = vunpack.c.l.b16 %v2492
  %v4637 = vunpack.c.l.b16 %v2493
  %v4638 = vunpack.c.l.b16 %v2494
  %v4639 = vunpack.c.l.b16 %v2495
  %v4640 = vunpack.c.l.b16 %v2496
  %v4641 = vunpack.c.l.b16 %v2497
  %v4642 = vunpack.c.l.b16 %v2498
  %v4643 = vunpack.c.l.b16 %v2499
  %v4644 = vunpack.c.l.b16 %v2500
  %v4645 = vunpack.c.l.b16 %v2501
  %v4646 = vunpack.c.l.b16 %v2502
  %v4647 = vunpack.c.l.b16 %v2503
  %v4648 = vunpack.c.l.b16 %v2504
  %v4649 = vunpack.c.l.b16 %v2505
  %v4650 = vunpack.c.l.b16 %v2506
  %v4651 = vunpack.c.l.b16 %v2507
  %v4652 = vunpack.c.l.b16 %v2508
  %v4653 = vunpack.c.l.b16 %v2509
  %v4654 = vunpack.c.l.b16 %v2510
  %v4655 = vunpack.c.l.b16 %v2511
  %v4656 = vunpack.c.l.b16 %v2512
  %v4657 = vunpack.c.l.b16 %v2513
  %v4658 = vunpack.c.l.b16 %v2514
  %v4659 = vunpack.c.l.b16 %v2515
  %v4660 = vunpack.c.l.b16 %v2516
  %v4661 = vunpack.c.l.b16 %v2517
  %v4662 = vunpack.c.l.b16 %v2518
  %v4663 = vunpack.c.l.b16 %v2519
  %v4664 = vunpack.c.l.b16 %v2520
  %v4665 = vunpack.c.l.b16 %v2521
  %v4666 = vunpack.c.l.b16 %v2522
  %v4667 = vunpack.c.l.b16 %v2523
  %v4668 = vunpack.c.l.b16 %v2524
  %v4669 = vunpack.c.l.b16 %v2525
  %v4670 = vunpack.c.l.b16 %v2526
  %v4671 = vunpack.c.l.b16 %v2527
  %v4672 = vunpack.c.l.b16 %v2528
  %v4673 = vunpack.c.l.b16 %v2529
  %v4674 = vunpack.c.l.b16 %v2530
  %v4675 = vunpack.c.l.b16 %v2531
  %v4676 = vunpack.c.l.b16 %v2532
  %v4677 = vunpack.c.l.b16 %v2533
  %v4678 = vpack.c.b16 %v4615, %v4614
  %v4679 = vpack.c.b16 %v4617, %v4616
  %v4680 = vpack.c.b16 %v4619, %v4618
  %v4681 = vpack.c.b16 %v4621, %v4620
  %v4682 = vpack.c.b16 %v4623, %v4622
  %v4683 = vpack.c.b16 %v4625, %v4624
  %v4684 = vpack.c.b16 %v4627, %v4626
  %v4685 = vpack.c.b16 %v4629, %v4628
  %v4686 = vpack.c.b16 %v4631, %v4630
  %v4687 = vpack.c.b16 %v4633, %v4632
  %v4688 = vpack.c.b16 %v4635, %v4634
  %v4689 = vpack.c.b16 %v4637, %v4636
  %v4690 = vpack.c.b16 %v4639, %v4638
  %v4691 = vpack.c.b16 %v4641, %v4640
  %v4692 = vpack.c.b16 %v4643, %v4642
  %v4693 = vpack.c.b16 %v4645, %v4644
  %v4694 = vpack.c.b16 %v4647, %v4646
  %v4695 = vpack.c.b16 %v4649, %v4648
  %v4696 = vpack.c.b16 %v4651, %v4650
  %v4697 = vpack.c.b16 %v4653, %v4652
  %v4698 = vpack.c.b16 %v4655, %v4654
  %v4699 = vpack.c.b16 %v4657, %v4656
  %v4700 = vpack.c.b16 %v4659, %v4658
  %v4701 = vpack.c.b16 %v4661, %v4660
  %v4702 = vpack.c.b16 %v4663, %v4662
  %v4703 = vpack.c.b16 %v4665, %v4664
  %v4704 = vpack.c.b16 %v4667, %v4666
  %v4705 = vpack.c.b16 %v4669, %v4668
  %v4706 = vpack.c.b16 %v4671, %v4670
  %v4707 = vpack.c.b16 %v4673, %v4672
  %v4708 = vpack.c.b16 %v4675, %v4674
  %v4709 = vpack.c.b16 %v4677, %v4676
  %4710 = vrot.lane.b32.xlu0 %v4678, 64
  %v4711 = vpop.permute.xlu0 %4710
  %4712 = vrot.lane.b32.xlu0 %v4679, 64
  %v4713 = vpop.permute.xlu0 %4712
  %4714 = vrot.lane.b32.xlu0 %v4680, 64
  %v4715 = vpop.permute.xlu0 %4714
  %4716 = vrot.lane.b32.xlu0 %v4681, 64
  %v4717 = vpop.permute.xlu0 %4716
  %4718 = vrot.lane.b32.xlu0 %v4682, 64
  %v4719 = vpop.permute.xlu0 %4718
  %4720 = vrot.lane.b32.xlu0 %v4683, 64
  %v4721 = vpop.permute.xlu0 %4720
  %4722 = vrot.lane.b32.xlu0 %v4684, 64
  %v4723 = vpop.permute.xlu0 %4722
  %4724 = vrot.lane.b32.xlu0 %v4685, 64
  %v4725 = vpop.permute.xlu0 %4724
  %4726 = vrot.lane.b32.xlu0 %v4686, 64
  %v4727 = vpop.permute.xlu0 %4726
  %4728 = vrot.lane.b32.xlu0 %v4687, 64
  %v4729 = vpop.permute.xlu0 %4728
  %4730 = vrot.lane.b32.xlu0 %v4688, 64
  %v4731 = vpop.permute.xlu0 %4730
  %4732 = vrot.lane.b32.xlu0 %v4689, 64
  %v4733 = vpop.permute.xlu0 %4732
  %4734 = vrot.lane.b32.xlu0 %v4690, 64
  %v4735 = vpop.permute.xlu0 %4734
  %4736 = vrot.lane.b32.xlu0 %v4691, 64
  %v4737 = vpop.permute.xlu0 %4736
  %4738 = vrot.lane.b32.xlu0 %v4692, 64
  %v4739 = vpop.permute.xlu0 %4738
  %4740 = vrot.lane.b32.xlu0 %v4693, 64
  %v4741 = vpop.permute.xlu0 %4740
  %4742 = vrot.lane.b32.xlu0 %v4694, 64
  %v4743 = vpop.permute.xlu0 %4742
  %4744 = vrot.lane.b32.xlu0 %v4695, 64
  %v4745 = vpop.permute.xlu0 %4744
  %4746 = vrot.lane.b32.xlu0 %v4696, 64
  %v4747 = vpop.permute.xlu0 %4746
  %4748 = vrot.lane.b32.xlu0 %v4697, 64
  %v4749 = vpop.permute.xlu0 %4748
  %4750 = vrot.lane.b32.xlu0 %v4698, 64
  %v4751 = vpop.permute.xlu0 %4750
  %4752 = vrot.lane.b32.xlu0 %v4699, 64
  %v4753 = vpop.permute.xlu0 %4752
  %4754 = vrot.lane.b32.xlu0 %v4700, 64
  %v4755 = vpop.permute.xlu0 %4754
  %4756 = vrot.lane.b32.xlu0 %v4701, 64
  %v4757 = vpop.permute.xlu0 %4756
  %4758 = vrot.lane.b32.xlu0 %v4702, 64
  %v4759 = vpop.permute.xlu0 %4758
  %4760 = vrot.lane.b32.xlu0 %v4703, 64
  %v4761 = vpop.permute.xlu0 %4760
  %4762 = vrot.lane.b32.xlu0 %v4704, 64
  %v4763 = vpop.permute.xlu0 %4762
  %4764 = vrot.lane.b32.xlu0 %v4705, 64
  %v4765 = vpop.permute.xlu0 %4764
  %4766 = vrot.lane.b32.xlu0 %v4706, 64
  %v4767 = vpop.permute.xlu0 %4766
  %4768 = vrot.lane.b32.xlu0 %v4707, 64
  %v4769 = vpop.permute.xlu0 %4768
  %4770 = vrot.lane.b32.xlu0 %v4708, 64
  %v4771 = vpop.permute.xlu0 %4770
  %4772 = vrot.lane.b32.xlu0 %v4709, 64
  %v4773 = vpop.permute.xlu0 %4772
  %v4774 = vunpack.c.l.b16 %v2579
  %v4775 = vunpack.c.l.b16 %v2589
  %v4776 = vunpack.c.l.b16 %v2603
  %v4777 = vunpack.c.l.b16 %v2613
  %v4778 = vunpack.c.l.b16 %v2627
  %v4779 = vunpack.c.l.b16 %v2637
  %v4780 = vunpack.c.l.b16 %v2651
  %v4781 = vunpack.c.l.b16 %v2661
  %v4782 = vunpack.c.l.b16 %v2675
  %v4783 = vunpack.c.l.b16 %v2685
  %v4784 = vunpack.c.l.b16 %v2699
  %v4785 = vunpack.c.l.b16 %v2709
  %v4786 = vunpack.c.l.b16 %v2723
  %v4787 = vunpack.c.l.b16 %v2733
  %v4788 = vunpack.c.l.b16 %v2747
  %v4789 = vunpack.c.l.b16 %v2757
  %v4790 = vunpack.c.l.b16 %v2771
  %v4791 = vunpack.c.l.b16 %v2781
  %v4792 = vunpack.c.l.b16 %v2795
  %v4793 = vunpack.c.l.b16 %v2805
  %v4794 = vunpack.c.l.b16 %v2819
  %v4795 = vunpack.c.l.b16 %v2829
  %v4796 = vunpack.c.l.b16 %v2843
  %v4797 = vunpack.c.l.b16 %v2853
  %v4798 = vunpack.c.l.b16 %v2867
  %v4799 = vunpack.c.l.b16 %v2877
  %v4800 = vunpack.c.l.b16 %v2891
  %v4801 = vunpack.c.l.b16 %v2901
  %v4802 = vunpack.c.l.b16 %v2915
  %v4803 = vunpack.c.l.b16 %v2925
  %v4804 = vunpack.c.l.b16 %v2939
  %v4805 = vunpack.c.l.b16 %v2949
  %v4806 = vunpack.c.l.b16 %v2963
  %v4807 = vunpack.c.l.b16 %v2973
  %v4808 = vunpack.c.l.b16 %v2987
  %v4809 = vunpack.c.l.b16 %v2997
  %v4810 = vunpack.c.l.b16 %v3011
  %v4811 = vunpack.c.l.b16 %v3021
  %v4812 = vunpack.c.l.b16 %v3035
  %v4813 = vunpack.c.l.b16 %v3045
  %v4814 = vunpack.c.l.b16 %v3059
  %v4815 = vunpack.c.l.b16 %v3069
  %v4816 = vunpack.c.l.b16 %v3083
  %v4817 = vunpack.c.l.b16 %v3093
  %v4818 = vunpack.c.l.b16 %v3107
  %v4819 = vunpack.c.l.b16 %v3117
  %v4820 = vunpack.c.l.b16 %v3131
  %v4821 = vunpack.c.l.b16 %v3141
  %v4822 = vunpack.c.l.b16 %v3155
  %v4823 = vunpack.c.l.b16 %v3165
  %v4824 = vunpack.c.l.b16 %v3179
  %v4825 = vunpack.c.l.b16 %v3189
  %v4826 = vunpack.c.l.b16 %v3203
  %v4827 = vunpack.c.l.b16 %v3213
  %v4828 = vunpack.c.l.b16 %v3227
  %v4829 = vunpack.c.l.b16 %v3237
  %v4830 = vunpack.c.l.b16 %v3251
  %v4831 = vunpack.c.l.b16 %v3261
  %v4832 = vunpack.c.l.b16 %v3275
  %v4833 = vunpack.c.l.b16 %v3285
  %v4834 = vunpack.c.l.b16 %v3299
  %v4835 = vunpack.c.l.b16 %v3309
  %v4836 = vunpack.c.l.b16 %v3323
  %v4837 = vunpack.c.l.b16 %v3333
  %v4838 = vpack.c.b16 %v4775, %v4774
  %v4839 = vpack.c.b16 %v4777, %v4776
  %v4840 = vpack.c.b16 %v4779, %v4778
  %v4841 = vpack.c.b16 %v4781, %v4780
  %v4842 = vpack.c.b16 %v4783, %v4782
  %v4843 = vpack.c.b16 %v4785, %v4784
  %v4844 = vpack.c.b16 %v4787, %v4786
  %v4845 = vpack.c.b16 %v4789, %v4788
  %v4846 = vpack.c.b16 %v4791, %v4790
  %v4847 = vpack.c.b16 %v4793, %v4792
  %v4848 = vpack.c.b16 %v4795, %v4794
  %v4849 = vpack.c.b16 %v4797, %v4796
  %v4850 = vpack.c.b16 %v4799, %v4798
  %v4851 = vpack.c.b16 %v4801, %v4800
  %v4852 = vpack.c.b16 %v4803, %v4802
  %v4853 = vpack.c.b16 %v4805, %v4804
  %v4854 = vpack.c.b16 %v4807, %v4806
  %v4855 = vpack.c.b16 %v4809, %v4808
  %v4856 = vpack.c.b16 %v4811, %v4810
  %v4857 = vpack.c.b16 %v4813, %v4812
  %v4858 = vpack.c.b16 %v4815, %v4814
  %v4859 = vpack.c.b16 %v4817, %v4816
  %v4860 = vpack.c.b16 %v4819, %v4818
  %v4861 = vpack.c.b16 %v4821, %v4820
  %v4862 = vpack.c.b16 %v4823, %v4822
  %v4863 = vpack.c.b16 %v4825, %v4824
  %v4864 = vpack.c.b16 %v4827, %v4826
  %v4865 = vpack.c.b16 %v4829, %v4828
  %v4866 = vpack.c.b16 %v4831, %v4830
  %v4867 = vpack.c.b16 %v4833, %v4832
  %v4868 = vpack.c.b16 %v4835, %v4834
  %v4869 = vpack.c.b16 %v4837, %v4836
  %4870 = vrot.lane.b32.xlu0 %v4838, 96
  %v4871 = vpop.permute.xlu0 %4870
  %4872 = vrot.lane.b32.xlu0 %v4839, 96
  %v4873 = vpop.permute.xlu0 %4872
  %4874 = vrot.lane.b32.xlu0 %v4840, 96
  %v4875 = vpop.permute.xlu0 %4874
  %4876 = vrot.lane.b32.xlu0 %v4841, 96
  %v4877 = vpop.permute.xlu0 %4876
  %4878 = vrot.lane.b32.xlu0 %v4842, 96
  %v4879 = vpop.permute.xlu0 %4878
  %4880 = vrot.lane.b32.xlu0 %v4843, 96
  %v4881 = vpop.permute.xlu0 %4880
  %4882 = vrot.lane.b32.xlu0 %v4844, 96
  %v4883 = vpop.permute.xlu0 %4882
  %4884 = vrot.lane.b32.xlu0 %v4845, 96
  %v4885 = vpop.permute.xlu0 %4884
  %4886 = vrot.lane.b32.xlu0 %v4846, 96
  %v4887 = vpop.permute.xlu0 %4886
  %4888 = vrot.lane.b32.xlu0 %v4847, 96
  %v4889 = vpop.permute.xlu0 %4888
  %4890 = vrot.lane.b32.xlu0 %v4848, 96
  %v4891 = vpop.permute.xlu0 %4890
  %4892 = vrot.lane.b32.xlu0 %v4849, 96
  %v4893 = vpop.permute.xlu0 %4892
  %4894 = vrot.lane.b32.xlu0 %v4850, 96
  %v4895 = vpop.permute.xlu0 %4894
  %4896 = vrot.lane.b32.xlu0 %v4851, 96
  %v4897 = vpop.permute.xlu0 %4896
  %4898 = vrot.lane.b32.xlu0 %v4852, 96
  %v4899 = vpop.permute.xlu0 %4898
  %4900 = vrot.lane.b32.xlu0 %v4853, 96
  %v4901 = vpop.permute.xlu0 %4900
  %4902 = vrot.lane.b32.xlu0 %v4854, 96
  %v4903 = vpop.permute.xlu0 %4902
  %4904 = vrot.lane.b32.xlu0 %v4855, 96
  %v4905 = vpop.permute.xlu0 %4904
  %4906 = vrot.lane.b32.xlu0 %v4856, 96
  %v4907 = vpop.permute.xlu0 %4906
  %4908 = vrot.lane.b32.xlu0 %v4857, 96
  %v4909 = vpop.permute.xlu0 %4908
  %4910 = vrot.lane.b32.xlu0 %v4858, 96
  %v4911 = vpop.permute.xlu0 %4910
  %4912 = vrot.lane.b32.xlu0 %v4859, 96
  %v4913 = vpop.permute.xlu0 %4912
  %4914 = vrot.lane.b32.xlu0 %v4860, 96
  %v4915 = vpop.permute.xlu0 %4914
  %4916 = vrot.lane.b32.xlu0 %v4861, 96
  %v4917 = vpop.permute.xlu0 %4916
  %4918 = vrot.lane.b32.xlu0 %v4862, 96
  %v4919 = vpop.permute.xlu0 %4918
  %4920 = vrot.lane.b32.xlu0 %v4863, 96
  %v4921 = vpop.permute.xlu0 %4920
  %4922 = vrot.lane.b32.xlu0 %v4864, 96
  %v4923 = vpop.permute.xlu0 %4922
  %4924 = vrot.lane.b32.xlu0 %v4865, 96
  %v4925 = vpop.permute.xlu0 %4924
  %4926 = vrot.lane.b32.xlu0 %v4866, 96
  %v4927 = vpop.permute.xlu0 %4926
  %4928 = vrot.lane.b32.xlu0 %v4867, 96
  %v4929 = vpop.permute.xlu0 %4928
  %4930 = vrot.lane.b32.xlu0 %v4868, 96
  %v4931 = vpop.permute.xlu0 %4930
  %4932 = vrot.lane.b32.xlu0 %v4869, 96
  %v4933 = vpop.permute.xlu0 %4932
  %v4934 = vunpack.c.l.b16 %v3465
  %v4935 = vunpack.c.l.b16 %v3468
  %v4936 = vunpack.c.l.b16 %v3472
  %v4937 = vunpack.c.l.b16 %v3475
  %v4938 = vunpack.c.l.b16 %v3479
  %v4939 = vunpack.c.l.b16 %v3482
  %v4940 = vunpack.c.l.b16 %v3486
  %v4941 = vunpack.c.l.b16 %v3489
  %v4942 = vunpack.c.l.b16 %v3493
  %v4943 = vunpack.c.l.b16 %v3496
  %v4944 = vunpack.c.l.b16 %v3500
  %v4945 = vunpack.c.l.b16 %v3503
  %v4946 = vunpack.c.l.b16 %v3507
  %v4947 = vunpack.c.l.b16 %v3510
  %v4948 = vunpack.c.l.b16 %v3514
  %v4949 = vunpack.c.l.b16 %v3517
  %v4950 = vunpack.c.l.b16 %v3521
  %v4951 = vunpack.c.l.b16 %v3524
  %v4952 = vunpack.c.l.b16 %v3528
  %v4953 = vunpack.c.l.b16 %v3531
  %v4954 = vunpack.c.l.b16 %v3535
  %v4955 = vunpack.c.l.b16 %v3538
  %v4956 = vunpack.c.l.b16 %v3542
  %v4957 = vunpack.c.l.b16 %v3545
  %v4958 = vunpack.c.l.b16 %v3549
  %v4959 = vunpack.c.l.b16 %v3552
  %v4960 = vunpack.c.l.b16 %v3556
  %v4961 = vunpack.c.l.b16 %v3559
  %v4962 = vunpack.c.l.b16 %v3563
  %v4963 = vunpack.c.l.b16 %v3566
  %v4964 = vunpack.c.l.b16 %v3570
  %v4965 = vunpack.c.l.b16 %v3573
  %v4966 = vunpack.c.l.b16 %v3577
  %v4967 = vunpack.c.l.b16 %v3580
  %v4968 = vunpack.c.l.b16 %v3584
  %v4969 = vunpack.c.l.b16 %v3587
  %v4970 = vunpack.c.l.b16 %v3591
  %v4971 = vunpack.c.l.b16 %v3594
  %v4972 = vunpack.c.l.b16 %v3598
  %v4973 = vunpack.c.l.b16 %v3601
  %v4974 = vunpack.c.l.b16 %v3605
  %v4975 = vunpack.c.l.b16 %v3608
  %v4976 = vunpack.c.l.b16 %v3612
  %v4977 = vunpack.c.l.b16 %v3615
  %v4978 = vunpack.c.l.b16 %v3619
  %v4979 = vunpack.c.l.b16 %v3622
  %v4980 = vunpack.c.l.b16 %v3626
  %v4981 = vunpack.c.l.b16 %v3629
  %v4982 = vunpack.c.l.b16 %v3633
  %v4983 = vunpack.c.l.b16 %v3636
  %v4984 = vunpack.c.l.b16 %v3640
  %v4985 = vunpack.c.l.b16 %v3643
  %v4986 = vunpack.c.l.b16 %v3647
  %v4987 = vunpack.c.l.b16 %v3650
  %v4988 = vunpack.c.l.b16 %v3654
  %v4989 = vunpack.c.l.b16 %v3657
  %v4990 = vunpack.c.l.b16 %v3661
  %v4991 = vunpack.c.l.b16 %v3664
  %v4992 = vunpack.c.l.b16 %v3668
  %v4993 = vunpack.c.l.b16 %v3671
  %v4994 = vunpack.c.l.b16 %v3675
  %v4995 = vunpack.c.l.b16 %v3678
  %v4996 = vunpack.c.l.b16 %v3682
  %v4997 = vunpack.c.l.b16 %v3685
  %v4998 = vpack.c.b16 %v4935, %v4934
  %v4999 = vpack.c.b16 %v4937, %v4936
  %v5000 = vpack.c.b16 %v4939, %v4938
  %v5001 = vpack.c.b16 %v4941, %v4940
  %v5002 = vpack.c.b16 %v4943, %v4942
  %v5003 = vpack.c.b16 %v4945, %v4944
  %v5004 = vpack.c.b16 %v4947, %v4946
  %v5005 = vpack.c.b16 %v4949, %v4948
  %v5006 = vpack.c.b16 %v4951, %v4950
  %v5007 = vpack.c.b16 %v4953, %v4952
  %v5008 = vpack.c.b16 %v4955, %v4954
  %v5009 = vpack.c.b16 %v4957, %v4956
  %v5010 = vpack.c.b16 %v4959, %v4958
  %v5011 = vpack.c.b16 %v4961, %v4960
  %v5012 = vpack.c.b16 %v4963, %v4962
  %v5013 = vpack.c.b16 %v4965, %v4964
  %v5014 = vpack.c.b16 %v4967, %v4966
  %v5015 = vpack.c.b16 %v4969, %v4968
  %v5016 = vpack.c.b16 %v4971, %v4970
  %v5017 = vpack.c.b16 %v4973, %v4972
  %v5018 = vpack.c.b16 %v4975, %v4974
  %v5019 = vpack.c.b16 %v4977, %v4976
  %v5020 = vpack.c.b16 %v4979, %v4978
  %v5021 = vpack.c.b16 %v4981, %v4980
  %v5022 = vpack.c.b16 %v4983, %v4982
  %v5023 = vpack.c.b16 %v4985, %v4984
  %v5024 = vpack.c.b16 %v4987, %v4986
  %v5025 = vpack.c.b16 %v4989, %v4988
  %v5026 = vpack.c.b16 %v4991, %v4990
  %v5027 = vpack.c.b16 %v4993, %v4992
  %v5028 = vpack.c.b16 %v4995, %v4994
  %v5029 = vpack.c.b16 %v4997, %v4996
  %vm5030 = vcmask 261120
  %v5033 = vsel %vm5030, %v3782, %v3911
  %v5036 = vsel %vm5030, %v3783, %v3913
  %v5039 = vsel %vm5030, %v3784, %v3915
  %v5042 = vsel %vm5030, %v3785, %v3917
  %v5045 = vsel %vm5030, %v3786, %v3919
  %v5048 = vsel %vm5030, %v3787, %v3921
  %v5051 = vsel %vm5030, %v3788, %v3923
  %v5054 = vsel %vm5030, %v3789, %v3925
  %v5057 = vsel %vm5030, %v3790, %v3927
  %v5060 = vsel %vm5030, %v3791, %v3929
  %v5063 = vsel %vm5030, %v3792, %v3931
  %v5066 = vsel %vm5030, %v3793, %v3933
  %v5069 = vsel %vm5030, %v3794, %v3935
  %v5072 = vsel %vm5030, %v3795, %v3937
  %v5075 = vsel %vm5030, %v3796, %v3939
  %v5078 = vsel %vm5030, %v3797, %v3941
  %v5081 = vsel %vm5030, %v3798, %v3943
  %v5084 = vsel %vm5030, %v3799, %v3945
  %v5087 = vsel %vm5030, %v3800, %v3947
  %v5090 = vsel %vm5030, %v3801, %v3949
  %v5093 = vsel %vm5030, %v3802, %v3951
  %v5096 = vsel %vm5030, %v3803, %v3953
  %v5099 = vsel %vm5030, %v3804, %v3955
  %v5102 = vsel %vm5030, %v3805, %v3957
  %v5105 = vsel %vm5030, %v3806, %v3959
  %v5108 = vsel %vm5030, %v3807, %v3961
  %v5111 = vsel %vm5030, %v3808, %v3963
  %v5114 = vsel %vm5030, %v3809, %v3965
  %v5117 = vsel %vm5030, %v3810, %v3967
  %v5120 = vsel %vm5030, %v3811, %v3969
  %v5123 = vsel %vm5030, %v3812, %v3971
  %v5126 = vsel %vm5030, %v3813, %v3973
  %vm5127 = vcmask 523264
  %v5129 = vsel %vm5127, %v5033, %v4071
  %v5131 = vsel %vm5127, %v5036, %v4073
  %v5133 = vsel %vm5127, %v5039, %v4075
  %v5135 = vsel %vm5127, %v5042, %v4077
  %v5137 = vsel %vm5127, %v5045, %v4079
  %v5139 = vsel %vm5127, %v5048, %v4081
  %v5141 = vsel %vm5127, %v5051, %v4083
  %v5143 = vsel %vm5127, %v5054, %v4085
  %v5145 = vsel %vm5127, %v5057, %v4087
  %v5147 = vsel %vm5127, %v5060, %v4089
  %v5149 = vsel %vm5127, %v5063, %v4091
  %v5151 = vsel %vm5127, %v5066, %v4093
  %v5153 = vsel %vm5127, %v5069, %v4095
  %v5155 = vsel %vm5127, %v5072, %v4097
  %v5157 = vsel %vm5127, %v5075, %v4099
  %v5159 = vsel %vm5127, %v5078, %v4101
  %v5161 = vsel %vm5127, %v5081, %v4103
  %v5163 = vsel %vm5127, %v5084, %v4105
  %v5165 = vsel %vm5127, %v5087, %v4107
  %v5167 = vsel %vm5127, %v5090, %v4109
  %v5169 = vsel %vm5127, %v5093, %v4111
  %v5171 = vsel %vm5127, %v5096, %v4113
  %v5173 = vsel %vm5127, %v5099, %v4115
  %v5175 = vsel %vm5127, %v5102, %v4117
  %v5177 = vsel %vm5127, %v5105, %v4119
  %v5179 = vsel %vm5127, %v5108, %v4121
  %v5181 = vsel %vm5127, %v5111, %v4123
  %v5183 = vsel %vm5127, %v5114, %v4125
  %v5185 = vsel %vm5127, %v5117, %v4127
  %v5187 = vsel %vm5127, %v5120, %v4129
  %v5189 = vsel %vm5127, %v5123, %v4131
  %v5191 = vsel %vm5127, %v5126, %v4133
  %vm5192 = vcmask 785408
  %v5194 = vsel %vm5192, %v5129, %v4263
  %v5197 = vsel %vm5192, %v5131, %v4265
  %v5200 = vsel %vm5192, %v5133, %v4267
  %v5203 = vsel %vm5192, %v5135, %v4269
  %v5206 = vsel %vm5192, %v5137, %v4271
  %v5209 = vsel %vm5192, %v5139, %v4273
  %v5212 = vsel %vm5192, %v5141, %v4275
  %v5215 = vsel %vm5192, %v5143, %v4277
  %v5218 = vsel %vm5192, %v5145, %v4279
  %v5221 = vsel %vm5192, %v5147, %v4281
  %v5224 = vsel %vm5192, %v5149, %v4283
  %v5227 = vsel %vm5192, %v5151, %v4285
  %v5230 = vsel %vm5192, %v5153, %v4287
  %v5233 = vsel %vm5192, %v5155, %v4289
  %v5236 = vsel %vm5192, %v5157, %v4291
  %v5239 = vsel %vm5192, %v5159, %v4293
  %v5242 = vsel %vm5192, %v5161, %v4295
  %v5245 = vsel %vm5192, %v5163, %v4297
  %v5248 = vsel %vm5192, %v5165, %v4299
  %v5251 = vsel %vm5192, %v5167, %v4301
  %v5254 = vsel %vm5192, %v5169, %v4303
  %v5257 = vsel %vm5192, %v5171, %v4305
  %v5260 = vsel %vm5192, %v5173, %v4307
  %v5263 = vsel %vm5192, %v5175, %v4309
  %v5266 = vsel %vm5192, %v5177, %v4311
  %v5269 = vsel %vm5192, %v5179, %v4313
  %v5272 = vsel %vm5192, %v5181, %v4315
  %v5275 = vsel %vm5192, %v5183, %v4317
  %v5278 = vsel %vm5192, %v5185, %v4319
  %v5281 = vsel %vm5192, %v5187, %v4321
  %v5284 = vsel %vm5192, %v5189, %v4323
  %v5287 = vsel %vm5192, %v5191, %v4325
  %v5291 = vsel %vm5030, %v4390, %v4519
  %v5294 = vsel %vm5030, %v4391, %v4521
  %v5297 = vsel %vm5030, %v4392, %v4523
  %v5300 = vsel %vm5030, %v4393, %v4525
  %v5303 = vsel %vm5030, %v4394, %v4527
  %v5306 = vsel %vm5030, %v4395, %v4529
  %v5309 = vsel %vm5030, %v4396, %v4531
  %v5312 = vsel %vm5030, %v4397, %v4533
  %v5315 = vsel %vm5030, %v4398, %v4535
  %v5318 = vsel %vm5030, %v4399, %v4537
  %v5321 = vsel %vm5030, %v4400, %v4539
  %v5324 = vsel %vm5030, %v4401, %v4541
  %v5327 = vsel %vm5030, %v4402, %v4543
  %v5330 = vsel %vm5030, %v4403, %v4545
  %v5333 = vsel %vm5030, %v4404, %v4547
  %v5336 = vsel %vm5030, %v4405, %v4549
  %v5339 = vsel %vm5030, %v4406, %v4551
  %v5342 = vsel %vm5030, %v4407, %v4553
  %v5345 = vsel %vm5030, %v4408, %v4555
  %v5348 = vsel %vm5030, %v4409, %v4557
  %v5351 = vsel %vm5030, %v4410, %v4559
  %v5354 = vsel %vm5030, %v4411, %v4561
  %v5357 = vsel %vm5030, %v4412, %v4563
  %v5360 = vsel %vm5030, %v4413, %v4565
  %v5363 = vsel %vm5030, %v4414, %v4567
  %v5366 = vsel %vm5030, %v4415, %v4569
  %v5369 = vsel %vm5030, %v4416, %v4571
  %v5372 = vsel %vm5030, %v4417, %v4573
  %v5375 = vsel %vm5030, %v4418, %v4575
  %v5378 = vsel %vm5030, %v4419, %v4577
  %v5381 = vsel %vm5030, %v4420, %v4579
  %v5384 = vsel %vm5030, %v4421, %v4581
  %v5386 = vsel %vm5127, %v5291, %v4711
  %v5388 = vsel %vm5127, %v5294, %v4713
  %v5390 = vsel %vm5127, %v5297, %v4715
  %v5392 = vsel %vm5127, %v5300, %v4717
  %v5394 = vsel %vm5127, %v5303, %v4719
  %v5396 = vsel %vm5127, %v5306, %v4721
  %v5398 = vsel %vm5127, %v5309, %v4723
  %v5400 = vsel %vm5127, %v5312, %v4725
  %v5402 = vsel %vm5127, %v5315, %v4727
  %v5404 = vsel %vm5127, %v5318, %v4729
  %v5406 = vsel %vm5127, %v5321, %v4731
  %v5408 = vsel %vm5127, %v5324, %v4733
  %v5410 = vsel %vm5127, %v5327, %v4735
  %v5412 = vsel %vm5127, %v5330, %v4737
  %v5414 = vsel %vm5127, %v5333, %v4739
  %v5416 = vsel %vm5127, %v5336, %v4741
  %v5418 = vsel %vm5127, %v5339, %v4743
  %v5420 = vsel %vm5127, %v5342, %v4745
  %v5422 = vsel %vm5127, %v5345, %v4747
  %v5424 = vsel %vm5127, %v5348, %v4749
  %v5426 = vsel %vm5127, %v5351, %v4751
  %v5428 = vsel %vm5127, %v5354, %v4753
  %v5430 = vsel %vm5127, %v5357, %v4755
  %v5432 = vsel %vm5127, %v5360, %v4757
  %v5434 = vsel %vm5127, %v5363, %v4759
  %v5436 = vsel %vm5127, %v5366, %v4761
  %v5438 = vsel %vm5127, %v5369, %v4763
  %v5440 = vsel %vm5127, %v5372, %v4765
  %v5442 = vsel %vm5127, %v5375, %v4767
  %v5444 = vsel %vm5127, %v5378, %v4769
  %v5446 = vsel %vm5127, %v5381, %v4771
  %v5448 = vsel %vm5127, %v5384, %v4773
  %v5450 = vsel %vm5192, %v5386, %v4871
  %v5453 = vsel %vm5192, %v5388, %v4873
  %v5456 = vsel %vm5192, %v5390, %v4875
  %v5459 = vsel %vm5192, %v5392, %v4877
  %v5462 = vsel %vm5192, %v5394, %v4879
  %v5465 = vsel %vm5192, %v5396, %v4881
  %v5468 = vsel %vm5192, %v5398, %v4883
  %v5471 = vsel %vm5192, %v5400, %v4885
  %v5474 = vsel %vm5192, %v5402, %v4887
  %v5477 = vsel %vm5192, %v5404, %v4889
  %v5480 = vsel %vm5192, %v5406, %v4891
  %v5483 = vsel %vm5192, %v5408, %v4893
  %v5486 = vsel %vm5192, %v5410, %v4895
  %v5489 = vsel %vm5192, %v5412, %v4897
  %v5492 = vsel %vm5192, %v5414, %v4899
  %v5495 = vsel %vm5192, %v5416, %v4901
  %v5498 = vsel %vm5192, %v5418, %v4903
  %v5501 = vsel %vm5192, %v5420, %v4905
  %v5504 = vsel %vm5192, %v5422, %v4907
  %v5507 = vsel %vm5192, %v5424, %v4909
  %v5510 = vsel %vm5192, %v5426, %v4911
  %v5513 = vsel %vm5192, %v5428, %v4913
  %v5516 = vsel %vm5192, %v5430, %v4915
  %v5519 = vsel %vm5192, %v5432, %v4917
  %v5522 = vsel %vm5192, %v5434, %v4919
  %v5525 = vsel %vm5192, %v5436, %v4921
  %v5528 = vsel %vm5192, %v5438, %v4923
  %v5531 = vsel %vm5192, %v5440, %v4925
  %v5534 = vsel %vm5192, %v5442, %v4927
  %v5537 = vsel %vm5192, %v5444, %v4929
  %v5540 = vsel %vm5192, %v5446, %v4931
  %v5543 = vsel %vm5192, %v5448, %v4933
  %v5545 = vld [vmem:[%s2] sm:$0xf]
  %v5546 = vld [vmem:[%s2 + $0x4] sm:$0xf]
  %v5547 = vld [vmem:[%s2 + $0x8] sm:$0xf]
  %v5548 = vld [vmem:[%s2 + $0xc] sm:$0xf]
  %v5549 = vld [vmem:[%s2 + $0x10] sm:$0xf]
  %v5550 = vld [vmem:[%s2 + $0x14] sm:$0xf]
  %v5551 = vld [vmem:[%s2 + $0x18] sm:$0xf]
  %v5552 = vld [vmem:[%s2 + $0x1c] sm:$0xf]
  %v5553 = vld [vmem:[%s2 + $0x20] sm:$0xf]
  %v5554 = vld [vmem:[%s2 + $0x24] sm:$0xf]
  %v5555 = vld [vmem:[%s2 + $0x28] sm:$0xf]
  %v5556 = vld [vmem:[%s2 + $0x2c] sm:$0xf]
  %v5557 = vld [vmem:[%s2 + $0x30] sm:$0xf]
  %v5558 = vld [vmem:[%s2 + $0x34] sm:$0xf]
  %v5559 = vld [vmem:[%s2 + $0x38] sm:$0xf]
  %v5560 = vld [vmem:[%s2 + $0x3c] sm:$0xf]
  %v5561 = vld [vmem:[%s2 + $0x40] sm:$0xf]
  %v5562 = vld [vmem:[%s2 + $0x44] sm:$0xf]
  %v5563 = vld [vmem:[%s2 + $0x48] sm:$0xf]
  %v5564 = vld [vmem:[%s2 + $0x4c] sm:$0xf]
  %v5565 = vld [vmem:[%s2 + $0x50] sm:$0xf]
  %v5566 = vld [vmem:[%s2 + $0x54] sm:$0xf]
  %v5567 = vld [vmem:[%s2 + $0x58] sm:$0xf]
  %v5568 = vld [vmem:[%s2 + $0x5c] sm:$0xf]
  %v5569 = vld [vmem:[%s2 + $0x60] sm:$0xf]
  %v5570 = vld [vmem:[%s2 + $0x64] sm:$0xf]
  %v5571 = vld [vmem:[%s2 + $0x68] sm:$0xf]
  %v5572 = vld [vmem:[%s2 + $0x6c] sm:$0xf]
  %v5573 = vld [vmem:[%s2 + $0x70] sm:$0xf]
  %v5574 = vld [vmem:[%s2 + $0x74] sm:$0xf]
  %v5575 = vld [vmem:[%s2 + $0x78] sm:$0xf]
  %v5576 = vld [vmem:[%s2 + $0x7c] sm:$0xf]
  %v5577 = vld [vmem:[%s2 + $0x80] sm:$0xf]
  %v5578 = vld [vmem:[%s2 + $0x84] sm:$0xf]
  %v5579 = vld [vmem:[%s2 + $0x88] sm:$0xf]
  %v5580 = vld [vmem:[%s2 + $0x8c] sm:$0xf]
  %v5617 = vunpack.c.l.b16 %v5545
  %v5618 = vunpack.c.l.b16 %v5546
  %v5619 = vunpack.c.l.b16 %v5547
  %v5620 = vunpack.c.l.b16 %v5548
  %v5621 = vunpack.c.l.b16 %v5549
  %v5622 = vunpack.c.l.b16 %v5550
  %v5623 = vunpack.c.l.b16 %v5551
  %v5624 = vunpack.c.l.b16 %v5552
  %v5625 = vunpack.c.l.b16 %v5553
  %v5626 = vunpack.c.l.b16 %v5554
  %v5627 = vunpack.c.l.b16 %v5555
  %v5628 = vunpack.c.l.b16 %v5556
  %v5629 = vunpack.c.l.b16 %v5557
  %v5630 = vunpack.c.l.b16 %v5558
  %v5631 = vunpack.c.l.b16 %v5559
  %v5632 = vunpack.c.l.b16 %v5560
  %v5633 = vunpack.c.l.b16 %v5561
  %v5634 = vunpack.c.l.b16 %v5562
  %v5635 = vunpack.c.l.b16 %v5563
  %v5636 = vunpack.c.l.b16 %v5564
  %v5637 = vunpack.c.l.b16 %v5565
  %v5638 = vunpack.c.l.b16 %v5566
  %v5639 = vunpack.c.l.b16 %v5567
  %v5640 = vunpack.c.l.b16 %v5568
  %v5641 = vunpack.c.l.b16 %v5569
  %v5642 = vunpack.c.l.b16 %v5570
  %v5643 = vunpack.c.l.b16 %v5571
  %v5644 = vunpack.c.l.b16 %v5572
  %v5645 = vunpack.c.l.b16 %v5573
  %v5646 = vunpack.c.l.b16 %v5574
  %v5647 = vunpack.c.l.b16 %v5575
  %v5648 = vunpack.c.l.b16 %v5576
  %v5649 = vunpack.c.l.b16 %v5577
  %v5650 = vunpack.c.l.b16 %v5578
  %v5651 = vunpack.c.l.b16 %v5579
  %v5652 = vunpack.c.l.b16 %v5580
  %v5653 = vpack.c.b16 %v5618, %v5617
  %v5654 = vpack.c.b16 %v5620, %v5619
  %v5655 = vpack.c.b16 %v5622, %v5621
  %v5656 = vpack.c.b16 %v5624, %v5623
  %v5657 = vpack.c.b16 %v5626, %v5625
  %v5658 = vpack.c.b16 %v5628, %v5627
  %v5659 = vpack.c.b16 %v5630, %v5629
  %v5660 = vpack.c.b16 %v5632, %v5631
  %v5661 = vpack.c.b16 %v5634, %v5633
  %v5662 = vpack.c.b16 %v5636, %v5635
  %v5663 = vpack.c.b16 %v5638, %v5637
  %v5664 = vpack.c.b16 %v5640, %v5639
  %v5665 = vpack.c.b16 %v5642, %v5641
  %v5666 = vpack.c.b16 %v5644, %v5643
  %v5667 = vpack.c.b16 %v5646, %v5645
  %v5668 = vpack.c.b16 %v5648, %v5647
  %v5669 = vpack.c.b16 %v5650, %v5649
  %v5670 = vpack.c.b16 %v5652, %v5651
  %v5690 = vsel %vm5030, %v4998, 0
  %v5693 = vsel %vm5030, %v4999, 0
  %v5696 = vsel %vm5030, %v5000, 0
  %v5699 = vsel %vm5030, %v5001, 0
  %v5702 = vsel %vm5030, %v5002, 0
  %v5705 = vsel %vm5030, %v5003, 0
  %v5708 = vsel %vm5030, %v5004, 0
  %v5711 = vsel %vm5030, %v5005, 0
  %v5714 = vsel %vm5030, %v5006, 0
  %v5717 = vsel %vm5030, %v5007, 0
  %v5720 = vsel %vm5030, %v5008, 0
  %v5723 = vsel %vm5030, %v5009, 0
  %v5726 = vsel %vm5030, %v5010, 0
  %v5729 = vsel %vm5030, %v5011, 0
  %v5732 = vsel %vm5030, %v5012, 0
  %v5735 = vsel %vm5030, %v5013, 0
  %v5738 = vsel %vm5030, %v5014, 0
  %v5741 = vsel %vm5030, %v5015, 0
  %v5744 = vsel %vm5030, %v5016, 0
  %v5747 = vsel %vm5030, %v5017, 0
  %v5750 = vsel %vm5030, %v5018, 0
  %v5753 = vsel %vm5030, %v5019, 0
  %v5756 = vsel %vm5030, %v5020, 0
  %v5759 = vsel %vm5030, %v5021, 0
  %v5762 = vsel %vm5030, %v5022, 0
  %v5765 = vsel %vm5030, %v5023, 0
  %v5768 = vsel %vm5030, %v5024, 0
  %v5771 = vsel %vm5030, %v5025, 0
  %v5774 = vsel %vm5030, %v5026, 0
  %v5777 = vsel %vm5030, %v5027, 0
  %v5780 = vsel %vm5030, %v5028, 0
  %v5783 = vsel %vm5030, %v5029, 0
  %5785 = vmatprep.subr.bf16.mxu0 0
  %5786 = vmatpush1.bf16.msra.mxu0 %v5653
  %5787 = vmatprep.subr.bf16.mxu0 0
  %5788 = vmatpush1.bf16.msra.mxu0 %v5654
  %5789 = vmatprep.subr.bf16.mxu0 0
  %5790 = vmatpush1.bf16.msra.mxu0 %v5655
  %5791 = vmatprep.subr.bf16.mxu0 0
  %5792 = vmatpush1.bf16.msra.mxu0 %v5656
  %5793 = vmatprep.subr.bf16.mxu0 0
  %5794 = vmatpush1.bf16.msra.mxu0 %v5657
  %5795 = vmatprep.subr.bf16.mxu0 0
  %5796 = vmatpush1.bf16.msra.mxu0 %v5658
  %5797 = vmatprep.subr.bf16.mxu0 0
  %5798 = vmatpush1.bf16.msra.mxu0 %v5659
  %5799 = vmatprep.subr.bf16.mxu0 0
  %5800 = vmatpush1.bf16.msra.mxu0 %v5660
  %5801 = vmatprep.subr.bf16.mxu0 0
  %5802 = vmatpush1.bf16.msra.mxu0 %v5661
  %5803 = vmatprep.subr.bf16.mxu0 0
  %5804 = vmatpush1.bf16.msra.mxu0 %v5662
  %5805 = vmatprep.subr.bf16.mxu0 0
  %5806 = vmatpush1.bf16.msra.mxu0 %v5663
  %5807 = vmatprep.subr.bf16.mxu0 0
  %5808 = vmatpush1.bf16.msra.mxu0 %v5664
  %5809 = vmatprep.subr.bf16.mxu0 0
  %5810 = vmatpush1.bf16.msra.mxu0 %v5665
  %5811 = vmatprep.subr.bf16.mxu0 0
  %5812 = vmatpush1.bf16.msra.mxu0 %v5666
  %5813 = vmatprep.subr.bf16.mxu0 0
  %5814 = vmatpush1.bf16.msra.mxu0 %v5667
  %5815 = vmatprep.subr.bf16.mxu0 0
  %5816 = vmatpush1.bf16.msra.mxu0 %v5668
  %5817 = vmatprep.mubr.bf16.mxu0 %v5450
  %5818 = vmatmul.mubr.bf16.gmra.mrb[0].mxu0 %v5194
  %v5819 = vpop.f32.mrb[0].mxu0
  %v5820 = vadd.f32 0.0, %v5819
  %v5821 = vpop.f32.mrb[0].mxu0
  %v5822 = vpop.f32.mrb[0].mxu0
  %v5823 = vadd.f32 0.0, %v5822
  %v5824 = vpop.f32.mrb[0].mxu0
  %5825 = vmatprep.mubr.bf16.mxu0 %v5453
  %5826 = vmatmul.mubr.bf16.gmra.mrb[0].mxu0 %v5197
  %v5827 = vpop.f32.mrb[0].mxu0
  %v5828 = vadd.f32 0.0, %v5827
  %v5829 = vpop.f32.mrb[0].mxu0
  %v5830 = vpop.f32.mrb[0].mxu0
  %v5831 = vadd.f32 0.0, %v5830
  %v5832 = vpop.f32.mrb[0].mxu0
  %5833 = vmatprep.mubr.bf16.mxu0 %v5456
  %5834 = vmatmul.mubr.bf16.gmra.mrb[0].mxu0 %v5200
  %v5835 = vpop.f32.mrb[0].mxu0
  %v5836 = vadd.f32 0.0, %v5835
  %v5837 = vpop.f32.mrb[0].mxu0
  %v5838 = vpop.f32.mrb[0].mxu0
  %v5839 = vadd.f32 0.0, %v5838
  %v5840 = vpop.f32.mrb[0].mxu0
  %5841 = vmatprep.mubr.bf16.mxu0 %v5459
  %5842 = vmatmul.mubr.bf16.gmra.mrb[0].mxu0 %v5203
  %v5843 = vpop.f32.mrb[0].mxu0
  %v5844 = vadd.f32 0.0, %v5843
  %v5845 = vpop.f32.mrb[0].mxu0
  %v5846 = vpop.f32.mrb[0].mxu0
  %v5847 = vadd.f32 0.0, %v5846
  %v5848 = vpop.f32.mrb[0].mxu0
  %5849 = vmatprep.mubr.bf16.mxu0 %v5462
  %5850 = vmatmul.mubr.bf16.gmra.mrb[0].mxu0 %v5206
  %v5851 = vpop.f32.mrb[0].mxu0
  %v5852 = vadd.f32 0.0, %v5851
  %v5853 = vpop.f32.mrb[0].mxu0
  %v5854 = vpop.f32.mrb[0].mxu0
  %v5855 = vadd.f32 0.0, %v5854
  %v5856 = vpop.f32.mrb[0].mxu0
  %5857 = vmatprep.mubr.bf16.mxu0 %v5465
  %5858 = vmatmul.mubr.bf16.gmra.mrb[0].mxu0 %v5209
  %v5859 = vpop.f32.mrb[0].mxu0
  %v5860 = vadd.f32 0.0, %v5859
  %v5861 = vpop.f32.mrb[0].mxu0
  %v5862 = vpop.f32.mrb[0].mxu0
  %v5863 = vadd.f32 0.0, %v5862
  %v5864 = vpop.f32.mrb[0].mxu0
  %5865 = vmatprep.mubr.bf16.mxu0 %v5468
  %5866 = vmatmul.mubr.bf16.gmra.mrb[0].mxu0 %v5212
  %v5867 = vpop.f32.mrb[0].mxu0
  %v5868 = vadd.f32 0.0, %v5867
  %v5869 = vpop.f32.mrb[0].mxu0
  %v5870 = vpop.f32.mrb[0].mxu0
  %v5871 = vadd.f32 0.0, %v5870
  %v5872 = vpop.f32.mrb[0].mxu0
  %5873 = vmatprep.mubr.bf16.mxu0 %v5471
  %5874 = vmatmul.mubr.bf16.gmra.mrb[0].mxu0 %v5215
  %v5875 = vpop.f32.mrb[0].mxu0
  %v5876 = vadd.f32 0.0, %v5875
  %v5877 = vpop.f32.mrb[0].mxu0
  %v5878 = vpop.f32.mrb[0].mxu0
  %v5879 = vadd.f32 0.0, %v5878
  %v5880 = vpop.f32.mrb[0].mxu0
  %5881 = vmatprep.mubr.bf16.mxu0 %v5474
  %5882 = vmatmul.mubr.bf16.gmra.mrb[0].mxu0 %v5218
  %v5883 = vpop.f32.mrb[0].mxu0
  %v5884 = vadd.f32 0.0, %v5883
  %v5885 = vpop.f32.mrb[0].mxu0
  %v5886 = vpop.f32.mrb[0].mxu0
  %v5887 = vadd.f32 0.0, %v5886
  %v5888 = vpop.f32.mrb[0].mxu0
  %5889 = vmatprep.mubr.bf16.mxu0 %v5477
  %5890 = vmatmul.mubr.bf16.gmra.mrb[0].mxu0 %v5221
  %v5891 = vpop.f32.mrb[0].mxu0
  %v5892 = vadd.f32 0.0, %v5891
  %v5893 = vpop.f32.mrb[0].mxu0
  %v5894 = vpop.f32.mrb[0].mxu0
  %v5895 = vadd.f32 0.0, %v5894
  %v5896 = vpop.f32.mrb[0].mxu0
  %5897 = vmatprep.mubr.bf16.mxu0 %v5480
  %5898 = vmatmul.mubr.bf16.gmra.mrb[0].mxu0 %v5224
  %v5899 = vpop.f32.mrb[0].mxu0
  %v5900 = vadd.f32 0.0, %v5899
  %v5901 = vpop.f32.mrb[0].mxu0
  %v5902 = vpop.f32.mrb[0].mxu0
  %v5903 = vadd.f32 0.0, %v5902
  %v5904 = vpop.f32.mrb[0].mxu0
  %5905 = vmatprep.mubr.bf16.mxu0 %v5483
  %5906 = vmatmul.mubr.bf16.gmra.mrb[0].mxu0 %v5227
  %v5907 = vpop.f32.mrb[0].mxu0
  %v5908 = vadd.f32 0.0, %v5907
  %v5909 = vpop.f32.mrb[0].mxu0
  %v5910 = vpop.f32.mrb[0].mxu0
  %v5911 = vadd.f32 0.0, %v5910
  %v5912 = vpop.f32.mrb[0].mxu0
  %5913 = vmatprep.mubr.bf16.mxu0 %v5486
  %5914 = vmatmul.mubr.bf16.gmra.mrb[0].mxu0 %v5230
  %v5915 = vpop.f32.mrb[0].mxu0
  %v5916 = vadd.f32 0.0, %v5915
  %v5917 = vpop.f32.mrb[0].mxu0
  %v5918 = vpop.f32.mrb[0].mxu0
  %v5919 = vadd.f32 0.0, %v5918
  %v5920 = vpop.f32.mrb[0].mxu0
  %5921 = vmatprep.mubr.bf16.mxu0 %v5489
  %5922 = vmatmul.mubr.bf16.gmra.mrb[0].mxu0 %v5233
  %v5923 = vpop.f32.mrb[0].mxu0
  %v5924 = vadd.f32 0.0, %v5923
  %v5925 = vpop.f32.mrb[0].mxu0
  %v5926 = vpop.f32.mrb[0].mxu0
  %v5927 = vadd.f32 0.0, %v5926
  %v5928 = vpop.f32.mrb[0].mxu0
  %5929 = vmatprep.mubr.bf16.mxu0 %v5492
  %5930 = vmatmul.mubr.bf16.gmra.mrb[0].mxu0 %v5236
  %v5931 = vpop.f32.mrb[0].mxu0
  %v5932 = vadd.f32 0.0, %v5931
  %v5933 = vpop.f32.mrb[0].mxu0
  %v5934 = vpop.f32.mrb[0].mxu0
  %v5935 = vadd.f32 0.0, %v5934
  %v5936 = vpop.f32.mrb[0].mxu0
  %5937 = vmatprep.mubr.bf16.mxu0 %v5495
  %5938 = vmatmul.mubr.bf16.gmra.mrb[0].mxu0 %v5239
  %v5939 = vpop.f32.mrb[0].mxu0
  %v5940 = vadd.f32 0.0, %v5939
  %v5941 = vpop.f32.mrb[0].mxu0
  %v5942 = vpop.f32.mrb[0].mxu0
  %v5943 = vadd.f32 0.0, %v5942
  %v5944 = vpop.f32.mrb[0].mxu0
  %5945 = vmatprep.mubr.bf16.mxu0 %v5498
  %5946 = vmatmul.mubr.bf16.gmra.mrb[0].mxu0 %v5242
  %v5947 = vpop.f32.mrb[0].mxu0
  %v5948 = vadd.f32 0.0, %v5947
  %v5949 = vpop.f32.mrb[0].mxu0
  %v5950 = vpop.f32.mrb[0].mxu0
  %v5951 = vadd.f32 0.0, %v5950
  %v5952 = vpop.f32.mrb[0].mxu0
  %5953 = vmatprep.mubr.bf16.mxu0 %v5501
  %5954 = vmatmul.mubr.bf16.gmra.mrb[0].mxu0 %v5245
  %v5955 = vpop.f32.mrb[0].mxu0
  %v5956 = vadd.f32 0.0, %v5955
  %v5957 = vpop.f32.mrb[0].mxu0
  %v5958 = vpop.f32.mrb[0].mxu0
  %v5959 = vadd.f32 0.0, %v5958
  %v5960 = vpop.f32.mrb[0].mxu0
  %5961 = vmatprep.mubr.bf16.mxu0 %v5504
  %5962 = vmatmul.mubr.bf16.gmra.mrb[0].mxu0 %v5248
  %v5963 = vpop.f32.mrb[0].mxu0
  %v5964 = vadd.f32 0.0, %v5963
  %v5965 = vpop.f32.mrb[0].mxu0
  %v5966 = vpop.f32.mrb[0].mxu0
  %v5967 = vadd.f32 0.0, %v5966
  %v5968 = vpop.f32.mrb[0].mxu0
  %5969 = vmatprep.mubr.bf16.mxu0 %v5507
  %5970 = vmatmul.mubr.bf16.gmra.mrb[0].mxu0 %v5251
  %v5971 = vpop.f32.mrb[0].mxu0
  %v5972 = vadd.f32 0.0, %v5971
  %v5973 = vpop.f32.mrb[0].mxu0
  %v5974 = vpop.f32.mrb[0].mxu0
  %v5975 = vadd.f32 0.0, %v5974
  %v5976 = vpop.f32.mrb[0].mxu0
  %5977 = vmatprep.mubr.bf16.mxu0 %v5510
  %5978 = vmatmul.mubr.bf16.gmra.mrb[0].mxu0 %v5254
  %v5979 = vpop.f32.mrb[0].mxu0
  %v5980 = vadd.f32 0.0, %v5979
  %v5981 = vpop.f32.mrb[0].mxu0
  %v5982 = vpop.f32.mrb[0].mxu0
  %v5983 = vadd.f32 0.0, %v5982
  %v5984 = vpop.f32.mrb[0].mxu0
  %5985 = vmatprep.mubr.bf16.mxu0 %v5513
  %5986 = vmatmul.mubr.bf16.gmra.mrb[0].mxu0 %v5257
  %v5987 = vpop.f32.mrb[0].mxu0
  %v5988 = vadd.f32 0.0, %v5987
  %v5989 = vpop.f32.mrb[0].mxu0
  %v5990 = vpop.f32.mrb[0].mxu0
  %v5991 = vadd.f32 0.0, %v5990
  %v5992 = vpop.f32.mrb[0].mxu0
  %5993 = vmatprep.mubr.bf16.mxu0 %v5516
  %5994 = vmatmul.mubr.bf16.gmra.mrb[0].mxu0 %v5260
  %v5995 = vpop.f32.mrb[0].mxu0
  %v5996 = vadd.f32 0.0, %v5995
  %v5997 = vpop.f32.mrb[0].mxu0
  %v5998 = vpop.f32.mrb[0].mxu0
  %v5999 = vadd.f32 0.0, %v5998
  %v6000 = vpop.f32.mrb[0].mxu0
  %6001 = vmatprep.mubr.bf16.mxu0 %v5519
  %6002 = vmatmul.mubr.bf16.gmra.mrb[0].mxu0 %v5263
  %v6003 = vpop.f32.mrb[0].mxu0
  %v6004 = vadd.f32 0.0, %v6003
  %v6005 = vpop.f32.mrb[0].mxu0
  %v6006 = vpop.f32.mrb[0].mxu0
  %v6007 = vadd.f32 0.0, %v6006
  %v6008 = vpop.f32.mrb[0].mxu0
  %6009 = vmatprep.mubr.bf16.mxu0 %v5522
  %6010 = vmatmul.mubr.bf16.gmra.mrb[0].mxu0 %v5266
  %v6011 = vpop.f32.mrb[0].mxu0
  %v6012 = vadd.f32 0.0, %v6011
  %v6013 = vpop.f32.mrb[0].mxu0
  %v6014 = vpop.f32.mrb[0].mxu0
  %v6015 = vadd.f32 0.0, %v6014
  %v6016 = vpop.f32.mrb[0].mxu0
  %6017 = vmatprep.mubr.bf16.mxu0 %v5525
  %6018 = vmatmul.mubr.bf16.gmra.mrb[0].mxu0 %v5269
  %v6019 = vpop.f32.mrb[0].mxu0
  %v6020 = vadd.f32 0.0, %v6019
  %v6021 = vpop.f32.mrb[0].mxu0
  %v6022 = vpop.f32.mrb[0].mxu0
  %v6023 = vadd.f32 0.0, %v6022
  %v6024 = vpop.f32.mrb[0].mxu0
  %6025 = vmatprep.mubr.bf16.mxu0 %v5528
  %6026 = vmatmul.mubr.bf16.gmra.mrb[0].mxu0 %v5272
  %v6027 = vpop.f32.mrb[0].mxu0
  %v6028 = vadd.f32 0.0, %v6027
  %v6029 = vpop.f32.mrb[0].mxu0
  %v6030 = vpop.f32.mrb[0].mxu0
  %v6031 = vadd.f32 0.0, %v6030
  %v6032 = vpop.f32.mrb[0].mxu0
  %6033 = vmatprep.mubr.bf16.mxu0 %v5531
  %6034 = vmatmul.mubr.bf16.gmra.mrb[0].mxu0 %v5275
  %v6035 = vpop.f32.mrb[0].mxu0
  %v6036 = vadd.f32 0.0, %v6035
  %v6037 = vpop.f32.mrb[0].mxu0
  %v6038 = vpop.f32.mrb[0].mxu0
  %v6039 = vadd.f32 0.0, %v6038
  %v6040 = vpop.f32.mrb[0].mxu0
  %6041 = vmatprep.mubr.bf16.mxu0 %v5534
  %6042 = vmatmul.mubr.bf16.gmra.mrb[0].mxu0 %v5278
  %v6043 = vpop.f32.mrb[0].mxu0
  %v6044 = vadd.f32 0.0, %v6043
  %v6045 = vpop.f32.mrb[0].mxu0
  %v6046 = vpop.f32.mrb[0].mxu0
  %v6047 = vadd.f32 0.0, %v6046
  %v6048 = vpop.f32.mrb[0].mxu0
  %6049 = vmatprep.mubr.bf16.mxu0 %v5537
  %6050 = vmatmul.mubr.bf16.gmra.mrb[0].mxu0 %v5281
  %v6051 = vpop.f32.mrb[0].mxu0
  %v6052 = vadd.f32 0.0, %v6051
  %v6053 = vpop.f32.mrb[0].mxu0
  %v6054 = vpop.f32.mrb[0].mxu0
  %v6055 = vadd.f32 0.0, %v6054
  %v6056 = vpop.f32.mrb[0].mxu0
  %6057 = vmatprep.mubr.bf16.mxu0 %v5540
  %6058 = vmatmul.mubr.bf16.gmra.mrb[0].mxu0 %v5284
  %v6059 = vpop.f32.mrb[0].mxu0
  %v6060 = vadd.f32 0.0, %v6059
  %v6061 = vpop.f32.mrb[0].mxu0
  %v6062 = vpop.f32.mrb[0].mxu0
  %v6063 = vadd.f32 0.0, %v6062
  %v6064 = vpop.f32.mrb[0].mxu0
  %6065 = vmatprep.mubr.bf16.mxu0 %v5543
  %6066 = vmatmul.mubr.bf16.gmra.mrb[0].mxu0 %v5287
  %v6067 = vpop.f32.mrb[0].mxu0
  %v6068 = vadd.f32 0.0, %v6067
  %v6069 = vpop.f32.mrb[0].mxu0
  %v6070 = vpop.f32.mrb[0].mxu0
  %v6071 = vadd.f32 0.0, %v6070
  %v6072 = vpop.f32.mrb[0].mxu0
  %6073 = vdwg.mxu0
  %6074 = vmatprep.subr.bf16.mxu0 0
  %6075 = vmatpush1.bf16.msra.mxu0 %v5669
  %6076 = vmatprep.subr.bf16.mxu0 0
  %6077 = vmatpush1.bf16.msra.mxu0 %v5670
  %6078 = vmatprep.subr.bf16.mxu0 0
  %6079 = vmatpush1.bf16.msra.mxu0 0
  %6080 = vmatprep.subr.bf16.mxu0 0
  %6081 = vmatpush1.bf16.msra.mxu0 0
  %6082 = vmatprep.subr.bf16.mxu0 0
  %6083 = vmatpush1.bf16.msra.mxu0 0
  %6084 = vmatprep.subr.bf16.mxu0 0
  %6085 = vmatpush1.bf16.msra.mxu0 0
  %6086 = vmatprep.subr.bf16.mxu0 0
  %6087 = vmatpush1.bf16.msra.mxu0 0
  %6088 = vmatprep.subr.bf16.mxu0 0
  %6089 = vmatpush1.bf16.msra.mxu0 0
  %6090 = vmatprep.subr.bf16.mxu0 0
  %6091 = vmatpush1.bf16.msra.mxu0 0
  %6092 = vmatprep.subr.bf16.mxu0 0
  %6093 = vmatpush1.bf16.msra.mxu0 0
  %6094 = vmatprep.subr.bf16.mxu0 0
  %6095 = vmatpush1.bf16.msra.mxu0 0
  %6096 = vmatprep.subr.bf16.mxu0 0
  %6097 = vmatpush1.bf16.msra.mxu0 0
  %6098 = vmatprep.subr.bf16.mxu0 0
  %6099 = vmatpush1.bf16.msra.mxu0 0
  %6100 = vmatprep.subr.bf16.mxu0 0
  %6101 = vmatpush1.bf16.msra.mxu0 0
  %6102 = vmatprep.subr.bf16.mxu0 0
  %6103 = vmatpush1.bf16.msra.mxu0 0
  %6104 = vmatprep.subr.bf16.mxu0 0
  %6105 = vmatpush1.bf16.msra.mxu0 0
  %6106 = vmatprep.mubr.bf16.mxu0 0
  %6107 = vmatmul.mubr.bf16.gmra.mrb[0].mxu0 %v5690
  %v6108 = vpop.f32.mrb[0].mxu0
  %v6109 = vadd.f32 %v5820, %v6108
  %v6110 = vpop.f32.mrb[0].mxu0
  %v6111 = vpop.f32.mrb[0].mxu0
  %v6112 = vadd.f32 %v5823, %v6111
  %v6113 = vpop.f32.mrb[0].mxu0
  %6114 = vmatprep.mubr.bf16.mxu0 0
  %6115 = vmatmul.mubr.bf16.gmra.mrb[0].mxu0 %v5693
  %v6116 = vpop.f32.mrb[0].mxu0
  %v6117 = vadd.f32 %v5828, %v6116
  %v6118 = vpop.f32.mrb[0].mxu0
  %v6119 = vpop.f32.mrb[0].mxu0
  %v6120 = vadd.f32 %v5831, %v6119
  %v6121 = vpop.f32.mrb[0].mxu0
  %6122 = vmatprep.mubr.bf16.mxu0 0
  %6123 = vmatmul.mubr.bf16.gmra.mrb[0].mxu0 %v5696
  %v6124 = vpop.f32.mrb[0].mxu0
  %v6125 = vadd.f32 %v5836, %v6124
  %v6126 = vpop.f32.mrb[0].mxu0
  %v6127 = vpop.f32.mrb[0].mxu0
  %v6128 = vadd.f32 %v5839, %v6127
  %v6129 = vpop.f32.mrb[0].mxu0
  %6130 = vmatprep.mubr.bf16.mxu0 0
  %6131 = vmatmul.mubr.bf16.gmra.mrb[0].mxu0 %v5699
  %v6132 = vpop.f32.mrb[0].mxu0
  %v6133 = vadd.f32 %v5844, %v6132
  %v6134 = vpop.f32.mrb[0].mxu0
  %v6135 = vpop.f32.mrb[0].mxu0
  %v6136 = vadd.f32 %v5847, %v6135
  %v6137 = vpop.f32.mrb[0].mxu0
  %6138 = vmatprep.mubr.bf16.mxu0 0
  %6139 = vmatmul.mubr.bf16.gmra.mrb[0].mxu0 %v5702
  %v6140 = vpop.f32.mrb[0].mxu0
  %v6141 = vadd.f32 %v5852, %v6140
  %v6142 = vpop.f32.mrb[0].mxu0
  %v6143 = vpop.f32.mrb[0].mxu0
  %v6144 = vadd.f32 %v5855, %v6143
  %v6145 = vpop.f32.mrb[0].mxu0
  %6146 = vmatprep.mubr.bf16.mxu0 0
  %6147 = vmatmul.mubr.bf16.gmra.mrb[0].mxu0 %v5705
  %v6148 = vpop.f32.mrb[0].mxu0
  %v6149 = vadd.f32 %v5860, %v6148
  %v6150 = vpop.f32.mrb[0].mxu0
  %v6151 = vpop.f32.mrb[0].mxu0
  %v6152 = vadd.f32 %v5863, %v6151
  %v6153 = vpop.f32.mrb[0].mxu0
  %6154 = vmatprep.mubr.bf16.mxu0 0
  %6155 = vmatmul.mubr.bf16.gmra.mrb[0].mxu0 %v5708
  %v6156 = vpop.f32.mrb[0].mxu0
  %v6157 = vadd.f32 %v5868, %v6156
  %v6158 = vpop.f32.mrb[0].mxu0
  %v6159 = vpop.f32.mrb[0].mxu0
  %v6160 = vadd.f32 %v5871, %v6159
  %v6161 = vpop.f32.mrb[0].mxu0
  %6162 = vmatprep.mubr.bf16.mxu0 0
  %6163 = vmatmul.mubr.bf16.gmra.mrb[0].mxu0 %v5711
  %v6164 = vpop.f32.mrb[0].mxu0
  %v6165 = vadd.f32 %v5876, %v6164
  %v6166 = vpop.f32.mrb[0].mxu0
  %v6167 = vpop.f32.mrb[0].mxu0
  %v6168 = vadd.f32 %v5879, %v6167
  %v6169 = vpop.f32.mrb[0].mxu0
  %6170 = vmatprep.mubr.bf16.mxu0 0
  %6171 = vmatmul.mubr.bf16.gmra.mrb[0].mxu0 %v5714
  %v6172 = vpop.f32.mrb[0].mxu0
  %v6173 = vadd.f32 %v5884, %v6172
  %v6174 = vpop.f32.mrb[0].mxu0
  %v6175 = vpop.f32.mrb[0].mxu0
  %v6176 = vadd.f32 %v5887, %v6175
  %v6177 = vpop.f32.mrb[0].mxu0
  %6178 = vmatprep.mubr.bf16.mxu0 0
  %6179 = vmatmul.mubr.bf16.gmra.mrb[0].mxu0 %v5717
  %v6180 = vpop.f32.mrb[0].mxu0
  %v6181 = vadd.f32 %v5892, %v6180
  %v6182 = vpop.f32.mrb[0].mxu0
  %v6183 = vpop.f32.mrb[0].mxu0
  %v6184 = vadd.f32 %v5895, %v6183
  %v6185 = vpop.f32.mrb[0].mxu0
  %6186 = vmatprep.mubr.bf16.mxu0 0
  %6187 = vmatmul.mubr.bf16.gmra.mrb[0].mxu0 %v5720
  %v6188 = vpop.f32.mrb[0].mxu0
  %v6189 = vadd.f32 %v5900, %v6188
  %v6190 = vpop.f32.mrb[0].mxu0
  %v6191 = vpop.f32.mrb[0].mxu0
  %v6192 = vadd.f32 %v5903, %v6191
  %v6193 = vpop.f32.mrb[0].mxu0
  %6194 = vmatprep.mubr.bf16.mxu0 0
  %6195 = vmatmul.mubr.bf16.gmra.mrb[0].mxu0 %v5723
  %v6196 = vpop.f32.mrb[0].mxu0
  %v6197 = vadd.f32 %v5908, %v6196
  %v6198 = vpop.f32.mrb[0].mxu0
  %v6199 = vpop.f32.mrb[0].mxu0
  %v6200 = vadd.f32 %v5911, %v6199
  %v6201 = vpop.f32.mrb[0].mxu0
  %6202 = vmatprep.mubr.bf16.mxu0 0
  %6203 = vmatmul.mubr.bf16.gmra.mrb[0].mxu0 %v5726
  %v6204 = vpop.f32.mrb[0].mxu0
  %v6205 = vadd.f32 %v5916, %v6204
  %v6206 = vpop.f32.mrb[0].mxu0
  %v6207 = vpop.f32.mrb[0].mxu0
  %v6208 = vadd.f32 %v5919, %v6207
  %v6209 = vpop.f32.mrb[0].mxu0
  %6210 = vmatprep.mubr.bf16.mxu0 0
  %6211 = vmatmul.mubr.bf16.gmra.mrb[0].mxu0 %v5729
  %v6212 = vpop.f32.mrb[0].mxu0
  %v6213 = vadd.f32 %v5924, %v6212
  %v6214 = vpop.f32.mrb[0].mxu0
  %v6215 = vpop.f32.mrb[0].mxu0
  %v6216 = vadd.f32 %v5927, %v6215
  %v6217 = vpop.f32.mrb[0].mxu0
  %6218 = vmatprep.mubr.bf16.mxu0 0
  %6219 = vmatmul.mubr.bf16.gmra.mrb[0].mxu0 %v5732
  %v6220 = vpop.f32.mrb[0].mxu0
  %v6221 = vadd.f32 %v5932, %v6220
  %v6222 = vpop.f32.mrb[0].mxu0
  %v6223 = vpop.f32.mrb[0].mxu0
  %v6224 = vadd.f32 %v5935, %v6223
  %v6225 = vpop.f32.mrb[0].mxu0
  %6226 = vmatprep.mubr.bf16.mxu0 0
  %6227 = vmatmul.mubr.bf16.gmra.mrb[0].mxu0 %v5735
  %v6228 = vpop.f32.mrb[0].mxu0
  %v6229 = vadd.f32 %v5940, %v6228
  %v6230 = vpop.f32.mrb[0].mxu0
  %v6231 = vpop.f32.mrb[0].mxu0
  %v6232 = vadd.f32 %v5943, %v6231
  %v6233 = vpop.f32.mrb[0].mxu0
  %6234 = vmatprep.mubr.bf16.mxu0 0
  %6235 = vmatmul.mubr.bf16.gmra.mrb[0].mxu0 %v5738
  %v6236 = vpop.f32.mrb[0].mxu0
  %v6237 = vadd.f32 %v5948, %v6236
  %v6238 = vpop.f32.mrb[0].mxu0
  %v6239 = vpop.f32.mrb[0].mxu0
  %v6240 = vadd.f32 %v5951, %v6239
  %v6241 = vpop.f32.mrb[0].mxu0
  %6242 = vmatprep.mubr.bf16.mxu0 0
  %6243 = vmatmul.mubr.bf16.gmra.mrb[0].mxu0 %v5741
  %v6244 = vpop.f32.mrb[0].mxu0
  %v6245 = vadd.f32 %v5956, %v6244
  %v6246 = vpop.f32.mrb[0].mxu0
  %v6247 = vpop.f32.mrb[0].mxu0
  %v6248 = vadd.f32 %v5959, %v6247
  %v6249 = vpop.f32.mrb[0].mxu0
  %6250 = vmatprep.mubr.bf16.mxu0 0
  %6251 = vmatmul.mubr.bf16.gmra.mrb[0].mxu0 %v5744
  %v6252 = vpop.f32.mrb[0].mxu0
  %v6253 = vadd.f32 %v5964, %v6252
  %v6254 = vpop.f32.mrb[0].mxu0
  %v6255 = vpop.f32.mrb[0].mxu0
  %v6256 = vadd.f32 %v5967, %v6255
  %v6257 = vpop.f32.mrb[0].mxu0
  %6258 = vmatprep.mubr.bf16.mxu0 0
  %6259 = vmatmul.mubr.bf16.gmra.mrb[0].mxu0 %v5747
  %v6260 = vpop.f32.mrb[0].mxu0
  %v6261 = vadd.f32 %v5972, %v6260
  %v6262 = vpop.f32.mrb[0].mxu0
  %v6263 = vpop.f32.mrb[0].mxu0
  %v6264 = vadd.f32 %v5975, %v6263
  %v6265 = vpop.f32.mrb[0].mxu0
  %6266 = vmatprep.mubr.bf16.mxu0 0
  %6267 = vmatmul.mubr.bf16.gmra.mrb[0].mxu0 %v5750
  %v6268 = vpop.f32.mrb[0].mxu0
  %v6269 = vadd.f32 %v5980, %v6268
  %v6270 = vpop.f32.mrb[0].mxu0
  %v6271 = vpop.f32.mrb[0].mxu0
  %v6272 = vadd.f32 %v5983, %v6271
  %v6273 = vpop.f32.mrb[0].mxu0
  %6274 = vmatprep.mubr.bf16.mxu0 0
  %6275 = vmatmul.mubr.bf16.gmra.mrb[0].mxu0 %v5753
  %v6276 = vpop.f32.mrb[0].mxu0
  %v6277 = vadd.f32 %v5988, %v6276
  %v6278 = vpop.f32.mrb[0].mxu0
  %v6279 = vpop.f32.mrb[0].mxu0
  %v6280 = vadd.f32 %v5991, %v6279
  %v6281 = vpop.f32.mrb[0].mxu0
  %6282 = vmatprep.mubr.bf16.mxu0 0
  %6283 = vmatmul.mubr.bf16.gmra.mrb[0].mxu0 %v5756
  %v6284 = vpop.f32.mrb[0].mxu0
  %v6285 = vadd.f32 %v5996, %v6284
  %v6286 = vpop.f32.mrb[0].mxu0
  %v6287 = vpop.f32.mrb[0].mxu0
  %v6288 = vadd.f32 %v5999, %v6287
  %v6289 = vpop.f32.mrb[0].mxu0
  %6290 = vmatprep.mubr.bf16.mxu0 0
  %6291 = vmatmul.mubr.bf16.gmra.mrb[0].mxu0 %v5759
  %v6292 = vpop.f32.mrb[0].mxu0
  %v6293 = vadd.f32 %v6004, %v6292
  %v6294 = vpop.f32.mrb[0].mxu0
  %v6295 = vpop.f32.mrb[0].mxu0
  %v6296 = vadd.f32 %v6007, %v6295
  %v6297 = vpop.f32.mrb[0].mxu0
  %6298 = vmatprep.mubr.bf16.mxu0 0
  %6299 = vmatmul.mubr.bf16.gmra.mrb[0].mxu0 %v5762
  %v6300 = vpop.f32.mrb[0].mxu0
  %v6301 = vadd.f32 %v6012, %v6300
  %v6302 = vpop.f32.mrb[0].mxu0
  %v6303 = vpop.f32.mrb[0].mxu0
  %v6304 = vadd.f32 %v6015, %v6303
  %v6305 = vpop.f32.mrb[0].mxu0
  %6306 = vmatprep.mubr.bf16.mxu0 0
  %6307 = vmatmul.mubr.bf16.gmra.mrb[0].mxu0 %v5765
  %v6308 = vpop.f32.mrb[0].mxu0
  %v6309 = vadd.f32 %v6020, %v6308
  %v6310 = vpop.f32.mrb[0].mxu0
  %v6311 = vpop.f32.mrb[0].mxu0
  %v6312 = vadd.f32 %v6023, %v6311
  %v6313 = vpop.f32.mrb[0].mxu0
  %6314 = vmatprep.mubr.bf16.mxu0 0
  %6315 = vmatmul.mubr.bf16.gmra.mrb[0].mxu0 %v5768
  %v6316 = vpop.f32.mrb[0].mxu0
  %v6317 = vadd.f32 %v6028, %v6316
  %v6318 = vpop.f32.mrb[0].mxu0
  %v6319 = vpop.f32.mrb[0].mxu0
  %v6320 = vadd.f32 %v6031, %v6319
  %v6321 = vpop.f32.mrb[0].mxu0
  %6322 = vmatprep.mubr.bf16.mxu0 0
  %6323 = vmatmul.mubr.bf16.gmra.mrb[0].mxu0 %v5771
  %v6324 = vpop.f32.mrb[0].mxu0
  %v6325 = vadd.f32 %v6036, %v6324
  %v6326 = vpop.f32.mrb[0].mxu0
  %v6327 = vpop.f32.mrb[0].mxu0
  %v6328 = vadd.f32 %v6039, %v6327
  %v6329 = vpop.f32.mrb[0].mxu0
  %6330 = vmatprep.mubr.bf16.mxu0 0
  %6331 = vmatmul.mubr.bf16.gmra.mrb[0].mxu0 %v5774
  %v6332 = vpop.f32.mrb[0].mxu0
  %v6333 = vadd.f32 %v6044, %v6332
  %v6334 = vpop.f32.mrb[0].mxu0
  %v6335 = vpop.f32.mrb[0].mxu0
  %v6336 = vadd.f32 %v6047, %v6335
  %v6337 = vpop.f32.mrb[0].mxu0
  %6338 = vmatprep.mubr.bf16.mxu0 0
  %6339 = vmatmul.mubr.bf16.gmra.mrb[0].mxu0 %v5777
  %v6340 = vpop.f32.mrb[0].mxu0
  %v6341 = vadd.f32 %v6052, %v6340
  %v6342 = vpop.f32.mrb[0].mxu0
  %v6343 = vpop.f32.mrb[0].mxu0
  %v6344 = vadd.f32 %v6055, %v6343
  %v6345 = vpop.f32.mrb[0].mxu0
  %6346 = vmatprep.mubr.bf16.mxu0 0
  %6347 = vmatmul.mubr.bf16.gmra.mrb[0].mxu0 %v5780
  %v6348 = vpop.f32.mrb[0].mxu0
  %v6349 = vadd.f32 %v6060, %v6348
  %v6350 = vpop.f32.mrb[0].mxu0
  %v6351 = vpop.f32.mrb[0].mxu0
  %v6352 = vadd.f32 %v6063, %v6351
  %v6353 = vpop.f32.mrb[0].mxu0
  %6354 = vmatprep.mubr.bf16.mxu0 0
  %6355 = vmatmul.mubr.bf16.gmra.mrb[0].mxu0 %v5783
  %v6356 = vpop.f32.mrb[0].mxu0
  %v6357 = vadd.f32 %v6068, %v6356
  %v6358 = vpop.f32.mrb[0].mxu0
  %v6359 = vpop.f32.mrb[0].mxu0
  %v6360 = vadd.f32 %v6071, %v6359
  %v6361 = vpop.f32.mrb[0].mxu0
  %6362 = vdwg.mxu0
  %v6363 = vsel %vm5030, %v6109, 0.0
  %v6364 = vsel %vm5030, %v6112, 0.0
  %v6365 = vadd.f32 %v6363, %v6364
  %v6366 = vsel %vm5030, %v6117, 0.0
  %v6367 = vadd.f32 %v6365, %v6366
  %v6368 = vsel %vm5030, %v6120, 0.0
  %v6369 = vadd.f32 %v6367, %v6368
  %v6370 = vsel %vm5030, %v6125, 0.0
  %v6371 = vadd.f32 %v6369, %v6370
  %v6372 = vsel %vm5030, %v6128, 0.0
  %v6373 = vadd.f32 %v6371, %v6372
  %v6374 = vsel %vm5030, %v6133, 0.0
  %v6375 = vadd.f32 %v6373, %v6374
  %v6376 = vsel %vm5030, %v6136, 0.0
  %v6377 = vadd.f32 %v6375, %v6376
  %v6378 = vsel %vm5030, %v6141, 0.0
  %v6379 = vadd.f32 %v6377, %v6378
  %v6380 = vsel %vm5030, %v6144, 0.0
  %v6381 = vadd.f32 %v6379, %v6380
  %v6382 = vsel %vm5030, %v6149, 0.0
  %v6383 = vadd.f32 %v6381, %v6382
  %v6384 = vsel %vm5030, %v6152, 0.0
  %v6385 = vadd.f32 %v6383, %v6384
  %v6386 = vsel %vm5030, %v6157, 0.0
  %v6387 = vadd.f32 %v6385, %v6386
  %v6388 = vsel %vm5030, %v6160, 0.0
  %v6389 = vadd.f32 %v6387, %v6388
  %v6390 = vsel %vm5030, %v6165, 0.0
  %v6391 = vadd.f32 %v6389, %v6390
  %v6392 = vsel %vm5030, %v6168, 0.0
  %v6393 = vadd.f32 %v6391, %v6392
  %v6394 = vsel %vm5030, %v6173, 0.0
  %v6395 = vadd.f32 %v6393, %v6394
  %v6396 = vsel %vm5030, %v6176, 0.0
  %v6397 = vadd.f32 %v6395, %v6396
  %v6398 = vsel %vm5030, %v6181, 0.0
  %v6399 = vadd.f32 %v6397, %v6398
  %v6400 = vsel %vm5030, %v6184, 0.0
  %v6401 = vadd.f32 %v6399, %v6400
  %v6402 = vsel %vm5030, %v6189, 0.0
  %v6403 = vadd.f32 %v6401, %v6402
  %v6404 = vsel %vm5030, %v6192, 0.0
  %v6405 = vadd.f32 %v6403, %v6404
  %v6406 = vsel %vm5030, %v6197, 0.0
  %v6407 = vadd.f32 %v6405, %v6406
  %v6408 = vsel %vm5030, %v6200, 0.0
  %v6409 = vadd.f32 %v6407, %v6408
  %v6410 = vsel %vm5030, %v6205, 0.0
  %v6411 = vadd.f32 %v6409, %v6410
  %v6412 = vsel %vm5030, %v6208, 0.0
  %v6413 = vadd.f32 %v6411, %v6412
  %v6414 = vsel %vm5030, %v6213, 0.0
  %v6415 = vadd.f32 %v6413, %v6414
  %v6416 = vsel %vm5030, %v6216, 0.0
  %v6417 = vadd.f32 %v6415, %v6416
  %v6418 = vsel %vm5030, %v6221, 0.0
  %v6419 = vadd.f32 %v6417, %v6418
  %v6420 = vsel %vm5030, %v6224, 0.0
  %v6421 = vadd.f32 %v6419, %v6420
  %v6422 = vsel %vm5030, %v6229, 0.0
  %v6423 = vadd.f32 %v6421, %v6422
  %v6424 = vsel %vm5030, %v6232, 0.0
  %v6425 = vadd.f32 %v6423, %v6424
  %v6426 = vsel %vm5030, %v6237, 0.0
  %v6427 = vadd.f32 %v6425, %v6426
  %v6428 = vsel %vm5030, %v6240, 0.0
  %v6429 = vadd.f32 %v6427, %v6428
  %v6430 = vsel %vm5030, %v6245, 0.0
  %v6431 = vadd.f32 %v6429, %v6430
  %v6432 = vsel %vm5030, %v6248, 0.0
  %v6433 = vadd.f32 %v6431, %v6432
  %v6434 = vsel %vm5030, %v6253, 0.0
  %v6435 = vadd.f32 %v6433, %v6434
  %v6436 = vsel %vm5030, %v6256, 0.0
  %v6437 = vadd.f32 %v6435, %v6436
  %v6438 = vsel %vm5030, %v6261, 0.0
  %v6439 = vadd.f32 %v6437, %v6438
  %v6440 = vsel %vm5030, %v6264, 0.0
  %v6441 = vadd.f32 %v6439, %v6440
  %v6442 = vsel %vm5030, %v6269, 0.0
  %v6443 = vadd.f32 %v6441, %v6442
  %v6444 = vsel %vm5030, %v6272, 0.0
  %v6445 = vadd.f32 %v6443, %v6444
  %v6446 = vsel %vm5030, %v6277, 0.0
  %v6447 = vadd.f32 %v6445, %v6446
  %v6448 = vsel %vm5030, %v6280, 0.0
  %v6449 = vadd.f32 %v6447, %v6448
  %v6450 = vsel %vm5030, %v6285, 0.0
  %v6451 = vadd.f32 %v6449, %v6450
  %v6452 = vsel %vm5030, %v6288, 0.0
  %v6453 = vadd.f32 %v6451, %v6452
  %v6454 = vsel %vm5030, %v6293, 0.0
  %v6455 = vadd.f32 %v6453, %v6454
  %v6456 = vsel %vm5030, %v6296, 0.0
  %v6457 = vadd.f32 %v6455, %v6456
  %v6458 = vsel %vm5030, %v6301, 0.0
  %v6459 = vadd.f32 %v6457, %v6458
  %v6460 = vsel %vm5030, %v6304, 0.0
  %v6461 = vadd.f32 %v6459, %v6460
  %v6462 = vsel %vm5030, %v6309, 0.0
  %v6463 = vadd.f32 %v6461, %v6462
  %v6464 = vsel %vm5030, %v6312, 0.0
  %v6465 = vadd.f32 %v6463, %v6464
  %v6466 = vsel %vm5030, %v6317, 0.0
  %v6467 = vadd.f32 %v6465, %v6466
  %v6468 = vsel %vm5030, %v6320, 0.0
  %v6469 = vadd.f32 %v6467, %v6468
  %v6470 = vsel %vm5030, %v6325, 0.0
  %v6471 = vadd.f32 %v6469, %v6470
  %v6472 = vsel %vm5030, %v6328, 0.0
  %v6473 = vadd.f32 %v6471, %v6472
  %v6474 = vsel %vm5030, %v6333, 0.0
  %v6475 = vadd.f32 %v6473, %v6474
  %v6476 = vsel %vm5030, %v6336, 0.0
  %v6477 = vadd.f32 %v6475, %v6476
  %v6478 = vsel %vm5030, %v6341, 0.0
  %v6479 = vadd.f32 %v6477, %v6478
  %v6480 = vsel %vm5030, %v6344, 0.0
  %v6481 = vadd.f32 %v6479, %v6480
  %v6482 = vsel %vm5030, %v6349, 0.0
  %v6483 = vadd.f32 %v6481, %v6482
  %v6484 = vsel %vm5030, %v6352, 0.0
  %v6485 = vadd.f32 %v6483, %v6484
  %v6486 = vsel %vm5030, %v6357, 0.0
  %v6487 = vadd.f32 %v6485, %v6486
  %v6488 = vsel %vm5030, %v6360, 0.0
  %v6489 = vadd.f32 %v6487, %v6488
  %v6490 = vrot.slane %v6489, 4
  %v6491 = vadd.f32 %v6489, %v6490
  %v6492 = vrot.slane %v6491, 2
  %v6493 = vadd.f32 %v6491, %v6492
  %v6494 = vrot.slane %v6493, 1
  %v6495 = vadd.f32 %v6493, %v6494
  %v6496 = vmul.f32 %v6495, 0.001953125
  %v6497 = vmul.f32 %v6109, %v6109
  %v6498 = vmul.f32 %v6112, %v6112
  %v6499 = vmul.f32 %v6117, %v6117
  %v6500 = vmul.f32 %v6120, %v6120
  %v6501 = vmul.f32 %v6125, %v6125
  %v6502 = vmul.f32 %v6128, %v6128
  %v6503 = vmul.f32 %v6133, %v6133
  %v6504 = vmul.f32 %v6136, %v6136
  %v6505 = vmul.f32 %v6141, %v6141
  %v6506 = vmul.f32 %v6144, %v6144
  %v6507 = vmul.f32 %v6149, %v6149
  %v6508 = vmul.f32 %v6152, %v6152
  %v6509 = vmul.f32 %v6157, %v6157
  %v6510 = vmul.f32 %v6160, %v6160
  %v6511 = vmul.f32 %v6165, %v6165
  %v6512 = vmul.f32 %v6168, %v6168
  %v6513 = vmul.f32 %v6173, %v6173
  %v6514 = vmul.f32 %v6176, %v6176
  %v6515 = vmul.f32 %v6181, %v6181
  %v6516 = vmul.f32 %v6184, %v6184
  %v6517 = vmul.f32 %v6189, %v6189
  %v6518 = vmul.f32 %v6192, %v6192
  %v6519 = vmul.f32 %v6197, %v6197
  %v6520 = vmul.f32 %v6200, %v6200
  %v6521 = vmul.f32 %v6205, %v6205
  %v6522 = vmul.f32 %v6208, %v6208
  %v6523 = vmul.f32 %v6213, %v6213
  %v6524 = vmul.f32 %v6216, %v6216
  %v6525 = vmul.f32 %v6221, %v6221
  %v6526 = vmul.f32 %v6224, %v6224
  %v6527 = vmul.f32 %v6229, %v6229
  %v6528 = vmul.f32 %v6232, %v6232
  %v6529 = vmul.f32 %v6237, %v6237
  %v6530 = vmul.f32 %v6240, %v6240
  %v6531 = vmul.f32 %v6245, %v6245
  %v6532 = vmul.f32 %v6248, %v6248
  %v6533 = vmul.f32 %v6253, %v6253
  %v6534 = vmul.f32 %v6256, %v6256
  %v6535 = vmul.f32 %v6261, %v6261
  %v6536 = vmul.f32 %v6264, %v6264
  %v6537 = vmul.f32 %v6269, %v6269
  %v6538 = vmul.f32 %v6272, %v6272
  %v6539 = vmul.f32 %v6277, %v6277
  %v6540 = vmul.f32 %v6280, %v6280
  %v6541 = vmul.f32 %v6285, %v6285
  %v6542 = vmul.f32 %v6288, %v6288
  %v6543 = vmul.f32 %v6293, %v6293
  %v6544 = vmul.f32 %v6296, %v6296
  %v6545 = vmul.f32 %v6301, %v6301
  %v6546 = vmul.f32 %v6304, %v6304
  %v6547 = vmul.f32 %v6309, %v6309
  %v6548 = vmul.f32 %v6312, %v6312
  %v6549 = vmul.f32 %v6317, %v6317
  %v6550 = vmul.f32 %v6320, %v6320
  %v6551 = vmul.f32 %v6325, %v6325
  %v6552 = vmul.f32 %v6328, %v6328
  %v6553 = vmul.f32 %v6333, %v6333
  %v6554 = vmul.f32 %v6336, %v6336
  %v6555 = vmul.f32 %v6341, %v6341
  %v6556 = vmul.f32 %v6344, %v6344
  %v6557 = vmul.f32 %v6349, %v6349
  %v6558 = vmul.f32 %v6352, %v6352
  %v6559 = vmul.f32 %v6357, %v6357
  %v6560 = vmul.f32 %v6360, %v6360
  %v6561 = vsel %vm5030, %v6497, 0.0
  %v6562 = vsel %vm5030, %v6498, 0.0
  %v6563 = vadd.f32 %v6561, %v6562
  %v6564 = vsel %vm5030, %v6499, 0.0
  %v6565 = vadd.f32 %v6563, %v6564
  %v6566 = vsel %vm5030, %v6500, 0.0
  %v6567 = vadd.f32 %v6565, %v6566
  %v6568 = vsel %vm5030, %v6501, 0.0
  %v6569 = vadd.f32 %v6567, %v6568
  %v6570 = vsel %vm5030, %v6502, 0.0
  %v6571 = vadd.f32 %v6569, %v6570
  %v6572 = vsel %vm5030, %v6503, 0.0
  %v6573 = vadd.f32 %v6571, %v6572
  %v6574 = vsel %vm5030, %v6504, 0.0
  %v6575 = vadd.f32 %v6573, %v6574
  %v6576 = vsel %vm5030, %v6505, 0.0
  %v6577 = vadd.f32 %v6575, %v6576
  %v6578 = vsel %vm5030, %v6506, 0.0
  %v6579 = vadd.f32 %v6577, %v6578
  %v6580 = vsel %vm5030, %v6507, 0.0
  %v6581 = vadd.f32 %v6579, %v6580
  %v6582 = vsel %vm5030, %v6508, 0.0
  %v6583 = vadd.f32 %v6581, %v6582
  %v6584 = vsel %vm5030, %v6509, 0.0
  %v6585 = vadd.f32 %v6583, %v6584
  %v6586 = vsel %vm5030, %v6510, 0.0
  %v6587 = vadd.f32 %v6585, %v6586
  %v6588 = vsel %vm5030, %v6511, 0.0
  %v6589 = vadd.f32 %v6587, %v6588
  %v6590 = vsel %vm5030, %v6512, 0.0
  %v6591 = vadd.f32 %v6589, %v6590
  %v6592 = vsel %vm5030, %v6513, 0.0
  %v6593 = vadd.f32 %v6591, %v6592
  %v6594 = vsel %vm5030, %v6514, 0.0
  %v6595 = vadd.f32 %v6593, %v6594
  %v6596 = vsel %vm5030, %v6515, 0.0
  %v6597 = vadd.f32 %v6595, %v6596
  %v6598 = vsel %vm5030, %v6516, 0.0
  %v6599 = vadd.f32 %v6597, %v6598
  %v6600 = vsel %vm5030, %v6517, 0.0
  %v6601 = vadd.f32 %v6599, %v6600
  %v6602 = vsel %vm5030, %v6518, 0.0
  %v6603 = vadd.f32 %v6601, %v6602
  %v6604 = vsel %vm5030, %v6519, 0.0
  %v6605 = vadd.f32 %v6603, %v6604
  %v6606 = vsel %vm5030, %v6520, 0.0
  %v6607 = vadd.f32 %v6605, %v6606
  %v6608 = vsel %vm5030, %v6521, 0.0
  %v6609 = vadd.f32 %v6607, %v6608
  %v6610 = vsel %vm5030, %v6522, 0.0
  %v6611 = vadd.f32 %v6609, %v6610
  %v6612 = vsel %vm5030, %v6523, 0.0
  %v6613 = vadd.f32 %v6611, %v6612
  %v6614 = vsel %vm5030, %v6524, 0.0
  %v6615 = vadd.f32 %v6613, %v6614
  %v6616 = vsel %vm5030, %v6525, 0.0
  %v6617 = vadd.f32 %v6615, %v6616
  %v6618 = vsel %vm5030, %v6526, 0.0
  %v6619 = vadd.f32 %v6617, %v6618
  %v6620 = vsel %vm5030, %v6527, 0.0
  %v6621 = vadd.f32 %v6619, %v6620
  %v6622 = vsel %vm5030, %v6528, 0.0
  %v6623 = vadd.f32 %v6621, %v6622
  %v6624 = vsel %vm5030, %v6529, 0.0
  %v6625 = vadd.f32 %v6623, %v6624
  %v6626 = vsel %vm5030, %v6530, 0.0
  %v6627 = vadd.f32 %v6625, %v6626
  %v6628 = vsel %vm5030, %v6531, 0.0
  %v6629 = vadd.f32 %v6627, %v6628
  %v6630 = vsel %vm5030, %v6532, 0.0
  %v6631 = vadd.f32 %v6629, %v6630
  %v6632 = vsel %vm5030, %v6533, 0.0
  %v6633 = vadd.f32 %v6631, %v6632
  %v6634 = vsel %vm5030, %v6534, 0.0
  %v6635 = vadd.f32 %v6633, %v6634
  %v6636 = vsel %vm5030, %v6535, 0.0
  %v6637 = vadd.f32 %v6635, %v6636
  %v6638 = vsel %vm5030, %v6536, 0.0
  %v6639 = vadd.f32 %v6637, %v6638
  %v6640 = vsel %vm5030, %v6537, 0.0
  %v6641 = vadd.f32 %v6639, %v6640
  %v6642 = vsel %vm5030, %v6538, 0.0
  %v6643 = vadd.f32 %v6641, %v6642
  %v6644 = vsel %vm5030, %v6539, 0.0
  %v6645 = vadd.f32 %v6643, %v6644
  %v6646 = vsel %vm5030, %v6540, 0.0
  %v6647 = vadd.f32 %v6645, %v6646
  %v6648 = vsel %vm5030, %v6541, 0.0
  %v6649 = vadd.f32 %v6647, %v6648
  %v6650 = vsel %vm5030, %v6542, 0.0
  %v6651 = vadd.f32 %v6649, %v6650
  %v6652 = vsel %vm5030, %v6543, 0.0
  %v6653 = vadd.f32 %v6651, %v6652
  %v6654 = vsel %vm5030, %v6544, 0.0
  %v6655 = vadd.f32 %v6653, %v6654
  %v6656 = vsel %vm5030, %v6545, 0.0
  %v6657 = vadd.f32 %v6655, %v6656
  %v6658 = vsel %vm5030, %v6546, 0.0
  %v6659 = vadd.f32 %v6657, %v6658
  %v6660 = vsel %vm5030, %v6547, 0.0
  %v6661 = vadd.f32 %v6659, %v6660
  %v6662 = vsel %vm5030, %v6548, 0.0
  %v6663 = vadd.f32 %v6661, %v6662
  %v6664 = vsel %vm5030, %v6549, 0.0
  %v6665 = vadd.f32 %v6663, %v6664
  %v6666 = vsel %vm5030, %v6550, 0.0
  %v6667 = vadd.f32 %v6665, %v6666
  %v6668 = vsel %vm5030, %v6551, 0.0
  %v6669 = vadd.f32 %v6667, %v6668
  %v6670 = vsel %vm5030, %v6552, 0.0
  %v6671 = vadd.f32 %v6669, %v6670
  %v6672 = vsel %vm5030, %v6553, 0.0
  %v6673 = vadd.f32 %v6671, %v6672
  %v6674 = vsel %vm5030, %v6554, 0.0
  %v6675 = vadd.f32 %v6673, %v6674
  %v6676 = vsel %vm5030, %v6555, 0.0
  %v6677 = vadd.f32 %v6675, %v6676
  %v6678 = vsel %vm5030, %v6556, 0.0
  %v6679 = vadd.f32 %v6677, %v6678
  %v6680 = vsel %vm5030, %v6557, 0.0
  %v6681 = vadd.f32 %v6679, %v6680
  %v6682 = vsel %vm5030, %v6558, 0.0
  %v6683 = vadd.f32 %v6681, %v6682
  %v6684 = vsel %vm5030, %v6559, 0.0
  %v6685 = vadd.f32 %v6683, %v6684
  %v6686 = vsel %vm5030, %v6560, 0.0
  %v6687 = vadd.f32 %v6685, %v6686
  %v6688 = vrot.slane %v6687, 4
  %v6689 = vadd.f32 %v6687, %v6688
  %v6690 = vrot.slane %v6689, 2
  %v6691 = vadd.f32 %v6689, %v6690
  %v6692 = vrot.slane %v6691, 1
  %v6693 = vadd.f32 %v6691, %v6692
  %v6694 = vmul.f32 %v6693, 0.001953125
  %v6695 = vmul.f32 %v6496, %v6496
  %v6696 = vsub.f32 %v6694, %v6695
  %v6697 = vmax.f32 %v6696, 0.0
  %v6698 = vadd.f32 %v6697, 1e-05
  %v6699 = vrsqrt.pop %v6698
  %v6700 = vld [vmem:[%s4] sm:$0x1]
  %v6701 = vmul.f32 %v6700, %v6699
  %v6702 = vld [vmem:[%s5] sm:$0x1]
  %v6703 = vmul.f32 %v6496, %v6701
  %v6704 = vsub.f32 %v6702, %v6703
  %v6706 = vlaneseq
  %v6707 = vshrl.u32 %v6706, 7
  %v6708 = vsub.s32 0, %v6707
  %v6709 = vrot.slane %v6701, %v6708
  %v6711 = vmul.f32 %v6109, %v6709
  %v6712 = vmul.f32 %v6112, %v6709
  %v6713 = vmul.f32 %v6117, %v6709
  %v6714 = vmul.f32 %v6120, %v6709
  %v6715 = vmul.f32 %v6125, %v6709
  %v6716 = vmul.f32 %v6128, %v6709
  %v6717 = vmul.f32 %v6133, %v6709
  %v6718 = vmul.f32 %v6136, %v6709
  %v6719 = vmul.f32 %v6141, %v6709
  %v6720 = vmul.f32 %v6144, %v6709
  %v6721 = vmul.f32 %v6149, %v6709
  %v6722 = vmul.f32 %v6152, %v6709
  %v6723 = vmul.f32 %v6157, %v6709
  %v6724 = vmul.f32 %v6160, %v6709
  %v6725 = vmul.f32 %v6165, %v6709
  %v6726 = vmul.f32 %v6168, %v6709
  %v6727 = vmul.f32 %v6173, %v6709
  %v6728 = vmul.f32 %v6176, %v6709
  %v6729 = vmul.f32 %v6181, %v6709
  %v6730 = vmul.f32 %v6184, %v6709
  %v6731 = vmul.f32 %v6189, %v6709
  %v6732 = vmul.f32 %v6192, %v6709
  %v6733 = vmul.f32 %v6197, %v6709
  %v6734 = vmul.f32 %v6200, %v6709
  %v6735 = vmul.f32 %v6205, %v6709
  %v6736 = vmul.f32 %v6208, %v6709
  %v6737 = vmul.f32 %v6213, %v6709
  %v6738 = vmul.f32 %v6216, %v6709
  %v6739 = vmul.f32 %v6221, %v6709
  %v6740 = vmul.f32 %v6224, %v6709
  %v6741 = vmul.f32 %v6229, %v6709
  %v6742 = vmul.f32 %v6232, %v6709
  %v6743 = vmul.f32 %v6237, %v6709
  %v6744 = vmul.f32 %v6240, %v6709
  %v6745 = vmul.f32 %v6245, %v6709
  %v6746 = vmul.f32 %v6248, %v6709
  %v6747 = vmul.f32 %v6253, %v6709
  %v6748 = vmul.f32 %v6256, %v6709
  %v6749 = vmul.f32 %v6261, %v6709
  %v6750 = vmul.f32 %v6264, %v6709
  %v6751 = vmul.f32 %v6269, %v6709
  %v6752 = vmul.f32 %v6272, %v6709
  %v6753 = vmul.f32 %v6277, %v6709
  %v6754 = vmul.f32 %v6280, %v6709
  %v6755 = vmul.f32 %v6285, %v6709
  %v6756 = vmul.f32 %v6288, %v6709
  %v6757 = vmul.f32 %v6293, %v6709
  %v6758 = vmul.f32 %v6296, %v6709
  %v6759 = vmul.f32 %v6301, %v6709
  %v6760 = vmul.f32 %v6304, %v6709
  %v6761 = vmul.f32 %v6309, %v6709
  %v6762 = vmul.f32 %v6312, %v6709
  %v6763 = vmul.f32 %v6317, %v6709
  %v6764 = vmul.f32 %v6320, %v6709
  %v6765 = vmul.f32 %v6325, %v6709
  %v6766 = vmul.f32 %v6328, %v6709
  %v6767 = vmul.f32 %v6333, %v6709
  %v6768 = vmul.f32 %v6336, %v6709
  %v6769 = vmul.f32 %v6341, %v6709
  %v6770 = vmul.f32 %v6344, %v6709
  %v6771 = vmul.f32 %v6349, %v6709
  %v6772 = vmul.f32 %v6352, %v6709
  %v6773 = vmul.f32 %v6357, %v6709
  %v6774 = vmul.f32 %v6360, %v6709
  %v6776 = vlaneseq
  %v6777 = vshrl.u32 %v6776, 7
  %v6778 = vsub.s32 0, %v6777
  %v6779 = vrot.slane %v6704, %v6778
  %v6781 = vadd.f32 %v6711, %v6779
  %v6782 = vadd.f32 %v6712, %v6779
  %v6783 = vadd.f32 %v6713, %v6779
  %v6784 = vadd.f32 %v6714, %v6779
  %v6785 = vadd.f32 %v6715, %v6779
  %v6786 = vadd.f32 %v6716, %v6779
  %v6787 = vadd.f32 %v6717, %v6779
  %v6788 = vadd.f32 %v6718, %v6779
  %v6789 = vadd.f32 %v6719, %v6779
  %v6790 = vadd.f32 %v6720, %v6779
  %v6791 = vadd.f32 %v6721, %v6779
  %v6792 = vadd.f32 %v6722, %v6779
  %v6793 = vadd.f32 %v6723, %v6779
  %v6794 = vadd.f32 %v6724, %v6779
  %v6795 = vadd.f32 %v6725, %v6779
  %v6796 = vadd.f32 %v6726, %v6779
  %v6797 = vadd.f32 %v6727, %v6779
  %v6798 = vadd.f32 %v6728, %v6779
  %v6799 = vadd.f32 %v6729, %v6779
  %v6800 = vadd.f32 %v6730, %v6779
  %v6801 = vadd.f32 %v6731, %v6779
  %v6802 = vadd.f32 %v6732, %v6779
  %v6803 = vadd.f32 %v6733, %v6779
  %v6804 = vadd.f32 %v6734, %v6779
  %v6805 = vadd.f32 %v6735, %v6779
  %v6806 = vadd.f32 %v6736, %v6779
  %v6807 = vadd.f32 %v6737, %v6779
  %v6808 = vadd.f32 %v6738, %v6779
  %v6809 = vadd.f32 %v6739, %v6779
  %v6810 = vadd.f32 %v6740, %v6779
  %v6811 = vadd.f32 %v6741, %v6779
  %v6812 = vadd.f32 %v6742, %v6779
  %v6813 = vadd.f32 %v6743, %v6779
  %v6814 = vadd.f32 %v6744, %v6779
  %v6815 = vadd.f32 %v6745, %v6779
  %v6816 = vadd.f32 %v6746, %v6779
  %v6817 = vadd.f32 %v6747, %v6779
  %v6818 = vadd.f32 %v6748, %v6779
  %v6819 = vadd.f32 %v6749, %v6779
  %v6820 = vadd.f32 %v6750, %v6779
  %v6821 = vadd.f32 %v6751, %v6779
  %v6822 = vadd.f32 %v6752, %v6779
  %v6823 = vadd.f32 %v6753, %v6779
  %v6824 = vadd.f32 %v6754, %v6779
  %v6825 = vadd.f32 %v6755, %v6779
  %v6826 = vadd.f32 %v6756, %v6779
  %v6827 = vadd.f32 %v6757, %v6779
  %v6828 = vadd.f32 %v6758, %v6779
  %v6829 = vadd.f32 %v6759, %v6779
  %v6830 = vadd.f32 %v6760, %v6779
  %v6831 = vadd.f32 %v6761, %v6779
  %v6832 = vadd.f32 %v6762, %v6779
  %v6833 = vadd.f32 %v6763, %v6779
  %v6834 = vadd.f32 %v6764, %v6779
  %v6835 = vadd.f32 %v6765, %v6779
  %v6836 = vadd.f32 %v6766, %v6779
  %v6837 = vadd.f32 %v6767, %v6779
  %v6838 = vadd.f32 %v6768, %v6779
  %v6839 = vadd.f32 %v6769, %v6779
  %v6840 = vadd.f32 %v6770, %v6779
  %v6841 = vadd.f32 %v6771, %v6779
  %v6842 = vadd.f32 %v6772, %v6779
  %v6843 = vadd.f32 %v6773, %v6779
  %v6844 = vadd.f32 %v6774, %v6779
  %v6845 = vmax.f32 %v6781, 0.0
  %v6846 = vmax.f32 %v6782, 0.0
  %v6847 = vmax.f32 %v6783, 0.0
  %v6848 = vmax.f32 %v6784, 0.0
  %v6849 = vmax.f32 %v6785, 0.0
  %v6850 = vmax.f32 %v6786, 0.0
  %v6851 = vmax.f32 %v6787, 0.0
  %v6852 = vmax.f32 %v6788, 0.0
  %v6853 = vmax.f32 %v6789, 0.0
  %v6854 = vmax.f32 %v6790, 0.0
  %v6855 = vmax.f32 %v6791, 0.0
  %v6856 = vmax.f32 %v6792, 0.0
  %v6857 = vmax.f32 %v6793, 0.0
  %v6858 = vmax.f32 %v6794, 0.0
  %v6859 = vmax.f32 %v6795, 0.0
  %v6860 = vmax.f32 %v6796, 0.0
  %v6861 = vmax.f32 %v6797, 0.0
  %v6862 = vmax.f32 %v6798, 0.0
  %v6863 = vmax.f32 %v6799, 0.0
  %v6864 = vmax.f32 %v6800, 0.0
  %v6865 = vmax.f32 %v6801, 0.0
  %v6866 = vmax.f32 %v6802, 0.0
  %v6867 = vmax.f32 %v6803, 0.0
  %v6868 = vmax.f32 %v6804, 0.0
  %v6869 = vmax.f32 %v6805, 0.0
  %v6870 = vmax.f32 %v6806, 0.0
  %v6871 = vmax.f32 %v6807, 0.0
  %v6872 = vmax.f32 %v6808, 0.0
  %v6873 = vmax.f32 %v6809, 0.0
  %v6874 = vmax.f32 %v6810, 0.0
  %v6875 = vmax.f32 %v6811, 0.0
  %v6876 = vmax.f32 %v6812, 0.0
  %v6877 = vmax.f32 %v6813, 0.0
  %v6878 = vmax.f32 %v6814, 0.0
  %v6879 = vmax.f32 %v6815, 0.0
  %v6880 = vmax.f32 %v6816, 0.0
  %v6881 = vmax.f32 %v6817, 0.0
  %v6882 = vmax.f32 %v6818, 0.0
  %v6883 = vmax.f32 %v6819, 0.0
  %v6884 = vmax.f32 %v6820, 0.0
  %v6885 = vmax.f32 %v6821, 0.0
  %v6886 = vmax.f32 %v6822, 0.0
  %v6887 = vmax.f32 %v6823, 0.0
  %v6888 = vmax.f32 %v6824, 0.0
  %v6889 = vmax.f32 %v6825, 0.0
  %v6890 = vmax.f32 %v6826, 0.0
  %v6891 = vmax.f32 %v6827, 0.0
  %v6892 = vmax.f32 %v6828, 0.0
  %v6893 = vmax.f32 %v6829, 0.0
  %v6894 = vmax.f32 %v6830, 0.0
  %v6895 = vmax.f32 %v6831, 0.0
  %v6896 = vmax.f32 %v6832, 0.0
  %v6897 = vmax.f32 %v6833, 0.0
  %v6898 = vmax.f32 %v6834, 0.0
  %v6899 = vmax.f32 %v6835, 0.0
  %v6900 = vmax.f32 %v6836, 0.0
  %v6901 = vmax.f32 %v6837, 0.0
  %v6902 = vmax.f32 %v6838, 0.0
  %v6903 = vmax.f32 %v6839, 0.0
  %v6904 = vmax.f32 %v6840, 0.0
  %v6905 = vmax.f32 %v6841, 0.0
  %v6906 = vmax.f32 %v6842, 0.0
  %v6907 = vmax.f32 %v6843, 0.0
  %v6908 = vmax.f32 %v6844, 0.0
  %vm6909 = vcmask 257024
  %6910 = vst.msk [vmem:[#allocation2] sm:$0xf] %vm6909, 0
  %6911 = vst.msk [vmem:[#allocation2 + $0x4] sm:$0xf] %vm6909, 0
  %vm6912 = vcmask 253952
  %6913 = vst.msk [vmem:[#allocation2 + $0x8] sm:$0x1] %vm6912, 0
  %6914 = vst.msk [vmem:[#allocation2 + $0xd8] sm:$0xf] %vm6909, 0
  %6915 = vst.msk [vmem:[#allocation2 + $0xdc] sm:$0xf] %vm6909, 0
  %6916 = vst.msk [vmem:[#allocation2 + $0xe0] sm:$0x1] %vm6912, 0
  %s6917 = scalar_lea.vmem [#allocation2], 204
  %6918 = vst.msk [vmem:[%s6917] sm:$0xf] %vm6909, 0
  %6919 = vst.msk [vmem:[%s6917 + $0x4] sm:$0xf] %vm6909, 0
  %6920 = vst.msk [vmem:[%s6917 + $0x8] sm:$0x1] %vm6912, 0
  %6921 = vst.msk [vmem:[%s6917 + $0xd8] sm:$0xf] %vm6909, 0
  %6922 = vst.msk [vmem:[%s6917 + $0xdc] sm:$0xf] %vm6909, 0
  %6923 = vst.msk [vmem:[%s6917 + $0xe0] sm:$0x1] %vm6912, 0
  %vm6924 = vcmask 253952
  %vm6925 = vsmask.f32 256
  %vm6926 = vmand %vm6924, %vm6925
  %v6927 = vld [vmem:[#allocation2] sm:$0x1]
  %v6928 = vsel %vm6926, 0, %v6927
  %6929 = vst [vmem:[#allocation2] sm:$0x1] %v6928
  %v6930 = vld [vmem:[#allocation2 + $0xc] sm:$0x1]
  %v6931 = vsel %vm6926, 0, %v6930
  %6932 = vst [vmem:[#allocation2 + $0xc] sm:$0x1] %v6931
  %v6933 = vld [vmem:[#allocation2 + $0x18] sm:$0x1]
  %v6934 = vsel %vm6926, 0, %v6933
  %6935 = vst [vmem:[#allocation2 + $0x18] sm:$0x1] %v6934
  %v6936 = vld [vmem:[#allocation2 + $0x24] sm:$0x1]
  %v6937 = vsel %vm6926, 0, %v6936
  %6938 = vst [vmem:[#allocation2 + $0x24] sm:$0x1] %v6937
  %v6939 = vld [vmem:[#allocation2 + $0x30] sm:$0x1]
  %v6940 = vsel %vm6926, 0, %v6939
  %6941 = vst [vmem:[#allocation2 + $0x30] sm:$0x1] %v6940
  %v6942 = vld [vmem:[#allocation2 + $0x3c] sm:$0x1]
  %v6943 = vsel %vm6926, 0, %v6942
  %6944 = vst [vmem:[#allocation2 + $0x3c] sm:$0x1] %v6943
  %v6945 = vld [vmem:[#allocation2 + $0x48] sm:$0x1]
  %v6946 = vsel %vm6926, 0, %v6945
  %6947 = vst [vmem:[#allocation2 + $0x48] sm:$0x1] %v6946
  %v6948 = vld [vmem:[#allocation2 + $0x54] sm:$0x1]
  %v6949 = vsel %vm6926, 0, %v6948
  %6950 = vst [vmem:[#allocation2 + $0x54] sm:$0x1] %v6949
  %v6951 = vld [vmem:[#allocation2 + $0x60] sm:$0x1]
  %v6952 = vsel %vm6926, 0, %v6951
  %6953 = vst [vmem:[#allocation2 + $0x60] sm:$0x1] %v6952
  %v6954 = vld [vmem:[#allocation2 + $0x6c] sm:$0x1]
  %v6955 = vsel %vm6926, 0, %v6954
  %6956 = vst [vmem:[#allocation2 + $0x6c] sm:$0x1] %v6955
  %v6957 = vld [vmem:[#allocation2 + $0x78] sm:$0x1]
  %v6958 = vsel %vm6926, 0, %v6957
  %6959 = vst [vmem:[#allocation2 + $0x78] sm:$0x1] %v6958
  %v6960 = vld [vmem:[#allocation2 + $0x84] sm:$0x1]
  %v6961 = vsel %vm6926, 0, %v6960
  %6962 = vst [vmem:[#allocation2 + $0x84] sm:$0x1] %v6961
  %v6963 = vld [vmem:[#allocation2 + $0x90] sm:$0x1]
  %v6964 = vsel %vm6926, 0, %v6963
  %6965 = vst [vmem:[#allocation2 + $0x90] sm:$0x1] %v6964
  %v6966 = vld [vmem:[#allocation2 + $0x9c] sm:$0x1]
  %v6967 = vsel %vm6926, 0, %v6966
  %6968 = vst [vmem:[#allocation2 + $0x9c] sm:$0x1] %v6967
  %v6969 = vld [vmem:[#allocation2 + $0xa8] sm:$0x1]
  %v6970 = vsel %vm6926, 0, %v6969
  %6971 = vst [vmem:[#allocation2 + $0xa8] sm:$0x1] %v6970
  %v6972 = vld [vmem:[#allocation2 + $0xb4] sm:$0x1]
  %v6973 = vsel %vm6926, 0, %v6972
  %6974 = vst [vmem:[#allocation2 + $0xb4] sm:$0x1] %v6973
  %v6975 = vld [vmem:[#allocation2 + $0xc0] sm:$0x1]
  %v6976 = vsel %vm6926, 0, %v6975
  %6977 = vst [vmem:[#allocation2 + $0xc0] sm:$0x1] %v6976
  %v6978 = vld [vmem:[#allocation2 + $0xcc] sm:$0x1]
  %v6979 = vsel %vm6926, 0, %v6978
  %6980 = vst [vmem:[#allocation2 + $0xcc] sm:$0x1] %v6979
  %v6981 = vld [vmem:[#allocation2 + $0xd8] sm:$0x1]
  %v6982 = vsel %vm6926, 0, %v6981
  %6983 = vst [vmem:[#allocation2 + $0xd8] sm:$0x1] %v6982
  %v6984 = vld [vmem:[#allocation2 + $0xe4] sm:$0x1]
  %v6985 = vsel %vm6926, 0, %v6984
  %6986 = vst [vmem:[#allocation2 + $0xe4] sm:$0x1] %v6985
  %v6987 = vld [vmem:[#allocation2 + $0xf0] sm:$0x1]
  %v6988 = vsel %vm6926, 0, %v6987
  %6989 = vst [vmem:[#allocation2 + $0xf0] sm:$0x1] %v6988
  %v6990 = vld [vmem:[#allocation2 + $0xfc] sm:$0x1]
  %v6991 = vsel %vm6926, 0, %v6990
  %6992 = vst [vmem:[#allocation2 + $0xfc] sm:$0x1] %v6991
  %v6993 = vld [vmem:[#allocation2 + $0x108] sm:$0x1]
  %v6994 = vsel %vm6926, 0, %v6993
  %6995 = vst [vmem:[#allocation2 + $0x108] sm:$0x1] %v6994
  %v6996 = vld [vmem:[#allocation2 + $0x114] sm:$0x1]
  %v6997 = vsel %vm6926, 0, %v6996
  %6998 = vst [vmem:[#allocation2 + $0x114] sm:$0x1] %v6997
  %v6999 = vld [vmem:[#allocation2 + $0x120] sm:$0x1]
  %v7000 = vsel %vm6926, 0, %v6999
  %7001 = vst [vmem:[#allocation2 + $0x120] sm:$0x1] %v7000
  %v7002 = vld [vmem:[#allocation2 + $0x12c] sm:$0x1]
  %v7003 = vsel %vm6926, 0, %v7002
  %7004 = vst [vmem:[#allocation2 + $0x12c] sm:$0x1] %v7003
  %v7005 = vld [vmem:[#allocation2 + $0x138] sm:$0x1]
  %v7006 = vsel %vm6926, 0, %v7005
  %7007 = vst [vmem:[#allocation2 + $0x138] sm:$0x1] %v7006
  %v7008 = vld [vmem:[#allocation2 + $0x144] sm:$0x1]
  %v7009 = vsel %vm6926, 0, %v7008
  %7010 = vst [vmem:[#allocation2 + $0x144] sm:$0x1] %v7009
  %v7011 = vld [vmem:[#allocation2 + $0x150] sm:$0x1]
  %v7012 = vsel %vm6926, 0, %v7011
  %7013 = vst [vmem:[#allocation2 + $0x150] sm:$0x1] %v7012
  %v7014 = vld [vmem:[#allocation2 + $0x15c] sm:$0x1]
  %v7015 = vsel %vm6926, 0, %v7014
  %7016 = vst [vmem:[#allocation2 + $0x15c] sm:$0x1] %v7015
  %v7017 = vld [vmem:[#allocation2 + $0x168] sm:$0x1]
  %v7018 = vsel %vm6926, 0, %v7017
  %7019 = vst [vmem:[#allocation2 + $0x168] sm:$0x1] %v7018
  %v7020 = vld [vmem:[#allocation2 + $0x174] sm:$0x1]
  %v7021 = vsel %vm6926, 0, %v7020
  %7022 = vst [vmem:[#allocation2 + $0x174] sm:$0x1] %v7021
  %v7023 = vld [vmem:[#allocation2 + $0x180] sm:$0x1]
  %v7024 = vsel %vm6926, 0, %v7023
  %7025 = vst [vmem:[#allocation2 + $0x180] sm:$0x1] %v7024
  %v7026 = vld [vmem:[#allocation2 + $0x18c] sm:$0x1]
  %v7027 = vsel %vm6926, 0, %v7026
  %7028 = vst [vmem:[#allocation2 + $0x18c] sm:$0x1] %v7027
  %v7029 = vld [vmem:[#allocation2 + $0x198] sm:$0x1]
  %v7030 = vsel %vm6926, 0, %v7029
  %7031 = vst [vmem:[#allocation2 + $0x198] sm:$0x1] %v7030
  %v7032 = vld [vmem:[#allocation2 + $0x1a4] sm:$0x1]
  %v7033 = vsel %vm6926, 0, %v7032
  %7034 = vst [vmem:[#allocation2 + $0x1a4] sm:$0x1] %v7033
  %vm7035 = vsmask.f32 7938
  %vm7036 = vmand %vm6924, %vm7035
  %v7037 = vld [vmem:[#allocation2 + $0x8] sm:$0x1]
  %v7038 = vsel %vm7036, 0, %v7037
  %7039 = vst [vmem:[#allocation2 + $0x8] sm:$0x1] %v7038
  %v7040 = vld [vmem:[#allocation2 + $0x14] sm:$0x1]
  %v7041 = vsel %vm7036, 0, %v7040
  %7042 = vst [vmem:[#allocation2 + $0x14] sm:$0x1] %v7041
  %v7043 = vld [vmem:[#allocation2 + $0x20] sm:$0x1]
  %v7044 = vsel %vm7036, 0, %v7043
  %7045 = vst [vmem:[#allocation2 + $0x20] sm:$0x1] %v7044
  %v7046 = vld [vmem:[#allocation2 + $0x2c] sm:$0x1]
  %v7047 = vsel %vm7036, 0, %v7046
  %7048 = vst [vmem:[#allocation2 + $0x2c] sm:$0x1] %v7047
  %v7049 = vld [vmem:[#allocation2 + $0x38] sm:$0x1]
  %v7050 = vsel %vm7036, 0, %v7049
  %7051 = vst [vmem:[#allocation2 + $0x38] sm:$0x1] %v7050
  %v7052 = vld [vmem:[#allocation2 + $0x44] sm:$0x1]
  %v7053 = vsel %vm7036, 0, %v7052
  %7054 = vst [vmem:[#allocation2 + $0x44] sm:$0x1] %v7053
  %v7055 = vld [vmem:[#allocation2 + $0x50] sm:$0x1]
  %v7056 = vsel %vm7036, 0, %v7055
  %7057 = vst [vmem:[#allocation2 + $0x50] sm:$0x1] %v7056
  %v7058 = vld [vmem:[#allocation2 + $0x5c] sm:$0x1]
  %v7059 = vsel %vm7036, 0, %v7058
  %7060 = vst [vmem:[#allocation2 + $0x5c] sm:$0x1] %v7059
  %v7061 = vld [vmem:[#allocation2 + $0x68] sm:$0x1]
  %v7062 = vsel %vm7036, 0, %v7061
  %7063 = vst [vmem:[#allocation2 + $0x68] sm:$0x1] %v7062
  %v7064 = vld [vmem:[#allocation2 + $0x74] sm:$0x1]
  %v7065 = vsel %vm7036, 0, %v7064
  %7066 = vst [vmem:[#allocation2 + $0x74] sm:$0x1] %v7065
  %v7067 = vld [vmem:[#allocation2 + $0x80] sm:$0x1]
  %v7068 = vsel %vm7036, 0, %v7067
  %7069 = vst [vmem:[#allocation2 + $0x80] sm:$0x1] %v7068
  %v7070 = vld [vmem:[#allocation2 + $0x8c] sm:$0x1]
  %v7071 = vsel %vm7036, 0, %v7070
  %7072 = vst [vmem:[#allocation2 + $0x8c] sm:$0x1] %v7071
  %v7073 = vld [vmem:[#allocation2 + $0x98] sm:$0x1]
  %v7074 = vsel %vm7036, 0, %v7073
  %7075 = vst [vmem:[#allocation2 + $0x98] sm:$0x1] %v7074
  %v7076 = vld [vmem:[#allocation2 + $0xa4] sm:$0x1]
  %v7077 = vsel %vm7036, 0, %v7076
  %7078 = vst [vmem:[#allocation2 + $0xa4] sm:$0x1] %v7077
  %v7079 = vld [vmem:[#allocation2 + $0xb0] sm:$0x1]
  %v7080 = vsel %vm7036, 0, %v7079
  %7081 = vst [vmem:[#allocation2 + $0xb0] sm:$0x1] %v7080
  %v7082 = vld [vmem:[#allocation2 + $0xbc] sm:$0x1]
  %v7083 = vsel %vm7036, 0, %v7082
  %7084 = vst [vmem:[#allocation2 + $0xbc] sm:$0x1] %v7083
  %v7085 = vld [vmem:[#allocation2 + $0xc8] sm:$0x1]
  %v7086 = vsel %vm7036, 0, %v7085
  %7087 = vst [vmem:[#allocation2 + $0xc8] sm:$0x1] %v7086
  %v7088 = vld [vmem:[#allocation2 + $0xd4] sm:$0x1]
  %v7089 = vsel %vm7036, 0, %v7088
  %7090 = vst [vmem:[#allocation2 + $0xd4] sm:$0x1] %v7089
  %v7091 = vld [vmem:[#allocation2 + $0xe0] sm:$0x1]
  %v7092 = vsel %vm7036, 0, %v7091
  %7093 = vst [vmem:[#allocation2 + $0xe0] sm:$0x1] %v7092
  %v7094 = vld [vmem:[#allocation2 + $0xec] sm:$0x1]
  %v7095 = vsel %vm7036, 0, %v7094
  %7096 = vst [vmem:[#allocation2 + $0xec] sm:$0x1] %v7095
  %v7097 = vld [vmem:[#allocation2 + $0xf8] sm:$0x1]
  %v7098 = vsel %vm7036, 0, %v7097
  %7099 = vst [vmem:[#allocation2 + $0xf8] sm:$0x1] %v7098
  %v7100 = vld [vmem:[#allocation2 + $0x104] sm:$0x1]
  %v7101 = vsel %vm7036, 0, %v7100
  %7102 = vst [vmem:[#allocation2 + $0x104] sm:$0x1] %v7101
  %v7103 = vld [vmem:[#allocation2 + $0x110] sm:$0x1]
  %v7104 = vsel %vm7036, 0, %v7103
  %7105 = vst [vmem:[#allocation2 + $0x110] sm:$0x1] %v7104
  %v7106 = vld [vmem:[#allocation2 + $0x11c] sm:$0x1]
  %v7107 = vsel %vm7036, 0, %v7106
  %7108 = vst [vmem:[#allocation2 + $0x11c] sm:$0x1] %v7107
  %v7109 = vld [vmem:[#allocation2 + $0x128] sm:$0x1]
  %v7110 = vsel %vm7036, 0, %v7109
  %7111 = vst [vmem:[#allocation2 + $0x128] sm:$0x1] %v7110
  %v7112 = vld [vmem:[#allocation2 + $0x134] sm:$0x1]
  %v7113 = vsel %vm7036, 0, %v7112
  %7114 = vst [vmem:[#allocation2 + $0x134] sm:$0x1] %v7113
  %v7115 = vld [vmem:[#allocation2 + $0x140] sm:$0x1]
  %v7116 = vsel %vm7036, 0, %v7115
  %7117 = vst [vmem:[#allocation2 + $0x140] sm:$0x1] %v7116
  %v7118 = vld [vmem:[#allocation2 + $0x14c] sm:$0x1]
  %v7119 = vsel %vm7036, 0, %v7118
  %7120 = vst [vmem:[#allocation2 + $0x14c] sm:$0x1] %v7119
  %v7121 = vld [vmem:[#allocation2 + $0x158] sm:$0x1]
  %v7122 = vsel %vm7036, 0, %v7121
  %7123 = vst [vmem:[#allocation2 + $0x158] sm:$0x1] %v7122
  %v7124 = vld [vmem:[#allocation2 + $0x164] sm:$0x1]
  %v7125 = vsel %vm7036, 0, %v7124
  %7126 = vst [vmem:[#allocation2 + $0x164] sm:$0x1] %v7125
  %v7127 = vld [vmem:[#allocation2 + $0x170] sm:$0x1]
  %v7128 = vsel %vm7036, 0, %v7127
  %7129 = vst [vmem:[#allocation2 + $0x170] sm:$0x1] %v7128
  %v7130 = vld [vmem:[#allocation2 + $0x17c] sm:$0x1]
  %v7131 = vsel %vm7036, 0, %v7130
  %7132 = vst [vmem:[#allocation2 + $0x17c] sm:$0x1] %v7131
  %v7133 = vld [vmem:[#allocation2 + $0x188] sm:$0x1]
  %v7134 = vsel %vm7036, 0, %v7133
  %7135 = vst [vmem:[#allocation2 + $0x188] sm:$0x1] %v7134
  %v7136 = vld [vmem:[#allocation2 + $0x194] sm:$0x1]
  %v7137 = vsel %vm7036, 0, %v7136
  %7138 = vst [vmem:[#allocation2 + $0x194] sm:$0x1] %v7137
  %v7139 = vld [vmem:[#allocation2 + $0x1a0] sm:$0x1]
  %v7140 = vsel %vm7036, 0, %v7139
  %7141 = vst [vmem:[#allocation2 + $0x1a0] sm:$0x1] %v7140
  %v7142 = vld [vmem:[#allocation2 + $0x1ac] sm:$0x1]
  %v7143 = vsel %vm7036, 0, %v7142
  %7144 = vst [vmem:[#allocation2 + $0x1ac] sm:$0x1] %v7143
  %v7145 = vpack.c.bf16 %v6846, %v6845
  %v7146 = vpack.c.bf16 %v6848, %v6847
  %v7147 = vpack.c.bf16 %v6850, %v6849
  %v7148 = vpack.c.bf16 %v6852, %v6851
  %v7149 = vpack.c.bf16 %v6854, %v6853
  %v7150 = vpack.c.bf16 %v6856, %v6855
  %v7151 = vpack.c.bf16 %v6858, %v6857
  %v7152 = vpack.c.bf16 %v6860, %v6859
  %v7153 = vpack.c.bf16 %v6862, %v6861
  %v7154 = vpack.c.bf16 %v6864, %v6863
  %v7155 = vpack.c.bf16 %v6866, %v6865
  %v7156 = vpack.c.bf16 %v6868, %v6867
  %v7157 = vpack.c.bf16 %v6870, %v6869
  %v7158 = vpack.c.bf16 %v6872, %v6871
  %v7159 = vpack.c.bf16 %v6874, %v6873
  %v7160 = vpack.c.bf16 %v6876, %v6875
  %v7161 = vpack.c.bf16 %v6878, %v6877
  %v7162 = vpack.c.bf16 %v6880, %v6879
  %v7163 = vpack.c.bf16 %v6882, %v6881
  %v7164 = vpack.c.bf16 %v6884, %v6883
  %v7165 = vpack.c.bf16 %v6886, %v6885
  %v7166 = vpack.c.bf16 %v6888, %v6887
  %v7167 = vpack.c.bf16 %v6890, %v6889
  %v7168 = vpack.c.bf16 %v6892, %v6891
  %v7169 = vpack.c.bf16 %v6894, %v6893
  %v7170 = vpack.c.bf16 %v6896, %v6895
  %v7171 = vpack.c.bf16 %v6898, %v6897
  %v7172 = vpack.c.bf16 %v6900, %v6899
  %v7173 = vpack.c.bf16 %v6902, %v6901
  %v7174 = vpack.c.bf16 %v6904, %v6903
  %v7175 = vpack.c.bf16 %v6906, %v6905
  %v7176 = vpack.c.bf16 %v6908, %v6907
  %v7209 = vunpack.c.l.b16 %v7145
  %v7210 = vunpack.c.h.b16 %v7145
  %v7211 = vunpack.c.l.b16 %v7146
  %v7212 = vunpack.c.h.b16 %v7146
  %v7213 = vunpack.c.l.b16 %v7147
  %v7214 = vunpack.c.h.b16 %v7147
  %v7215 = vunpack.c.l.b16 %v7148
  %v7216 = vunpack.c.h.b16 %v7148
  %v7217 = vunpack.c.l.b16 %v7149
  %v7218 = vunpack.c.h.b16 %v7149
  %v7219 = vunpack.c.l.b16 %v7150
  %v7220 = vunpack.c.h.b16 %v7150
  %v7221 = vunpack.c.l.b16 %v7151
  %v7222 = vunpack.c.h.b16 %v7151
  %v7223 = vunpack.c.l.b16 %v7152
  %v7224 = vunpack.c.h.b16 %v7152
  %v7225 = vunpack.c.l.b16 %v7153
  %v7226 = vunpack.c.h.b16 %v7153
  %v7227 = vunpack.c.l.b16 %v7154
  %v7228 = vunpack.c.h.b16 %v7154
  %v7229 = vunpack.c.l.b16 %v7155
  %v7230 = vunpack.c.h.b16 %v7155
  %v7231 = vunpack.c.l.b16 %v7156
  %v7232 = vunpack.c.h.b16 %v7156
  %v7233 = vunpack.c.l.b16 %v7157
  %v7234 = vunpack.c.h.b16 %v7157
  %v7235 = vunpack.c.l.b16 %v7158
  %v7236 = vunpack.c.h.b16 %v7158
  %v7237 = vunpack.c.l.b16 %v7159
  %v7238 = vunpack.c.h.b16 %v7159
  %v7239 = vunpack.c.l.b16 %v7160
  %v7240 = vunpack.c.h.b16 %v7160
  %v7241 = vunpack.c.l.b16 %v7161
  %v7242 = vunpack.c.h.b16 %v7161
  %v7243 = vunpack.c.l.b16 %v7162
  %v7244 = vunpack.c.h.b16 %v7162
  %v7245 = vunpack.c.l.b16 %v7163
  %v7246 = vunpack.c.h.b16 %v7163
  %v7247 = vunpack.c.l.b16 %v7164
  %v7248 = vunpack.c.h.b16 %v7164
  %v7249 = vunpack.c.l.b16 %v7165
  %v7250 = vunpack.c.h.b16 %v7165
  %v7251 = vunpack.c.l.b16 %v7166
  %v7252 = vunpack.c.h.b16 %v7166
  %v7253 = vunpack.c.l.b16 %v7167
  %v7254 = vunpack.c.h.b16 %v7167
  %v7255 = vunpack.c.l.b16 %v7168
  %v7256 = vunpack.c.h.b16 %v7168
  %v7257 = vunpack.c.l.b16 %v7169
  %v7258 = vunpack.c.h.b16 %v7169
  %v7259 = vunpack.c.l.b16 %v7170
  %v7260 = vunpack.c.h.b16 %v7170
  %v7261 = vunpack.c.l.b16 %v7171
  %v7262 = vunpack.c.h.b16 %v7171
  %v7263 = vunpack.c.l.b16 %v7172
  %v7264 = vunpack.c.h.b16 %v7172
  %v7265 = vunpack.c.l.b16 %v7173
  %v7266 = vunpack.c.h.b16 %v7173
  %v7267 = vunpack.c.l.b16 %v7174
  %v7268 = vunpack.c.h.b16 %v7174
  %v7269 = vunpack.c.l.b16 %v7175
  %v7270 = vunpack.c.h.b16 %v7175
  %v7271 = vunpack.c.l.b16 %v7176
  %v7272 = vunpack.c.h.b16 %v7176
  %v7273 = vpack.c.b16 %v7209, %v7209
  %v7274 = vpack.c.b16 %v7210, %v7210
  %v7275 = vpack.c.b16 %v7211, %v7211
  %v7276 = vpack.c.b16 %v7212, %v7212
  %v7277 = vpack.c.b16 %v7213, %v7213
  %v7278 = vpack.c.b16 %v7214, %v7214
  %v7279 = vpack.c.b16 %v7215, %v7215
  %v7280 = vpack.c.b16 %v7216, %v7216
  %v7281 = vpack.c.b16 %v7217, %v7217
  %v7282 = vpack.c.b16 %v7218, %v7218
  %v7283 = vpack.c.b16 %v7219, %v7219
  %v7284 = vpack.c.b16 %v7220, %v7220
  %v7285 = vpack.c.b16 %v7221, %v7221
  %v7286 = vpack.c.b16 %v7222, %v7222
  %v7287 = vpack.c.b16 %v7223, %v7223
  %v7288 = vpack.c.b16 %v7224, %v7224
  %v7289 = vpack.c.b16 %v7225, %v7225
  %v7290 = vpack.c.b16 %v7226, %v7226
  %v7291 = vpack.c.b16 %v7227, %v7227
  %v7292 = vpack.c.b16 %v7228, %v7228
  %v7293 = vpack.c.b16 %v7229, %v7229
  %v7294 = vpack.c.b16 %v7230, %v7230
  %v7295 = vpack.c.b16 %v7231, %v7231
  %v7296 = vpack.c.b16 %v7232, %v7232
  %v7297 = vpack.c.b16 %v7233, %v7233
  %v7298 = vpack.c.b16 %v7234, %v7234
  %v7299 = vpack.c.b16 %v7235, %v7235
  %v7300 = vpack.c.b16 %v7236, %v7236
  %v7301 = vpack.c.b16 %v7237, %v7237
  %v7302 = vpack.c.b16 %v7238, %v7238
  %v7303 = vpack.c.b16 %v7239, %v7239
  %v7304 = vpack.c.b16 %v7240, %v7240
  %v7305 = vpack.c.b16 %v7241, %v7241
  %v7306 = vpack.c.b16 %v7242, %v7242
  %v7307 = vpack.c.b16 %v7243, %v7243
  %v7308 = vpack.c.b16 %v7244, %v7244
  %v7309 = vpack.c.b16 %v7245, %v7245
  %v7310 = vpack.c.b16 %v7246, %v7246
  %v7311 = vpack.c.b16 %v7247, %v7247
  %v7312 = vpack.c.b16 %v7248, %v7248
  %v7313 = vpack.c.b16 %v7249, %v7249
  %v7314 = vpack.c.b16 %v7250, %v7250
  %v7315 = vpack.c.b16 %v7251, %v7251
  %v7316 = vpack.c.b16 %v7252, %v7252
  %v7317 = vpack.c.b16 %v7253, %v7253
  %v7318 = vpack.c.b16 %v7254, %v7254
  %v7319 = vpack.c.b16 %v7255, %v7255
  %v7320 = vpack.c.b16 %v7256, %v7256
  %v7321 = vpack.c.b16 %v7257, %v7257
  %v7322 = vpack.c.b16 %v7258, %v7258
  %v7323 = vpack.c.b16 %v7259, %v7259
  %v7324 = vpack.c.b16 %v7260, %v7260
  %v7325 = vpack.c.b16 %v7261, %v7261
  %v7326 = vpack.c.b16 %v7262, %v7262
  %v7327 = vpack.c.b16 %v7263, %v7263
  %v7328 = vpack.c.b16 %v7264, %v7264
  %v7329 = vpack.c.b16 %v7265, %v7265
  %v7330 = vpack.c.b16 %v7266, %v7266
  %v7331 = vpack.c.b16 %v7267, %v7267
  %v7332 = vpack.c.b16 %v7268, %v7268
  %v7333 = vpack.c.b16 %v7269, %v7269
  %v7334 = vpack.c.b16 %v7270, %v7270
  %v7335 = vpack.c.b16 %v7271, %v7271
  %v7336 = vpack.c.b16 %v7272, %v7272
  %vm7337 = vsmask.f32 4368
  %vm7338 = vmor %vm6925, %vm7337
  %v7340 = vshrl.u32 %v7273, 16
  %v7342 = vrot.slane %v7340, 7
  %v7343 = vshll.u32 %v7273, 16
  %v7345 = vor.u32 %v7342, %v7343
  %v7346 = vrot.slane %v7342, 4
  %v7348 = vshrl.u32 %v7274, 16
  %v7350 = vrot.slane %v7348, 7
  %v7351 = vshll.u32 %v7274, 16
  %v7353 = vor.u32 %v7350, %v7351
  %v7354 = vsel %vm7338, %v7346, %v7353
  %v7355 = vrot.slane %v7350, 4
  %v7357 = vshrl.u32 %v7275, 16
  %v7359 = vrot.slane %v7357, 7
  %v7360 = vshll.u32 %v7275, 16
  %v7362 = vor.u32 %v7359, %v7360
  %v7363 = vrot.slane %v7359, 4
  %v7365 = vshrl.u32 %v7276, 16
  %v7367 = vrot.slane %v7365, 7
  %v7368 = vshll.u32 %v7276, 16
  %v7370 = vor.u32 %v7367, %v7368
  %v7371 = vsel %vm7338, %v7363, %v7370
  %v7372 = vrot.slane %v7367, 4
  %v7374 = vshrl.u32 %v7277, 16
  %v7376 = vrot.slane %v7374, 7
  %v7377 = vshll.u32 %v7277, 16
  %v7379 = vor.u32 %v7376, %v7377
  %v7380 = vrot.slane %v7376, 4
  %v7382 = vshrl.u32 %v7278, 16
  %v7384 = vrot.slane %v7382, 7
  %v7385 = vshll.u32 %v7278, 16
  %v7387 = vor.u32 %v7384, %v7385
  %v7388 = vsel %vm7338, %v7380, %v7387
  %v7389 = vrot.slane %v7384, 4
  %v7391 = vshrl.u32 %v7279, 16
  %v7393 = vrot.slane %v7391, 7
  %v7394 = vshll.u32 %v7279, 16
  %v7396 = vor.u32 %v7393, %v7394
  %v7397 = vrot.slane %v7393, 4
  %v7399 = vshrl.u32 %v7280, 16
  %v7401 = vrot.slane %v7399, 7
  %v7402 = vshll.u32 %v7280, 16
  %v7404 = vor.u32 %v7401, %v7402
  %v7405 = vsel %vm7338, %v7397, %v7404
  %v7406 = vrot.slane %v7401, 4
  %v7408 = vshrl.u32 %v7281, 16
  %v7410 = vrot.slane %v7408, 7
  %v7411 = vshll.u32 %v7281, 16
  %v7413 = vor.u32 %v7410, %v7411
  %v7414 = vrot.slane %v7410, 4
  %v7416 = vshrl.u32 %v7282, 16
  %v7418 = vrot.slane %v7416, 7
  %v7419 = vshll.u32 %v7282, 16
  %v7421 = vor.u32 %v7418, %v7419
  %v7422 = vsel %vm7338, %v7414, %v7421
  %v7423 = vrot.slane %v7418, 4
  %v7425 = vshrl.u32 %v7283, 16
  %v7427 = vrot.slane %v7425, 7
  %v7428 = vshll.u32 %v7283, 16
  %v7430 = vor.u32 %v7427, %v7428
  %v7431 = vrot.slane %v7427, 4
  %v7433 = vshrl.u32 %v7284, 16
  %v7435 = vrot.slane %v7433, 7
  %v7436 = vshll.u32 %v7284, 16
  %v7438 = vor.u32 %v7435, %v7436
  %v7439 = vsel %vm7338, %v7431, %v7438
  %v7440 = vrot.slane %v7435, 4
  %v7442 = vshrl.u32 %v7285, 16
  %v7444 = vrot.slane %v7442, 7
  %v7445 = vshll.u32 %v7285, 16
  %v7447 = vor.u32 %v7444, %v7445
  %v7448 = vrot.slane %v7444, 4
  %v7450 = vshrl.u32 %v7286, 16
  %v7452 = vrot.slane %v7450, 7
  %v7453 = vshll.u32 %v7286, 16
  %v7455 = vor.u32 %v7452, %v7453
  %v7456 = vsel %vm7338, %v7448, %v7455
  %v7457 = vrot.slane %v7452, 4
  %v7459 = vshrl.u32 %v7287, 16
  %v7461 = vrot.slane %v7459, 7
  %v7462 = vshll.u32 %v7287, 16
  %v7464 = vor.u32 %v7461, %v7462
  %v7465 = vrot.slane %v7461, 4
  %v7467 = vshrl.u32 %v7288, 16
  %v7469 = vrot.slane %v7467, 7
  %v7470 = vshll.u32 %v7288, 16
  %v7472 = vor.u32 %v7469, %v7470
  %v7473 = vsel %vm7338, %v7465, %v7472
  %v7474 = vrot.slane %v7469, 4
  %v7476 = vshrl.u32 %v7289, 16
  %v7478 = vrot.slane %v7476, 7
  %v7479 = vshll.u32 %v7289, 16
  %v7481 = vor.u32 %v7478, %v7479
  %v7482 = vrot.slane %v7478, 4
  %v7484 = vshrl.u32 %v7290, 16
  %v7486 = vrot.slane %v7484, 7
  %v7487 = vshll.u32 %v7290, 16
  %v7489 = vor.u32 %v7486, %v7487
  %v7490 = vsel %vm7338, %v7482, %v7489
  %v7491 = vrot.slane %v7486, 4
  %v7493 = vshrl.u32 %v7291, 16
  %v7495 = vrot.slane %v7493, 7
  %v7496 = vshll.u32 %v7291, 16
  %v7498 = vor.u32 %v7495, %v7496
  %v7499 = vrot.slane %v7495, 4
  %v7501 = vshrl.u32 %v7292, 16
  %v7503 = vrot.slane %v7501, 7
  %v7504 = vshll.u32 %v7292, 16
  %v7506 = vor.u32 %v7503, %v7504
  %v7507 = vsel %vm7338, %v7499, %v7506
  %v7508 = vrot.slane %v7503, 4
  %v7510 = vshrl.u32 %v7293, 16
  %v7512 = vrot.slane %v7510, 7
  %v7513 = vshll.u32 %v7293, 16
  %v7515 = vor.u32 %v7512, %v7513
  %v7516 = vrot.slane %v7512, 4
  %v7518 = vshrl.u32 %v7294, 16
  %v7520 = vrot.slane %v7518, 7
  %v7521 = vshll.u32 %v7294, 16
  %v7523 = vor.u32 %v7520, %v7521
  %v7524 = vsel %vm7338, %v7516, %v7523
  %v7525 = vrot.slane %v7520, 4
  %v7527 = vshrl.u32 %v7295, 16
  %v7529 = vrot.slane %v7527, 7
  %v7530 = vshll.u32 %v7295, 16
  %v7532 = vor.u32 %v7529, %v7530
  %v7533 = vrot.slane %v7529, 4
  %v7535 = vshrl.u32 %v7296, 16
  %v7537 = vrot.slane %v7535, 7
  %v7538 = vshll.u32 %v7296, 16
  %v7540 = vor.u32 %v7537, %v7538
  %v7541 = vsel %vm7338, %v7533, %v7540
  %v7542 = vrot.slane %v7537, 4
  %v7544 = vshrl.u32 %v7297, 16
  %v7546 = vrot.slane %v7544, 7
  %v7547 = vshll.u32 %v7297, 16
  %v7549 = vor.u32 %v7546, %v7547
  %v7550 = vrot.slane %v7546, 4
  %v7552 = vshrl.u32 %v7298, 16
  %v7554 = vrot.slane %v7552, 7
  %v7555 = vshll.u32 %v7298, 16
  %v7557 = vor.u32 %v7554, %v7555
  %v7558 = vsel %vm7338, %v7550, %v7557
  %v7559 = vrot.slane %v7554, 4
  %v7561 = vshrl.u32 %v7299, 16
  %v7563 = vrot.slane %v7561, 7
  %v7564 = vshll.u32 %v7299, 16
  %v7566 = vor.u32 %v7563, %v7564
  %v7567 = vrot.slane %v7563, 4
  %v7569 = vshrl.u32 %v7300, 16
  %v7571 = vrot.slane %v7569, 7
  %v7572 = vshll.u32 %v7300, 16
  %v7574 = vor.u32 %v7571, %v7572
  %v7575 = vsel %vm7338, %v7567, %v7574
  %v7576 = vrot.slane %v7571, 4
  %v7578 = vshrl.u32 %v7301, 16
  %v7580 = vrot.slane %v7578, 7
  %v7581 = vshll.u32 %v7301, 16
  %v7583 = vor.u32 %v7580, %v7581
  %v7584 = vrot.slane %v7580, 4
  %v7586 = vshrl.u32 %v7302, 16
  %v7588 = vrot.slane %v7586, 7
  %v7589 = vshll.u32 %v7302, 16
  %v7591 = vor.u32 %v7588, %v7589
  %v7592 = vsel %vm7338, %v7584, %v7591
  %v7593 = vrot.slane %v7588, 4
  %v7595 = vshrl.u32 %v7303, 16
  %v7597 = vrot.slane %v7595, 7
  %v7598 = vshll.u32 %v7303, 16
  %v7600 = vor.u32 %v7597, %v7598
  %v7601 = vrot.slane %v7597, 4
  %v7603 = vshrl.u32 %v7304, 16
  %v7605 = vrot.slane %v7603, 7
  %v7606 = vshll.u32 %v7304, 16
  %v7608 = vor.u32 %v7605, %v7606
  %v7609 = vsel %vm7338, %v7601, %v7608
  %v7610 = vrot.slane %v7605, 4
  %v7612 = vshrl.u32 %v7305, 16
  %v7614 = vrot.slane %v7612, 7
  %v7615 = vshll.u32 %v7305, 16
  %v7617 = vor.u32 %v7614, %v7615
  %v7618 = vrot.slane %v7614, 4
  %v7620 = vshrl.u32 %v7306, 16
  %v7622 = vrot.slane %v7620, 7
  %v7623 = vshll.u32 %v7306, 16
  %v7625 = vor.u32 %v7622, %v7623
  %v7626 = vsel %vm7338, %v7618, %v7625
  %v7627 = vrot.slane %v7622, 4
  %v7629 = vshrl.u32 %v7307, 16
  %v7631 = vrot.slane %v7629, 7
  %v7632 = vshll.u32 %v7307, 16
  %v7634 = vor.u32 %v7631, %v7632
  %v7635 = vrot.slane %v7631, 4
  %v7637 = vshrl.u32 %v7308, 16
  %v7639 = vrot.slane %v7637, 7
  %v7640 = vshll.u32 %v7308, 16
  %v7642 = vor.u32 %v7639, %v7640
  %v7643 = vsel %vm7338, %v7635, %v7642
  %v7644 = vrot.slane %v7639, 4
  %v7646 = vshrl.u32 %v7309, 16
  %v7648 = vrot.slane %v7646, 7
  %v7649 = vshll.u32 %v7309, 16
  %v7651 = vor.u32 %v7648, %v7649
  %v7652 = vrot.slane %v7648, 4
  %v7654 = vshrl.u32 %v7310, 16
  %v7656 = vrot.slane %v7654, 7
  %v7657 = vshll.u32 %v7310, 16
  %v7659 = vor.u32 %v7656, %v7657
  %v7660 = vsel %vm7338, %v7652, %v7659
  %v7661 = vrot.slane %v7656, 4
  %v7663 = vshrl.u32 %v7311, 16
  %v7665 = vrot.slane %v7663, 7
  %v7666 = vshll.u32 %v7311, 16
  %v7668 = vor.u32 %v7665, %v7666
  %v7669 = vrot.slane %v7665, 4
  %v7671 = vshrl.u32 %v7312, 16
  %v7673 = vrot.slane %v7671, 7
  %v7674 = vshll.u32 %v7312, 16
  %v7676 = vor.u32 %v7673, %v7674
  %v7677 = vsel %vm7338, %v7669, %v7676
  %v7678 = vrot.slane %v7673, 4
  %v7680 = vshrl.u32 %v7313, 16
  %v7682 = vrot.slane %v7680, 7
  %v7683 = vshll.u32 %v7313, 16
  %v7685 = vor.u32 %v7682, %v7683
  %v7686 = vrot.slane %v7682, 4
  %v7688 = vshrl.u32 %v7314, 16
  %v7690 = vrot.slane %v7688, 7
  %v7691 = vshll.u32 %v7314, 16
  %v7693 = vor.u32 %v7690, %v7691
  %v7694 = vsel %vm7338, %v7686, %v7693
  %v7695 = vrot.slane %v7690, 4
  %v7697 = vshrl.u32 %v7315, 16
  %v7699 = vrot.slane %v7697, 7
  %v7700 = vshll.u32 %v7315, 16
  %v7702 = vor.u32 %v7699, %v7700
  %v7703 = vrot.slane %v7699, 4
  %v7705 = vshrl.u32 %v7316, 16
  %v7707 = vrot.slane %v7705, 7
  %v7708 = vshll.u32 %v7316, 16
  %v7710 = vor.u32 %v7707, %v7708
  %v7711 = vsel %vm7338, %v7703, %v7710
  %v7712 = vrot.slane %v7707, 4
  %v7714 = vshrl.u32 %v7317, 16
  %v7716 = vrot.slane %v7714, 7
  %v7717 = vshll.u32 %v7317, 16
  %v7719 = vor.u32 %v7716, %v7717
  %v7720 = vrot.slane %v7716, 4
  %v7722 = vshrl.u32 %v7318, 16
  %v7724 = vrot.slane %v7722, 7
  %v7725 = vshll.u32 %v7318, 16
  %v7727 = vor.u32 %v7724, %v7725
  %v7728 = vsel %vm7338, %v7720, %v7727
  %v7729 = vrot.slane %v7724, 4
  %v7731 = vshrl.u32 %v7319, 16
  %v7733 = vrot.slane %v7731, 7
  %v7734 = vshll.u32 %v7319, 16
  %v7736 = vor.u32 %v7733, %v7734
  %v7737 = vrot.slane %v7733, 4
  %v7739 = vshrl.u32 %v7320, 16
  %v7741 = vrot.slane %v7739, 7
  %v7742 = vshll.u32 %v7320, 16
  %v7744 = vor.u32 %v7741, %v7742
  %v7745 = vsel %vm7338, %v7737, %v7744
  %v7746 = vrot.slane %v7741, 4
  %v7748 = vshrl.u32 %v7321, 16
  %v7750 = vrot.slane %v7748, 7
  %v7751 = vshll.u32 %v7321, 16
  %v7753 = vor.u32 %v7750, %v7751
  %v7754 = vrot.slane %v7750, 4
  %v7756 = vshrl.u32 %v7322, 16
  %v7758 = vrot.slane %v7756, 7
  %v7759 = vshll.u32 %v7322, 16
  %v7761 = vor.u32 %v7758, %v7759
  %v7762 = vsel %vm7338, %v7754, %v7761
  %v7763 = vrot.slane %v7758, 4
  %v7765 = vshrl.u32 %v7323, 16
  %v7767 = vrot.slane %v7765, 7
  %v7768 = vshll.u32 %v7323, 16
  %v7770 = vor.u32 %v7767, %v7768
  %v7771 = vrot.slane %v7767, 4
  %v7773 = vshrl.u32 %v7324, 16
  %v7775 = vrot.slane %v7773, 7
  %v7776 = vshll.u32 %v7324, 16
  %v7778 = vor.u32 %v7775, %v7776
  %v7779 = vsel %vm7338, %v7771, %v7778
  %v7780 = vrot.slane %v7775, 4
  %v7782 = vshrl.u32 %v7325, 16
  %v7784 = vrot.slane %v7782, 7
  %v7785 = vshll.u32 %v7325, 16
  %v7787 = vor.u32 %v7784, %v7785
  %v7788 = vrot.slane %v7784, 4
  %v7790 = vshrl.u32 %v7326, 16
  %v7792 = vrot.slane %v7790, 7
  %v7793 = vshll.u32 %v7326, 16
  %v7795 = vor.u32 %v7792, %v7793
  %v7796 = vsel %vm7338, %v7788, %v7795
  %v7797 = vrot.slane %v7792, 4
  %v7799 = vshrl.u32 %v7327, 16
  %v7801 = vrot.slane %v7799, 7
  %v7802 = vshll.u32 %v7327, 16
  %v7804 = vor.u32 %v7801, %v7802
  %v7805 = vrot.slane %v7801, 4
  %v7807 = vshrl.u32 %v7328, 16
  %v7809 = vrot.slane %v7807, 7
  %v7810 = vshll.u32 %v7328, 16
  %v7812 = vor.u32 %v7809, %v7810
  %v7813 = vsel %vm7338, %v7805, %v7812
  %v7814 = vrot.slane %v7809, 4
  %v7816 = vshrl.u32 %v7329, 16
  %v7818 = vrot.slane %v7816, 7
  %v7819 = vshll.u32 %v7329, 16
  %v7821 = vor.u32 %v7818, %v7819
  %v7822 = vrot.slane %v7818, 4
  %v7824 = vshrl.u32 %v7330, 16
  %v7826 = vrot.slane %v7824, 7
  %v7827 = vshll.u32 %v7330, 16
  %v7829 = vor.u32 %v7826, %v7827
  %v7830 = vsel %vm7338, %v7822, %v7829
  %v7831 = vrot.slane %v7826, 4
  %v7833 = vshrl.u32 %v7331, 16
  %v7835 = vrot.slane %v7833, 7
  %v7836 = vshll.u32 %v7331, 16
  %v7838 = vor.u32 %v7835, %v7836
  %v7839 = vrot.slane %v7835, 4
  %v7841 = vshrl.u32 %v7332, 16
  %v7843 = vrot.slane %v7841, 7
  %v7844 = vshll.u32 %v7332, 16
  %v7846 = vor.u32 %v7843, %v7844
  %v7847 = vsel %vm7338, %v7839, %v7846
  %v7848 = vrot.slane %v7843, 4
  %v7850 = vshrl.u32 %v7333, 16
  %v7852 = vrot.slane %v7850, 7
  %v7853 = vshll.u32 %v7333, 16
  %v7855 = vor.u32 %v7852, %v7853
  %v7856 = vrot.slane %v7852, 4
  %v7858 = vshrl.u32 %v7334, 16
  %v7860 = vrot.slane %v7858, 7
  %v7861 = vshll.u32 %v7334, 16
  %v7863 = vor.u32 %v7860, %v7861
  %v7864 = vsel %vm7338, %v7856, %v7863
  %v7865 = vrot.slane %v7860, 4
  %v7867 = vshrl.u32 %v7335, 16
  %v7869 = vrot.slane %v7867, 7
  %v7870 = vshll.u32 %v7335, 16
  %v7872 = vor.u32 %v7869, %v7870
  %v7873 = vrot.slane %v7869, 4
  %v7875 = vshrl.u32 %v7336, 16
  %v7877 = vrot.slane %v7875, 7
  %v7878 = vshll.u32 %v7336, 16
  %v7880 = vor.u32 %v7877, %v7878
  %v7881 = vsel %vm7338, %v7873, %v7880
  %v7882 = vrot.slane %v7877, 4
  %s7979 = scalar_lea.vmem [#allocation2], 12
  %vm7980 = vcmask 257024
  %vm7981 = vmand %vm7980, %vm7035
  %v7982 = vld [vmem:[%s7979] sm:$0xf]
  %v7983 = vsel %vm7981, %v7345, %v7982
  %7984 = vst [vmem:[%s7979] sm:$0xf] %v7983
  %7985 = vst.msk [vmem:[%s7979 + $0x4] sm:$0xf] %vm6909, %v7354
  %v7986 = vld [vmem:[%s7979 + $0x8] sm:$0x1]
  %v7987 = vsel %vm6926, %v7355, %v7986
  %7988 = vst [vmem:[%s7979 + $0x8] sm:$0x1] %v7987
  %v7989 = vld [vmem:[%s7979 + $0xc] sm:$0xf]
  %v7990 = vsel %vm7981, %v7362, %v7989
  %7991 = vst [vmem:[%s7979 + $0xc] sm:$0xf] %v7990
  %7992 = vst.msk [vmem:[%s7979 + $0x10] sm:$0xf] %vm6909, %v7371
  %v7993 = vld [vmem:[%s7979 + $0x14] sm:$0x1]
  %v7994 = vsel %vm6926, %v7372, %v7993
  %7995 = vst [vmem:[%s7979 + $0x14] sm:$0x1] %v7994
  %v7996 = vld [vmem:[%s7979 + $0x18] sm:$0xf]
  %v7997 = vsel %vm7981, %v7379, %v7996
  %7998 = vst [vmem:[%s7979 + $0x18] sm:$0xf] %v7997
  %7999 = vst.msk [vmem:[%s7979 + $0x1c] sm:$0xf] %vm6909, %v7388
  %v8000 = vld [vmem:[%s7979 + $0x20] sm:$0x1]
  %v8001 = vsel %vm6926, %v7389, %v8000
  %8002 = vst [vmem:[%s7979 + $0x20] sm:$0x1] %v8001
  %v8003 = vld [vmem:[%s7979 + $0x24] sm:$0xf]
  %v8004 = vsel %vm7981, %v7396, %v8003
  %8005 = vst [vmem:[%s7979 + $0x24] sm:$0xf] %v8004
  %8006 = vst.msk [vmem:[%s7979 + $0x28] sm:$0xf] %vm6909, %v7405
  %v8007 = vld [vmem:[%s7979 + $0x2c] sm:$0x1]
  %v8008 = vsel %vm6926, %v7406, %v8007
  %8009 = vst [vmem:[%s7979 + $0x2c] sm:$0x1] %v8008
  %v8010 = vld [vmem:[%s7979 + $0x30] sm:$0xf]
  %v8011 = vsel %vm7981, %v7413, %v8010
  %8012 = vst [vmem:[%s7979 + $0x30] sm:$0xf] %v8011
  %8013 = vst.msk [vmem:[%s7979 + $0x34] sm:$0xf] %vm6909, %v7422
  %v8014 = vld [vmem:[%s7979 + $0x38] sm:$0x1]
  %v8015 = vsel %vm6926, %v7423, %v8014
  %8016 = vst [vmem:[%s7979 + $0x38] sm:$0x1] %v8015
  %v8017 = vld [vmem:[%s7979 + $0x3c] sm:$0xf]
  %v8018 = vsel %vm7981, %v7430, %v8017
  %8019 = vst [vmem:[%s7979 + $0x3c] sm:$0xf] %v8018
  %8020 = vst.msk [vmem:[%s7979 + $0x40] sm:$0xf] %vm6909, %v7439
  %v8021 = vld [vmem:[%s7979 + $0x44] sm:$0x1]
  %v8022 = vsel %vm6926, %v7440, %v8021
  %8023 = vst [vmem:[%s7979 + $0x44] sm:$0x1] %v8022
  %v8024 = vld [vmem:[%s7979 + $0x48] sm:$0xf]
  %v8025 = vsel %vm7981, %v7447, %v8024
  %8026 = vst [vmem:[%s7979 + $0x48] sm:$0xf] %v8025
  %8027 = vst.msk [vmem:[%s7979 + $0x4c] sm:$0xf] %vm6909, %v7456
  %v8028 = vld [vmem:[%s7979 + $0x50] sm:$0x1]
  %v8029 = vsel %vm6926, %v7457, %v8028
  %8030 = vst [vmem:[%s7979 + $0x50] sm:$0x1] %v8029
  %v8031 = vld [vmem:[%s7979 + $0x54] sm:$0xf]
  %v8032 = vsel %vm7981, %v7464, %v8031
  %8033 = vst [vmem:[%s7979 + $0x54] sm:$0xf] %v8032
  %8034 = vst.msk [vmem:[%s7979 + $0x58] sm:$0xf] %vm6909, %v7473
  %v8035 = vld [vmem:[%s7979 + $0x5c] sm:$0x1]
  %v8036 = vsel %vm6926, %v7474, %v8035
  %8037 = vst [vmem:[%s7979 + $0x5c] sm:$0x1] %v8036
  %v8038 = vld [vmem:[%s7979 + $0x60] sm:$0xf]
  %v8039 = vsel %vm7981, %v7481, %v8038
  %8040 = vst [vmem:[%s7979 + $0x60] sm:$0xf] %v8039
  %8041 = vst.msk [vmem:[%s7979 + $0x64] sm:$0xf] %vm6909, %v7490
  %v8042 = vld [vmem:[%s7979 + $0x68] sm:$0x1]
  %v8043 = vsel %vm6926, %v7491, %v8042
  %8044 = vst [vmem:[%s7979 + $0x68] sm:$0x1] %v8043
  %v8045 = vld [vmem:[%s7979 + $0x6c] sm:$0xf]
  %v8046 = vsel %vm7981, %v7498, %v8045
  %8047 = vst [vmem:[%s7979 + $0x6c] sm:$0xf] %v8046
  %8048 = vst.msk [vmem:[%s7979 + $0x70] sm:$0xf] %vm6909, %v7507
  %v8049 = vld [vmem:[%s7979 + $0x74] sm:$0x1]
  %v8050 = vsel %vm6926, %v7508, %v8049
  %8051 = vst [vmem:[%s7979 + $0x74] sm:$0x1] %v8050
  %v8052 = vld [vmem:[%s7979 + $0x78] sm:$0xf]
  %v8053 = vsel %vm7981, %v7515, %v8052
  %8054 = vst [vmem:[%s7979 + $0x78] sm:$0xf] %v8053
  %8055 = vst.msk [vmem:[%s7979 + $0x7c] sm:$0xf] %vm6909, %v7524
  %v8056 = vld [vmem:[%s7979 + $0x80] sm:$0x1]
  %v8057 = vsel %vm6926, %v7525, %v8056
  %8058 = vst [vmem:[%s7979 + $0x80] sm:$0x1] %v8057
  %v8059 = vld [vmem:[%s7979 + $0x84] sm:$0xf]
  %v8060 = vsel %vm7981, %v7532, %v8059
  %8061 = vst [vmem:[%s7979 + $0x84] sm:$0xf] %v8060
  %8062 = vst.msk [vmem:[%s7979 + $0x88] sm:$0xf] %vm6909, %v7541
  %v8063 = vld [vmem:[%s7979 + $0x8c] sm:$0x1]
  %v8064 = vsel %vm6926, %v7542, %v8063
  %8065 = vst [vmem:[%s7979 + $0x8c] sm:$0x1] %v8064
  %v8066 = vld [vmem:[%s7979 + $0x90] sm:$0xf]
  %v8067 = vsel %vm7981, %v7549, %v8066
  %8068 = vst [vmem:[%s7979 + $0x90] sm:$0xf] %v8067
  %8069 = vst.msk [vmem:[%s7979 + $0x94] sm:$0xf] %vm6909, %v7558
  %v8070 = vld [vmem:[%s7979 + $0x98] sm:$0x1]
  %v8071 = vsel %vm6926, %v7559, %v8070
  %8072 = vst [vmem:[%s7979 + $0x98] sm:$0x1] %v8071
  %v8073 = vld [vmem:[%s7979 + $0x9c] sm:$0xf]
  %v8074 = vsel %vm7981, %v7566, %v8073
  %8075 = vst [vmem:[%s7979 + $0x9c] sm:$0xf] %v8074
  %8076 = vst.msk [vmem:[%s7979 + $0xa0] sm:$0xf] %vm6909, %v7575
  %v8077 = vld [vmem:[%s7979 + $0xa4] sm:$0x1]
  %v8078 = vsel %vm6926, %v7576, %v8077
  %8079 = vst [vmem:[%s7979 + $0xa4] sm:$0x1] %v8078
  %v8080 = vld [vmem:[%s7979 + $0xa8] sm:$0xf]
  %v8081 = vsel %vm7981, %v7583, %v8080
  %8082 = vst [vmem:[%s7979 + $0xa8] sm:$0xf] %v8081
  %8083 = vst.msk [vmem:[%s7979 + $0xac] sm:$0xf] %vm6909, %v7592
  %v8084 = vld [vmem:[%s7979 + $0xb0] sm:$0x1]
  %v8085 = vsel %vm6926, %v7593, %v8084
  %8086 = vst [vmem:[%s7979 + $0xb0] sm:$0x1] %v8085
  %v8087 = vld [vmem:[%s7979 + $0xb4] sm:$0xf]
  %v8088 = vsel %vm7981, %v7600, %v8087
  %8089 = vst [vmem:[%s7979 + $0xb4] sm:$0xf] %v8088
  %8090 = vst.msk [vmem:[%s7979 + $0xb8] sm:$0xf] %vm6909, %v7609
  %v8091 = vld [vmem:[%s7979 + $0xbc] sm:$0x1]
  %v8092 = vsel %vm6926, %v7610, %v8091
  %8093 = vst [vmem:[%s7979 + $0xbc] sm:$0x1] %v8092
  %v8094 = vld [vmem:[%s7979 + $0xd8] sm:$0xf]
  %v8095 = vsel %vm7981, %v7617, %v8094
  %8096 = vst [vmem:[%s7979 + $0xd8] sm:$0xf] %v8095
  %8097 = vst.msk [vmem:[%s7979 + $0xdc] sm:$0xf] %vm6909, %v7626
  %v8098 = vld [vmem:[%s7979 + $0xe0] sm:$0x1]
  %v8099 = vsel %vm6926, %v7627, %v8098
  %8100 = vst [vmem:[%s7979 + $0xe0] sm:$0x1] %v8099
  %v8101 = vld [vmem:[%s7979 + $0xe4] sm:$0xf]
  %v8102 = vsel %vm7981, %v7634, %v8101
  %8103 = vst [vmem:[%s7979 + $0xe4] sm:$0xf] %v8102
  %8104 = vst.msk [vmem:[%s7979 + $0xe8] sm:$0xf] %vm6909, %v7643
  %v8105 = vld [vmem:[%s7979 + $0xec] sm:$0x1]
  %v8106 = vsel %vm6926, %v7644, %v8105
  %8107 = vst [vmem:[%s7979 + $0xec] sm:$0x1] %v8106
  %v8108 = vld [vmem:[%s7979 + $0xf0] sm:$0xf]
  %v8109 = vsel %vm7981, %v7651, %v8108
  %8110 = vst [vmem:[%s7979 + $0xf0] sm:$0xf] %v8109
  %8111 = vst.msk [vmem:[%s7979 + $0xf4] sm:$0xf] %vm6909, %v7660
  %v8112 = vld [vmem:[%s7979 + $0xf8] sm:$0x1]
  %v8113 = vsel %vm6926, %v7661, %v8112
  %8114 = vst [vmem:[%s7979 + $0xf8] sm:$0x1] %v8113
  %v8115 = vld [vmem:[%s7979 + $0xfc] sm:$0xf]
  %v8116 = vsel %vm7981, %v7668, %v8115
  %8117 = vst [vmem:[%s7979 + $0xfc] sm:$0xf] %v8116
  %8118 = vst.msk [vmem:[%s7979 + $0x100] sm:$0xf] %vm6909, %v7677
  %v8119 = vld [vmem:[%s7979 + $0x104] sm:$0x1]
  %v8120 = vsel %vm6926, %v7678, %v8119
  %8121 = vst [vmem:[%s7979 + $0x104] sm:$0x1] %v8120
  %v8122 = vld [vmem:[%s7979 + $0x108] sm:$0xf]
  %v8123 = vsel %vm7981, %v7685, %v8122
  %8124 = vst [vmem:[%s7979 + $0x108] sm:$0xf] %v8123
  %8125 = vst.msk [vmem:[%s7979 + $0x10c] sm:$0xf] %vm6909, %v7694
  %v8126 = vld [vmem:[%s7979 + $0x110] sm:$0x1]
  %v8127 = vsel %vm6926, %v7695, %v8126
  %8128 = vst [vmem:[%s7979 + $0x110] sm:$0x1] %v8127
  %v8129 = vld [vmem:[%s7979 + $0x114] sm:$0xf]
  %v8130 = vsel %vm7981, %v7702, %v8129
  %8131 = vst [vmem:[%s7979 + $0x114] sm:$0xf] %v8130
  %8132 = vst.msk [vmem:[%s7979 + $0x118] sm:$0xf] %vm6909, %v7711
  %v8133 = vld [vmem:[%s7979 + $0x11c] sm:$0x1]
  %v8134 = vsel %vm6926, %v7712, %v8133
  %8135 = vst [vmem:[%s7979 + $0x11c] sm:$0x1] %v8134
  %v8136 = vld [vmem:[%s7979 + $0x120] sm:$0xf]
  %v8137 = vsel %vm7981, %v7719, %v8136
  %8138 = vst [vmem:[%s7979 + $0x120] sm:$0xf] %v8137
  %8139 = vst.msk [vmem:[%s7979 + $0x124] sm:$0xf] %vm6909, %v7728
  %v8140 = vld [vmem:[%s7979 + $0x128] sm:$0x1]
  %v8141 = vsel %vm6926, %v7729, %v8140
  %8142 = vst [vmem:[%s7979 + $0x128] sm:$0x1] %v8141
  %v8143 = vld [vmem:[%s7979 + $0x12c] sm:$0xf]
  %v8144 = vsel %vm7981, %v7736, %v8143
  %8145 = vst [vmem:[%s7979 + $0x12c] sm:$0xf] %v8144
  %8146 = vst.msk [vmem:[%s7979 + $0x130] sm:$0xf] %vm6909, %v7745
  %v8147 = vld [vmem:[%s7979 + $0x134] sm:$0x1]
  %v8148 = vsel %vm6926, %v7746, %v8147
  %8149 = vst [vmem:[%s7979 + $0x134] sm:$0x1] %v8148
  %v8150 = vld [vmem:[%s7979 + $0x138] sm:$0xf]
  %v8151 = vsel %vm7981, %v7753, %v8150
  %8152 = vst [vmem:[%s7979 + $0x138] sm:$0xf] %v8151
  %8153 = vst.msk [vmem:[%s7979 + $0x13c] sm:$0xf] %vm6909, %v7762
  %v8154 = vld [vmem:[%s7979 + $0x140] sm:$0x1]
  %v8155 = vsel %vm6926, %v7763, %v8154
  %8156 = vst [vmem:[%s7979 + $0x140] sm:$0x1] %v8155
  %v8157 = vld [vmem:[%s7979 + $0x144] sm:$0xf]
  %v8158 = vsel %vm7981, %v7770, %v8157
  %8159 = vst [vmem:[%s7979 + $0x144] sm:$0xf] %v8158
  %8160 = vst.msk [vmem:[%s7979 + $0x148] sm:$0xf] %vm6909, %v7779
  %v8161 = vld [vmem:[%s7979 + $0x14c] sm:$0x1]
  %v8162 = vsel %vm6926, %v7780, %v8161
  %8163 = vst [vmem:[%s7979 + $0x14c] sm:$0x1] %v8162
  %v8164 = vld [vmem:[%s7979 + $0x150] sm:$0xf]
  %v8165 = vsel %vm7981, %v7787, %v8164
  %8166 = vst [vmem:[%s7979 + $0x150] sm:$0xf] %v8165
  %8167 = vst.msk [vmem:[%s7979 + $0x154] sm:$0xf] %vm6909, %v7796
  %v8168 = vld [vmem:[%s7979 + $0x158] sm:$0x1]
  %v8169 = vsel %vm6926, %v7797, %v8168
  %8170 = vst [vmem:[%s7979 + $0x158] sm:$0x1] %v8169
  %v8171 = vld [vmem:[%s7979 + $0x15c] sm:$0xf]
  %v8172 = vsel %vm7981, %v7804, %v8171
  %8173 = vst [vmem:[%s7979 + $0x15c] sm:$0xf] %v8172
  %8174 = vst.msk [vmem:[%s7979 + $0x160] sm:$0xf] %vm6909, %v7813
  %v8175 = vld [vmem:[%s7979 + $0x164] sm:$0x1]
  %v8176 = vsel %vm6926, %v7814, %v8175
  %8177 = vst [vmem:[%s7979 + $0x164] sm:$0x1] %v8176
  %v8178 = vld [vmem:[%s7979 + $0x168] sm:$0xf]
  %v8179 = vsel %vm7981, %v7821, %v8178
  %8180 = vst [vmem:[%s7979 + $0x168] sm:$0xf] %v8179
  %8181 = vst.msk [vmem:[%s7979 + $0x16c] sm:$0xf] %vm6909, %v7830
  %v8182 = vld [vmem:[%s7979 + $0x170] sm:$0x1]
  %v8183 = vsel %vm6926, %v7831, %v8182
  %8184 = vst [vmem:[%s7979 + $0x170] sm:$0x1] %v8183
  %v8185 = vld [vmem:[%s7979 + $0x174] sm:$0xf]
  %v8186 = vsel %vm7981, %v7838, %v8185
  %8187 = vst [vmem:[%s7979 + $0x174] sm:$0xf] %v8186
  %8188 = vst.msk [vmem:[%s7979 + $0x178] sm:$0xf] %vm6909, %v7847
  %v8189 = vld [vmem:[%s7979 + $0x17c] sm:$0x1]
  %v8190 = vsel %vm6926, %v7848, %v8189
  %8191 = vst [vmem:[%s7979 + $0x17c] sm:$0x1] %v8190
  %v8192 = vld [vmem:[%s7979 + $0x180] sm:$0xf]
  %v8193 = vsel %vm7981, %v7855, %v8192
  %8194 = vst [vmem:[%s7979 + $0x180] sm:$0xf] %v8193
  %8195 = vst.msk [vmem:[%s7979 + $0x184] sm:$0xf] %vm6909, %v7864
  %v8196 = vld [vmem:[%s7979 + $0x188] sm:$0x1]
  %v8197 = vsel %vm6926, %v7865, %v8196
  %8198 = vst [vmem:[%s7979 + $0x188] sm:$0x1] %v8197
  %v8199 = vld [vmem:[%s7979 + $0x18c] sm:$0xf]
  %v8200 = vsel %vm7981, %v7872, %v8199
  %8201 = vst [vmem:[%s7979 + $0x18c] sm:$0xf] %v8200
  %8202 = vst.msk [vmem:[%s7979 + $0x190] sm:$0xf] %vm6909, %v7881
  %v8203 = vld [vmem:[%s7979 + $0x194] sm:$0x1]
  %v8204 = vsel %vm6926, %v7882, %v8203
  %8205 = vst [vmem:[%s7979 + $0x194] sm:$0x1] %v8204
  %v8206 = vld [vmem:[#allocation2] sm:$0xf]
  %v8207 = vld [vmem:[#allocation2 + $0x4] sm:$0xf]
  %v8208 = vld [vmem:[#allocation2 + $0xc] sm:$0xf]
  %v8209 = vld [vmem:[#allocation2 + $0x10] sm:$0xf]
  %v8210 = vld [vmem:[#allocation2 + $0x18] sm:$0xf]
  %v8211 = vld [vmem:[#allocation2 + $0x1c] sm:$0xf]
  %v8212 = vld [vmem:[#allocation2 + $0x24] sm:$0xf]
  %v8213 = vld [vmem:[#allocation2 + $0x28] sm:$0xf]
  %v8214 = vld [vmem:[#allocation2 + $0x30] sm:$0xf]
  %v8215 = vld [vmem:[#allocation2 + $0x34] sm:$0xf]
  %v8216 = vld [vmem:[#allocation2 + $0x3c] sm:$0xf]
  %v8217 = vld [vmem:[#allocation2 + $0x40] sm:$0xf]
  %v8218 = vld [vmem:[#allocation2 + $0x48] sm:$0xf]
  %v8219 = vld [vmem:[#allocation2 + $0x4c] sm:$0xf]
  %v8220 = vld [vmem:[#allocation2 + $0x54] sm:$0xf]
  %v8221 = vld [vmem:[#allocation2 + $0x58] sm:$0xf]
  %v8222 = vld [vmem:[#allocation2 + $0x60] sm:$0xf]
  %v8223 = vld [vmem:[#allocation2 + $0x64] sm:$0xf]
  %v8224 = vld [vmem:[#allocation2 + $0x6c] sm:$0xf]
  %v8225 = vld [vmem:[#allocation2 + $0x70] sm:$0xf]
  %v8226 = vld [vmem:[#allocation2 + $0x78] sm:$0xf]
  %v8227 = vld [vmem:[#allocation2 + $0x7c] sm:$0xf]
  %v8228 = vld [vmem:[#allocation2 + $0x84] sm:$0xf]
  %v8229 = vld [vmem:[#allocation2 + $0x88] sm:$0xf]
  %v8230 = vld [vmem:[#allocation2 + $0x90] sm:$0xf]
  %v8231 = vld [vmem:[#allocation2 + $0x94] sm:$0xf]
  %v8232 = vld [vmem:[#allocation2 + $0x9c] sm:$0xf]
  %v8233 = vld [vmem:[#allocation2 + $0xa0] sm:$0xf]
  %v8234 = vld [vmem:[#allocation2 + $0xa8] sm:$0xf]
  %v8235 = vld [vmem:[#allocation2 + $0xac] sm:$0xf]
  %v8236 = vld [vmem:[#allocation2 + $0xb4] sm:$0xf]
  %v8237 = vld [vmem:[#allocation2 + $0xb8] sm:$0xf]
  %v8238 = vld [vmem:[#allocation2 + $0xd8] sm:$0xf]
  %v8239 = vld [vmem:[#allocation2 + $0xdc] sm:$0xf]
  %v8240 = vld [vmem:[#allocation2 + $0xe4] sm:$0xf]
  %v8241 = vld [vmem:[#allocation2 + $0xe8] sm:$0xf]
  %v8242 = vld [vmem:[#allocation2 + $0xf0] sm:$0xf]
  %v8243 = vld [vmem:[#allocation2 + $0xf4] sm:$0xf]
  %v8244 = vld [vmem:[#allocation2 + $0xfc] sm:$0xf]
  %v8245 = vld [vmem:[#allocation2 + $0x100] sm:$0xf]
  %v8246 = vld [vmem:[#allocation2 + $0x108] sm:$0xf]
  %v8247 = vld [vmem:[#allocation2 + $0x10c] sm:$0xf]
  %v8248 = vld [vmem:[#allocation2 + $0x114] sm:$0xf]
  %v8249 = vld [vmem:[#allocation2 + $0x118] sm:$0xf]
  %v8250 = vld [vmem:[#allocation2 + $0x120] sm:$0xf]
  %v8251 = vld [vmem:[#allocation2 + $0x124] sm:$0xf]
  %v8252 = vld [vmem:[#allocation2 + $0x12c] sm:$0xf]
  %v8253 = vld [vmem:[#allocation2 + $0x130] sm:$0xf]
  %v8254 = vld [vmem:[#allocation2 + $0x138] sm:$0xf]
  %v8255 = vld [vmem:[#allocation2 + $0x13c] sm:$0xf]
  %v8256 = vld [vmem:[#allocation2 + $0x144] sm:$0xf]
  %v8257 = vld [vmem:[#allocation2 + $0x148] sm:$0xf]
  %v8258 = vld [vmem:[#allocation2 + $0x150] sm:$0xf]
  %v8259 = vld [vmem:[#allocation2 + $0x154] sm:$0xf]
  %v8260 = vld [vmem:[#allocation2 + $0x15c] sm:$0xf]
  %v8261 = vld [vmem:[#allocation2 + $0x160] sm:$0xf]
  %v8262 = vld [vmem:[#allocation2 + $0x168] sm:$0xf]
  %v8263 = vld [vmem:[#allocation2 + $0x16c] sm:$0xf]
  %v8264 = vld [vmem:[#allocation2 + $0x174] sm:$0xf]
  %v8265 = vld [vmem:[#allocation2 + $0x178] sm:$0xf]
  %v8266 = vld [vmem:[#allocation2 + $0x180] sm:$0xf]
  %v8267 = vld [vmem:[#allocation2 + $0x184] sm:$0xf]
  %v8268 = vld [vmem:[#allocation2 + $0x18c] sm:$0xf]
  %v8269 = vld [vmem:[#allocation2 + $0x190] sm:$0xf]
  %v8270 = vld [vmem:[#allocation2 + $0x8] sm:$0x1]
  %v8271 = vld [vmem:[#allocation2 + $0x14] sm:$0x1]
  %v8272 = vld [vmem:[#allocation2 + $0x20] sm:$0x1]
  %v8273 = vld [vmem:[#allocation2 + $0x2c] sm:$0x1]
  %v8274 = vld [vmem:[#allocation2 + $0x38] sm:$0x1]
  %v8275 = vld [vmem:[#allocation2 + $0x44] sm:$0x1]
  %v8276 = vld [vmem:[#allocation2 + $0x50] sm:$0x1]
  %v8277 = vld [vmem:[#allocation2 + $0x5c] sm:$0x1]
  %v8278 = vld [vmem:[#allocation2 + $0x68] sm:$0x1]
  %v8279 = vld [vmem:[#allocation2 + $0x74] sm:$0x1]
  %v8280 = vld [vmem:[#allocation2 + $0x80] sm:$0x1]
  %v8281 = vld [vmem:[#allocation2 + $0x8c] sm:$0x1]
  %v8282 = vld [vmem:[#allocation2 + $0x98] sm:$0x1]
  %v8283 = vld [vmem:[#allocation2 + $0xa4] sm:$0x1]
  %v8284 = vld [vmem:[#allocation2 + $0xb0] sm:$0x1]
  %v8285 = vld [vmem:[#allocation2 + $0xbc] sm:$0x1]
  %v8286 = vld [vmem:[#allocation2 + $0xe0] sm:$0x1]
  %v8287 = vld [vmem:[#allocation2 + $0xec] sm:$0x1]
  %v8288 = vld [vmem:[#allocation2 + $0xf8] sm:$0x1]
  %v8289 = vld [vmem:[#allocation2 + $0x104] sm:$0x1]
  %v8290 = vld [vmem:[#allocation2 + $0x110] sm:$0x1]
  %v8291 = vld [vmem:[#allocation2 + $0x11c] sm:$0x1]
  %v8292 = vld [vmem:[#allocation2 + $0x128] sm:$0x1]
  %v8293 = vld [vmem:[#allocation2 + $0x134] sm:$0x1]
  %v8294 = vld [vmem:[#allocation2 + $0x140] sm:$0x1]
  %v8295 = vld [vmem:[#allocation2 + $0x14c] sm:$0x1]
  %v8296 = vld [vmem:[#allocation2 + $0x158] sm:$0x1]
  %v8297 = vld [vmem:[#allocation2 + $0x164] sm:$0x1]
  %v8298 = vld [vmem:[#allocation2 + $0x170] sm:$0x1]
  %v8299 = vld [vmem:[#allocation2 + $0x17c] sm:$0x1]
  %v8300 = vld [vmem:[#allocation2 + $0x188] sm:$0x1]
  %v8301 = vld [vmem:[#allocation2 + $0x194] sm:$0x1]
  %v8303 = vshrl.u32 %v8206, 16
  %v8305 = vrot.slane %v8303, 4
  %v8306 = vshll.u32 %v8206, 16
  %v8308 = vrot.slane %v8306, 5
  %v8309 = vor.u32 %v8305, %v8308
  %v8310 = vrot.slane %v8309, 4
  %v8312 = vshll.u32 %v8207, 16
  %v8314 = vrot.slane %v8312, 5
  %v8315 = vsel %vm128, %v8310, %v8314
  %v8316 = vshrl.u32 %v8207, 16
  %v8318 = vrot.slane %v8316, 4
  %v8319 = vor.u32 %v8318, %v8314
  %v8320 = vrot.slane %v8319, 4
  %v8322 = vshll.u32 %v8270, 16
  %v8324 = vrot.slane %v8322, 5
  %v8325 = vsel %vm128, %v8320, %v8324
  %v8327 = vshrl.u32 %v8208, 16
  %v8329 = vrot.slane %v8327, 4
  %v8330 = vshll.u32 %v8208, 16
  %v8332 = vrot.slane %v8330, 5
  %v8333 = vor.u32 %v8329, %v8332
  %v8334 = vrot.slane %v8333, 4
  %v8336 = vshll.u32 %v8209, 16
  %v8338 = vrot.slane %v8336, 5
  %v8339 = vsel %vm128, %v8334, %v8338
  %v8340 = vshrl.u32 %v8209, 16
  %v8342 = vrot.slane %v8340, 4
  %v8343 = vor.u32 %v8342, %v8338
  %v8344 = vrot.slane %v8343, 4
  %v8346 = vshll.u32 %v8271, 16
  %v8348 = vrot.slane %v8346, 5
  %v8349 = vsel %vm128, %v8344, %v8348
  %v8351 = vshrl.u32 %v8210, 16
  %v8353 = vrot.slane %v8351, 4
  %v8354 = vshll.u32 %v8210, 16
  %v8356 = vrot.slane %v8354, 5
  %v8357 = vor.u32 %v8353, %v8356
  %v8358 = vrot.slane %v8357, 4
  %v8360 = vshll.u32 %v8211, 16
  %v8362 = vrot.slane %v8360, 5
  %v8363 = vsel %vm128, %v8358, %v8362
  %v8364 = vshrl.u32 %v8211, 16
  %v8366 = vrot.slane %v8364, 4
  %v8367 = vor.u32 %v8366, %v8362
  %v8368 = vrot.slane %v8367, 4
  %v8370 = vshll.u32 %v8272, 16
  %v8372 = vrot.slane %v8370, 5
  %v8373 = vsel %vm128, %v8368, %v8372
  %v8375 = vshrl.u32 %v8212, 16
  %v8377 = vrot.slane %v8375, 4
  %v8378 = vshll.u32 %v8212, 16
  %v8380 = vrot.slane %v8378, 5
  %v8381 = vor.u32 %v8377, %v8380
  %v8382 = vrot.slane %v8381, 4
  %v8384 = vshll.u32 %v8213, 16
  %v8386 = vrot.slane %v8384, 5
  %v8387 = vsel %vm128, %v8382, %v8386
  %v8388 = vshrl.u32 %v8213, 16
  %v8390 = vrot.slane %v8388, 4
  %v8391 = vor.u32 %v8390, %v8386
  %v8392 = vrot.slane %v8391, 4
  %v8394 = vshll.u32 %v8273, 16
  %v8396 = vrot.slane %v8394, 5
  %v8397 = vsel %vm128, %v8392, %v8396
  %v8399 = vshrl.u32 %v8214, 16
  %v8401 = vrot.slane %v8399, 4
  %v8402 = vshll.u32 %v8214, 16
  %v8404 = vrot.slane %v8402, 5
  %v8405 = vor.u32 %v8401, %v8404
  %v8406 = vrot.slane %v8405, 4
  %v8408 = vshll.u32 %v8215, 16
  %v8410 = vrot.slane %v8408, 5
  %v8411 = vsel %vm128, %v8406, %v8410
  %v8412 = vshrl.u32 %v8215, 16
  %v8414 = vrot.slane %v8412, 4
  %v8415 = vor.u32 %v8414, %v8410
  %v8416 = vrot.slane %v8415, 4
  %v8418 = vshll.u32 %v8274, 16
  %v8420 = vrot.slane %v8418, 5
  %v8421 = vsel %vm128, %v8416, %v8420
  %v8423 = vshrl.u32 %v8216, 16
  %v8425 = vrot.slane %v8423, 4
  %v8426 = vshll.u32 %v8216, 16
  %v8428 = vrot.slane %v8426, 5
  %v8429 = vor.u32 %v8425, %v8428
  %v8430 = vrot.slane %v8429, 4
  %v8432 = vshll.u32 %v8217, 16
  %v8434 = vrot.slane %v8432, 5
  %v8435 = vsel %vm128, %v8430, %v8434
  %v8436 = vshrl.u32 %v8217, 16
  %v8438 = vrot.slane %v8436, 4
  %v8439 = vor.u32 %v8438, %v8434
  %v8440 = vrot.slane %v8439, 4
  %v8442 = vshll.u32 %v8275, 16
  %v8444 = vrot.slane %v8442, 5
  %v8445 = vsel %vm128, %v8440, %v8444
  %v8447 = vshrl.u32 %v8218, 16
  %v8449 = vrot.slane %v8447, 4
  %v8450 = vshll.u32 %v8218, 16
  %v8452 = vrot.slane %v8450, 5
  %v8453 = vor.u32 %v8449, %v8452
  %v8454 = vrot.slane %v8453, 4
  %v8456 = vshll.u32 %v8219, 16
  %v8458 = vrot.slane %v8456, 5
  %v8459 = vsel %vm128, %v8454, %v8458
  %v8460 = vshrl.u32 %v8219, 16
  %v8462 = vrot.slane %v8460, 4
  %v8463 = vor.u32 %v8462, %v8458
  %v8464 = vrot.slane %v8463, 4
  %v8466 = vshll.u32 %v8276, 16
  %v8468 = vrot.slane %v8466, 5
  %v8469 = vsel %vm128, %v8464, %v8468
  %v8471 = vshrl.u32 %v8220, 16
  %v8473 = vrot.slane %v8471, 4
  %v8474 = vshll.u32 %v8220, 16
  %v8476 = vrot.slane %v8474, 5
  %v8477 = vor.u32 %v8473, %v8476
  %v8478 = vrot.slane %v8477, 4
  %v8480 = vshll.u32 %v8221, 16
  %v8482 = vrot.slane %v8480, 5
  %v8483 = vsel %vm128, %v8478, %v8482
  %v8484 = vshrl.u32 %v8221, 16
  %v8486 = vrot.slane %v8484, 4
  %v8487 = vor.u32 %v8486, %v8482
  %v8488 = vrot.slane %v8487, 4
  %v8490 = vshll.u32 %v8277, 16
  %v8492 = vrot.slane %v8490, 5
  %v8493 = vsel %vm128, %v8488, %v8492
  %v8495 = vshrl.u32 %v8222, 16
  %v8497 = vrot.slane %v8495, 4
  %v8498 = vshll.u32 %v8222, 16
  %v8500 = vrot.slane %v8498, 5
  %v8501 = vor.u32 %v8497, %v8500
  %v8502 = vrot.slane %v8501, 4
  %v8504 = vshll.u32 %v8223, 16
  %v8506 = vrot.slane %v8504, 5
  %v8507 = vsel %vm128, %v8502, %v8506
  %v8508 = vshrl.u32 %v8223, 16
  %v8510 = vrot.slane %v8508, 4
  %v8511 = vor.u32 %v8510, %v8506
  %v8512 = vrot.slane %v8511, 4
  %v8514 = vshll.u32 %v8278, 16
  %v8516 = vrot.slane %v8514, 5
  %v8517 = vsel %vm128, %v8512, %v8516
  %v8519 = vshrl.u32 %v8224, 16
  %v8521 = vrot.slane %v8519, 4
  %v8522 = vshll.u32 %v8224, 16
  %v8524 = vrot.slane %v8522, 5
  %v8525 = vor.u32 %v8521, %v8524
  %v8526 = vrot.slane %v8525, 4
  %v8528 = vshll.u32 %v8225, 16
  %v8530 = vrot.slane %v8528, 5
  %v8531 = vsel %vm128, %v8526, %v8530
  %v8532 = vshrl.u32 %v8225, 16
  %v8534 = vrot.slane %v8532, 4
  %v8535 = vor.u32 %v8534, %v8530
  %v8536 = vrot.slane %v8535, 4
  %v8538 = vshll.u32 %v8279, 16
  %v8540 = vrot.slane %v8538, 5
  %v8541 = vsel %vm128, %v8536, %v8540
  %v8543 = vshrl.u32 %v8226, 16
  %v8545 = vrot.slane %v8543, 4
  %v8546 = vshll.u32 %v8226, 16
  %v8548 = vrot.slane %v8546, 5
  %v8549 = vor.u32 %v8545, %v8548
  %v8550 = vrot.slane %v8549, 4
  %v8552 = vshll.u32 %v8227, 16
  %v8554 = vrot.slane %v8552, 5
  %v8555 = vsel %vm128, %v8550, %v8554
  %v8556 = vshrl.u32 %v8227, 16
  %v8558 = vrot.slane %v8556, 4
  %v8559 = vor.u32 %v8558, %v8554
  %v8560 = vrot.slane %v8559, 4
  %v8562 = vshll.u32 %v8280, 16
  %v8564 = vrot.slane %v8562, 5
  %v8565 = vsel %vm128, %v8560, %v8564
  %v8567 = vshrl.u32 %v8228, 16
  %v8569 = vrot.slane %v8567, 4
  %v8570 = vshll.u32 %v8228, 16
  %v8572 = vrot.slane %v8570, 5
  %v8573 = vor.u32 %v8569, %v8572
  %v8574 = vrot.slane %v8573, 4
  %v8576 = vshll.u32 %v8229, 16
  %v8578 = vrot.slane %v8576, 5
  %v8579 = vsel %vm128, %v8574, %v8578
  %v8580 = vshrl.u32 %v8229, 16
  %v8582 = vrot.slane %v8580, 4
  %v8583 = vor.u32 %v8582, %v8578
  %v8584 = vrot.slane %v8583, 4
  %v8586 = vshll.u32 %v8281, 16
  %v8588 = vrot.slane %v8586, 5
  %v8589 = vsel %vm128, %v8584, %v8588
  %v8591 = vshrl.u32 %v8230, 16
  %v8593 = vrot.slane %v8591, 4
  %v8594 = vshll.u32 %v8230, 16
  %v8596 = vrot.slane %v8594, 5
  %v8597 = vor.u32 %v8593, %v8596
  %v8598 = vrot.slane %v8597, 4
  %v8600 = vshll.u32 %v8231, 16
  %v8602 = vrot.slane %v8600, 5
  %v8603 = vsel %vm128, %v8598, %v8602
  %v8604 = vshrl.u32 %v8231, 16
  %v8606 = vrot.slane %v8604, 4
  %v8607 = vor.u32 %v8606, %v8602
  %v8608 = vrot.slane %v8607, 4
  %v8610 = vshll.u32 %v8282, 16
  %v8612 = vrot.slane %v8610, 5
  %v8613 = vsel %vm128, %v8608, %v8612
  %v8615 = vshrl.u32 %v8232, 16
  %v8617 = vrot.slane %v8615, 4
  %v8618 = vshll.u32 %v8232, 16
  %v8620 = vrot.slane %v8618, 5
  %v8621 = vor.u32 %v8617, %v8620
  %v8622 = vrot.slane %v8621, 4
  %v8624 = vshll.u32 %v8233, 16
  %v8626 = vrot.slane %v8624, 5
  %v8627 = vsel %vm128, %v8622, %v8626
  %v8628 = vshrl.u32 %v8233, 16
  %v8630 = vrot.slane %v8628, 4
  %v8631 = vor.u32 %v8630, %v8626
  %v8632 = vrot.slane %v8631, 4
  %v8634 = vshll.u32 %v8283, 16
  %v8636 = vrot.slane %v8634, 5
  %v8637 = vsel %vm128, %v8632, %v8636
  %v8639 = vshrl.u32 %v8234, 16
  %v8641 = vrot.slane %v8639, 4
  %v8642 = vshll.u32 %v8234, 16
  %v8644 = vrot.slane %v8642, 5
  %v8645 = vor.u32 %v8641, %v8644
  %v8646 = vrot.slane %v8645, 4
  %v8648 = vshll.u32 %v8235, 16
  %v8650 = vrot.slane %v8648, 5
  %v8651 = vsel %vm128, %v8646, %v8650
  %v8652 = vshrl.u32 %v8235, 16
  %v8654 = vrot.slane %v8652, 4
  %v8655 = vor.u32 %v8654, %v8650
  %v8656 = vrot.slane %v8655, 4
  %v8658 = vshll.u32 %v8284, 16
  %v8660 = vrot.slane %v8658, 5
  %v8661 = vsel %vm128, %v8656, %v8660
  %v8663 = vshrl.u32 %v8236, 16
  %v8665 = vrot.slane %v8663, 4
  %v8666 = vshll.u32 %v8236, 16
  %v8668 = vrot.slane %v8666, 5
  %v8669 = vor.u32 %v8665, %v8668
  %v8670 = vrot.slane %v8669, 4
  %v8672 = vshll.u32 %v8237, 16
  %v8674 = vrot.slane %v8672, 5
  %v8675 = vsel %vm128, %v8670, %v8674
  %v8676 = vshrl.u32 %v8237, 16
  %v8678 = vrot.slane %v8676, 4
  %v8679 = vor.u32 %v8678, %v8674
  %v8680 = vrot.slane %v8679, 4
  %v8682 = vshll.u32 %v8285, 16
  %v8684 = vrot.slane %v8682, 5
  %v8685 = vsel %vm128, %v8680, %v8684
  %v8687 = vshrl.u32 %v8238, 16
  %v8689 = vrot.slane %v8687, 4
  %v8690 = vshll.u32 %v8238, 16
  %v8692 = vrot.slane %v8690, 5
  %v8693 = vor.u32 %v8689, %v8692
  %v8694 = vrot.slane %v8693, 4
  %v8696 = vshll.u32 %v8239, 16
  %v8698 = vrot.slane %v8696, 5
  %v8699 = vsel %vm128, %v8694, %v8698
  %v8700 = vshrl.u32 %v8239, 16
  %v8702 = vrot.slane %v8700, 4
  %v8703 = vor.u32 %v8702, %v8698
  %v8704 = vrot.slane %v8703, 4
  %v8706 = vshll.u32 %v8286, 16
  %v8708 = vrot.slane %v8706, 5
  %v8709 = vsel %vm128, %v8704, %v8708
  %v8711 = vshrl.u32 %v8240, 16
  %v8713 = vrot.slane %v8711, 4
  %v8714 = vshll.u32 %v8240, 16
  %v8716 = vrot.slane %v8714, 5
  %v8717 = vor.u32 %v8713, %v8716
  %v8718 = vrot.slane %v8717, 4
  %v8720 = vshll.u32 %v8241, 16
  %v8722 = vrot.slane %v8720, 5
  %v8723 = vsel %vm128, %v8718, %v8722
  %v8724 = vshrl.u32 %v8241, 16
  %v8726 = vrot.slane %v8724, 4
  %v8727 = vor.u32 %v8726, %v8722
  %v8728 = vrot.slane %v8727, 4
  %v8730 = vshll.u32 %v8287, 16
  %v8732 = vrot.slane %v8730, 5
  %v8733 = vsel %vm128, %v8728, %v8732
  %v8735 = vshrl.u32 %v8242, 16
  %v8737 = vrot.slane %v8735, 4
  %v8738 = vshll.u32 %v8242, 16
  %v8740 = vrot.slane %v8738, 5
  %v8741 = vor.u32 %v8737, %v8740
  %v8742 = vrot.slane %v8741, 4
  %v8744 = vshll.u32 %v8243, 16
  %v8746 = vrot.slane %v8744, 5
  %v8747 = vsel %vm128, %v8742, %v8746
  %v8748 = vshrl.u32 %v8243, 16
  %v8750 = vrot.slane %v8748, 4
  %v8751 = vor.u32 %v8750, %v8746
  %v8752 = vrot.slane %v8751, 4
  %v8754 = vshll.u32 %v8288, 16
  %v8756 = vrot.slane %v8754, 5
  %v8757 = vsel %vm128, %v8752, %v8756
  %v8759 = vshrl.u32 %v8244, 16
  %v8761 = vrot.slane %v8759, 4
  %v8762 = vshll.u32 %v8244, 16
  %v8764 = vrot.slane %v8762, 5
  %v8765 = vor.u32 %v8761, %v8764
  %v8766 = vrot.slane %v8765, 4
  %v8768 = vshll.u32 %v8245, 16
  %v8770 = vrot.slane %v8768, 5
  %v8771 = vsel %vm128, %v8766, %v8770
  %v8772 = vshrl.u32 %v8245, 16
  %v8774 = vrot.slane %v8772, 4
  %v8775 = vor.u32 %v8774, %v8770
  %v8776 = vrot.slane %v8775, 4
  %v8778 = vshll.u32 %v8289, 16
  %v8780 = vrot.slane %v8778, 5
  %v8781 = vsel %vm128, %v8776, %v8780
  %v8783 = vshrl.u32 %v8246, 16
  %v8785 = vrot.slane %v8783, 4
  %v8786 = vshll.u32 %v8246, 16
  %v8788 = vrot.slane %v8786, 5
  %v8789 = vor.u32 %v8785, %v8788
  %v8790 = vrot.slane %v8789, 4
  %v8792 = vshll.u32 %v8247, 16
  %v8794 = vrot.slane %v8792, 5
  %v8795 = vsel %vm128, %v8790, %v8794
  %v8796 = vshrl.u32 %v8247, 16
  %v8798 = vrot.slane %v8796, 4
  %v8799 = vor.u32 %v8798, %v8794
  %v8800 = vrot.slane %v8799, 4
  %v8802 = vshll.u32 %v8290, 16
  %v8804 = vrot.slane %v8802, 5
  %v8805 = vsel %vm128, %v8800, %v8804
  %v8807 = vshrl.u32 %v8248, 16
  %v8809 = vrot.slane %v8807, 4
  %v8810 = vshll.u32 %v8248, 16
  %v8812 = vrot.slane %v8810, 5
  %v8813 = vor.u32 %v8809, %v8812
  %v8814 = vrot.slane %v8813, 4
  %v8816 = vshll.u32 %v8249, 16
  %v8818 = vrot.slane %v8816, 5
  %v8819 = vsel %vm128, %v8814, %v8818
  %v8820 = vshrl.u32 %v8249, 16
  %v8822 = vrot.slane %v8820, 4
  %v8823 = vor.u32 %v8822, %v8818
  %v8824 = vrot.slane %v8823, 4
  %v8826 = vshll.u32 %v8291, 16
  %v8828 = vrot.slane %v8826, 5
  %v8829 = vsel %vm128, %v8824, %v8828
  %v8831 = vshrl.u32 %v8250, 16
  %v8833 = vrot.slane %v8831, 4
  %v8834 = vshll.u32 %v8250, 16
  %v8836 = vrot.slane %v8834, 5
  %v8837 = vor.u32 %v8833, %v8836
  %v8838 = vrot.slane %v8837, 4
  %v8840 = vshll.u32 %v8251, 16
  %v8842 = vrot.slane %v8840, 5
  %v8843 = vsel %vm128, %v8838, %v8842
  %v8844 = vshrl.u32 %v8251, 16
  %v8846 = vrot.slane %v8844, 4
  %v8847 = vor.u32 %v8846, %v8842
  %v8848 = vrot.slane %v8847, 4
  %v8850 = vshll.u32 %v8292, 16
  %v8852 = vrot.slane %v8850, 5
  %v8853 = vsel %vm128, %v8848, %v8852
  %v8855 = vshrl.u32 %v8252, 16
  %v8857 = vrot.slane %v8855, 4
  %v8858 = vshll.u32 %v8252, 16
  %v8860 = vrot.slane %v8858, 5
  %v8861 = vor.u32 %v8857, %v8860
  %v8862 = vrot.slane %v8861, 4
  %v8864 = vshll.u32 %v8253, 16
  %v8866 = vrot.slane %v8864, 5
  %v8867 = vsel %vm128, %v8862, %v8866
  %v8868 = vshrl.u32 %v8253, 16
  %v8870 = vrot.slane %v8868, 4
  %v8871 = vor.u32 %v8870, %v8866
  %v8872 = vrot.slane %v8871, 4
  %v8874 = vshll.u32 %v8293, 16
  %v8876 = vrot.slane %v8874, 5
  %v8877 = vsel %vm128, %v8872, %v8876
  %v8879 = vshrl.u32 %v8254, 16
  %v8881 = vrot.slane %v8879, 4
  %v8882 = vshll.u32 %v8254, 16
  %v8884 = vrot.slane %v8882, 5
  %v8885 = vor.u32 %v8881, %v8884
  %v8886 = vrot.slane %v8885, 4
  %v8888 = vshll.u32 %v8255, 16
  %v8890 = vrot.slane %v8888, 5
  %v8891 = vsel %vm128, %v8886, %v8890
  %v8892 = vshrl.u32 %v8255, 16
  %v8894 = vrot.slane %v8892, 4
  %v8895 = vor.u32 %v8894, %v8890
  %v8896 = vrot.slane %v8895, 4
  %v8898 = vshll.u32 %v8294, 16
  %v8900 = vrot.slane %v8898, 5
  %v8901 = vsel %vm128, %v8896, %v8900
  %v8903 = vshrl.u32 %v8256, 16
  %v8905 = vrot.slane %v8903, 4
  %v8906 = vshll.u32 %v8256, 16
  %v8908 = vrot.slane %v8906, 5
  %v8909 = vor.u32 %v8905, %v8908
  %v8910 = vrot.slane %v8909, 4
  %v8912 = vshll.u32 %v8257, 16
  %v8914 = vrot.slane %v8912, 5
  %v8915 = vsel %vm128, %v8910, %v8914
  %v8916 = vshrl.u32 %v8257, 16
  %v8918 = vrot.slane %v8916, 4
  %v8919 = vor.u32 %v8918, %v8914
  %v8920 = vrot.slane %v8919, 4
  %v8922 = vshll.u32 %v8295, 16
  %v8924 = vrot.slane %v8922, 5
  %v8925 = vsel %vm128, %v8920, %v8924
  %v8927 = vshrl.u32 %v8258, 16
  %v8929 = vrot.slane %v8927, 4
  %v8930 = vshll.u32 %v8258, 16
  %v8932 = vrot.slane %v8930, 5
  %v8933 = vor.u32 %v8929, %v8932
  %v8934 = vrot.slane %v8933, 4
  %v8936 = vshll.u32 %v8259, 16
  %v8938 = vrot.slane %v8936, 5
  %v8939 = vsel %vm128, %v8934, %v8938
  %v8940 = vshrl.u32 %v8259, 16
  %v8942 = vrot.slane %v8940, 4
  %v8943 = vor.u32 %v8942, %v8938
  %v8944 = vrot.slane %v8943, 4
  %v8946 = vshll.u32 %v8296, 16
  %v8948 = vrot.slane %v8946, 5
  %v8949 = vsel %vm128, %v8944, %v8948
  %v8951 = vshrl.u32 %v8260, 16
  %v8953 = vrot.slane %v8951, 4
  %v8954 = vshll.u32 %v8260, 16
  %v8956 = vrot.slane %v8954, 5
  %v8957 = vor.u32 %v8953, %v8956
  %v8958 = vrot.slane %v8957, 4
  %v8960 = vshll.u32 %v8261, 16
  %v8962 = vrot.slane %v8960, 5
  %v8963 = vsel %vm128, %v8958, %v8962
  %v8964 = vshrl.u32 %v8261, 16
  %v8966 = vrot.slane %v8964, 4
  %v8967 = vor.u32 %v8966, %v8962
  %v8968 = vrot.slane %v8967, 4
  %v8970 = vshll.u32 %v8297, 16
  %v8972 = vrot.slane %v8970, 5
  %v8973 = vsel %vm128, %v8968, %v8972
  %v8975 = vshrl.u32 %v8262, 16
  %v8977 = vrot.slane %v8975, 4
  %v8978 = vshll.u32 %v8262, 16
  %v8980 = vrot.slane %v8978, 5
  %v8981 = vor.u32 %v8977, %v8980
  %v8982 = vrot.slane %v8981, 4
  %v8984 = vshll.u32 %v8263, 16
  %v8986 = vrot.slane %v8984, 5
  %v8987 = vsel %vm128, %v8982, %v8986
  %v8988 = vshrl.u32 %v8263, 16
  %v8990 = vrot.slane %v8988, 4
  %v8991 = vor.u32 %v8990, %v8986
  %v8992 = vrot.slane %v8991, 4
  %v8994 = vshll.u32 %v8298, 16
  %v8996 = vrot.slane %v8994, 5
  %v8997 = vsel %vm128, %v8992, %v8996
  %v8999 = vshrl.u32 %v8264, 16
  %v9001 = vrot.slane %v8999, 4
  %v9002 = vshll.u32 %v8264, 16
  %v9004 = vrot.slane %v9002, 5
  %v9005 = vor.u32 %v9001, %v9004
  %v9006 = vrot.slane %v9005, 4
  %v9008 = vshll.u32 %v8265, 16
  %v9010 = vrot.slane %v9008, 5
  %v9011 = vsel %vm128, %v9006, %v9010
  %v9012 = vshrl.u32 %v8265, 16
  %v9014 = vrot.slane %v9012, 4
  %v9015 = vor.u32 %v9014, %v9010
  %v9016 = vrot.slane %v9015, 4
  %v9018 = vshll.u32 %v8299, 16
  %v9020 = vrot.slane %v9018, 5
  %v9021 = vsel %vm128, %v9016, %v9020
  %v9023 = vshrl.u32 %v8266, 16
  %v9025 = vrot.slane %v9023, 4
  %v9026 = vshll.u32 %v8266, 16
  %v9028 = vrot.slane %v9026, 5
  %v9029 = vor.u32 %v9025, %v9028
  %v9030 = vrot.slane %v9029, 4
  %v9032 = vshll.u32 %v8267, 16
  %v9034 = vrot.slane %v9032, 5
  %v9035 = vsel %vm128, %v9030, %v9034
  %v9036 = vshrl.u32 %v8267, 16
  %v9038 = vrot.slane %v9036, 4
  %v9039 = vor.u32 %v9038, %v9034
  %v9040 = vrot.slane %v9039, 4
  %v9042 = vshll.u32 %v8300, 16
  %v9044 = vrot.slane %v9042, 5
  %v9045 = vsel %vm128, %v9040, %v9044
  %v9047 = vshrl.u32 %v8268, 16
  %v9049 = vrot.slane %v9047, 4
  %v9050 = vshll.u32 %v8268, 16
  %v9052 = vrot.slane %v9050, 5
  %v9053 = vor.u32 %v9049, %v9052
  %v9054 = vrot.slane %v9053, 4
  %v9056 = vshll.u32 %v8269, 16
  %v9058 = vrot.slane %v9056, 5
  %v9059 = vsel %vm128, %v9054, %v9058
  %v9060 = vshrl.u32 %v8269, 16
  %v9062 = vrot.slane %v9060, 4
  %v9063 = vor.u32 %v9062, %v9058
  %v9064 = vrot.slane %v9063, 4
  %v9066 = vshll.u32 %v8301, 16
  %v9068 = vrot.slane %v9066, 5
  %v9069 = vsel %vm128, %v9064, %v9068
  %v9070 = vld [vmem:[#allocation2] sm:$0xe]
  %v9071 = vld [vmem:[#allocation2 + $0xc] sm:$0xe]
  %v9072 = vld [vmem:[#allocation2 + $0x18] sm:$0xe]
  %v9073 = vld [vmem:[#allocation2 + $0x24] sm:$0xe]
  %v9074 = vld [vmem:[#allocation2 + $0x30] sm:$0xe]
  %v9075 = vld [vmem:[#allocation2 + $0x3c] sm:$0xe]
  %v9076 = vld [vmem:[#allocation2 + $0x48] sm:$0xe]
  %v9077 = vld [vmem:[#allocation2 + $0x54] sm:$0xe]
  %v9078 = vld [vmem:[#allocation2 + $0x60] sm:$0xe]
  %v9079 = vld [vmem:[#allocation2 + $0x6c] sm:$0xe]
  %v9080 = vld [vmem:[#allocation2 + $0x78] sm:$0xe]
  %v9081 = vld [vmem:[#allocation2 + $0x84] sm:$0xe]
  %v9082 = vld [vmem:[#allocation2 + $0x90] sm:$0xe]
  %v9083 = vld [vmem:[#allocation2 + $0x9c] sm:$0xe]
  %v9084 = vld [vmem:[#allocation2 + $0xa8] sm:$0xe]
  %v9085 = vld [vmem:[#allocation2 + $0xb4] sm:$0xe]
  %v9086 = vld [vmem:[#allocation2 + $0xd8] sm:$0xe]
  %v9087 = vld [vmem:[#allocation2 + $0xe4] sm:$0xe]
  %v9088 = vld [vmem:[#allocation2 + $0xf0] sm:$0xe]
  %v9089 = vld [vmem:[#allocation2 + $0xfc] sm:$0xe]
  %v9090 = vld [vmem:[#allocation2 + $0x108] sm:$0xe]
  %v9091 = vld [vmem:[#allocation2 + $0x114] sm:$0xe]
  %v9092 = vld [vmem:[#allocation2 + $0x120] sm:$0xe]
  %v9093 = vld [vmem:[#allocation2 + $0x12c] sm:$0xe]
  %v9094 = vld [vmem:[#allocation2 + $0x138] sm:$0xe]
  %v9095 = vld [vmem:[#allocation2 + $0x144] sm:$0xe]
  %v9096 = vld [vmem:[#allocation2 + $0x150] sm:$0xe]
  %v9097 = vld [vmem:[#allocation2 + $0x15c] sm:$0xe]
  %v9098 = vld [vmem:[#allocation2 + $0x168] sm:$0xe]
  %v9099 = vld [vmem:[#allocation2 + $0x174] sm:$0xe]
  %v9100 = vld [vmem:[#allocation2 + $0x180] sm:$0xe]
  %v9101 = vld [vmem:[#allocation2 + $0x18c] sm:$0xe]
  %v9198 = vrot.slane %v9070, 5
  %v9199 = vrot.slane %v9198, 4
  %v9200 = vrot.slane %v8207, 5
  %v9201 = vsel %vm1027, %v9199, %v9200
  %v9202 = vrot.slane %v9200, 4
  %v9203 = vrot.slane %v8270, 5
  %v9204 = vsel %vm1027, %v9202, %v9203
  %v9205 = vrot.slane %v9071, 5
  %v9206 = vrot.slane %v9205, 4
  %v9207 = vrot.slane %v8209, 5
  %v9208 = vsel %vm1027, %v9206, %v9207
  %v9209 = vrot.slane %v9207, 4
  %v9210 = vrot.slane %v8271, 5
  %v9211 = vsel %vm1027, %v9209, %v9210
  %v9212 = vrot.slane %v9072, 5
  %v9213 = vrot.slane %v9212, 4
  %v9214 = vrot.slane %v8211, 5
  %v9215 = vsel %vm1027, %v9213, %v9214
  %v9216 = vrot.slane %v9214, 4
  %v9217 = vrot.slane %v8272, 5
  %v9218 = vsel %vm1027, %v9216, %v9217
  %v9219 = vrot.slane %v9073, 5
  %v9220 = vrot.slane %v9219, 4
  %v9221 = vrot.slane %v8213, 5
  %v9222 = vsel %vm1027, %v9220, %v9221
  %v9223 = vrot.slane %v9221, 4
  %v9224 = vrot.slane %v8273, 5
  %v9225 = vsel %vm1027, %v9223, %v9224
  %v9226 = vrot.slane %v9074, 5
  %v9227 = vrot.slane %v9226, 4
  %v9228 = vrot.slane %v8215, 5
  %v9229 = vsel %vm1027, %v9227, %v9228
  %v9230 = vrot.slane %v9228, 4
  %v9231 = vrot.slane %v8274, 5
  %v9232 = vsel %vm1027, %v9230, %v9231
  %v9233 = vrot.slane %v9075, 5
  %v9234 = vrot.slane %v9233, 4
  %v9235 = vrot.slane %v8217, 5
  %v9236 = vsel %vm1027, %v9234, %v9235
  %v9237 = vrot.slane %v9235, 4
  %v9238 = vrot.slane %v8275, 5
  %v9239 = vsel %vm1027, %v9237, %v9238
  %v9240 = vrot.slane %v9076, 5
  %v9241 = vrot.slane %v9240, 4
  %v9242 = vrot.slane %v8219, 5
  %v9243 = vsel %vm1027, %v9241, %v9242
  %v9244 = vrot.slane %v9242, 4
  %v9245 = vrot.slane %v8276, 5
  %v9246 = vsel %vm1027, %v9244, %v9245
  %v9247 = vrot.slane %v9077, 5
  %v9248 = vrot.slane %v9247, 4
  %v9249 = vrot.slane %v8221, 5
  %v9250 = vsel %vm1027, %v9248, %v9249
  %v9251 = vrot.slane %v9249, 4
  %v9252 = vrot.slane %v8277, 5
  %v9253 = vsel %vm1027, %v9251, %v9252
  %v9254 = vrot.slane %v9078, 5
  %v9255 = vrot.slane %v9254, 4
  %v9256 = vrot.slane %v8223, 5
  %v9257 = vsel %vm1027, %v9255, %v9256
  %v9258 = vrot.slane %v9256, 4
  %v9259 = vrot.slane %v8278, 5
  %v9260 = vsel %vm1027, %v9258, %v9259
  %v9261 = vrot.slane %v9079, 5
  %v9262 = vrot.slane %v9261, 4
  %v9263 = vrot.slane %v8225, 5
  %v9264 = vsel %vm1027, %v9262, %v9263
  %v9265 = vrot.slane %v9263, 4
  %v9266 = vrot.slane %v8279, 5
  %v9267 = vsel %vm1027, %v9265, %v9266
  %v9268 = vrot.slane %v9080, 5
  %v9269 = vrot.slane %v9268, 4
  %v9270 = vrot.slane %v8227, 5
  %v9271 = vsel %vm1027, %v9269, %v9270
  %v9272 = vrot.slane %v9270, 4
  %v9273 = vrot.slane %v8280, 5
  %v9274 = vsel %vm1027, %v9272, %v9273
  %v9275 = vrot.slane %v9081, 5
  %v9276 = vrot.slane %v9275, 4
  %v9277 = vrot.slane %v8229, 5
  %v9278 = vsel %vm1027, %v9276, %v9277
  %v9279 = vrot.slane %v9277, 4
  %v9280 = vrot.slane %v8281, 5
  %v9281 = vsel %vm1027, %v9279, %v9280
  %v9282 = vrot.slane %v9082, 5
  %v9283 = vrot.slane %v9282, 4
  %v9284 = vrot.slane %v8231, 5
  %v9285 = vsel %vm1027, %v9283, %v9284
  %v9286 = vrot.slane %v9284, 4
  %v9287 = vrot.slane %v8282, 5
  %v9288 = vsel %vm1027, %v9286, %v9287
  %v9289 = vrot.slane %v9083, 5
  %v9290 = vrot.slane %v9289, 4
  %v9291 = vrot.slane %v8233, 5
  %v9292 = vsel %vm1027, %v9290, %v9291
  %v9293 = vrot.slane %v9291, 4
  %v9294 = vrot.slane %v8283, 5
  %v9295 = vsel %vm1027, %v9293, %v9294
  %v9296 = vrot.slane %v9084, 5
  %v9297 = vrot.slane %v9296, 4
  %v9298 = vrot.slane %v8235, 5
  %v9299 = vsel %vm1027, %v9297, %v9298
  %v9300 = vrot.slane %v9298, 4
  %v9301 = vrot.slane %v8284, 5
  %v9302 = vsel %vm1027, %v9300, %v9301
  %v9303 = vrot.slane %v9085, 5
  %v9304 = vrot.slane %v9303, 4
  %v9305 = vrot.slane %v8237, 5
  %v9306 = vsel %vm1027, %v9304, %v9305
  %v9307 = vrot.slane %v9305, 4
  %v9308 = vrot.slane %v8285, 5
  %v9309 = vsel %vm1027, %v9307, %v9308
  %v9310 = vrot.slane %v9086, 5
  %v9311 = vrot.slane %v9310, 4
  %v9312 = vrot.slane %v8239, 5
  %v9313 = vsel %vm1027, %v9311, %v9312
  %v9314 = vrot.slane %v9312, 4
  %v9315 = vrot.slane %v8286, 5
  %v9316 = vsel %vm1027, %v9314, %v9315
  %v9317 = vrot.slane %v9087, 5
  %v9318 = vrot.slane %v9317, 4
  %v9319 = vrot.slane %v8241, 5
  %v9320 = vsel %vm1027, %v9318, %v9319
  %v9321 = vrot.slane %v9319, 4
  %v9322 = vrot.slane %v8287, 5
  %v9323 = vsel %vm1027, %v9321, %v9322
  %v9324 = vrot.slane %v9088, 5
  %v9325 = vrot.slane %v9324, 4
  %v9326 = vrot.slane %v8243, 5
  %v9327 = vsel %vm1027, %v9325, %v9326
  %v9328 = vrot.slane %v9326, 4
  %v9329 = vrot.slane %v8288, 5
  %v9330 = vsel %vm1027, %v9328, %v9329
  %v9331 = vrot.slane %v9089, 5
  %v9332 = vrot.slane %v9331, 4
  %v9333 = vrot.slane %v8245, 5
  %v9334 = vsel %vm1027, %v9332, %v9333
  %v9335 = vrot.slane %v9333, 4
  %v9336 = vrot.slane %v8289, 5
  %v9337 = vsel %vm1027, %v9335, %v9336
  %v9338 = vrot.slane %v9090, 5
  %v9339 = vrot.slane %v9338, 4
  %v9340 = vrot.slane %v8247, 5
  %v9341 = vsel %vm1027, %v9339, %v9340
  %v9342 = vrot.slane %v9340, 4
  %v9343 = vrot.slane %v8290, 5
  %v9344 = vsel %vm1027, %v9342, %v9343
  %v9345 = vrot.slane %v9091, 5
  %v9346 = vrot.slane %v9345, 4
  %v9347 = vrot.slane %v8249, 5
  %v9348 = vsel %vm1027, %v9346, %v9347
  %v9349 = vrot.slane %v9347, 4
  %v9350 = vrot.slane %v8291, 5
  %v9351 = vsel %vm1027, %v9349, %v9350
  %v9352 = vrot.slane %v9092, 5
  %v9353 = vrot.slane %v9352, 4
  %v9354 = vrot.slane %v8251, 5
  %v9355 = vsel %vm1027, %v9353, %v9354
  %v9356 = vrot.slane %v9354, 4
  %v9357 = vrot.slane %v8292, 5
  %v9358 = vsel %vm1027, %v9356, %v9357
  %v9359 = vrot.slane %v9093, 5
  %v9360 = vrot.slane %v9359, 4
  %v9361 = vrot.slane %v8253, 5
  %v9362 = vsel %vm1027, %v9360, %v9361
  %v9363 = vrot.slane %v9361, 4
  %v9364 = vrot.slane %v8293, 5
  %v9365 = vsel %vm1027, %v9363, %v9364
  %v9366 = vrot.slane %v9094, 5
  %v9367 = vrot.slane %v9366, 4
  %v9368 = vrot.slane %v8255, 5
  %v9369 = vsel %vm1027, %v9367, %v9368
  %v9370 = vrot.slane %v9368, 4
  %v9371 = vrot.slane %v8294, 5
  %v9372 = vsel %vm1027, %v9370, %v9371
  %v9373 = vrot.slane %v9095, 5
  %v9374 = vrot.slane %v9373, 4
  %v9375 = vrot.slane %v8257, 5
  %v9376 = vsel %vm1027, %v9374, %v9375
  %v9377 = vrot.slane %v9375, 4
  %v9378 = vrot.slane %v8295, 5
  %v9379 = vsel %vm1027, %v9377, %v9378
  %v9380 = vrot.slane %v9096, 5
  %v9381 = vrot.slane %v9380, 4
  %v9382 = vrot.slane %v8259, 5
  %v9383 = vsel %vm1027, %v9381, %v9382
  %v9384 = vrot.slane %v9382, 4
  %v9385 = vrot.slane %v8296, 5
  %v9386 = vsel %vm1027, %v9384, %v9385
  %v9387 = vrot.slane %v9097, 5
  %v9388 = vrot.slane %v9387, 4
  %v9389 = vrot.slane %v8261, 5
  %v9390 = vsel %vm1027, %v9388, %v9389
  %v9391 = vrot.slane %v9389, 4
  %v9392 = vrot.slane %v8297, 5
  %v9393 = vsel %vm1027, %v9391, %v9392
  %v9394 = vrot.slane %v9098, 5
  %v9395 = vrot.slane %v9394, 4
  %v9396 = vrot.slane %v8263, 5
  %v9397 = vsel %vm1027, %v9395, %v9396
  %v9398 = vrot.slane %v9396, 4
  %v9399 = vrot.slane %v8298, 5
  %v9400 = vsel %vm1027, %v9398, %v9399
  %v9401 = vrot.slane %v9099, 5
  %v9402 = vrot.slane %v9401, 4
  %v9403 = vrot.slane %v8265, 5
  %v9404 = vsel %vm1027, %v9402, %v9403
  %v9405 = vrot.slane %v9403, 4
  %v9406 = vrot.slane %v8299, 5
  %v9407 = vsel %vm1027, %v9405, %v9406
  %v9408 = vrot.slane %v9100, 5
  %v9409 = vrot.slane %v9408, 4
  %v9410 = vrot.slane %v8267, 5
  %v9411 = vsel %vm1027, %v9409, %v9410
  %v9412 = vrot.slane %v9410, 4
  %v9413 = vrot.slane %v8300, 5
  %v9414 = vsel %vm1027, %v9412, %v9413
  %v9415 = vrot.slane %v9101, 5
  %v9416 = vrot.slane %v9415, 4
  %v9417 = vrot.slane %v8269, 5
  %v9418 = vsel %vm1027, %v9416, %v9417
  %v9419 = vrot.slane %v9417, 4
  %v9420 = vrot.slane %v8301, 5
  %v9421 = vsel %vm1027, %v9419, %v9420
  %v9422 = vld [vmem:[%s7979] sm:$0xf]
  %v9423 = vld [vmem:[%s7979 + $0x4] sm:$0xf]
  %v9424 = vld [vmem:[%s7979 + $0xc] sm:$0xf]
  %v9425 = vld [vmem:[%s7979 + $0x10] sm:$0xf]
  %v9426 = vld [vmem:[%s7979 + $0x18] sm:$0xf]
  %v9427 = vld [vmem:[%s7979 + $0x1c] sm:$0xf]
  %v9428 = vld [vmem:[%s7979 + $0x24] sm:$0xf]
  %v9429 = vld [vmem:[%s7979 + $0x28] sm:$0xf]
  %v9430 = vld [vmem:[%s7979 + $0x30] sm:$0xf]
  %v9431 = vld [vmem:[%s7979 + $0x34] sm:$0xf]
  %v9432 = vld [vmem:[%s7979 + $0x3c] sm:$0xf]
  %v9433 = vld [vmem:[%s7979 + $0x40] sm:$0xf]
  %v9434 = vld [vmem:[%s7979 + $0x48] sm:$0xf]
  %v9435 = vld [vmem:[%s7979 + $0x4c] sm:$0xf]
  %v9436 = vld [vmem:[%s7979 + $0x54] sm:$0xf]
  %v9437 = vld [vmem:[%s7979 + $0x58] sm:$0xf]
  %v9438 = vld [vmem:[%s7979 + $0x60] sm:$0xf]
  %v9439 = vld [vmem:[%s7979 + $0x64] sm:$0xf]
  %v9440 = vld [vmem:[%s7979 + $0x6c] sm:$0xf]
  %v9441 = vld [vmem:[%s7979 + $0x70] sm:$0xf]
  %v9442 = vld [vmem:[%s7979 + $0x78] sm:$0xf]
  %v9443 = vld [vmem:[%s7979 + $0x7c] sm:$0xf]
  %v9444 = vld [vmem:[%s7979 + $0x84] sm:$0xf]
  %v9445 = vld [vmem:[%s7979 + $0x88] sm:$0xf]
  %v9446 = vld [vmem:[%s7979 + $0x90] sm:$0xf]
  %v9447 = vld [vmem:[%s7979 + $0x94] sm:$0xf]
  %v9448 = vld [vmem:[%s7979 + $0x9c] sm:$0xf]
  %v9449 = vld [vmem:[%s7979 + $0xa0] sm:$0xf]
  %v9450 = vld [vmem:[%s7979 + $0xa8] sm:$0xf]
  %v9451 = vld [vmem:[%s7979 + $0xac] sm:$0xf]
  %v9452 = vld [vmem:[%s7979 + $0xb4] sm:$0xf]
  %v9453 = vld [vmem:[%s7979 + $0xb8] sm:$0xf]
  %v9454 = vld [vmem:[%s7979 + $0xd8] sm:$0xf]
  %v9455 = vld [vmem:[%s7979 + $0xdc] sm:$0xf]
  %v9456 = vld [vmem:[%s7979 + $0xe4] sm:$0xf]
  %v9457 = vld [vmem:[%s7979 + $0xe8] sm:$0xf]
  %v9458 = vld [vmem:[%s7979 + $0xf0] sm:$0xf]
  %v9459 = vld [vmem:[%s7979 + $0xf4] sm:$0xf]
  %v9460 = vld [vmem:[%s7979 + $0xfc] sm:$0xf]
  %v9461 = vld [vmem:[%s7979 + $0x100] sm:$0xf]
  %v9462 = vld [vmem:[%s7979 + $0x108] sm:$0xf]
  %v9463 = vld [vmem:[%s7979 + $0x10c] sm:$0xf]
  %v9464 = vld [vmem:[%s7979 + $0x114] sm:$0xf]
  %v9465 = vld [vmem:[%s7979 + $0x118] sm:$0xf]
  %v9466 = vld [vmem:[%s7979 + $0x120] sm:$0xf]
  %v9467 = vld [vmem:[%s7979 + $0x124] sm:$0xf]
  %v9468 = vld [vmem:[%s7979 + $0x12c] sm:$0xf]
  %v9469 = vld [vmem:[%s7979 + $0x130] sm:$0xf]
  %v9470 = vld [vmem:[%s7979 + $0x138] sm:$0xf]
  %v9471 = vld [vmem:[%s7979 + $0x13c] sm:$0xf]
  %v9472 = vld [vmem:[%s7979 + $0x144] sm:$0xf]
  %v9473 = vld [vmem:[%s7979 + $0x148] sm:$0xf]
  %v9474 = vld [vmem:[%s7979 + $0x150] sm:$0xf]
  %v9475 = vld [vmem:[%s7979 + $0x154] sm:$0xf]
  %v9476 = vld [vmem:[%s7979 + $0x15c] sm:$0xf]
  %v9477 = vld [vmem:[%s7979 + $0x160] sm:$0xf]
  %v9478 = vld [vmem:[%s7979 + $0x168] sm:$0xf]
  %v9479 = vld [vmem:[%s7979 + $0x16c] sm:$0xf]
  %v9480 = vld [vmem:[%s7979 + $0x174] sm:$0xf]
  %v9481 = vld [vmem:[%s7979 + $0x178] sm:$0xf]
  %v9482 = vld [vmem:[%s7979 + $0x180] sm:$0xf]
  %v9483 = vld [vmem:[%s7979 + $0x184] sm:$0xf]
  %v9484 = vld [vmem:[%s7979 + $0x18c] sm:$0xf]
  %v9485 = vld [vmem:[%s7979 + $0x190] sm:$0xf]
  %v9486 = vld [vmem:[%s7979 + $0x8] sm:$0x1]
  %v9487 = vld [vmem:[%s7979 + $0x14] sm:$0x1]
  %v9488 = vld [vmem:[%s7979 + $0x20] sm:$0x1]
  %v9489 = vld [vmem:[%s7979 + $0x2c] sm:$0x1]
  %v9490 = vld [vmem:[%s7979 + $0x38] sm:$0x1]
  %v9491 = vld [vmem:[%s7979 + $0x44] sm:$0x1]
  %v9492 = vld [vmem:[%s7979 + $0x50] sm:$0x1]
  %v9493 = vld [vmem:[%s7979 + $0x5c] sm:$0x1]
  %v9494 = vld [vmem:[%s7979 + $0x68] sm:$0x1]
  %v9495 = vld [vmem:[%s7979 + $0x74] sm:$0x1]
  %v9496 = vld [vmem:[%s7979 + $0x80] sm:$0x1]
  %v9497 = vld [vmem:[%s7979 + $0x8c] sm:$0x1]
  %v9498 = vld [vmem:[%s7979 + $0x98] sm:$0x1]
  %v9499 = vld [vmem:[%s7979 + $0xa4] sm:$0x1]
  %v9500 = vld [vmem:[%s7979 + $0xb0] sm:$0x1]
  %v9501 = vld [vmem:[%s7979 + $0xbc] sm:$0x1]
  %v9502 = vld [vmem:[%s7979 + $0xe0] sm:$0x1]
  %v9503 = vld [vmem:[%s7979 + $0xec] sm:$0x1]
  %v9504 = vld [vmem:[%s7979 + $0xf8] sm:$0x1]
  %v9505 = vld [vmem:[%s7979 + $0x104] sm:$0x1]
  %v9506 = vld [vmem:[%s7979 + $0x110] sm:$0x1]
  %v9507 = vld [vmem:[%s7979 + $0x11c] sm:$0x1]
  %v9508 = vld [vmem:[%s7979 + $0x128] sm:$0x1]
  %v9509 = vld [vmem:[%s7979 + $0x134] sm:$0x1]
  %v9510 = vld [vmem:[%s7979 + $0x140] sm:$0x1]
  %v9511 = vld [vmem:[%s7979 + $0x14c] sm:$0x1]
  %v9512 = vld [vmem:[%s7979 + $0x158] sm:$0x1]
  %v9513 = vld [vmem:[%s7979 + $0x164] sm:$0x1]
  %v9514 = vld [vmem:[%s7979 + $0x170] sm:$0x1]
  %v9515 = vld [vmem:[%s7979 + $0x17c] sm:$0x1]
  %v9516 = vld [vmem:[%s7979 + $0x188] sm:$0x1]
  %v9517 = vld [vmem:[%s7979 + $0x194] sm:$0x1]
  %v9519 = vshrl.u32 %v9422, 16
  %v9521 = vrot.slane %v9519, 4
  %v9522 = vshll.u32 %v9422, 16
  %v9524 = vrot.slane %v9522, 5
  %v9525 = vor.u32 %v9521, %v9524
  %v9526 = vrot.slane %v9525, 4
  %v9528 = vshll.u32 %v9423, 16
  %v9530 = vrot.slane %v9528, 5
  %v9531 = vsel %vm128, %v9526, %v9530
  %v9532 = vshrl.u32 %v9423, 16
  %v9534 = vrot.slane %v9532, 4
  %v9535 = vor.u32 %v9534, %v9530
  %v9536 = vrot.slane %v9535, 4
  %v9538 = vshll.u32 %v9486, 16
  %v9540 = vrot.slane %v9538, 5
  %v9541 = vsel %vm128, %v9536, %v9540
  %v9543 = vshrl.u32 %v9424, 16
  %v9545 = vrot.slane %v9543, 4
  %v9546 = vshll.u32 %v9424, 16
  %v9548 = vrot.slane %v9546, 5
  %v9549 = vor.u32 %v9545, %v9548
  %v9550 = vrot.slane %v9549, 4
  %v9552 = vshll.u32 %v9425, 16
  %v9554 = vrot.slane %v9552, 5
  %v9555 = vsel %vm128, %v9550, %v9554
  %v9556 = vshrl.u32 %v9425, 16
  %v9558 = vrot.slane %v9556, 4
  %v9559 = vor.u32 %v9558, %v9554
  %v9560 = vrot.slane %v9559, 4
  %v9562 = vshll.u32 %v9487, 16
  %v9564 = vrot.slane %v9562, 5
  %v9565 = vsel %vm128, %v9560, %v9564
  %v9567 = vshrl.u32 %v9426, 16
  %v9569 = vrot.slane %v9567, 4
  %v9570 = vshll.u32 %v9426, 16
  %v9572 = vrot.slane %v9570, 5
  %v9573 = vor.u32 %v9569, %v9572
  %v9574 = vrot.slane %v9573, 4
  %v9576 = vshll.u32 %v9427, 16
  %v9578 = vrot.slane %v9576, 5
  %v9579 = vsel %vm128, %v9574, %v9578
  %v9580 = vshrl.u32 %v9427, 16
  %v9582 = vrot.slane %v9580, 4
  %v9583 = vor.u32 %v9582, %v9578
  %v9584 = vrot.slane %v9583, 4
  %v9586 = vshll.u32 %v9488, 16
  %v9588 = vrot.slane %v9586, 5
  %v9589 = vsel %vm128, %v9584, %v9588
  %v9591 = vshrl.u32 %v9428, 16
  %v9593 = vrot.slane %v9591, 4
  %v9594 = vshll.u32 %v9428, 16
  %v9596 = vrot.slane %v9594, 5
  %v9597 = vor.u32 %v9593, %v9596
  %v9598 = vrot.slane %v9597, 4
  %v9600 = vshll.u32 %v9429, 16
  %v9602 = vrot.slane %v9600, 5
  %v9603 = vsel %vm128, %v9598, %v9602
  %v9604 = vshrl.u32 %v9429, 16
  %v9606 = vrot.slane %v9604, 4
  %v9607 = vor.u32 %v9606, %v9602
  %v9608 = vrot.slane %v9607, 4
  %v9610 = vshll.u32 %v9489, 16
  %v9612 = vrot.slane %v9610, 5
  %v9613 = vsel %vm128, %v9608, %v9612
  %v9615 = vshrl.u32 %v9430, 16
  %v9617 = vrot.slane %v9615, 4
  %v9618 = vshll.u32 %v9430, 16
  %v9620 = vrot.slane %v9618, 5
  %v9621 = vor.u32 %v9617, %v9620
  %v9622 = vrot.slane %v9621, 4
  %v9624 = vshll.u32 %v9431, 16
  %v9626 = vrot.slane %v9624, 5
  %v9627 = vsel %vm128, %v9622, %v9626
  %v9628 = vshrl.u32 %v9431, 16
  %v9630 = vrot.slane %v9628, 4
  %v9631 = vor.u32 %v9630, %v9626
  %v9632 = vrot.slane %v9631, 4
  %v9634 = vshll.u32 %v9490, 16
  %v9636 = vrot.slane %v9634, 5
  %v9637 = vsel %vm128, %v9632, %v9636
  %v9639 = vshrl.u32 %v9432, 16
  %v9641 = vrot.slane %v9639, 4
  %v9642 = vshll.u32 %v9432, 16
  %v9644 = vrot.slane %v9642, 5
  %v9645 = vor.u32 %v9641, %v9644
  %v9646 = vrot.slane %v9645, 4
  %v9648 = vshll.u32 %v9433, 16
  %v9650 = vrot.slane %v9648, 5
  %v9651 = vsel %vm128, %v9646, %v9650
  %v9652 = vshrl.u32 %v9433, 16
  %v9654 = vrot.slane %v9652, 4
  %v9655 = vor.u32 %v9654, %v9650
  %v9656 = vrot.slane %v9655, 4
  %v9658 = vshll.u32 %v9491, 16
  %v9660 = vrot.slane %v9658, 5
  %v9661 = vsel %vm128, %v9656, %v9660
  %v9663 = vshrl.u32 %v9434, 16
  %v9665 = vrot.slane %v9663, 4
  %v9666 = vshll.u32 %v9434, 16
  %v9668 = vrot.slane %v9666, 5
  %v9669 = vor.u32 %v9665, %v9668
  %v9670 = vrot.slane %v9669, 4
  %v9672 = vshll.u32 %v9435, 16
  %v9674 = vrot.slane %v9672, 5
  %v9675 = vsel %vm128, %v9670, %v9674
  %v9676 = vshrl.u32 %v9435, 16
  %v9678 = vrot.slane %v9676, 4
  %v9679 = vor.u32 %v9678, %v9674
  %v9680 = vrot.slane %v9679, 4
  %v9682 = vshll.u32 %v9492, 16
  %v9684 = vrot.slane %v9682, 5
  %v9685 = vsel %vm128, %v9680, %v9684
  %v9687 = vshrl.u32 %v9436, 16
  %v9689 = vrot.slane %v9687, 4
  %v9690 = vshll.u32 %v9436, 16
  %v9692 = vrot.slane %v9690, 5
  %v9693 = vor.u32 %v9689, %v9692
  %v9694 = vrot.slane %v9693, 4
  %v9696 = vshll.u32 %v9437, 16
  %v9698 = vrot.slane %v9696, 5
  %v9699 = vsel %vm128, %v9694, %v9698
  %v9700 = vshrl.u32 %v9437, 16
  %v9702 = vrot.slane %v9700, 4
  %v9703 = vor.u32 %v9702, %v9698
  %v9704 = vrot.slane %v9703, 4
  %v9706 = vshll.u32 %v9493, 16
  %v9708 = vrot.slane %v9706, 5
  %v9709 = vsel %vm128, %v9704, %v9708
  %v9711 = vshrl.u32 %v9438, 16
  %v9713 = vrot.slane %v9711, 4
  %v9714 = vshll.u32 %v9438, 16
  %v9716 = vrot.slane %v9714, 5
  %v9717 = vor.u32 %v9713, %v9716
  %v9718 = vrot.slane %v9717, 4
  %v9720 = vshll.u32 %v9439, 16
  %v9722 = vrot.slane %v9720, 5
  %v9723 = vsel %vm128, %v9718, %v9722
  %v9724 = vshrl.u32 %v9439, 16
  %v9726 = vrot.slane %v9724, 4
  %v9727 = vor.u32 %v9726, %v9722
  %v9728 = vrot.slane %v9727, 4
  %v9730 = vshll.u32 %v9494, 16
  %v9732 = vrot.slane %v9730, 5
  %v9733 = vsel %vm128, %v9728, %v9732
  %v9735 = vshrl.u32 %v9440, 16
  %v9737 = vrot.slane %v9735, 4
  %v9738 = vshll.u32 %v9440, 16
  %v9740 = vrot.slane %v9738, 5
  %v9741 = vor.u32 %v9737, %v9740
  %v9742 = vrot.slane %v9741, 4
  %v9744 = vshll.u32 %v9441, 16
  %v9746 = vrot.slane %v9744, 5
  %v9747 = vsel %vm128, %v9742, %v9746
  %v9748 = vshrl.u32 %v9441, 16
  %v9750 = vrot.slane %v9748, 4
  %v9751 = vor.u32 %v9750, %v9746
  %v9752 = vrot.slane %v9751, 4
  %v9754 = vshll.u32 %v9495, 16
  %v9756 = vrot.slane %v9754, 5
  %v9757 = vsel %vm128, %v9752, %v9756
  %v9759 = vshrl.u32 %v9442, 16
  %v9761 = vrot.slane %v9759, 4
  %v9762 = vshll.u32 %v9442, 16
  %v9764 = vrot.slane %v9762, 5
  %v9765 = vor.u32 %v9761, %v9764
  %v9766 = vrot.slane %v9765, 4
  %v9768 = vshll.u32 %v9443, 16
  %v9770 = vrot.slane %v9768, 5
  %v9771 = vsel %vm128, %v9766, %v9770
  %v9772 = vshrl.u32 %v9443, 16
  %v9774 = vrot.slane %v9772, 4
  %v9775 = vor.u32 %v9774, %v9770
  %v9776 = vrot.slane %v9775, 4
  %v9778 = vshll.u32 %v9496, 16
  %v9780 = vrot.slane %v9778, 5
  %v9781 = vsel %vm128, %v9776, %v9780
  %v9783 = vshrl.u32 %v9444, 16
  %v9785 = vrot.slane %v9783, 4
  %v9786 = vshll.u32 %v9444, 16
  %v9788 = vrot.slane %v9786, 5
  %v9789 = vor.u32 %v9785, %v9788
  %v9790 = vrot.slane %v9789, 4
  %v9792 = vshll.u32 %v9445, 16
  %v9794 = vrot.slane %v9792, 5
  %v9795 = vsel %vm128, %v9790, %v9794
  %v9796 = vshrl.u32 %v9445, 16
  %v9798 = vrot.slane %v9796, 4
  %v9799 = vor.u32 %v9798, %v9794
  %v9800 = vrot.slane %v9799, 4
  %v9802 = vshll.u32 %v9497, 16
  %v9804 = vrot.slane %v9802, 5
  %v9805 = vsel %vm128, %v9800, %v9804
  %v9807 = vshrl.u32 %v9446, 16
  %v9809 = vrot.slane %v9807, 4
  %v9810 = vshll.u32 %v9446, 16
  %v9812 = vrot.slane %v9810, 5
  %v9813 = vor.u32 %v9809, %v9812
  %v9814 = vrot.slane %v9813, 4
  %v9816 = vshll.u32 %v9447, 16
  %v9818 = vrot.slane %v9816, 5
  %v9819 = vsel %vm128, %v9814, %v9818
  %v9820 = vshrl.u32 %v9447, 16
  %v9822 = vrot.slane %v9820, 4
  %v9823 = vor.u32 %v9822, %v9818
  %v9824 = vrot.slane %v9823, 4
  %v9826 = vshll.u32 %v9498, 16
  %v9828 = vrot.slane %v9826, 5
  %v9829 = vsel %vm128, %v9824, %v9828
  %v9831 = vshrl.u32 %v9448, 16
  %v9833 = vrot.slane %v9831, 4
  %v9834 = vshll.u32 %v9448, 16
  %v9836 = vrot.slane %v9834, 5
  %v9837 = vor.u32 %v9833, %v9836
  %v9838 = vrot.slane %v9837, 4
  %v9840 = vshll.u32 %v9449, 16
  %v9842 = vrot.slane %v9840, 5
  %v9843 = vsel %vm128, %v9838, %v9842
  %v9844 = vshrl.u32 %v9449, 16
  %v9846 = vrot.slane %v9844, 4
  %v9847 = vor.u32 %v9846, %v9842
  %v9848 = vrot.slane %v9847, 4
  %v9850 = vshll.u32 %v9499, 16
  %v9852 = vrot.slane %v9850, 5
  %v9853 = vsel %vm128, %v9848, %v9852
  %v9855 = vshrl.u32 %v9450, 16
  %v9857 = vrot.slane %v9855, 4
  %v9858 = vshll.u32 %v9450, 16
  %v9860 = vrot.slane %v9858, 5
  %v9861 = vor.u32 %v9857, %v9860
  %v9862 = vrot.slane %v9861, 4
  %v9864 = vshll.u32 %v9451, 16
  %v9866 = vrot.slane %v9864, 5
  %v9867 = vsel %vm128, %v9862, %v9866
  %v9868 = vshrl.u32 %v9451, 16
  %v9870 = vrot.slane %v9868, 4
  %v9871 = vor.u32 %v9870, %v9866
  %v9872 = vrot.slane %v9871, 4
  %v9874 = vshll.u32 %v9500, 16
  %v9876 = vrot.slane %v9874, 5
  %v9877 = vsel %vm128, %v9872, %v9876
  %v9879 = vshrl.u32 %v9452, 16
  %v9881 = vrot.slane %v9879, 4
  %v9882 = vshll.u32 %v9452, 16
  %v9884 = vrot.slane %v9882, 5
  %v9885 = vor.u32 %v9881, %v9884
  %v9886 = vrot.slane %v9885, 4
  %v9888 = vshll.u32 %v9453, 16
  %v9890 = vrot.slane %v9888, 5
  %v9891 = vsel %vm128, %v9886, %v9890
  %v9892 = vshrl.u32 %v9453, 16
  %v9894 = vrot.slane %v9892, 4
  %v9895 = vor.u32 %v9894, %v9890
  %v9896 = vrot.slane %v9895, 4
  %v9898 = vshll.u32 %v9501, 16
  %v9900 = vrot.slane %v9898, 5
  %v9901 = vsel %vm128, %v9896, %v9900
  %v9903 = vshrl.u32 %v9454, 16
  %v9905 = vrot.slane %v9903, 4
  %v9906 = vshll.u32 %v9454, 16
  %v9908 = vrot.slane %v9906, 5
  %v9909 = vor.u32 %v9905, %v9908
  %v9910 = vrot.slane %v9909, 4
  %v9912 = vshll.u32 %v9455, 16
  %v9914 = vrot.slane %v9912, 5
  %v9915 = vsel %vm128, %v9910, %v9914
  %v9916 = vshrl.u32 %v9455, 16
  %v9918 = vrot.slane %v9916, 4
  %v9919 = vor.u32 %v9918, %v9914
  %v9920 = vrot.slane %v9919, 4
  %v9922 = vshll.u32 %v9502, 16
  %v9924 = vrot.slane %v9922, 5
  %v9925 = vsel %vm128, %v9920, %v9924
  %v9927 = vshrl.u32 %v9456, 16
  %v9929 = vrot.slane %v9927, 4
  %v9930 = vshll.u32 %v9456, 16
  %v9932 = vrot.slane %v9930, 5
  %v9933 = vor.u32 %v9929, %v9932
  %v9934 = vrot.slane %v9933, 4
  %v9936 = vshll.u32 %v9457, 16
  %v9938 = vrot.slane %v9936, 5
  %v9939 = vsel %vm128, %v9934, %v9938
  %v9940 = vshrl.u32 %v9457, 16
  %v9942 = vrot.slane %v9940, 4
  %v9943 = vor.u32 %v9942, %v9938
  %v9944 = vrot.slane %v9943, 4
  %v9946 = vshll.u32 %v9503, 16
  %v9948 = vrot.slane %v9946, 5
  %v9949 = vsel %vm128, %v9944, %v9948
  %v9951 = vshrl.u32 %v9458, 16
  %v9953 = vrot.slane %v9951, 4
  %v9954 = vshll.u32 %v9458, 16
  %v9956 = vrot.slane %v9954, 5
  %v9957 = vor.u32 %v9953, %v9956
  %v9958 = vrot.slane %v9957, 4
  %v9960 = vshll.u32 %v9459, 16
  %v9962 = vrot.slane %v9960, 5
  %v9963 = vsel %vm128, %v9958, %v9962
  %v9964 = vshrl.u32 %v9459, 16
  %v9966 = vrot.slane %v9964, 4
  %v9967 = vor.u32 %v9966, %v9962
  %v9968 = vrot.slane %v9967, 4
  %v9970 = vshll.u32 %v9504, 16
  %v9972 = vrot.slane %v9970, 5
  %v9973 = vsel %vm128, %v9968, %v9972
  %v9975 = vshrl.u32 %v9460, 16
  %v9977 = vrot.slane %v9975, 4
  %v9978 = vshll.u32 %v9460, 16
  %v9980 = vrot.slane %v9978, 5
  %v9981 = vor.u32 %v9977, %v9980
  %v9982 = vrot.slane %v9981, 4
  %v9984 = vshll.u32 %v9461, 16
  %v9986 = vrot.slane %v9984, 5
  %v9987 = vsel %vm128, %v9982, %v9986
  %v9988 = vshrl.u32 %v9461, 16
  %v9990 = vrot.slane %v9988, 4
  %v9991 = vor.u32 %v9990, %v9986
  %v9992 = vrot.slane %v9991, 4
  %v9994 = vshll.u32 %v9505, 16
  %v9996 = vrot.slane %v9994, 5
  %v9997 = vsel %vm128, %v9992, %v9996
  %v9999 = vshrl.u32 %v9462, 16
  %v10001 = vrot.slane %v9999, 4
  %v10002 = vshll.u32 %v9462, 16
  %v10004 = vrot.slane %v10002, 5
  %v10005 = vor.u32 %v10001, %v10004
  %v10006 = vrot.slane %v10005, 4
  %v10008 = vshll.u32 %v9463, 16
  %v10010 = vrot.slane %v10008, 5
  %v10011 = vsel %vm128, %v10006, %v10010
  %v10012 = vshrl.u32 %v9463, 16
  %v10014 = vrot.slane %v10012, 4
  %v10015 = vor.u32 %v10014, %v10010
  %v10016 = vrot.slane %v10015, 4
  %v10018 = vshll.u32 %v9506, 16
  %v10020 = vrot.slane %v10018, 5
  %v10021 = vsel %vm128, %v10016, %v10020
  %v10023 = vshrl.u32 %v9464, 16
  %v10025 = vrot.slane %v10023, 4
  %v10026 = vshll.u32 %v9464, 16
  %v10028 = vrot.slane %v10026, 5
  %v10029 = vor.u32 %v10025, %v10028
  %v10030 = vrot.slane %v10029, 4
  %v10032 = vshll.u32 %v9465, 16
  %v10034 = vrot.slane %v10032, 5
  %v10035 = vsel %vm128, %v10030, %v10034
  %v10036 = vshrl.u32 %v9465, 16
  %v10038 = vrot.slane %v10036, 4
  %v10039 = vor.u32 %v10038, %v10034
  %v10040 = vrot.slane %v10039, 4
  %v10042 = vshll.u32 %v9507, 16
  %v10044 = vrot.slane %v10042, 5
  %v10045 = vsel %vm128, %v10040, %v10044
  %v10047 = vshrl.u32 %v9466, 16
  %v10049 = vrot.slane %v10047, 4
  %v10050 = vshll.u32 %v9466, 16
  %v10052 = vrot.slane %v10050, 5
  %v10053 = vor.u32 %v10049, %v10052
  %v10054 = vrot.slane %v10053, 4
  %v10056 = vshll.u32 %v9467, 16
  %v10058 = vrot.slane %v10056, 5
  %v10059 = vsel %vm128, %v10054, %v10058
  %v10060 = vshrl.u32 %v9467, 16
  %v10062 = vrot.slane %v10060, 4
  %v10063 = vor.u32 %v10062, %v10058
  %v10064 = vrot.slane %v10063, 4
  %v10066 = vshll.u32 %v9508, 16
  %v10068 = vrot.slane %v10066, 5
  %v10069 = vsel %vm128, %v10064, %v10068
  %v10071 = vshrl.u32 %v9468, 16
  %v10073 = vrot.slane %v10071, 4
  %v10074 = vshll.u32 %v9468, 16
  %v10076 = vrot.slane %v10074, 5
  %v10077 = vor.u32 %v10073, %v10076
  %v10078 = vrot.slane %v10077, 4
  %v10080 = vshll.u32 %v9469, 16
  %v10082 = vrot.slane %v10080, 5
  %v10083 = vsel %vm128, %v10078, %v10082
  %v10084 = vshrl.u32 %v9469, 16
  %v10086 = vrot.slane %v10084, 4
  %v10087 = vor.u32 %v10086, %v10082
  %v10088 = vrot.slane %v10087, 4
  %v10090 = vshll.u32 %v9509, 16
  %v10092 = vrot.slane %v10090, 5
  %v10093 = vsel %vm128, %v10088, %v10092
  %v10095 = vshrl.u32 %v9470, 16
  %v10097 = vrot.slane %v10095, 4
  %v10098 = vshll.u32 %v9470, 16
  %v10100 = vrot.slane %v10098, 5
  %v10101 = vor.u32 %v10097, %v10100
  %v10102 = vrot.slane %v10101, 4
  %v10104 = vshll.u32 %v9471, 16
  %v10106 = vrot.slane %v10104, 5
  %v10107 = vsel %vm128, %v10102, %v10106
  %v10108 = vshrl.u32 %v9471, 16
  %v10110 = vrot.slane %v10108, 4
  %v10111 = vor.u32 %v10110, %v10106
  %v10112 = vrot.slane %v10111, 4
  %v10114 = vshll.u32 %v9510, 16
  %v10116 = vrot.slane %v10114, 5
  %v10117 = vsel %vm128, %v10112, %v10116
  %v10119 = vshrl.u32 %v9472, 16
  %v10121 = vrot.slane %v10119, 4
  %v10122 = vshll.u32 %v9472, 16
  %v10124 = vrot.slane %v10122, 5
  %v10125 = vor.u32 %v10121, %v10124
  %v10126 = vrot.slane %v10125, 4
  %v10128 = vshll.u32 %v9473, 16
  %v10130 = vrot.slane %v10128, 5
  %v10131 = vsel %vm128, %v10126, %v10130
  %v10132 = vshrl.u32 %v9473, 16
  %v10134 = vrot.slane %v10132, 4
  %v10135 = vor.u32 %v10134, %v10130
  %v10136 = vrot.slane %v10135, 4
  %v10138 = vshll.u32 %v9511, 16
  %v10140 = vrot.slane %v10138, 5
  %v10141 = vsel %vm128, %v10136, %v10140
  %v10143 = vshrl.u32 %v9474, 16
  %v10145 = vrot.slane %v10143, 4
  %v10146 = vshll.u32 %v9474, 16
  %v10148 = vrot.slane %v10146, 5
  %v10149 = vor.u32 %v10145, %v10148
  %v10150 = vrot.slane %v10149, 4
  %v10152 = vshll.u32 %v9475, 16
  %v10154 = vrot.slane %v10152, 5
  %v10155 = vsel %vm128, %v10150, %v10154
  %v10156 = vshrl.u32 %v9475, 16
  %v10158 = vrot.slane %v10156, 4
  %v10159 = vor.u32 %v10158, %v10154
  %v10160 = vrot.slane %v10159, 4
  %v10162 = vshll.u32 %v9512, 16
  %v10164 = vrot.slane %v10162, 5
  %v10165 = vsel %vm128, %v10160, %v10164
  %v10167 = vshrl.u32 %v9476, 16
  %v10169 = vrot.slane %v10167, 4
  %v10170 = vshll.u32 %v9476, 16
  %v10172 = vrot.slane %v10170, 5
  %v10173 = vor.u32 %v10169, %v10172
  %v10174 = vrot.slane %v10173, 4
  %v10176 = vshll.u32 %v9477, 16
  %v10178 = vrot.slane %v10176, 5
  %v10179 = vsel %vm128, %v10174, %v10178
  %v10180 = vshrl.u32 %v9477, 16
  %v10182 = vrot.slane %v10180, 4
  %v10183 = vor.u32 %v10182, %v10178
  %v10184 = vrot.slane %v10183, 4
  %v10186 = vshll.u32 %v9513, 16
  %v10188 = vrot.slane %v10186, 5
  %v10189 = vsel %vm128, %v10184, %v10188
  %v10191 = vshrl.u32 %v9478, 16
  %v10193 = vrot.slane %v10191, 4
  %v10194 = vshll.u32 %v9478, 16
  %v10196 = vrot.slane %v10194, 5
  %v10197 = vor.u32 %v10193, %v10196
  %v10198 = vrot.slane %v10197, 4
  %v10200 = vshll.u32 %v9479, 16
  %v10202 = vrot.slane %v10200, 5
  %v10203 = vsel %vm128, %v10198, %v10202
  %v10204 = vshrl.u32 %v9479, 16
  %v10206 = vrot.slane %v10204, 4
  %v10207 = vor.u32 %v10206, %v10202
  %v10208 = vrot.slane %v10207, 4
  %v10210 = vshll.u32 %v9514, 16
  %v10212 = vrot.slane %v10210, 5
  %v10213 = vsel %vm128, %v10208, %v10212
  %v10215 = vshrl.u32 %v9480, 16
  %v10217 = vrot.slane %v10215, 4
  %v10218 = vshll.u32 %v9480, 16
  %v10220 = vrot.slane %v10218, 5
  %v10221 = vor.u32 %v10217, %v10220
  %v10222 = vrot.slane %v10221, 4
  %v10224 = vshll.u32 %v9481, 16
  %v10226 = vrot.slane %v10224, 5
  %v10227 = vsel %vm128, %v10222, %v10226
  %v10228 = vshrl.u32 %v9481, 16
  %v10230 = vrot.slane %v10228, 4
  %v10231 = vor.u32 %v10230, %v10226
  %v10232 = vrot.slane %v10231, 4
  %v10234 = vshll.u32 %v9515, 16
  %v10236 = vrot.slane %v10234, 5
  %v10237 = vsel %vm128, %v10232, %v10236
  %v10239 = vshrl.u32 %v9482, 16
  %v10241 = vrot.slane %v10239, 4
  %v10242 = vshll.u32 %v9482, 16
  %v10244 = vrot.slane %v10242, 5
  %v10245 = vor.u32 %v10241, %v10244
  %v10246 = vrot.slane %v10245, 4
  %v10248 = vshll.u32 %v9483, 16
  %v10250 = vrot.slane %v10248, 5
  %v10251 = vsel %vm128, %v10246, %v10250
  %v10252 = vshrl.u32 %v9483, 16
  %v10254 = vrot.slane %v10252, 4
  %v10255 = vor.u32 %v10254, %v10250
  %v10256 = vrot.slane %v10255, 4
  %v10258 = vshll.u32 %v9516, 16
  %v10260 = vrot.slane %v10258, 5
  %v10261 = vsel %vm128, %v10256, %v10260
  %v10263 = vshrl.u32 %v9484, 16
  %v10265 = vrot.slane %v10263, 4
  %v10266 = vshll.u32 %v9484, 16
  %v10268 = vrot.slane %v10266, 5
  %v10269 = vor.u32 %v10265, %v10268
  %v10270 = vrot.slane %v10269, 4
  %v10272 = vshll.u32 %v9485, 16
  %v10274 = vrot.slane %v10272, 5
  %v10275 = vsel %vm128, %v10270, %v10274
  %v10276 = vshrl.u32 %v9485, 16
  %v10278 = vrot.slane %v10276, 4
  %v10279 = vor.u32 %v10278, %v10274
  %v10280 = vrot.slane %v10279, 4
  %v10282 = vshll.u32 %v9517, 16
  %v10284 = vrot.slane %v10282, 5
  %v10285 = vsel %vm128, %v10280, %v10284
  %v10286 = vld [vmem:[%s7979] sm:$0xe]
  %v10287 = vld [vmem:[%s7979 + $0xc] sm:$0xe]
  %v10288 = vld [vmem:[%s7979 + $0x18] sm:$0xe]
  %v10289 = vld [vmem:[%s7979 + $0x24] sm:$0xe]
  %v10290 = vld [vmem:[%s7979 + $0x30] sm:$0xe]
  %v10291 = vld [vmem:[%s7979 + $0x3c] sm:$0xe]
  %v10292 = vld [vmem:[%s7979 + $0x48] sm:$0xe]
  %v10293 = vld [vmem:[%s7979 + $0x54] sm:$0xe]
  %v10294 = vld [vmem:[%s7979 + $0x60] sm:$0xe]
  %v10295 = vld [vmem:[%s7979 + $0x6c] sm:$0xe]
  %v10296 = vld [vmem:[%s7979 + $0x78] sm:$0xe]
  %v10297 = vld [vmem:[%s7979 + $0x84] sm:$0xe]
  %v10298 = vld [vmem:[%s7979 + $0x90] sm:$0xe]
  %v10299 = vld [vmem:[%s7979 + $0x9c] sm:$0xe]
  %v10300 = vld [vmem:[%s7979 + $0xa8] sm:$0xe]
  %v10301 = vld [vmem:[%s7979 + $0xb4] sm:$0xe]
  %v10302 = vld [vmem:[%s7979 + $0xd8] sm:$0xe]
  %v10303 = vld [vmem:[%s7979 + $0xe4] sm:$0xe]
  %v10304 = vld [vmem:[%s7979 + $0xf0] sm:$0xe]
  %v10305 = vld [vmem:[%s7979 + $0xfc] sm:$0xe]
  %v10306 = vld [vmem:[%s7979 + $0x108] sm:$0xe]
  %v10307 = vld [vmem:[%s7979 + $0x114] sm:$0xe]
  %v10308 = vld [vmem:[%s7979 + $0x120] sm:$0xe]
  %v10309 = vld [vmem:[%s7979 + $0x12c] sm:$0xe]
  %v10310 = vld [vmem:[%s7979 + $0x138] sm:$0xe]
  %v10311 = vld [vmem:[%s7979 + $0x144] sm:$0xe]
  %v10312 = vld [vmem:[%s7979 + $0x150] sm:$0xe]
  %v10313 = vld [vmem:[%s7979 + $0x15c] sm:$0xe]
  %v10314 = vld [vmem:[%s7979 + $0x168] sm:$0xe]
  %v10315 = vld [vmem:[%s7979 + $0x174] sm:$0xe]
  %v10316 = vld [vmem:[%s7979 + $0x180] sm:$0xe]
  %v10317 = vld [vmem:[%s7979 + $0x18c] sm:$0xe]
  %v10414 = vrot.slane %v10286, 5
  %v10415 = vrot.slane %v10414, 4
  %v10416 = vrot.slane %v9423, 5
  %v10417 = vsel %vm1027, %v10415, %v10416
  %v10418 = vrot.slane %v10416, 4
  %v10419 = vrot.slane %v9486, 5
  %v10420 = vsel %vm1027, %v10418, %v10419
  %v10421 = vrot.slane %v10287, 5
  %v10422 = vrot.slane %v10421, 4
  %v10423 = vrot.slane %v9425, 5
  %v10424 = vsel %vm1027, %v10422, %v10423
  %v10425 = vrot.slane %v10423, 4
  %v10426 = vrot.slane %v9487, 5
  %v10427 = vsel %vm1027, %v10425, %v10426
  %v10428 = vrot.slane %v10288, 5
  %v10429 = vrot.slane %v10428, 4
  %v10430 = vrot.slane %v9427, 5
  %v10431 = vsel %vm1027, %v10429, %v10430
  %v10432 = vrot.slane %v10430, 4
  %v10433 = vrot.slane %v9488, 5
  %v10434 = vsel %vm1027, %v10432, %v10433
  %v10435 = vrot.slane %v10289, 5
  %v10436 = vrot.slane %v10435, 4
  %v10437 = vrot.slane %v9429, 5
  %v10438 = vsel %vm1027, %v10436, %v10437
  %v10439 = vrot.slane %v10437, 4
  %v10440 = vrot.slane %v9489, 5
  %v10441 = vsel %vm1027, %v10439, %v10440
  %v10442 = vrot.slane %v10290, 5
  %v10443 = vrot.slane %v10442, 4
  %v10444 = vrot.slane %v9431, 5
  %v10445 = vsel %vm1027, %v10443, %v10444
  %v10446 = vrot.slane %v10444, 4
  %v10447 = vrot.slane %v9490, 5
  %v10448 = vsel %vm1027, %v10446, %v10447
  %v10449 = vrot.slane %v10291, 5
  %v10450 = vrot.slane %v10449, 4
  %v10451 = vrot.slane %v9433, 5
  %v10452 = vsel %vm1027, %v10450, %v10451
  %v10453 = vrot.slane %v10451, 4
  %v10454 = vrot.slane %v9491, 5
  %v10455 = vsel %vm1027, %v10453, %v10454
  %v10456 = vrot.slane %v10292, 5
  %v10457 = vrot.slane %v10456, 4
  %v10458 = vrot.slane %v9435, 5
  %v10459 = vsel %vm1027, %v10457, %v10458
  %v10460 = vrot.slane %v10458, 4
  %v10461 = vrot.slane %v9492, 5
  %v10462 = vsel %vm1027, %v10460, %v10461
  %v10463 = vrot.slane %v10293, 5
  %v10464 = vrot.slane %v10463, 4
  %v10465 = vrot.slane %v9437, 5
  %v10466 = vsel %vm1027, %v10464, %v10465
  %v10467 = vrot.slane %v10465, 4
  %v10468 = vrot.slane %v9493, 5
  %v10469 = vsel %vm1027, %v10467, %v10468
  %v10470 = vrot.slane %v10294, 5
  %v10471 = vrot.slane %v10470, 4
  %v10472 = vrot.slane %v9439, 5
  %v10473 = vsel %vm1027, %v10471, %v10472
  %v10474 = vrot.slane %v10472, 4
  %v10475 = vrot.slane %v9494, 5
  %v10476 = vsel %vm1027, %v10474, %v10475
  %v10477 = vrot.slane %v10295, 5
  %v10478 = vrot.slane %v10477, 4
  %v10479 = vrot.slane %v9441, 5
  %v10480 = vsel %vm1027, %v10478, %v10479
  %v10481 = vrot.slane %v10479, 4
  %v10482 = vrot.slane %v9495, 5
  %v10483 = vsel %vm1027, %v10481, %v10482
  %v10484 = vrot.slane %v10296, 5
  %v10485 = vrot.slane %v10484, 4
  %v10486 = vrot.slane %v9443, 5
  %v10487 = vsel %vm1027, %v10485, %v10486
  %v10488 = vrot.slane %v10486, 4
  %v10489 = vrot.slane %v9496, 5
  %v10490 = vsel %vm1027, %v10488, %v10489
  %v10491 = vrot.slane %v10297, 5
  %v10492 = vrot.slane %v10491, 4
  %v10493 = vrot.slane %v9445, 5
  %v10494 = vsel %vm1027, %v10492, %v10493
  %v10495 = vrot.slane %v10493, 4
  %v10496 = vrot.slane %v9497, 5
  %v10497 = vsel %vm1027, %v10495, %v10496
  %v10498 = vrot.slane %v10298, 5
  %v10499 = vrot.slane %v10498, 4
  %v10500 = vrot.slane %v9447, 5
  %v10501 = vsel %vm1027, %v10499, %v10500
  %v10502 = vrot.slane %v10500, 4
  %v10503 = vrot.slane %v9498, 5
  %v10504 = vsel %vm1027, %v10502, %v10503
  %v10505 = vrot.slane %v10299, 5
  %v10506 = vrot.slane %v10505, 4
  %v10507 = vrot.slane %v9449, 5
  %v10508 = vsel %vm1027, %v10506, %v10507
  %v10509 = vrot.slane %v10507, 4
  %v10510 = vrot.slane %v9499, 5
  %v10511 = vsel %vm1027, %v10509, %v10510
  %v10512 = vrot.slane %v10300, 5
  %v10513 = vrot.slane %v10512, 4
  %v10514 = vrot.slane %v9451, 5
  %v10515 = vsel %vm1027, %v10513, %v10514
  %v10516 = vrot.slane %v10514, 4
  %v10517 = vrot.slane %v9500, 5
  %v10518 = vsel %vm1027, %v10516, %v10517
  %v10519 = vrot.slane %v10301, 5
  %v10520 = vrot.slane %v10519, 4
  %v10521 = vrot.slane %v9453, 5
  %v10522 = vsel %vm1027, %v10520, %v10521
  %v10523 = vrot.slane %v10521, 4
  %v10524 = vrot.slane %v9501, 5
  %v10525 = vsel %vm1027, %v10523, %v10524
  %v10526 = vrot.slane %v10302, 5
  %v10527 = vrot.slane %v10526, 4
  %v10528 = vrot.slane %v9455, 5
  %v10529 = vsel %vm1027, %v10527, %v10528
  %v10530 = vrot.slane %v10528, 4
  %v10531 = vrot.slane %v9502, 5
  %v10532 = vsel %vm1027, %v10530, %v10531
  %v10533 = vrot.slane %v10303, 5
  %v10534 = vrot.slane %v10533, 4
  %v10535 = vrot.slane %v9457, 5
  %v10536 = vsel %vm1027, %v10534, %v10535
  %v10537 = vrot.slane %v10535, 4
  %v10538 = vrot.slane %v9503, 5
  %v10539 = vsel %vm1027, %v10537, %v10538
  %v10540 = vrot.slane %v10304, 5
  %v10541 = vrot.slane %v10540, 4
  %v10542 = vrot.slane %v9459, 5
  %v10543 = vsel %vm1027, %v10541, %v10542
  %v10544 = vrot.slane %v10542, 4
  %v10545 = vrot.slane %v9504, 5
  %v10546 = vsel %vm1027, %v10544, %v10545
  %v10547 = vrot.slane %v10305, 5
  %v10548 = vrot.slane %v10547, 4
  %v10549 = vrot.slane %v9461, 5
  %v10550 = vsel %vm1027, %v10548, %v10549
  %v10551 = vrot.slane %v10549, 4
  %v10552 = vrot.slane %v9505, 5
  %v10553 = vsel %vm1027, %v10551, %v10552
  %v10554 = vrot.slane %v10306, 5
  %v10555 = vrot.slane %v10554, 4
  %v10556 = vrot.slane %v9463, 5
  %v10557 = vsel %vm1027, %v10555, %v10556
  %v10558 = vrot.slane %v10556, 4
  %v10559 = vrot.slane %v9506, 5
  %v10560 = vsel %vm1027, %v10558, %v10559
  %v10561 = vrot.slane %v10307, 5
  %v10562 = vrot.slane %v10561, 4
  %v10563 = vrot.slane %v9465, 5
  %v10564 = vsel %vm1027, %v10562, %v10563
  %v10565 = vrot.slane %v10563, 4
  %v10566 = vrot.slane %v9507, 5
  %v10567 = vsel %vm1027, %v10565, %v10566
  %v10568 = vrot.slane %v10308, 5
  %v10569 = vrot.slane %v10568, 4
  %v10570 = vrot.slane %v9467, 5
  %v10571 = vsel %vm1027, %v10569, %v10570
  %v10572 = vrot.slane %v10570, 4
  %v10573 = vrot.slane %v9508, 5
  %v10574 = vsel %vm1027, %v10572, %v10573
  %v10575 = vrot.slane %v10309, 5
  %v10576 = vrot.slane %v10575, 4
  %v10577 = vrot.slane %v9469, 5
  %v10578 = vsel %vm1027, %v10576, %v10577
  %v10579 = vrot.slane %v10577, 4
  %v10580 = vrot.slane %v9509, 5
  %v10581 = vsel %vm1027, %v10579, %v10580
  %v10582 = vrot.slane %v10310, 5
  %v10583 = vrot.slane %v10582, 4
  %v10584 = vrot.slane %v9471, 5
  %v10585 = vsel %vm1027, %v10583, %v10584
  %v10586 = vrot.slane %v10584, 4
  %v10587 = vrot.slane %v9510, 5
  %v10588 = vsel %vm1027, %v10586, %v10587
  %v10589 = vrot.slane %v10311, 5
  %v10590 = vrot.slane %v10589, 4
  %v10591 = vrot.slane %v9473, 5
  %v10592 = vsel %vm1027, %v10590, %v10591
  %v10593 = vrot.slane %v10591, 4
  %v10594 = vrot.slane %v9511, 5
  %v10595 = vsel %vm1027, %v10593, %v10594
  %v10596 = vrot.slane %v10312, 5
  %v10597 = vrot.slane %v10596, 4
  %v10598 = vrot.slane %v9475, 5
  %v10599 = vsel %vm1027, %v10597, %v10598
  %v10600 = vrot.slane %v10598, 4
  %v10601 = vrot.slane %v9512, 5
  %v10602 = vsel %vm1027, %v10600, %v10601
  %v10603 = vrot.slane %v10313, 5
  %v10604 = vrot.slane %v10603, 4
  %v10605 = vrot.slane %v9477, 5
  %v10606 = vsel %vm1027, %v10604, %v10605
  %v10607 = vrot.slane %v10605, 4
  %v10608 = vrot.slane %v9513, 5
  %v10609 = vsel %vm1027, %v10607, %v10608
  %v10610 = vrot.slane %v10314, 5
  %v10611 = vrot.slane %v10610, 4
  %v10612 = vrot.slane %v9479, 5
  %v10613 = vsel %vm1027, %v10611, %v10612
  %v10614 = vrot.slane %v10612, 4
  %v10615 = vrot.slane %v9514, 5
  %v10616 = vsel %vm1027, %v10614, %v10615
  %v10617 = vrot.slane %v10315, 5
  %v10618 = vrot.slane %v10617, 4
  %v10619 = vrot.slane %v9481, 5
  %v10620 = vsel %vm1027, %v10618, %v10619
  %v10621 = vrot.slane %v10619, 4
  %v10622 = vrot.slane %v9515, 5
  %v10623 = vsel %vm1027, %v10621, %v10622
  %v10624 = vrot.slane %v10316, 5
  %v10625 = vrot.slane %v10624, 4
  %v10626 = vrot.slane %v9483, 5
  %v10627 = vsel %vm1027, %v10625, %v10626
  %v10628 = vrot.slane %v10626, 4
  %v10629 = vrot.slane %v9516, 5
  %v10630 = vsel %vm1027, %v10628, %v10629
  %v10631 = vrot.slane %v10317, 5
  %v10632 = vrot.slane %v10631, 4
  %v10633 = vrot.slane %v9485, 5
  %v10634 = vsel %vm1027, %v10632, %v10633
  %v10635 = vrot.slane %v10633, 4
  %v10636 = vrot.slane %v9517, 5
  %v10637 = vsel %vm1027, %v10635, %v10636
  %s10638 = scalar_lea.vmem [#allocation2], 24
  %v10639 = vld [vmem:[%s10638] sm:$0xf]
  %v10640 = vld [vmem:[%s10638 + $0x4] sm:$0xf]
  %v10641 = vld [vmem:[%s10638 + $0xc] sm:$0xf]
  %v10642 = vld [vmem:[%s10638 + $0x10] sm:$0xf]
  %v10643 = vld [vmem:[%s10638 + $0x18] sm:$0xf]
  %v10644 = vld [vmem:[%s10638 + $0x1c] sm:$0xf]
  %v10645 = vld [vmem:[%s10638 + $0x24] sm:$0xf]
  %v10646 = vld [vmem:[%s10638 + $0x28] sm:$0xf]
  %v10647 = vld [vmem:[%s10638 + $0x30] sm:$0xf]
  %v10648 = vld [vmem:[%s10638 + $0x34] sm:$0xf]
  %v10649 = vld [vmem:[%s10638 + $0x3c] sm:$0xf]
  %v10650 = vld [vmem:[%s10638 + $0x40] sm:$0xf]
  %v10651 = vld [vmem:[%s10638 + $0x48] sm:$0xf]
  %v10652 = vld [vmem:[%s10638 + $0x4c] sm:$0xf]
  %v10653 = vld [vmem:[%s10638 + $0x54] sm:$0xf]
  %v10654 = vld [vmem:[%s10638 + $0x58] sm:$0xf]
  %v10655 = vld [vmem:[%s10638 + $0x60] sm:$0xf]
  %v10656 = vld [vmem:[%s10638 + $0x64] sm:$0xf]
  %v10657 = vld [vmem:[%s10638 + $0x6c] sm:$0xf]
  %v10658 = vld [vmem:[%s10638 + $0x70] sm:$0xf]
  %v10659 = vld [vmem:[%s10638 + $0x78] sm:$0xf]
  %v10660 = vld [vmem:[%s10638 + $0x7c] sm:$0xf]
  %v10661 = vld [vmem:[%s10638 + $0x84] sm:$0xf]
  %v10662 = vld [vmem:[%s10638 + $0x88] sm:$0xf]
  %v10663 = vld [vmem:[%s10638 + $0x90] sm:$0xf]
  %v10664 = vld [vmem:[%s10638 + $0x94] sm:$0xf]
  %v10665 = vld [vmem:[%s10638 + $0x9c] sm:$0xf]
  %v10666 = vld [vmem:[%s10638 + $0xa0] sm:$0xf]
  %v10667 = vld [vmem:[%s10638 + $0xa8] sm:$0xf]
  %v10668 = vld [vmem:[%s10638 + $0xac] sm:$0xf]
  %v10669 = vld [vmem:[%s10638 + $0xb4] sm:$0xf]
  %v10670 = vld [vmem:[%s10638 + $0xb8] sm:$0xf]
  %v10671 = vld [vmem:[%s10638 + $0xd8] sm:$0xf]
  %v10672 = vld [vmem:[%s10638 + $0xdc] sm:$0xf]
  %v10673 = vld [vmem:[%s10638 + $0xe4] sm:$0xf]
  %v10674 = vld [vmem:[%s10638 + $0xe8] sm:$0xf]
  %v10675 = vld [vmem:[%s10638 + $0xf0] sm:$0xf]
  %v10676 = vld [vmem:[%s10638 + $0xf4] sm:$0xf]
  %v10677 = vld [vmem:[%s10638 + $0xfc] sm:$0xf]
  %v10678 = vld [vmem:[%s10638 + $0x100] sm:$0xf]
  %v10679 = vld [vmem:[%s10638 + $0x108] sm:$0xf]
  %v10680 = vld [vmem:[%s10638 + $0x10c] sm:$0xf]
  %v10681 = vld [vmem:[%s10638 + $0x114] sm:$0xf]
  %v10682 = vld [vmem:[%s10638 + $0x118] sm:$0xf]
  %v10683 = vld [vmem:[%s10638 + $0x120] sm:$0xf]
  %v10684 = vld [vmem:[%s10638 + $0x124] sm:$0xf]
  %v10685 = vld [vmem:[%s10638 + $0x12c] sm:$0xf]
  %v10686 = vld [vmem:[%s10638 + $0x130] sm:$0xf]
  %v10687 = vld [vmem:[%s10638 + $0x138] sm:$0xf]
  %v10688 = vld [vmem:[%s10638 + $0x13c] sm:$0xf]
  %v10689 = vld [vmem:[%s10638 + $0x144] sm:$0xf]
  %v10690 = vld [vmem:[%s10638 + $0x148] sm:$0xf]
  %v10691 = vld [vmem:[%s10638 + $0x150] sm:$0xf]
  %v10692 = vld [vmem:[%s10638 + $0x154] sm:$0xf]
  %v10693 = vld [vmem:[%s10638 + $0x15c] sm:$0xf]
  %v10694 = vld [vmem:[%s10638 + $0x160] sm:$0xf]
  %v10695 = vld [vmem:[%s10638 + $0x168] sm:$0xf]
  %v10696 = vld [vmem:[%s10638 + $0x16c] sm:$0xf]
  %v10697 = vld [vmem:[%s10638 + $0x174] sm:$0xf]
  %v10698 = vld [vmem:[%s10638 + $0x178] sm:$0xf]
  %v10699 = vld [vmem:[%s10638 + $0x180] sm:$0xf]
  %v10700 = vld [vmem:[%s10638 + $0x184] sm:$0xf]
  %v10701 = vld [vmem:[%s10638 + $0x18c] sm:$0xf]
  %v10702 = vld [vmem:[%s10638 + $0x190] sm:$0xf]
  %v10703 = vld [vmem:[%s10638 + $0x8] sm:$0x1]
  %v10704 = vld [vmem:[%s10638 + $0x14] sm:$0x1]
  %v10705 = vld [vmem:[%s10638 + $0x20] sm:$0x1]
  %v10706 = vld [vmem:[%s10638 + $0x2c] sm:$0x1]
  %v10707 = vld [vmem:[%s10638 + $0x38] sm:$0x1]
  %v10708 = vld [vmem:[%s10638 + $0x44] sm:$0x1]
  %v10709 = vld [vmem:[%s10638 + $0x50] sm:$0x1]
  %v10710 = vld [vmem:[%s10638 + $0x5c] sm:$0x1]
  %v10711 = vld [vmem:[%s10638 + $0x68] sm:$0x1]
  %v10712 = vld [vmem:[%s10638 + $0x74] sm:$0x1]
  %v10713 = vld [vmem:[%s10638 + $0x80] sm:$0x1]
  %v10714 = vld [vmem:[%s10638 + $0x8c] sm:$0x1]
  %v10715 = vld [vmem:[%s10638 + $0x98] sm:$0x1]
  %v10716 = vld [vmem:[%s10638 + $0xa4] sm:$0x1]
  %v10717 = vld [vmem:[%s10638 + $0xb0] sm:$0x1]
  %v10718 = vld [vmem:[%s10638 + $0xbc] sm:$0x1]
  %v10719 = vld [vmem:[%s10638 + $0xe0] sm:$0x1]
  %v10720 = vld [vmem:[%s10638 + $0xec] sm:$0x1]
  %v10721 = vld [vmem:[%s10638 + $0xf8] sm:$0x1]
  %v10722 = vld [vmem:[%s10638 + $0x104] sm:$0x1]
  %v10723 = vld [vmem:[%s10638 + $0x110] sm:$0x1]
  %v10724 = vld [vmem:[%s10638 + $0x11c] sm:$0x1]
  %v10725 = vld [vmem:[%s10638 + $0x128] sm:$0x1]
  %v10726 = vld [vmem:[%s10638 + $0x134] sm:$0x1]
  %v10727 = vld [vmem:[%s10638 + $0x140] sm:$0x1]
  %v10728 = vld [vmem:[%s10638 + $0x14c] sm:$0x1]
  %v10729 = vld [vmem:[%s10638 + $0x158] sm:$0x1]
  %v10730 = vld [vmem:[%s10638 + $0x164] sm:$0x1]
  %v10731 = vld [vmem:[%s10638 + $0x170] sm:$0x1]
  %v10732 = vld [vmem:[%s10638 + $0x17c] sm:$0x1]
  %v10733 = vld [vmem:[%s10638 + $0x188] sm:$0x1]
  %v10734 = vld [vmem:[%s10638 + $0x194] sm:$0x1]
  %v10736 = vshrl.u32 %v10639, 16
  %v10738 = vrot.slane %v10736, 4
  %v10739 = vshll.u32 %v10639, 16
  %v10741 = vrot.slane %v10739, 5
  %v10742 = vor.u32 %v10738, %v10741
  %v10743 = vrot.slane %v10742, 4
  %v10745 = vshll.u32 %v10640, 16
  %v10747 = vrot.slane %v10745, 5
  %v10748 = vsel %vm128, %v10743, %v10747
  %v10749 = vshrl.u32 %v10640, 16
  %v10751 = vrot.slane %v10749, 4
  %v10752 = vor.u32 %v10751, %v10747
  %v10753 = vrot.slane %v10752, 4
  %v10755 = vshll.u32 %v10703, 16
  %v10757 = vrot.slane %v10755, 5
  %v10758 = vsel %vm128, %v10753, %v10757
  %v10760 = vshrl.u32 %v10641, 16
  %v10762 = vrot.slane %v10760, 4
  %v10763 = vshll.u32 %v10641, 16
  %v10765 = vrot.slane %v10763, 5
  %v10766 = vor.u32 %v10762, %v10765
  %v10767 = vrot.slane %v10766, 4
  %v10769 = vshll.u32 %v10642, 16
  %v10771 = vrot.slane %v10769, 5
  %v10772 = vsel %vm128, %v10767, %v10771
  %v10773 = vshrl.u32 %v10642, 16
  %v10775 = vrot.slane %v10773, 4
  %v10776 = vor.u32 %v10775, %v10771
  %v10777 = vrot.slane %v10776, 4
  %v10779 = vshll.u32 %v10704, 16
  %v10781 = vrot.slane %v10779, 5
  %v10782 = vsel %vm128, %v10777, %v10781
  %v10784 = vshrl.u32 %v10643, 16
  %v10786 = vrot.slane %v10784, 4
  %v10787 = vshll.u32 %v10643, 16
  %v10789 = vrot.slane %v10787, 5
  %v10790 = vor.u32 %v10786, %v10789
  %v10791 = vrot.slane %v10790, 4
  %v10793 = vshll.u32 %v10644, 16
  %v10795 = vrot.slane %v10793, 5
  %v10796 = vsel %vm128, %v10791, %v10795
  %v10797 = vshrl.u32 %v10644, 16
  %v10799 = vrot.slane %v10797, 4
  %v10800 = vor.u32 %v10799, %v10795
  %v10801 = vrot.slane %v10800, 4
  %v10803 = vshll.u32 %v10705, 16
  %v10805 = vrot.slane %v10803, 5
  %v10806 = vsel %vm128, %v10801, %v10805
  %v10808 = vshrl.u32 %v10645, 16
  %v10810 = vrot.slane %v10808, 4
  %v10811 = vshll.u32 %v10645, 16
  %v10813 = vrot.slane %v10811, 5
  %v10814 = vor.u32 %v10810, %v10813
  %v10815 = vrot.slane %v10814, 4
  %v10817 = vshll.u32 %v10646, 16
  %v10819 = vrot.slane %v10817, 5
  %v10820 = vsel %vm128, %v10815, %v10819
  %v10821 = vshrl.u32 %v10646, 16
  %v10823 = vrot.slane %v10821, 4
  %v10824 = vor.u32 %v10823, %v10819
  %v10825 = vrot.slane %v10824, 4
  %v10827 = vshll.u32 %v10706, 16
  %v10829 = vrot.slane %v10827, 5
  %v10830 = vsel %vm128, %v10825, %v10829
  %v10832 = vshrl.u32 %v10647, 16
  %v10834 = vrot.slane %v10832, 4
  %v10835 = vshll.u32 %v10647, 16
  %v10837 = vrot.slane %v10835, 5
  %v10838 = vor.u32 %v10834, %v10837
  %v10839 = vrot.slane %v10838, 4
  %v10841 = vshll.u32 %v10648, 16
  %v10843 = vrot.slane %v10841, 5
  %v10844 = vsel %vm128, %v10839, %v10843
  %v10845 = vshrl.u32 %v10648, 16
  %v10847 = vrot.slane %v10845, 4
  %v10848 = vor.u32 %v10847, %v10843
  %v10849 = vrot.slane %v10848, 4
  %v10851 = vshll.u32 %v10707, 16
  %v10853 = vrot.slane %v10851, 5
  %v10854 = vsel %vm128, %v10849, %v10853
  %v10856 = vshrl.u32 %v10649, 16
  %v10858 = vrot.slane %v10856, 4
  %v10859 = vshll.u32 %v10649, 16
  %v10861 = vrot.slane %v10859, 5
  %v10862 = vor.u32 %v10858, %v10861
  %v10863 = vrot.slane %v10862, 4
  %v10865 = vshll.u32 %v10650, 16
  %v10867 = vrot.slane %v10865, 5
  %v10868 = vsel %vm128, %v10863, %v10867
  %v10869 = vshrl.u32 %v10650, 16
  %v10871 = vrot.slane %v10869, 4
  %v10872 = vor.u32 %v10871, %v10867
  %v10873 = vrot.slane %v10872, 4
  %v10875 = vshll.u32 %v10708, 16
  %v10877 = vrot.slane %v10875, 5
  %v10878 = vsel %vm128, %v10873, %v10877
  %v10880 = vshrl.u32 %v10651, 16
  %v10882 = vrot.slane %v10880, 4
  %v10883 = vshll.u32 %v10651, 16
  %v10885 = vrot.slane %v10883, 5
  %v10886 = vor.u32 %v10882, %v10885
  %v10887 = vrot.slane %v10886, 4
  %v10889 = vshll.u32 %v10652, 16
  %v10891 = vrot.slane %v10889, 5
  %v10892 = vsel %vm128, %v10887, %v10891
  %v10893 = vshrl.u32 %v10652, 16
  %v10895 = vrot.slane %v10893, 4
  %v10896 = vor.u32 %v10895, %v10891
  %v10897 = vrot.slane %v10896, 4
  %v10899 = vshll.u32 %v10709, 16
  %v10901 = vrot.slane %v10899, 5
  %v10902 = vsel %vm128, %v10897, %v10901
  %v10904 = vshrl.u32 %v10653, 16
  %v10906 = vrot.slane %v10904, 4
  %v10907 = vshll.u32 %v10653, 16
  %v10909 = vrot.slane %v10907, 5
  %v10910 = vor.u32 %v10906, %v10909
  %v10911 = vrot.slane %v10910, 4
  %v10913 = vshll.u32 %v10654, 16
  %v10915 = vrot.slane %v10913, 5
  %v10916 = vsel %vm128, %v10911, %v10915
  %v10917 = vshrl.u32 %v10654, 16
  %v10919 = vrot.slane %v10917, 4
  %v10920 = vor.u32 %v10919, %v10915
  %v10921 = vrot.slane %v10920, 4
  %v10923 = vshll.u32 %v10710, 16
  %v10925 = vrot.slane %v10923, 5
  %v10926 = vsel %vm128, %v10921, %v10925
  %v10928 = vshrl.u32 %v10655, 16
  %v10930 = vrot.slane %v10928, 4
  %v10931 = vshll.u32 %v10655, 16
  %v10933 = vrot.slane %v10931, 5
  %v10934 = vor.u32 %v10930, %v10933
  %v10935 = vrot.slane %v10934, 4
  %v10937 = vshll.u32 %v10656, 16
  %v10939 = vrot.slane %v10937, 5
  %v10940 = vsel %vm128, %v10935, %v10939
  %v10941 = vshrl.u32 %v10656, 16
  %v10943 = vrot.slane %v10941, 4
  %v10944 = vor.u32 %v10943, %v10939
  %v10945 = vrot.slane %v10944, 4
  %v10947 = vshll.u32 %v10711, 16
  %v10949 = vrot.slane %v10947, 5
  %v10950 = vsel %vm128, %v10945, %v10949
  %v10952 = vshrl.u32 %v10657, 16
  %v10954 = vrot.slane %v10952, 4
  %v10955 = vshll.u32 %v10657, 16
  %v10957 = vrot.slane %v10955, 5
  %v10958 = vor.u32 %v10954, %v10957
  %v10959 = vrot.slane %v10958, 4
  %v10961 = vshll.u32 %v10658, 16
  %v10963 = vrot.slane %v10961, 5
  %v10964 = vsel %vm128, %v10959, %v10963
  %v10965 = vshrl.u32 %v10658, 16
  %v10967 = vrot.slane %v10965, 4
  %v10968 = vor.u32 %v10967, %v10963
  %v10969 = vrot.slane %v10968, 4
  %v10971 = vshll.u32 %v10712, 16
  %v10973 = vrot.slane %v10971, 5
  %v10974 = vsel %vm128, %v10969, %v10973
  %v10976 = vshrl.u32 %v10659, 16
  %v10978 = vrot.slane %v10976, 4
  %v10979 = vshll.u32 %v10659, 16
  %v10981 = vrot.slane %v10979, 5
  %v10982 = vor.u32 %v10978, %v10981
  %v10983 = vrot.slane %v10982, 4
  %v10985 = vshll.u32 %v10660, 16
  %v10987 = vrot.slane %v10985, 5
  %v10988 = vsel %vm128, %v10983, %v10987
  %v10989 = vshrl.u32 %v10660, 16
  %v10991 = vrot.slane %v10989, 4
  %v10992 = vor.u32 %v10991, %v10987
  %v10993 = vrot.slane %v10992, 4
  %v10995 = vshll.u32 %v10713, 16
  %v10997 = vrot.slane %v10995, 5
  %v10998 = vsel %vm128, %v10993, %v10997
  %v11000 = vshrl.u32 %v10661, 16
  %v11002 = vrot.slane %v11000, 4
  %v11003 = vshll.u32 %v10661, 16
  %v11005 = vrot.slane %v11003, 5
  %v11006 = vor.u32 %v11002, %v11005
  %v11007 = vrot.slane %v11006, 4
  %v11009 = vshll.u32 %v10662, 16
  %v11011 = vrot.slane %v11009, 5
  %v11012 = vsel %vm128, %v11007, %v11011
  %v11013 = vshrl.u32 %v10662, 16
  %v11015 = vrot.slane %v11013, 4
  %v11016 = vor.u32 %v11015, %v11011
  %v11017 = vrot.slane %v11016, 4
  %v11019 = vshll.u32 %v10714, 16
  %v11021 = vrot.slane %v11019, 5
  %v11022 = vsel %vm128, %v11017, %v11021
  %v11024 = vshrl.u32 %v10663, 16
  %v11026 = vrot.slane %v11024, 4
  %v11027 = vshll.u32 %v10663, 16
  %v11029 = vrot.slane %v11027, 5
  %v11030 = vor.u32 %v11026, %v11029
  %v11031 = vrot.slane %v11030, 4
  %v11033 = vshll.u32 %v10664, 16
  %v11035 = vrot.slane %v11033, 5
  %v11036 = vsel %vm128, %v11031, %v11035
  %v11037 = vshrl.u32 %v10664, 16
  %v11039 = vrot.slane %v11037, 4
  %v11040 = vor.u32 %v11039, %v11035
  %v11041 = vrot.slane %v11040, 4
  %v11043 = vshll.u32 %v10715, 16
  %v11045 = vrot.slane %v11043, 5
  %v11046 = vsel %vm128, %v11041, %v11045
  %v11048 = vshrl.u32 %v10665, 16
  %v11050 = vrot.slane %v11048, 4
  %v11051 = vshll.u32 %v10665, 16
  %v11053 = vrot.slane %v11051, 5
  %v11054 = vor.u32 %v11050, %v11053
  %v11055 = vrot.slane %v11054, 4
  %v11057 = vshll.u32 %v10666, 16
  %v11059 = vrot.slane %v11057, 5
  %v11060 = vsel %vm128, %v11055, %v11059
  %v11061 = vshrl.u32 %v10666, 16
  %v11063 = vrot.slane %v11061, 4
  %v11064 = vor.u32 %v11063, %v11059
  %v11065 = vrot.slane %v11064, 4
  %v11067 = vshll.u32 %v10716, 16
  %v11069 = vrot.slane %v11067, 5
  %v11070 = vsel %vm128, %v11065, %v11069
  %v11072 = vshrl.u32 %v10667, 16
  %v11074 = vrot.slane %v11072, 4
  %v11075 = vshll.u32 %v10667, 16
  %v11077 = vrot.slane %v11075, 5
  %v11078 = vor.u32 %v11074, %v11077
  %v11079 = vrot.slane %v11078, 4
  %v11081 = vshll.u32 %v10668, 16
  %v11083 = vrot.slane %v11081, 5
  %v11084 = vsel %vm128, %v11079, %v11083
  %v11085 = vshrl.u32 %v10668, 16
  %v11087 = vrot.slane %v11085, 4
  %v11088 = vor.u32 %v11087, %v11083
  %v11089 = vrot.slane %v11088, 4
  %v11091 = vshll.u32 %v10717, 16
  %v11093 = vrot.slane %v11091, 5
  %v11094 = vsel %vm128, %v11089, %v11093
  %v11096 = vshrl.u32 %v10669, 16
  %v11098 = vrot.slane %v11096, 4
  %v11099 = vshll.u32 %v10669, 16
  %v11101 = vrot.slane %v11099, 5
  %v11102 = vor.u32 %v11098, %v11101
  %v11103 = vrot.slane %v11102, 4
  %v11105 = vshll.u32 %v10670, 16
  %v11107 = vrot.slane %v11105, 5
  %v11108 = vsel %vm128, %v11103, %v11107
  %v11109 = vshrl.u32 %v10670, 16
  %v11111 = vrot.slane %v11109, 4
  %v11112 = vor.u32 %v11111, %v11107
  %v11113 = vrot.slane %v11112, 4
  %v11115 = vshll.u32 %v10718, 16
  %v11117 = vrot.slane %v11115, 5
  %v11118 = vsel %vm128, %v11113, %v11117
  %v11120 = vshrl.u32 %v10671, 16
  %v11122 = vrot.slane %v11120, 4
  %v11123 = vshll.u32 %v10671, 16
  %v11125 = vrot.slane %v11123, 5
  %v11126 = vor.u32 %v11122, %v11125
  %v11127 = vrot.slane %v11126, 4
  %v11129 = vshll.u32 %v10672, 16
  %v11131 = vrot.slane %v11129, 5
  %v11132 = vsel %vm128, %v11127, %v11131
  %v11133 = vshrl.u32 %v10672, 16
  %v11135 = vrot.slane %v11133, 4
  %v11136 = vor.u32 %v11135, %v11131
  %v11137 = vrot.slane %v11136, 4
  %v11139 = vshll.u32 %v10719, 16
  %v11141 = vrot.slane %v11139, 5
  %v11142 = vsel %vm128, %v11137, %v11141
  %v11144 = vshrl.u32 %v10673, 16
  %v11146 = vrot.slane %v11144, 4
  %v11147 = vshll.u32 %v10673, 16
  %v11149 = vrot.slane %v11147, 5
  %v11150 = vor.u32 %v11146, %v11149
  %v11151 = vrot.slane %v11150, 4
  %v11153 = vshll.u32 %v10674, 16
  %v11155 = vrot.slane %v11153, 5
  %v11156 = vsel %vm128, %v11151, %v11155
  %v11157 = vshrl.u32 %v10674, 16
  %v11159 = vrot.slane %v11157, 4
  %v11160 = vor.u32 %v11159, %v11155
  %v11161 = vrot.slane %v11160, 4
  %v11163 = vshll.u32 %v10720, 16
  %v11165 = vrot.slane %v11163, 5
  %v11166 = vsel %vm128, %v11161, %v11165
  %v11168 = vshrl.u32 %v10675, 16
  %v11170 = vrot.slane %v11168, 4
  %v11171 = vshll.u32 %v10675, 16
  %v11173 = vrot.slane %v11171, 5
  %v11174 = vor.u32 %v11170, %v11173
  %v11175 = vrot.slane %v11174, 4
  %v11177 = vshll.u32 %v10676, 16
  %v11179 = vrot.slane %v11177, 5
  %v11180 = vsel %vm128, %v11175, %v11179
  %v11181 = vshrl.u32 %v10676, 16
  %v11183 = vrot.slane %v11181, 4
  %v11184 = vor.u32 %v11183, %v11179
  %v11185 = vrot.slane %v11184, 4
  %v11187 = vshll.u32 %v10721, 16
  %v11189 = vrot.slane %v11187, 5
  %v11190 = vsel %vm128, %v11185, %v11189
  %v11192 = vshrl.u32 %v10677, 16
  %v11194 = vrot.slane %v11192, 4
  %v11195 = vshll.u32 %v10677, 16
  %v11197 = vrot.slane %v11195, 5
  %v11198 = vor.u32 %v11194, %v11197
  %v11199 = vrot.slane %v11198, 4
  %v11201 = vshll.u32 %v10678, 16
  %v11203 = vrot.slane %v11201, 5
  %v11204 = vsel %vm128, %v11199, %v11203
  %v11205 = vshrl.u32 %v10678, 16
  %v11207 = vrot.slane %v11205, 4
  %v11208 = vor.u32 %v11207, %v11203
  %v11209 = vrot.slane %v11208, 4
  %v11211 = vshll.u32 %v10722, 16
  %v11213 = vrot.slane %v11211, 5
  %v11214 = vsel %vm128, %v11209, %v11213
  %v11216 = vshrl.u32 %v10679, 16
  %v11218 = vrot.slane %v11216, 4
  %v11219 = vshll.u32 %v10679, 16
  %v11221 = vrot.slane %v11219, 5
  %v11222 = vor.u32 %v11218, %v11221
  %v11223 = vrot.slane %v11222, 4
  %v11225 = vshll.u32 %v10680, 16
  %v11227 = vrot.slane %v11225, 5
  %v11228 = vsel %vm128, %v11223, %v11227
  %v11229 = vshrl.u32 %v10680, 16
  %v11231 = vrot.slane %v11229, 4
  %v11232 = vor.u32 %v11231, %v11227
  %v11233 = vrot.slane %v11232, 4
  %v11235 = vshll.u32 %v10723, 16
  %v11237 = vrot.slane %v11235, 5
  %v11238 = vsel %vm128, %v11233, %v11237
  %v11240 = vshrl.u32 %v10681, 16
  %v11242 = vrot.slane %v11240, 4
  %v11243 = vshll.u32 %v10681, 16
  %v11245 = vrot.slane %v11243, 5
  %v11246 = vor.u32 %v11242, %v11245
  %v11247 = vrot.slane %v11246, 4
  %v11249 = vshll.u32 %v10682, 16
  %v11251 = vrot.slane %v11249, 5
  %v11252 = vsel %vm128, %v11247, %v11251
  %v11253 = vshrl.u32 %v10682, 16
  %v11255 = vrot.slane %v11253, 4
  %v11256 = vor.u32 %v11255, %v11251
  %v11257 = vrot.slane %v11256, 4
  %v11259 = vshll.u32 %v10724, 16
  %v11261 = vrot.slane %v11259, 5
  %v11262 = vsel %vm128, %v11257, %v11261
  %v11264 = vshrl.u32 %v10683, 16
  %v11266 = vrot.slane %v11264, 4
  %v11267 = vshll.u32 %v10683, 16
  %v11269 = vrot.slane %v11267, 5
  %v11270 = vor.u32 %v11266, %v11269
  %v11271 = vrot.slane %v11270, 4
  %v11273 = vshll.u32 %v10684, 16
  %v11275 = vrot.slane %v11273, 5
  %v11276 = vsel %vm128, %v11271, %v11275
  %v11277 = vshrl.u32 %v10684, 16
  %v11279 = vrot.slane %v11277, 4
  %v11280 = vor.u32 %v11279, %v11275
  %v11281 = vrot.slane %v11280, 4
  %v11283 = vshll.u32 %v10725, 16
  %v11285 = vrot.slane %v11283, 5
  %v11286 = vsel %vm128, %v11281, %v11285
  %v11288 = vshrl.u32 %v10685, 16
  %v11290 = vrot.slane %v11288, 4
  %v11291 = vshll.u32 %v10685, 16
  %v11293 = vrot.slane %v11291, 5
  %v11294 = vor.u32 %v11290, %v11293
  %v11295 = vrot.slane %v11294, 4
  %v11297 = vshll.u32 %v10686, 16
  %v11299 = vrot.slane %v11297, 5
  %v11300 = vsel %vm128, %v11295, %v11299
  %v11301 = vshrl.u32 %v10686, 16
  %v11303 = vrot.slane %v11301, 4
  %v11304 = vor.u32 %v11303, %v11299
  %v11305 = vrot.slane %v11304, 4
  %v11307 = vshll.u32 %v10726, 16
  %v11309 = vrot.slane %v11307, 5
  %v11310 = vsel %vm128, %v11305, %v11309
  %v11312 = vshrl.u32 %v10687, 16
  %v11314 = vrot.slane %v11312, 4
  %v11315 = vshll.u32 %v10687, 16
  %v11317 = vrot.slane %v11315, 5
  %v11318 = vor.u32 %v11314, %v11317
  %v11319 = vrot.slane %v11318, 4
  %v11321 = vshll.u32 %v10688, 16
  %v11323 = vrot.slane %v11321, 5
  %v11324 = vsel %vm128, %v11319, %v11323
  %v11325 = vshrl.u32 %v10688, 16
  %v11327 = vrot.slane %v11325, 4
  %v11328 = vor.u32 %v11327, %v11323
  %v11329 = vrot.slane %v11328, 4
  %v11331 = vshll.u32 %v10727, 16
  %v11333 = vrot.slane %v11331, 5
  %v11334 = vsel %vm128, %v11329, %v11333
  %v11336 = vshrl.u32 %v10689, 16
  %v11338 = vrot.slane %v11336, 4
  %v11339 = vshll.u32 %v10689, 16
  %v11341 = vrot.slane %v11339, 5
  %v11342 = vor.u32 %v11338, %v11341
  %v11343 = vrot.slane %v11342, 4
  %v11345 = vshll.u32 %v10690, 16
  %v11347 = vrot.slane %v11345, 5
  %v11348 = vsel %vm128, %v11343, %v11347
  %v11349 = vshrl.u32 %v10690, 16
  %v11351 = vrot.slane %v11349, 4
  %v11352 = vor.u32 %v11351, %v11347
  %v11353 = vrot.slane %v11352, 4
  %v11355 = vshll.u32 %v10728, 16
  %v11357 = vrot.slane %v11355, 5
  %v11358 = vsel %vm128, %v11353, %v11357
  %v11360 = vshrl.u32 %v10691, 16
  %v11362 = vrot.slane %v11360, 4
  %v11363 = vshll.u32 %v10691, 16
  %v11365 = vrot.slane %v11363, 5
  %v11366 = vor.u32 %v11362, %v11365
  %v11367 = vrot.slane %v11366, 4
  %v11369 = vshll.u32 %v10692, 16
  %v11371 = vrot.slane %v11369, 5
  %v11372 = vsel %vm128, %v11367, %v11371
  %v11373 = vshrl.u32 %v10692, 16
  %v11375 = vrot.slane %v11373, 4
  %v11376 = vor.u32 %v11375, %v11371
  %v11377 = vrot.slane %v11376, 4
  %v11379 = vshll.u32 %v10729, 16
  %v11381 = vrot.slane %v11379, 5
  %v11382 = vsel %vm128, %v11377, %v11381
  %v11384 = vshrl.u32 %v10693, 16
  %v11386 = vrot.slane %v11384, 4
  %v11387 = vshll.u32 %v10693, 16
  %v11389 = vrot.slane %v11387, 5
  %v11390 = vor.u32 %v11386, %v11389
  %v11391 = vrot.slane %v11390, 4
  %v11393 = vshll.u32 %v10694, 16
  %v11395 = vrot.slane %v11393, 5
  %v11396 = vsel %vm128, %v11391, %v11395
  %v11397 = vshrl.u32 %v10694, 16
  %v11399 = vrot.slane %v11397, 4
  %v11400 = vor.u32 %v11399, %v11395
  %v11401 = vrot.slane %v11400, 4
  %v11403 = vshll.u32 %v10730, 16
  %v11405 = vrot.slane %v11403, 5
  %v11406 = vsel %vm128, %v11401, %v11405
  %v11408 = vshrl.u32 %v10695, 16
  %v11410 = vrot.slane %v11408, 4
  %v11411 = vshll.u32 %v10695, 16
  %v11413 = vrot.slane %v11411, 5
  %v11414 = vor.u32 %v11410, %v11413
  %v11415 = vrot.slane %v11414, 4
  %v11417 = vshll.u32 %v10696, 16
  %v11419 = vrot.slane %v11417, 5
  %v11420 = vsel %vm128, %v11415, %v11419
  %v11421 = vshrl.u32 %v10696, 16
  %v11423 = vrot.slane %v11421, 4
  %v11424 = vor.u32 %v11423, %v11419
  %v11425 = vrot.slane %v11424, 4
  %v11427 = vshll.u32 %v10731, 16
  %v11429 = vrot.slane %v11427, 5
  %v11430 = vsel %vm128, %v11425, %v11429
  %v11432 = vshrl.u32 %v10697, 16
  %v11434 = vrot.slane %v11432, 4
  %v11435 = vshll.u32 %v10697, 16
  %v11437 = vrot.slane %v11435, 5
  %v11438 = vor.u32 %v11434, %v11437
  %v11439 = vrot.slane %v11438, 4
  %v11441 = vshll.u32 %v10698, 16
  %v11443 = vrot.slane %v11441, 5
  %v11444 = vsel %vm128, %v11439, %v11443
  %v11445 = vshrl.u32 %v10698, 16
  %v11447 = vrot.slane %v11445, 4
  %v11448 = vor.u32 %v11447, %v11443
  %v11449 = vrot.slane %v11448, 4
  %v11451 = vshll.u32 %v10732, 16
  %v11453 = vrot.slane %v11451, 5
  %v11454 = vsel %vm128, %v11449, %v11453
  %v11456 = vshrl.u32 %v10699, 16
  %v11458 = vrot.slane %v11456, 4
  %v11459 = vshll.u32 %v10699, 16
  %v11461 = vrot.slane %v11459, 5
  %v11462 = vor.u32 %v11458, %v11461
  %v11463 = vrot.slane %v11462, 4
  %v11465 = vshll.u32 %v10700, 16
  %v11467 = vrot.slane %v11465, 5
  %v11468 = vsel %vm128, %v11463, %v11467
  %v11469 = vshrl.u32 %v10700, 16
  %v11471 = vrot.slane %v11469, 4
  %v11472 = vor.u32 %v11471, %v11467
  %v11473 = vrot.slane %v11472, 4
  %v11475 = vshll.u32 %v10733, 16
  %v11477 = vrot.slane %v11475, 5
  %v11478 = vsel %vm128, %v11473, %v11477
  %v11480 = vshrl.u32 %v10701, 16
  %v11482 = vrot.slane %v11480, 4
  %v11483 = vshll.u32 %v10701, 16
  %v11485 = vrot.slane %v11483, 5
  %v11486 = vor.u32 %v11482, %v11485
  %v11487 = vrot.slane %v11486, 4
  %v11489 = vshll.u32 %v10702, 16
  %v11491 = vrot.slane %v11489, 5
  %v11492 = vsel %vm128, %v11487, %v11491
  %v11493 = vshrl.u32 %v10702, 16
  %v11495 = vrot.slane %v11493, 4
  %v11496 = vor.u32 %v11495, %v11491
  %v11497 = vrot.slane %v11496, 4
  %v11499 = vshll.u32 %v10734, 16
  %v11501 = vrot.slane %v11499, 5
  %v11502 = vsel %vm128, %v11497, %v11501
  %v11503 = vld [vmem:[%s10638] sm:$0xe]
  %v11504 = vld [vmem:[%s10638 + $0xc] sm:$0xe]
  %v11505 = vld [vmem:[%s10638 + $0x18] sm:$0xe]
  %v11506 = vld [vmem:[%s10638 + $0x24] sm:$0xe]
  %v11507 = vld [vmem:[%s10638 + $0x30] sm:$0xe]
  %v11508 = vld [vmem:[%s10638 + $0x3c] sm:$0xe]
  %v11509 = vld [vmem:[%s10638 + $0x48] sm:$0xe]
  %v11510 = vld [vmem:[%s10638 + $0x54] sm:$0xe]
  %v11511 = vld [vmem:[%s10638 + $0x60] sm:$0xe]
  %v11512 = vld [vmem:[%s10638 + $0x6c] sm:$0xe]
  %v11513 = vld [vmem:[%s10638 + $0x78] sm:$0xe]
  %v11514 = vld [vmem:[%s10638 + $0x84] sm:$0xe]
  %v11515 = vld [vmem:[%s10638 + $0x90] sm:$0xe]
  %v11516 = vld [vmem:[%s10638 + $0x9c] sm:$0xe]
  %v11517 = vld [vmem:[%s10638 + $0xa8] sm:$0xe]
  %v11518 = vld [vmem:[%s10638 + $0xb4] sm:$0xe]
  %v11519 = vld [vmem:[%s10638 + $0xd8] sm:$0xe]
  %v11520 = vld [vmem:[%s10638 + $0xe4] sm:$0xe]
  %v11521 = vld [vmem:[%s10638 + $0xf0] sm:$0xe]
  %v11522 = vld [vmem:[%s10638 + $0xfc] sm:$0xe]
  %v11523 = vld [vmem:[%s10638 + $0x108] sm:$0xe]
  %v11524 = vld [vmem:[%s10638 + $0x114] sm:$0xe]
  %v11525 = vld [vmem:[%s10638 + $0x120] sm:$0xe]
  %v11526 = vld [vmem:[%s10638 + $0x12c] sm:$0xe]
  %v11527 = vld [vmem:[%s10638 + $0x138] sm:$0xe]
  %v11528 = vld [vmem:[%s10638 + $0x144] sm:$0xe]
  %v11529 = vld [vmem:[%s10638 + $0x150] sm:$0xe]
  %v11530 = vld [vmem:[%s10638 + $0x15c] sm:$0xe]
  %v11531 = vld [vmem:[%s10638 + $0x168] sm:$0xe]
  %v11532 = vld [vmem:[%s10638 + $0x174] sm:$0xe]
  %v11533 = vld [vmem:[%s10638 + $0x180] sm:$0xe]
  %v11534 = vld [vmem:[%s10638 + $0x18c] sm:$0xe]
  %v11631 = vrot.slane %v11503, 5
  %v11632 = vrot.slane %v11631, 4
  %v11633 = vrot.slane %v10640, 5
  %v11634 = vsel %vm1027, %v11632, %v11633
  %v11635 = vrot.slane %v11633, 4
  %v11636 = vrot.slane %v10703, 5
  %v11637 = vsel %vm1027, %v11635, %v11636
  %v11638 = vrot.slane %v11504, 5
  %v11639 = vrot.slane %v11638, 4
  %v11640 = vrot.slane %v10642, 5
  %v11641 = vsel %vm1027, %v11639, %v11640
  %v11642 = vrot.slane %v11640, 4
  %v11643 = vrot.slane %v10704, 5
  %v11644 = vsel %vm1027, %v11642, %v11643
  %v11645 = vrot.slane %v11505, 5
  %v11646 = vrot.slane %v11645, 4
  %v11647 = vrot.slane %v10644, 5
  %v11648 = vsel %vm1027, %v11646, %v11647
  %v11649 = vrot.slane %v11647, 4
  %v11650 = vrot.slane %v10705, 5
  %v11651 = vsel %vm1027, %v11649, %v11650
  %v11652 = vrot.slane %v11506, 5
  %v11653 = vrot.slane %v11652, 4
  %v11654 = vrot.slane %v10646, 5
  %v11655 = vsel %vm1027, %v11653, %v11654
  %v11656 = vrot.slane %v11654, 4
  %v11657 = vrot.slane %v10706, 5
  %v11658 = vsel %vm1027, %v11656, %v11657
  %v11659 = vrot.slane %v11507, 5
  %v11660 = vrot.slane %v11659, 4
  %v11661 = vrot.slane %v10648, 5
  %v11662 = vsel %vm1027, %v11660, %v11661
  %v11663 = vrot.slane %v11661, 4
  %v11664 = vrot.slane %v10707, 5
  %v11665 = vsel %vm1027, %v11663, %v11664
  %v11666 = vrot.slane %v11508, 5
  %v11667 = vrot.slane %v11666, 4
  %v11668 = vrot.slane %v10650, 5
  %v11669 = vsel %vm1027, %v11667, %v11668
  %v11670 = vrot.slane %v11668, 4
  %v11671 = vrot.slane %v10708, 5
  %v11672 = vsel %vm1027, %v11670, %v11671
  %v11673 = vrot.slane %v11509, 5
  %v11674 = vrot.slane %v11673, 4
  %v11675 = vrot.slane %v10652, 5
  %v11676 = vsel %vm1027, %v11674, %v11675
  %v11677 = vrot.slane %v11675, 4
  %v11678 = vrot.slane %v10709, 5
  %v11679 = vsel %vm1027, %v11677, %v11678
  %v11680 = vrot.slane %v11510, 5
  %v11681 = vrot.slane %v11680, 4
  %v11682 = vrot.slane %v10654, 5
  %v11683 = vsel %vm1027, %v11681, %v11682
  %v11684 = vrot.slane %v11682, 4
  %v11685 = vrot.slane %v10710, 5
  %v11686 = vsel %vm1027, %v11684, %v11685
  %v11687 = vrot.slane %v11511, 5
  %v11688 = vrot.slane %v11687, 4
  %v11689 = vrot.slane %v10656, 5
  %v11690 = vsel %vm1027, %v11688, %v11689
  %v11691 = vrot.slane %v11689, 4
  %v11692 = vrot.slane %v10711, 5
  %v11693 = vsel %vm1027, %v11691, %v11692
  %v11694 = vrot.slane %v11512, 5
  %v11695 = vrot.slane %v11694, 4
  %v11696 = vrot.slane %v10658, 5
  %v11697 = vsel %vm1027, %v11695, %v11696
  %v11698 = vrot.slane %v11696, 4
  %v11699 = vrot.slane %v10712, 5
  %v11700 = vsel %vm1027, %v11698, %v11699
  %v11701 = vrot.slane %v11513, 5
  %v11702 = vrot.slane %v11701, 4
  %v11703 = vrot.slane %v10660, 5
  %v11704 = vsel %vm1027, %v11702, %v11703
  %v11705 = vrot.slane %v11703, 4
  %v11706 = vrot.slane %v10713, 5
  %v11707 = vsel %vm1027, %v11705, %v11706
  %v11708 = vrot.slane %v11514, 5
  %v11709 = vrot.slane %v11708, 4
  %v11710 = vrot.slane %v10662, 5
  %v11711 = vsel %vm1027, %v11709, %v11710
  %v11712 = vrot.slane %v11710, 4
  %v11713 = vrot.slane %v10714, 5
  %v11714 = vsel %vm1027, %v11712, %v11713
  %v11715 = vrot.slane %v11515, 5
  %v11716 = vrot.slane %v11715, 4
  %v11717 = vrot.slane %v10664, 5
  %v11718 = vsel %vm1027, %v11716, %v11717
  %v11719 = vrot.slane %v11717, 4
  %v11720 = vrot.slane %v10715, 5
  %v11721 = vsel %vm1027, %v11719, %v11720
  %v11722 = vrot.slane %v11516, 5
  %v11723 = vrot.slane %v11722, 4
  %v11724 = vrot.slane %v10666, 5
  %v11725 = vsel %vm1027, %v11723, %v11724
  %v11726 = vrot.slane %v11724, 4
  %v11727 = vrot.slane %v10716, 5
  %v11728 = vsel %vm1027, %v11726, %v11727
  %v11729 = vrot.slane %v11517, 5
  %v11730 = vrot.slane %v11729, 4
  %v11731 = vrot.slane %v10668, 5
  %v11732 = vsel %vm1027, %v11730, %v11731
  %v11733 = vrot.slane %v11731, 4
  %v11734 = vrot.slane %v10717, 5
  %v11735 = vsel %vm1027, %v11733, %v11734
  %v11736 = vrot.slane %v11518, 5
  %v11737 = vrot.slane %v11736, 4
  %v11738 = vrot.slane %v10670, 5
  %v11739 = vsel %vm1027, %v11737, %v11738
  %v11740 = vrot.slane %v11738, 4
  %v11741 = vrot.slane %v10718, 5
  %v11742 = vsel %vm1027, %v11740, %v11741
  %v11743 = vrot.slane %v11519, 5
  %v11744 = vrot.slane %v11743, 4
  %v11745 = vrot.slane %v10672, 5
  %v11746 = vsel %vm1027, %v11744, %v11745
  %v11747 = vrot.slane %v11745, 4
  %v11748 = vrot.slane %v10719, 5
  %v11749 = vsel %vm1027, %v11747, %v11748
  %v11750 = vrot.slane %v11520, 5
  %v11751 = vrot.slane %v11750, 4
  %v11752 = vrot.slane %v10674, 5
  %v11753 = vsel %vm1027, %v11751, %v11752
  %v11754 = vrot.slane %v11752, 4
  %v11755 = vrot.slane %v10720, 5
  %v11756 = vsel %vm1027, %v11754, %v11755
  %v11757 = vrot.slane %v11521, 5
  %v11758 = vrot.slane %v11757, 4
  %v11759 = vrot.slane %v10676, 5
  %v11760 = vsel %vm1027, %v11758, %v11759
  %v11761 = vrot.slane %v11759, 4
  %v11762 = vrot.slane %v10721, 5
  %v11763 = vsel %vm1027, %v11761, %v11762
  %v11764 = vrot.slane %v11522, 5
  %v11765 = vrot.slane %v11764, 4
  %v11766 = vrot.slane %v10678, 5
  %v11767 = vsel %vm1027, %v11765, %v11766
  %v11768 = vrot.slane %v11766, 4
  %v11769 = vrot.slane %v10722, 5
  %v11770 = vsel %vm1027, %v11768, %v11769
  %v11771 = vrot.slane %v11523, 5
  %v11772 = vrot.slane %v11771, 4
  %v11773 = vrot.slane %v10680, 5
  %v11774 = vsel %vm1027, %v11772, %v11773
  %v11775 = vrot.slane %v11773, 4
  %v11776 = vrot.slane %v10723, 5
  %v11777 = vsel %vm1027, %v11775, %v11776
  %v11778 = vrot.slane %v11524, 5
  %v11779 = vrot.slane %v11778, 4
  %v11780 = vrot.slane %v10682, 5
  %v11781 = vsel %vm1027, %v11779, %v11780
  %v11782 = vrot.slane %v11780, 4
  %v11783 = vrot.slane %v10724, 5
  %v11784 = vsel %vm1027, %v11782, %v11783
  %v11785 = vrot.slane %v11525, 5
  %v11786 = vrot.slane %v11785, 4
  %v11787 = vrot.slane %v10684, 5
  %v11788 = vsel %vm1027, %v11786, %v11787
  %v11789 = vrot.slane %v11787, 4
  %v11790 = vrot.slane %v10725, 5
  %v11791 = vsel %vm1027, %v11789, %v11790
  %v11792 = vrot.slane %v11526, 5
  %v11793 = vrot.slane %v11792, 4
  %v11794 = vrot.slane %v10686, 5
  %v11795 = vsel %vm1027, %v11793, %v11794
  %v11796 = vrot.slane %v11794, 4
  %v11797 = vrot.slane %v10726, 5
  %v11798 = vsel %vm1027, %v11796, %v11797
  %v11799 = vrot.slane %v11527, 5
  %v11800 = vrot.slane %v11799, 4
  %v11801 = vrot.slane %v10688, 5
  %v11802 = vsel %vm1027, %v11800, %v11801
  %v11803 = vrot.slane %v11801, 4
  %v11804 = vrot.slane %v10727, 5
  %v11805 = vsel %vm1027, %v11803, %v11804
  %v11806 = vrot.slane %v11528, 5
  %v11807 = vrot.slane %v11806, 4
  %v11808 = vrot.slane %v10690, 5
  %v11809 = vsel %vm1027, %v11807, %v11808
  %v11810 = vrot.slane %v11808, 4
  %v11811 = vrot.slane %v10728, 5
  %v11812 = vsel %vm1027, %v11810, %v11811
  %v11813 = vrot.slane %v11529, 5
  %v11814 = vrot.slane %v11813, 4
  %v11815 = vrot.slane %v10692, 5
  %v11816 = vsel %vm1027, %v11814, %v11815
  %v11817 = vrot.slane %v11815, 4
  %v11818 = vrot.slane %v10729, 5
  %v11819 = vsel %vm1027, %v11817, %v11818
  %v11820 = vrot.slane %v11530, 5
  %v11821 = vrot.slane %v11820, 4
  %v11822 = vrot.slane %v10694, 5
  %v11823 = vsel %vm1027, %v11821, %v11822
  %v11824 = vrot.slane %v11822, 4
  %v11825 = vrot.slane %v10730, 5
  %v11826 = vsel %vm1027, %v11824, %v11825
  %v11827 = vrot.slane %v11531, 5
  %v11828 = vrot.slane %v11827, 4
  %v11829 = vrot.slane %v10696, 5
  %v11830 = vsel %vm1027, %v11828, %v11829
  %v11831 = vrot.slane %v11829, 4
  %v11832 = vrot.slane %v10731, 5
  %v11833 = vsel %vm1027, %v11831, %v11832
  %v11834 = vrot.slane %v11532, 5
  %v11835 = vrot.slane %v11834, 4
  %v11836 = vrot.slane %v10698, 5
  %v11837 = vsel %vm1027, %v11835, %v11836
  %v11838 = vrot.slane %v11836, 4
  %v11839 = vrot.slane %v10732, 5
  %v11840 = vsel %vm1027, %v11838, %v11839
  %v11841 = vrot.slane %v11533, 5
  %v11842 = vrot.slane %v11841, 4
  %v11843 = vrot.slane %v10700, 5
  %v11844 = vsel %vm1027, %v11842, %v11843
  %v11845 = vrot.slane %v11843, 4
  %v11846 = vrot.slane %v10733, 5
  %v11847 = vsel %vm1027, %v11845, %v11846
  %v11848 = vrot.slane %v11534, 5
  %v11849 = vrot.slane %v11848, 4
  %v11850 = vrot.slane %v10702, 5
  %v11851 = vsel %vm1027, %v11849, %v11850
  %v11852 = vrot.slane %v11850, 4
  %v11853 = vrot.slane %v10734, 5
  %v11854 = vsel %vm1027, %v11852, %v11853
  %v11887 = vunpack.c.l.b16 %v8206
  %v11888 = vunpack.c.l.b16 %v8207
  %v11889 = vunpack.c.l.b16 %v8208
  %v11890 = vunpack.c.l.b16 %v8209
  %v11891 = vunpack.c.l.b16 %v8210
  %v11892 = vunpack.c.l.b16 %v8211
  %v11893 = vunpack.c.l.b16 %v8212
  %v11894 = vunpack.c.l.b16 %v8213
  %v11895 = vunpack.c.l.b16 %v8214
  %v11896 = vunpack.c.l.b16 %v8215
  %v11897 = vunpack.c.l.b16 %v8216
  %v11898 = vunpack.c.l.b16 %v8217
  %v11899 = vunpack.c.l.b16 %v8218
  %v11900 = vunpack.c.l.b16 %v8219
  %v11901 = vunpack.c.l.b16 %v8220
  %v11902 = vunpack.c.l.b16 %v8221
  %v11903 = vunpack.c.l.b16 %v8222
  %v11904 = vunpack.c.l.b16 %v8223
  %v11905 = vunpack.c.l.b16 %v8224
  %v11906 = vunpack.c.l.b16 %v8225
  %v11907 = vunpack.c.l.b16 %v8226
  %v11908 = vunpack.c.l.b16 %v8227
  %v11909 = vunpack.c.l.b16 %v8228
  %v11910 = vunpack.c.l.b16 %v8229
  %v11911 = vunpack.c.l.b16 %v8230
  %v11912 = vunpack.c.l.b16 %v8231
  %v11913 = vunpack.c.l.b16 %v8232
  %v11914 = vunpack.c.l.b16 %v8233
  %v11915 = vunpack.c.l.b16 %v8234
  %v11916 = vunpack.c.l.b16 %v8235
  %v11917 = vunpack.c.l.b16 %v8236
  %v11918 = vunpack.c.l.b16 %v8237
  %v11919 = vunpack.c.l.b16 %v8238
  %v11920 = vunpack.c.l.b16 %v8239
  %v11921 = vunpack.c.l.b16 %v8240
  %v11922 = vunpack.c.l.b16 %v8241
  %v11923 = vunpack.c.l.b16 %v8242
  %v11924 = vunpack.c.l.b16 %v8243
  %v11925 = vunpack.c.l.b16 %v8244
  %v11926 = vunpack.c.l.b16 %v8245
  %v11927 = vunpack.c.l.b16 %v8246
  %v11928 = vunpack.c.l.b16 %v8247
  %v11929 = vunpack.c.l.b16 %v8248
  %v11930 = vunpack.c.l.b16 %v8249
  %v11931 = vunpack.c.l.b16 %v8250
  %v11932 = vunpack.c.l.b16 %v8251
  %v11933 = vunpack.c.l.b16 %v8252
  %v11934 = vunpack.c.l.b16 %v8253
  %v11935 = vunpack.c.l.b16 %v8254
  %v11936 = vunpack.c.l.b16 %v8255
  %v11937 = vunpack.c.l.b16 %v8256
  %v11938 = vunpack.c.l.b16 %v8257
  %v11939 = vunpack.c.l.b16 %v8258
  %v11940 = vunpack.c.l.b16 %v8259
  %v11941 = vunpack.c.l.b16 %v8260
  %v11942 = vunpack.c.l.b16 %v8261
  %v11943 = vunpack.c.l.b16 %v8262
  %v11944 = vunpack.c.l.b16 %v8263
  %v11945 = vunpack.c.l.b16 %v8264
  %v11946 = vunpack.c.l.b16 %v8265
  %v11947 = vunpack.c.l.b16 %v8266
  %v11948 = vunpack.c.l.b16 %v8267
  %v11949 = vunpack.c.l.b16 %v8268
  %v11950 = vunpack.c.l.b16 %v8269
  %v11951 = vpack.c.b16 %v11888, %v11887
  %v11952 = vpack.c.b16 %v11890, %v11889
  %v11953 = vpack.c.b16 %v11892, %v11891
  %v11954 = vpack.c.b16 %v11894, %v11893
  %v11955 = vpack.c.b16 %v11896, %v11895
  %v11956 = vpack.c.b16 %v11898, %v11897
  %v11957 = vpack.c.b16 %v11900, %v11899
  %v11958 = vpack.c.b16 %v11902, %v11901
  %v11959 = vpack.c.b16 %v11904, %v11903
  %v11960 = vpack.c.b16 %v11906, %v11905
  %v11961 = vpack.c.b16 %v11908, %v11907
  %v11962 = vpack.c.b16 %v11910, %v11909
  %v11963 = vpack.c.b16 %v11912, %v11911
  %v11964 = vpack.c.b16 %v11914, %v11913
  %v11965 = vpack.c.b16 %v11916, %v11915
  %v11966 = vpack.c.b16 %v11918, %v11917
  %v11967 = vpack.c.b16 %v11920, %v11919
  %v11968 = vpack.c.b16 %v11922, %v11921
  %v11969 = vpack.c.b16 %v11924, %v11923
  %v11970 = vpack.c.b16 %v11926, %v11925
  %v11971 = vpack.c.b16 %v11928, %v11927
  %v11972 = vpack.c.b16 %v11930, %v11929
  %v11973 = vpack.c.b16 %v11932, %v11931
  %v11974 = vpack.c.b16 %v11934, %v11933
  %v11975 = vpack.c.b16 %v11936, %v11935
  %v11976 = vpack.c.b16 %v11938, %v11937
  %v11977 = vpack.c.b16 %v11940, %v11939
  %v11978 = vpack.c.b16 %v11942, %v11941
  %v11979 = vpack.c.b16 %v11944, %v11943
  %v11980 = vpack.c.b16 %v11946, %v11945
  %v11981 = vpack.c.b16 %v11948, %v11947
  %v11982 = vpack.c.b16 %v11950, %v11949
  %v11983 = vunpack.c.l.b16 %v8315
  %v11984 = vunpack.c.l.b16 %v8325
  %v11985 = vunpack.c.l.b16 %v8339
  %v11986 = vunpack.c.l.b16 %v8349
  %v11987 = vunpack.c.l.b16 %v8363
  %v11988 = vunpack.c.l.b16 %v8373
  %v11989 = vunpack.c.l.b16 %v8387
  %v11990 = vunpack.c.l.b16 %v8397
  %v11991 = vunpack.c.l.b16 %v8411
  %v11992 = vunpack.c.l.b16 %v8421
  %v11993 = vunpack.c.l.b16 %v8435
  %v11994 = vunpack.c.l.b16 %v8445
  %v11995 = vunpack.c.l.b16 %v8459
  %v11996 = vunpack.c.l.b16 %v8469
  %v11997 = vunpack.c.l.b16 %v8483
  %v11998 = vunpack.c.l.b16 %v8493
  %v11999 = vunpack.c.l.b16 %v8507
  %v12000 = vunpack.c.l.b16 %v8517
  %v12001 = vunpack.c.l.b16 %v8531
  %v12002 = vunpack.c.l.b16 %v8541
  %v12003 = vunpack.c.l.b16 %v8555
  %v12004 = vunpack.c.l.b16 %v8565
  %v12005 = vunpack.c.l.b16 %v8579
  %v12006 = vunpack.c.l.b16 %v8589
  %v12007 = vunpack.c.l.b16 %v8603
  %v12008 = vunpack.c.l.b16 %v8613
  %v12009 = vunpack.c.l.b16 %v8627
  %v12010 = vunpack.c.l.b16 %v8637
  %v12011 = vunpack.c.l.b16 %v8651
  %v12012 = vunpack.c.l.b16 %v8661
  %v12013 = vunpack.c.l.b16 %v8675
  %v12014 = vunpack.c.l.b16 %v8685
  %v12015 = vunpack.c.l.b16 %v8699
  %v12016 = vunpack.c.l.b16 %v8709
  %v12017 = vunpack.c.l.b16 %v8723
  %v12018 = vunpack.c.l.b16 %v8733
  %v12019 = vunpack.c.l.b16 %v8747
  %v12020 = vunpack.c.l.b16 %v8757
  %v12021 = vunpack.c.l.b16 %v8771
  %v12022 = vunpack.c.l.b16 %v8781
  %v12023 = vunpack.c.l.b16 %v8795
  %v12024 = vunpack.c.l.b16 %v8805
  %v12025 = vunpack.c.l.b16 %v8819
  %v12026 = vunpack.c.l.b16 %v8829
  %v12027 = vunpack.c.l.b16 %v8843
  %v12028 = vunpack.c.l.b16 %v8853
  %v12029 = vunpack.c.l.b16 %v8867
  %v12030 = vunpack.c.l.b16 %v8877
  %v12031 = vunpack.c.l.b16 %v8891
  %v12032 = vunpack.c.l.b16 %v8901
  %v12033 = vunpack.c.l.b16 %v8915
  %v12034 = vunpack.c.l.b16 %v8925
  %v12035 = vunpack.c.l.b16 %v8939
  %v12036 = vunpack.c.l.b16 %v8949
  %v12037 = vunpack.c.l.b16 %v8963
  %v12038 = vunpack.c.l.b16 %v8973
  %v12039 = vunpack.c.l.b16 %v8987
  %v12040 = vunpack.c.l.b16 %v8997
  %v12041 = vunpack.c.l.b16 %v9011
  %v12042 = vunpack.c.l.b16 %v9021
  %v12043 = vunpack.c.l.b16 %v9035
  %v12044 = vunpack.c.l.b16 %v9045
  %v12045 = vunpack.c.l.b16 %v9059
  %v12046 = vunpack.c.l.b16 %v9069
  %v12047 = vpack.c.b16 %v11984, %v11983
  %v12048 = vpack.c.b16 %v11986, %v11985
  %v12049 = vpack.c.b16 %v11988, %v11987
  %v12050 = vpack.c.b16 %v11990, %v11989
  %v12051 = vpack.c.b16 %v11992, %v11991
  %v12052 = vpack.c.b16 %v11994, %v11993
  %v12053 = vpack.c.b16 %v11996, %v11995
  %v12054 = vpack.c.b16 %v11998, %v11997
  %v12055 = vpack.c.b16 %v12000, %v11999
  %v12056 = vpack.c.b16 %v12002, %v12001
  %v12057 = vpack.c.b16 %v12004, %v12003
  %v12058 = vpack.c.b16 %v12006, %v12005
  %v12059 = vpack.c.b16 %v12008, %v12007
  %v12060 = vpack.c.b16 %v12010, %v12009
  %v12061 = vpack.c.b16 %v12012, %v12011
  %v12062 = vpack.c.b16 %v12014, %v12013
  %v12063 = vpack.c.b16 %v12016, %v12015
  %v12064 = vpack.c.b16 %v12018, %v12017
  %v12065 = vpack.c.b16 %v12020, %v12019
  %v12066 = vpack.c.b16 %v12022, %v12021
  %v12067 = vpack.c.b16 %v12024, %v12023
  %v12068 = vpack.c.b16 %v12026, %v12025
  %v12069 = vpack.c.b16 %v12028, %v12027
  %v12070 = vpack.c.b16 %v12030, %v12029
  %v12071 = vpack.c.b16 %v12032, %v12031
  %v12072 = vpack.c.b16 %v12034, %v12033
  %v12073 = vpack.c.b16 %v12036, %v12035
  %v12074 = vpack.c.b16 %v12038, %v12037
  %v12075 = vpack.c.b16 %v12040, %v12039
  %v12076 = vpack.c.b16 %v12042, %v12041
  %v12077 = vpack.c.b16 %v12044, %v12043
  %v12078 = vpack.c.b16 %v12046, %v12045
  %12079 = vrot.lane.b32.xlu0 %v12047, 32
  %v12080 = vpop.permute.xlu0 %12079
  %12081 = vrot.lane.b32.xlu0 %v12048, 32
  %v12082 = vpop.permute.xlu0 %12081
  %12083 = vrot.lane.b32.xlu0 %v12049, 32
  %v12084 = vpop.permute.xlu0 %12083
  %12085 = vrot.lane.b32.xlu0 %v12050, 32
  %v12086 = vpop.permute.xlu0 %12085
  %12087 = vrot.lane.b32.xlu0 %v12051, 32
  %v12088 = vpop.permute.xlu0 %12087
  %12089 = vrot.lane.b32.xlu0 %v12052, 32
  %v12090 = vpop.permute.xlu0 %12089
  %12091 = vrot.lane.b32.xlu0 %v12053, 32
  %v12092 = vpop.permute.xlu0 %12091
  %12093 = vrot.lane.b32.xlu0 %v12054, 32
  %v12094 = vpop.permute.xlu0 %12093
  %12095 = vrot.lane.b32.xlu0 %v12055, 32
  %v12096 = vpop.permute.xlu0 %12095
  %12097 = vrot.lane.b32.xlu0 %v12056, 32
  %v12098 = vpop.permute.xlu0 %12097
  %12099 = vrot.lane.b32.xlu0 %v12057, 32
  %v12100 = vpop.permute.xlu0 %12099
  %12101 = vrot.lane.b32.xlu0 %v12058, 32
  %v12102 = vpop.permute.xlu0 %12101
  %12103 = vrot.lane.b32.xlu0 %v12059, 32
  %v12104 = vpop.permute.xlu0 %12103
  %12105 = vrot.lane.b32.xlu0 %v12060, 32
  %v12106 = vpop.permute.xlu0 %12105
  %12107 = vrot.lane.b32.xlu0 %v12061, 32
  %v12108 = vpop.permute.xlu0 %12107
  %12109 = vrot.lane.b32.xlu0 %v12062, 32
  %v12110 = vpop.permute.xlu0 %12109
  %12111 = vrot.lane.b32.xlu0 %v12063, 32
  %v12112 = vpop.permute.xlu0 %12111
  %12113 = vrot.lane.b32.xlu0 %v12064, 32
  %v12114 = vpop.permute.xlu0 %12113
  %12115 = vrot.lane.b32.xlu0 %v12065, 32
  %v12116 = vpop.permute.xlu0 %12115
  %12117 = vrot.lane.b32.xlu0 %v12066, 32
  %v12118 = vpop.permute.xlu0 %12117
  %12119 = vrot.lane.b32.xlu0 %v12067, 32
  %v12120 = vpop.permute.xlu0 %12119
  %12121 = vrot.lane.b32.xlu0 %v12068, 32
  %v12122 = vpop.permute.xlu0 %12121
  %12123 = vrot.lane.b32.xlu0 %v12069, 32
  %v12124 = vpop.permute.xlu0 %12123
  %12125 = vrot.lane.b32.xlu0 %v12070, 32
  %v12126 = vpop.permute.xlu0 %12125
  %12127 = vrot.lane.b32.xlu0 %v12071, 32
  %v12128 = vpop.permute.xlu0 %12127
  %12129 = vrot.lane.b32.xlu0 %v12072, 32
  %v12130 = vpop.permute.xlu0 %12129
  %12131 = vrot.lane.b32.xlu0 %v12073, 32
  %v12132 = vpop.permute.xlu0 %12131
  %12133 = vrot.lane.b32.xlu0 %v12074, 32
  %v12134 = vpop.permute.xlu0 %12133
  %12135 = vrot.lane.b32.xlu0 %v12075, 32
  %v12136 = vpop.permute.xlu0 %12135
  %12137 = vrot.lane.b32.xlu0 %v12076, 32
  %v12138 = vpop.permute.xlu0 %12137
  %12139 = vrot.lane.b32.xlu0 %v12077, 32
  %v12140 = vpop.permute.xlu0 %12139
  %12141 = vrot.lane.b32.xlu0 %v12078, 32
  %v12142 = vpop.permute.xlu0 %12141
  %v12143 = vunpack.c.l.b16 %v9201
  %v12144 = vunpack.c.l.b16 %v9204
  %v12145 = vunpack.c.l.b16 %v9208
  %v12146 = vunpack.c.l.b16 %v9211
  %v12147 = vunpack.c.l.b16 %v9215
  %v12148 = vunpack.c.l.b16 %v9218
  %v12149 = vunpack.c.l.b16 %v9222
  %v12150 = vunpack.c.l.b16 %v9225
  %v12151 = vunpack.c.l.b16 %v9229
  %v12152 = vunpack.c.l.b16 %v9232
  %v12153 = vunpack.c.l.b16 %v9236
  %v12154 = vunpack.c.l.b16 %v9239
  %v12155 = vunpack.c.l.b16 %v9243
  %v12156 = vunpack.c.l.b16 %v9246
  %v12157 = vunpack.c.l.b16 %v9250
  %v12158 = vunpack.c.l.b16 %v9253
  %v12159 = vunpack.c.l.b16 %v9257
  %v12160 = vunpack.c.l.b16 %v9260
  %v12161 = vunpack.c.l.b16 %v9264
  %v12162 = vunpack.c.l.b16 %v9267
  %v12163 = vunpack.c.l.b16 %v9271
  %v12164 = vunpack.c.l.b16 %v9274
  %v12165 = vunpack.c.l.b16 %v9278
  %v12166 = vunpack.c.l.b16 %v9281
  %v12167 = vunpack.c.l.b16 %v9285
  %v12168 = vunpack.c.l.b16 %v9288
  %v12169 = vunpack.c.l.b16 %v9292
  %v12170 = vunpack.c.l.b16 %v9295
  %v12171 = vunpack.c.l.b16 %v9299
  %v12172 = vunpack.c.l.b16 %v9302
  %v12173 = vunpack.c.l.b16 %v9306
  %v12174 = vunpack.c.l.b16 %v9309
  %v12175 = vunpack.c.l.b16 %v9313
  %v12176 = vunpack.c.l.b16 %v9316
  %v12177 = vunpack.c.l.b16 %v9320
  %v12178 = vunpack.c.l.b16 %v9323
  %v12179 = vunpack.c.l.b16 %v9327
  %v12180 = vunpack.c.l.b16 %v9330
  %v12181 = vunpack.c.l.b16 %v9334
  %v12182 = vunpack.c.l.b16 %v9337
  %v12183 = vunpack.c.l.b16 %v9341
  %v12184 = vunpack.c.l.b16 %v9344
  %v12185 = vunpack.c.l.b16 %v9348
  %v12186 = vunpack.c.l.b16 %v9351
  %v12187 = vunpack.c.l.b16 %v9355
  %v12188 = vunpack.c.l.b16 %v9358
  %v12189 = vunpack.c.l.b16 %v9362
  %v12190 = vunpack.c.l.b16 %v9365
  %v12191 = vunpack.c.l.b16 %v9369
  %v12192 = vunpack.c.l.b16 %v9372
  %v12193 = vunpack.c.l.b16 %v9376
  %v12194 = vunpack.c.l.b16 %v9379
  %v12195 = vunpack.c.l.b16 %v9383
  %v12196 = vunpack.c.l.b16 %v9386
  %v12197 = vunpack.c.l.b16 %v9390
  %v12198 = vunpack.c.l.b16 %v9393
  %v12199 = vunpack.c.l.b16 %v9397
  %v12200 = vunpack.c.l.b16 %v9400
  %v12201 = vunpack.c.l.b16 %v9404
  %v12202 = vunpack.c.l.b16 %v9407
  %v12203 = vunpack.c.l.b16 %v9411
  %v12204 = vunpack.c.l.b16 %v9414
  %v12205 = vunpack.c.l.b16 %v9418
  %v12206 = vunpack.c.l.b16 %v9421
  %v12207 = vpack.c.b16 %v12144, %v12143
  %v12208 = vpack.c.b16 %v12146, %v12145
  %v12209 = vpack.c.b16 %v12148, %v12147
  %v12210 = vpack.c.b16 %v12150, %v12149
  %v12211 = vpack.c.b16 %v12152, %v12151
  %v12212 = vpack.c.b16 %v12154, %v12153
  %v12213 = vpack.c.b16 %v12156, %v12155
  %v12214 = vpack.c.b16 %v12158, %v12157
  %v12215 = vpack.c.b16 %v12160, %v12159
  %v12216 = vpack.c.b16 %v12162, %v12161
  %v12217 = vpack.c.b16 %v12164, %v12163
  %v12218 = vpack.c.b16 %v12166, %v12165
  %v12219 = vpack.c.b16 %v12168, %v12167
  %v12220 = vpack.c.b16 %v12170, %v12169
  %v12221 = vpack.c.b16 %v12172, %v12171
  %v12222 = vpack.c.b16 %v12174, %v12173
  %v12223 = vpack.c.b16 %v12176, %v12175
  %v12224 = vpack.c.b16 %v12178, %v12177
  %v12225 = vpack.c.b16 %v12180, %v12179
  %v12226 = vpack.c.b16 %v12182, %v12181
  %v12227 = vpack.c.b16 %v12184, %v12183
  %v12228 = vpack.c.b16 %v12186, %v12185
  %v12229 = vpack.c.b16 %v12188, %v12187
  %v12230 = vpack.c.b16 %v12190, %v12189
  %v12231 = vpack.c.b16 %v12192, %v12191
  %v12232 = vpack.c.b16 %v12194, %v12193
  %v12233 = vpack.c.b16 %v12196, %v12195
  %v12234 = vpack.c.b16 %v12198, %v12197
  %v12235 = vpack.c.b16 %v12200, %v12199
  %v12236 = vpack.c.b16 %v12202, %v12201
  %v12237 = vpack.c.b16 %v12204, %v12203
  %v12238 = vpack.c.b16 %v12206, %v12205
  %12239 = vrot.lane.b32.xlu0 %v12207, 64
  %v12240 = vpop.permute.xlu0 %12239
  %12241 = vrot.lane.b32.xlu0 %v12208, 64
  %v12242 = vpop.permute.xlu0 %12241
  %12243 = vrot.lane.b32.xlu0 %v12209, 64
  %v12244 = vpop.permute.xlu0 %12243
  %12245 = vrot.lane.b32.xlu0 %v12210, 64
  %v12246 = vpop.permute.xlu0 %12245
  %12247 = vrot.lane.b32.xlu0 %v12211, 64
  %v12248 = vpop.permute.xlu0 %12247
  %12249 = vrot.lane.b32.xlu0 %v12212, 64
  %v12250 = vpop.permute.xlu0 %12249
  %12251 = vrot.lane.b32.xlu0 %v12213, 64
  %v12252 = vpop.permute.xlu0 %12251
  %12253 = vrot.lane.b32.xlu0 %v12214, 64
  %v12254 = vpop.permute.xlu0 %12253
  %12255 = vrot.lane.b32.xlu0 %v12215, 64
  %v12256 = vpop.permute.xlu0 %12255
  %12257 = vrot.lane.b32.xlu0 %v12216, 64
  %v12258 = vpop.permute.xlu0 %12257
  %12259 = vrot.lane.b32.xlu0 %v12217, 64
  %v12260 = vpop.permute.xlu0 %12259
  %12261 = vrot.lane.b32.xlu0 %v12218, 64
  %v12262 = vpop.permute.xlu0 %12261
  %12263 = vrot.lane.b32.xlu0 %v12219, 64
  %v12264 = vpop.permute.xlu0 %12263
  %12265 = vrot.lane.b32.xlu0 %v12220, 64
  %v12266 = vpop.permute.xlu0 %12265
  %12267 = vrot.lane.b32.xlu0 %v12221, 64
  %v12268 = vpop.permute.xlu0 %12267
  %12269 = vrot.lane.b32.xlu0 %v12222, 64
  %v12270 = vpop.permute.xlu0 %12269
  %12271 = vrot.lane.b32.xlu0 %v12223, 64
  %v12272 = vpop.permute.xlu0 %12271
  %12273 = vrot.lane.b32.xlu0 %v12224, 64
  %v12274 = vpop.permute.xlu0 %12273
  %12275 = vrot.lane.b32.xlu0 %v12225, 64
  %v12276 = vpop.permute.xlu0 %12275
  %12277 = vrot.lane.b32.xlu0 %v12226, 64
  %v12278 = vpop.permute.xlu0 %12277
  %12279 = vrot.lane.b32.xlu0 %v12227, 64
  %v12280 = vpop.permute.xlu0 %12279
  %12281 = vrot.lane.b32.xlu0 %v12228, 64
  %v12282 = vpop.permute.xlu0 %12281
  %12283 = vrot.lane.b32.xlu0 %v12229, 64
  %v12284 = vpop.permute.xlu0 %12283
  %12285 = vrot.lane.b32.xlu0 %v12230, 64
  %v12286 = vpop.permute.xlu0 %12285
  %12287 = vrot.lane.b32.xlu0 %v12231, 64
  %v12288 = vpop.permute.xlu0 %12287
  %12289 = vrot.lane.b32.xlu0 %v12232, 64
  %v12290 = vpop.permute.xlu0 %12289
  %12291 = vrot.lane.b32.xlu0 %v12233, 64
  %v12292 = vpop.permute.xlu0 %12291
  %12293 = vrot.lane.b32.xlu0 %v12234, 64
  %v12294 = vpop.permute.xlu0 %12293
  %12295 = vrot.lane.b32.xlu0 %v12235, 64
  %v12296 = vpop.permute.xlu0 %12295
  %12297 = vrot.lane.b32.xlu0 %v12236, 64
  %v12298 = vpop.permute.xlu0 %12297
  %12299 = vrot.lane.b32.xlu0 %v12237, 64
  %v12300 = vpop.permute.xlu0 %12299
  %12301 = vrot.lane.b32.xlu0 %v12238, 64
  %v12302 = vpop.permute.xlu0 %12301
  %v12335 = vunpack.c.l.b16 %v9422
  %v12336 = vunpack.c.l.b16 %v9423
  %v12337 = vunpack.c.l.b16 %v9424
  %v12338 = vunpack.c.l.b16 %v9425
  %v12339 = vunpack.c.l.b16 %v9426
  %v12340 = vunpack.c.l.b16 %v9427
  %v12341 = vunpack.c.l.b16 %v9428
  %v12342 = vunpack.c.l.b16 %v9429
  %v12343 = vunpack.c.l.b16 %v9430
  %v12344 = vunpack.c.l.b16 %v9431
  %v12345 = vunpack.c.l.b16 %v9432
  %v12346 = vunpack.c.l.b16 %v9433
  %v12347 = vunpack.c.l.b16 %v9434
  %v12348 = vunpack.c.l.b16 %v9435
  %v12349 = vunpack.c.l.b16 %v9436
  %v12350 = vunpack.c.l.b16 %v9437
  %v12351 = vunpack.c.l.b16 %v9438
  %v12352 = vunpack.c.l.b16 %v9439
  %v12353 = vunpack.c.l.b16 %v9440
  %v12354 = vunpack.c.l.b16 %v9441
  %v12355 = vunpack.c.l.b16 %v9442
  %v12356 = vunpack.c.l.b16 %v9443
  %v12357 = vunpack.c.l.b16 %v9444
  %v12358 = vunpack.c.l.b16 %v9445
  %v12359 = vunpack.c.l.b16 %v9446
  %v12360 = vunpack.c.l.b16 %v9447
  %v12361 = vunpack.c.l.b16 %v9448
  %v12362 = vunpack.c.l.b16 %v9449
  %v12363 = vunpack.c.l.b16 %v9450
  %v12364 = vunpack.c.l.b16 %v9451
  %v12365 = vunpack.c.l.b16 %v9452
  %v12366 = vunpack.c.l.b16 %v9453
  %v12367 = vunpack.c.l.b16 %v9454
  %v12368 = vunpack.c.l.b16 %v9455
  %v12369 = vunpack.c.l.b16 %v9456
  %v12370 = vunpack.c.l.b16 %v9457
  %v12371 = vunpack.c.l.b16 %v9458
  %v12372 = vunpack.c.l.b16 %v9459
  %v12373 = vunpack.c.l.b16 %v9460
  %v12374 = vunpack.c.l.b16 %v9461
  %v12375 = vunpack.c.l.b16 %v9462
  %v12376 = vunpack.c.l.b16 %v9463
  %v12377 = vunpack.c.l.b16 %v9464
  %v12378 = vunpack.c.l.b16 %v9465
  %v12379 = vunpack.c.l.b16 %v9466
  %v12380 = vunpack.c.l.b16 %v9467
  %v12381 = vunpack.c.l.b16 %v9468
  %v12382 = vunpack.c.l.b16 %v9469
  %v12383 = vunpack.c.l.b16 %v9470
  %v12384 = vunpack.c.l.b16 %v9471
  %v12385 = vunpack.c.l.b16 %v9472
  %v12386 = vunpack.c.l.b16 %v9473
  %v12387 = vunpack.c.l.b16 %v9474
  %v12388 = vunpack.c.l.b16 %v9475
  %v12389 = vunpack.c.l.b16 %v9476
  %v12390 = vunpack.c.l.b16 %v9477
  %v12391 = vunpack.c.l.b16 %v9478
  %v12392 = vunpack.c.l.b16 %v9479
  %v12393 = vunpack.c.l.b16 %v9480
  %v12394 = vunpack.c.l.b16 %v9481
  %v12395 = vunpack.c.l.b16 %v9482
  %v12396 = vunpack.c.l.b16 %v9483
  %v12397 = vunpack.c.l.b16 %v9484
  %v12398 = vunpack.c.l.b16 %v9485
  %v12399 = vpack.c.b16 %v12336, %v12335
  %v12400 = vpack.c.b16 %v12338, %v12337
  %v12401 = vpack.c.b16 %v12340, %v12339
  %v12402 = vpack.c.b16 %v12342, %v12341
  %v12403 = vpack.c.b16 %v12344, %v12343
  %v12404 = vpack.c.b16 %v12346, %v12345
  %v12405 = vpack.c.b16 %v12348, %v12347
  %v12406 = vpack.c.b16 %v12350, %v12349
  %v12407 = vpack.c.b16 %v12352, %v12351
  %v12408 = vpack.c.b16 %v12354, %v12353
  %v12409 = vpack.c.b16 %v12356, %v12355
  %v12410 = vpack.c.b16 %v12358, %v12357
  %v12411 = vpack.c.b16 %v12360, %v12359
  %v12412 = vpack.c.b16 %v12362, %v12361
  %v12413 = vpack.c.b16 %v12364, %v12363
  %v12414 = vpack.c.b16 %v12366, %v12365
  %v12415 = vpack.c.b16 %v12368, %v12367
  %v12416 = vpack.c.b16 %v12370, %v12369
  %v12417 = vpack.c.b16 %v12372, %v12371
  %v12418 = vpack.c.b16 %v12374, %v12373
  %v12419 = vpack.c.b16 %v12376, %v12375
  %v12420 = vpack.c.b16 %v12378, %v12377
  %v12421 = vpack.c.b16 %v12380, %v12379
  %v12422 = vpack.c.b16 %v12382, %v12381
  %v12423 = vpack.c.b16 %v12384, %v12383
  %v12424 = vpack.c.b16 %v12386, %v12385
  %v12425 = vpack.c.b16 %v12388, %v12387
  %v12426 = vpack.c.b16 %v12390, %v12389
  %v12427 = vpack.c.b16 %v12392, %v12391
  %v12428 = vpack.c.b16 %v12394, %v12393
  %v12429 = vpack.c.b16 %v12396, %v12395
  %v12430 = vpack.c.b16 %v12398, %v12397
  %12431 = vrot.lane.b32.xlu0 %v12399, 96
  %v12432 = vpop.permute.xlu0 %12431
  %12433 = vrot.lane.b32.xlu0 %v12400, 96
  %v12434 = vpop.permute.xlu0 %12433
  %12435 = vrot.lane.b32.xlu0 %v12401, 96
  %v12436 = vpop.permute.xlu0 %12435
  %12437 = vrot.lane.b32.xlu0 %v12402, 96
  %v12438 = vpop.permute.xlu0 %12437
  %12439 = vrot.lane.b32.xlu0 %v12403, 96
  %v12440 = vpop.permute.xlu0 %12439
  %12441 = vrot.lane.b32.xlu0 %v12404, 96
  %v12442 = vpop.permute.xlu0 %12441
  %12443 = vrot.lane.b32.xlu0 %v12405, 96
  %v12444 = vpop.permute.xlu0 %12443
  %12445 = vrot.lane.b32.xlu0 %v12406, 96
  %v12446 = vpop.permute.xlu0 %12445
  %12447 = vrot.lane.b32.xlu0 %v12407, 96
  %v12448 = vpop.permute.xlu0 %12447
  %12449 = vrot.lane.b32.xlu0 %v12408, 96
  %v12450 = vpop.permute.xlu0 %12449
  %12451 = vrot.lane.b32.xlu0 %v12409, 96
  %v12452 = vpop.permute.xlu0 %12451
  %12453 = vrot.lane.b32.xlu0 %v12410, 96
  %v12454 = vpop.permute.xlu0 %12453
  %12455 = vrot.lane.b32.xlu0 %v12411, 96
  %v12456 = vpop.permute.xlu0 %12455
  %12457 = vrot.lane.b32.xlu0 %v12412, 96
  %v12458 = vpop.permute.xlu0 %12457
  %12459 = vrot.lane.b32.xlu0 %v12413, 96
  %v12460 = vpop.permute.xlu0 %12459
  %12461 = vrot.lane.b32.xlu0 %v12414, 96
  %v12462 = vpop.permute.xlu0 %12461
  %12463 = vrot.lane.b32.xlu0 %v12415, 96
  %v12464 = vpop.permute.xlu0 %12463
  %12465 = vrot.lane.b32.xlu0 %v12416, 96
  %v12466 = vpop.permute.xlu0 %12465
  %12467 = vrot.lane.b32.xlu0 %v12417, 96
  %v12468 = vpop.permute.xlu0 %12467
  %12469 = vrot.lane.b32.xlu0 %v12418, 96
  %v12470 = vpop.permute.xlu0 %12469
  %12471 = vrot.lane.b32.xlu0 %v12419, 96
  %v12472 = vpop.permute.xlu0 %12471
  %12473 = vrot.lane.b32.xlu0 %v12420, 96
  %v12474 = vpop.permute.xlu0 %12473
  %12475 = vrot.lane.b32.xlu0 %v12421, 96
  %v12476 = vpop.permute.xlu0 %12475
  %12477 = vrot.lane.b32.xlu0 %v12422, 96
  %v12478 = vpop.permute.xlu0 %12477
  %12479 = vrot.lane.b32.xlu0 %v12423, 96
  %v12480 = vpop.permute.xlu0 %12479
  %12481 = vrot.lane.b32.xlu0 %v12424, 96
  %v12482 = vpop.permute.xlu0 %12481
  %12483 = vrot.lane.b32.xlu0 %v12425, 96
  %v12484 = vpop.permute.xlu0 %12483
  %12485 = vrot.lane.b32.xlu0 %v12426, 96
  %v12486 = vpop.permute.xlu0 %12485
  %12487 = vrot.lane.b32.xlu0 %v12427, 96
  %v12488 = vpop.permute.xlu0 %12487
  %12489 = vrot.lane.b32.xlu0 %v12428, 96
  %v12490 = vpop.permute.xlu0 %12489
  %12491 = vrot.lane.b32.xlu0 %v12429, 96
  %v12492 = vpop.permute.xlu0 %12491
  %12493 = vrot.lane.b32.xlu0 %v12430, 96
  %v12494 = vpop.permute.xlu0 %12493
  %v12495 = vunpack.c.l.b16 %v9531
  %v12496 = vunpack.c.l.b16 %v9541
  %v12497 = vunpack.c.l.b16 %v9555
  %v12498 = vunpack.c.l.b16 %v9565
  %v12499 = vunpack.c.l.b16 %v9579
  %v12500 = vunpack.c.l.b16 %v9589
  %v12501 = vunpack.c.l.b16 %v9603
  %v12502 = vunpack.c.l.b16 %v9613
  %v12503 = vunpack.c.l.b16 %v9627
  %v12504 = vunpack.c.l.b16 %v9637
  %v12505 = vunpack.c.l.b16 %v9651
  %v12506 = vunpack.c.l.b16 %v9661
  %v12507 = vunpack.c.l.b16 %v9675
  %v12508 = vunpack.c.l.b16 %v9685
  %v12509 = vunpack.c.l.b16 %v9699
  %v12510 = vunpack.c.l.b16 %v9709
  %v12511 = vunpack.c.l.b16 %v9723
  %v12512 = vunpack.c.l.b16 %v9733
  %v12513 = vunpack.c.l.b16 %v9747
  %v12514 = vunpack.c.l.b16 %v9757
  %v12515 = vunpack.c.l.b16 %v9771
  %v12516 = vunpack.c.l.b16 %v9781
  %v12517 = vunpack.c.l.b16 %v9795
  %v12518 = vunpack.c.l.b16 %v9805
  %v12519 = vunpack.c.l.b16 %v9819
  %v12520 = vunpack.c.l.b16 %v9829
  %v12521 = vunpack.c.l.b16 %v9843
  %v12522 = vunpack.c.l.b16 %v9853
  %v12523 = vunpack.c.l.b16 %v9867
  %v12524 = vunpack.c.l.b16 %v9877
  %v12525 = vunpack.c.l.b16 %v9891
  %v12526 = vunpack.c.l.b16 %v9901
  %v12527 = vunpack.c.l.b16 %v9915
  %v12528 = vunpack.c.l.b16 %v9925
  %v12529 = vunpack.c.l.b16 %v9939
  %v12530 = vunpack.c.l.b16 %v9949
  %v12531 = vunpack.c.l.b16 %v9963
  %v12532 = vunpack.c.l.b16 %v9973
  %v12533 = vunpack.c.l.b16 %v9987
  %v12534 = vunpack.c.l.b16 %v9997
  %v12535 = vunpack.c.l.b16 %v10011
  %v12536 = vunpack.c.l.b16 %v10021
  %v12537 = vunpack.c.l.b16 %v10035
  %v12538 = vunpack.c.l.b16 %v10045
  %v12539 = vunpack.c.l.b16 %v10059
  %v12540 = vunpack.c.l.b16 %v10069
  %v12541 = vunpack.c.l.b16 %v10083
  %v12542 = vunpack.c.l.b16 %v10093
  %v12543 = vunpack.c.l.b16 %v10107
  %v12544 = vunpack.c.l.b16 %v10117
  %v12545 = vunpack.c.l.b16 %v10131
  %v12546 = vunpack.c.l.b16 %v10141
  %v12547 = vunpack.c.l.b16 %v10155
  %v12548 = vunpack.c.l.b16 %v10165
  %v12549 = vunpack.c.l.b16 %v10179
  %v12550 = vunpack.c.l.b16 %v10189
  %v12551 = vunpack.c.l.b16 %v10203
  %v12552 = vunpack.c.l.b16 %v10213
  %v12553 = vunpack.c.l.b16 %v10227
  %v12554 = vunpack.c.l.b16 %v10237
  %v12555 = vunpack.c.l.b16 %v10251
  %v12556 = vunpack.c.l.b16 %v10261
  %v12557 = vunpack.c.l.b16 %v10275
  %v12558 = vunpack.c.l.b16 %v10285
  %v12559 = vpack.c.b16 %v12496, %v12495
  %v12560 = vpack.c.b16 %v12498, %v12497
  %v12561 = vpack.c.b16 %v12500, %v12499
  %v12562 = vpack.c.b16 %v12502, %v12501
  %v12563 = vpack.c.b16 %v12504, %v12503
  %v12564 = vpack.c.b16 %v12506, %v12505
  %v12565 = vpack.c.b16 %v12508, %v12507
  %v12566 = vpack.c.b16 %v12510, %v12509
  %v12567 = vpack.c.b16 %v12512, %v12511
  %v12568 = vpack.c.b16 %v12514, %v12513
  %v12569 = vpack.c.b16 %v12516, %v12515
  %v12570 = vpack.c.b16 %v12518, %v12517
  %v12571 = vpack.c.b16 %v12520, %v12519
  %v12572 = vpack.c.b16 %v12522, %v12521
  %v12573 = vpack.c.b16 %v12524, %v12523
  %v12574 = vpack.c.b16 %v12526, %v12525
  %v12575 = vpack.c.b16 %v12528, %v12527
  %v12576 = vpack.c.b16 %v12530, %v12529
  %v12577 = vpack.c.b16 %v12532, %v12531
  %v12578 = vpack.c.b16 %v12534, %v12533
  %v12579 = vpack.c.b16 %v12536, %v12535
  %v12580 = vpack.c.b16 %v12538, %v12537
  %v12581 = vpack.c.b16 %v12540, %v12539
  %v12582 = vpack.c.b16 %v12542, %v12541
  %v12583 = vpack.c.b16 %v12544, %v12543
  %v12584 = vpack.c.b16 %v12546, %v12545
  %v12585 = vpack.c.b16 %v12548, %v12547
  %v12586 = vpack.c.b16 %v12550, %v12549
  %v12587 = vpack.c.b16 %v12552, %v12551
  %v12588 = vpack.c.b16 %v12554, %v12553
  %v12589 = vpack.c.b16 %v12556, %v12555
  %v12590 = vpack.c.b16 %v12558, %v12557
  %v12591 = vunpack.c.l.b16 %v10417
  %v12592 = vunpack.c.l.b16 %v10420
  %v12593 = vunpack.c.l.b16 %v10424
  %v12594 = vunpack.c.l.b16 %v10427
  %v12595 = vunpack.c.l.b16 %v10431
  %v12596 = vunpack.c.l.b16 %v10434
  %v12597 = vunpack.c.l.b16 %v10438
  %v12598 = vunpack.c.l.b16 %v10441
  %v12599 = vunpack.c.l.b16 %v10445
  %v12600 = vunpack.c.l.b16 %v10448
  %v12601 = vunpack.c.l.b16 %v10452
  %v12602 = vunpack.c.l.b16 %v10455
  %v12603 = vunpack.c.l.b16 %v10459
  %v12604 = vunpack.c.l.b16 %v10462
  %v12605 = vunpack.c.l.b16 %v10466
  %v12606 = vunpack.c.l.b16 %v10469
  %v12607 = vunpack.c.l.b16 %v10473
  %v12608 = vunpack.c.l.b16 %v10476
  %v12609 = vunpack.c.l.b16 %v10480
  %v12610 = vunpack.c.l.b16 %v10483
  %v12611 = vunpack.c.l.b16 %v10487
  %v12612 = vunpack.c.l.b16 %v10490
  %v12613 = vunpack.c.l.b16 %v10494
  %v12614 = vunpack.c.l.b16 %v10497
  %v12615 = vunpack.c.l.b16 %v10501
  %v12616 = vunpack.c.l.b16 %v10504
  %v12617 = vunpack.c.l.b16 %v10508
  %v12618 = vunpack.c.l.b16 %v10511
  %v12619 = vunpack.c.l.b16 %v10515
  %v12620 = vunpack.c.l.b16 %v10518
  %v12621 = vunpack.c.l.b16 %v10522
  %v12622 = vunpack.c.l.b16 %v10525
  %v12623 = vunpack.c.l.b16 %v10529
  %v12624 = vunpack.c.l.b16 %v10532
  %v12625 = vunpack.c.l.b16 %v10536
  %v12626 = vunpack.c.l.b16 %v10539
  %v12627 = vunpack.c.l.b16 %v10543
  %v12628 = vunpack.c.l.b16 %v10546
  %v12629 = vunpack.c.l.b16 %v10550
  %v12630 = vunpack.c.l.b16 %v10553
  %v12631 = vunpack.c.l.b16 %v10557
  %v12632 = vunpack.c.l.b16 %v10560
  %v12633 = vunpack.c.l.b16 %v10564
  %v12634 = vunpack.c.l.b16 %v10567
  %v12635 = vunpack.c.l.b16 %v10571
  %v12636 = vunpack.c.l.b16 %v10574
  %v12637 = vunpack.c.l.b16 %v10578
  %v12638 = vunpack.c.l.b16 %v10581
  %v12639 = vunpack.c.l.b16 %v10585
  %v12640 = vunpack.c.l.b16 %v10588
  %v12641 = vunpack.c.l.b16 %v10592
  %v12642 = vunpack.c.l.b16 %v10595
  %v12643 = vunpack.c.l.b16 %v10599
  %v12644 = vunpack.c.l.b16 %v10602
  %v12645 = vunpack.c.l.b16 %v10606
  %v12646 = vunpack.c.l.b16 %v10609
  %v12647 = vunpack.c.l.b16 %v10613
  %v12648 = vunpack.c.l.b16 %v10616
  %v12649 = vunpack.c.l.b16 %v10620
  %v12650 = vunpack.c.l.b16 %v10623
  %v12651 = vunpack.c.l.b16 %v10627
  %v12652 = vunpack.c.l.b16 %v10630
  %v12653 = vunpack.c.l.b16 %v10634
  %v12654 = vunpack.c.l.b16 %v10637
  %v12655 = vpack.c.b16 %v12592, %v12591
  %v12656 = vpack.c.b16 %v12594, %v12593
  %v12657 = vpack.c.b16 %v12596, %v12595
  %v12658 = vpack.c.b16 %v12598, %v12597
  %v12659 = vpack.c.b16 %v12600, %v12599
  %v12660 = vpack.c.b16 %v12602, %v12601
  %v12661 = vpack.c.b16 %v12604, %v12603
  %v12662 = vpack.c.b16 %v12606, %v12605
  %v12663 = vpack.c.b16 %v12608, %v12607
  %v12664 = vpack.c.b16 %v12610, %v12609
  %v12665 = vpack.c.b16 %v12612, %v12611
  %v12666 = vpack.c.b16 %v12614, %v12613
  %v12667 = vpack.c.b16 %v12616, %v12615
  %v12668 = vpack.c.b16 %v12618, %v12617
  %v12669 = vpack.c.b16 %v12620, %v12619
  %v12670 = vpack.c.b16 %v12622, %v12621
  %v12671 = vpack.c.b16 %v12624, %v12623
  %v12672 = vpack.c.b16 %v12626, %v12625
  %v12673 = vpack.c.b16 %v12628, %v12627
  %v12674 = vpack.c.b16 %v12630, %v12629
  %v12675 = vpack.c.b16 %v12632, %v12631
  %v12676 = vpack.c.b16 %v12634, %v12633
  %v12677 = vpack.c.b16 %v12636, %v12635
  %v12678 = vpack.c.b16 %v12638, %v12637
  %v12679 = vpack.c.b16 %v12640, %v12639
  %v12680 = vpack.c.b16 %v12642, %v12641
  %v12681 = vpack.c.b16 %v12644, %v12643
  %v12682 = vpack.c.b16 %v12646, %v12645
  %v12683 = vpack.c.b16 %v12648, %v12647
  %v12684 = vpack.c.b16 %v12650, %v12649
  %v12685 = vpack.c.b16 %v12652, %v12651
  %v12686 = vpack.c.b16 %v12654, %v12653
  %12687 = vrot.lane.b32.xlu0 %v12655, 32
  %v12688 = vpop.permute.xlu0 %12687
  %12689 = vrot.lane.b32.xlu0 %v12656, 32
  %v12690 = vpop.permute.xlu0 %12689
  %12691 = vrot.lane.b32.xlu0 %v12657, 32
  %v12692 = vpop.permute.xlu0 %12691
  %12693 = vrot.lane.b32.xlu0 %v12658, 32
  %v12694 = vpop.permute.xlu0 %12693
  %12695 = vrot.lane.b32.xlu0 %v12659, 32
  %v12696 = vpop.permute.xlu0 %12695
  %12697 = vrot.lane.b32.xlu0 %v12660, 32
  %v12698 = vpop.permute.xlu0 %12697
  %12699 = vrot.lane.b32.xlu0 %v12661, 32
  %v12700 = vpop.permute.xlu0 %12699
  %12701 = vrot.lane.b32.xlu0 %v12662, 32
  %v12702 = vpop.permute.xlu0 %12701
  %12703 = vrot.lane.b32.xlu0 %v12663, 32
  %v12704 = vpop.permute.xlu0 %12703
  %12705 = vrot.lane.b32.xlu0 %v12664, 32
  %v12706 = vpop.permute.xlu0 %12705
  %12707 = vrot.lane.b32.xlu0 %v12665, 32
  %v12708 = vpop.permute.xlu0 %12707
  %12709 = vrot.lane.b32.xlu0 %v12666, 32
  %v12710 = vpop.permute.xlu0 %12709
  %12711 = vrot.lane.b32.xlu0 %v12667, 32
  %v12712 = vpop.permute.xlu0 %12711
  %12713 = vrot.lane.b32.xlu0 %v12668, 32
  %v12714 = vpop.permute.xlu0 %12713
  %12715 = vrot.lane.b32.xlu0 %v12669, 32
  %v12716 = vpop.permute.xlu0 %12715
  %12717 = vrot.lane.b32.xlu0 %v12670, 32
  %v12718 = vpop.permute.xlu0 %12717
  %12719 = vrot.lane.b32.xlu0 %v12671, 32
  %v12720 = vpop.permute.xlu0 %12719
  %12721 = vrot.lane.b32.xlu0 %v12672, 32
  %v12722 = vpop.permute.xlu0 %12721
  %12723 = vrot.lane.b32.xlu0 %v12673, 32
  %v12724 = vpop.permute.xlu0 %12723
  %12725 = vrot.lane.b32.xlu0 %v12674, 32
  %v12726 = vpop.permute.xlu0 %12725
  %12727 = vrot.lane.b32.xlu0 %v12675, 32
  %v12728 = vpop.permute.xlu0 %12727
  %12729 = vrot.lane.b32.xlu0 %v12676, 32
  %v12730 = vpop.permute.xlu0 %12729
  %12731 = vrot.lane.b32.xlu0 %v12677, 32
  %v12732 = vpop.permute.xlu0 %12731
  %12733 = vrot.lane.b32.xlu0 %v12678, 32
  %v12734 = vpop.permute.xlu0 %12733
  %12735 = vrot.lane.b32.xlu0 %v12679, 32
  %v12736 = vpop.permute.xlu0 %12735
  %12737 = vrot.lane.b32.xlu0 %v12680, 32
  %v12738 = vpop.permute.xlu0 %12737
  %12739 = vrot.lane.b32.xlu0 %v12681, 32
  %v12740 = vpop.permute.xlu0 %12739
  %12741 = vrot.lane.b32.xlu0 %v12682, 32
  %v12742 = vpop.permute.xlu0 %12741
  %12743 = vrot.lane.b32.xlu0 %v12683, 32
  %v12744 = vpop.permute.xlu0 %12743
  %12745 = vrot.lane.b32.xlu0 %v12684, 32
  %v12746 = vpop.permute.xlu0 %12745
  %12747 = vrot.lane.b32.xlu0 %v12685, 32
  %v12748 = vpop.permute.xlu0 %12747
  %12749 = vrot.lane.b32.xlu0 %v12686, 32
  %v12750 = vpop.permute.xlu0 %12749
  %v12783 = vunpack.c.l.b16 %v10639
  %v12784 = vunpack.c.l.b16 %v10640
  %v12785 = vunpack.c.l.b16 %v10641
  %v12786 = vunpack.c.l.b16 %v10642
  %v12787 = vunpack.c.l.b16 %v10643
  %v12788 = vunpack.c.l.b16 %v10644
  %v12789 = vunpack.c.l.b16 %v10645
  %v12790 = vunpack.c.l.b16 %v10646
  %v12791 = vunpack.c.l.b16 %v10647
  %v12792 = vunpack.c.l.b16 %v10648
  %v12793 = vunpack.c.l.b16 %v10649
  %v12794 = vunpack.c.l.b16 %v10650
  %v12795 = vunpack.c.l.b16 %v10651
  %v12796 = vunpack.c.l.b16 %v10652
  %v12797 = vunpack.c.l.b16 %v10653
  %v12798 = vunpack.c.l.b16 %v10654
  %v12799 = vunpack.c.l.b16 %v10655
  %v12800 = vunpack.c.l.b16 %v10656
  %v12801 = vunpack.c.l.b16 %v10657
  %v12802 = vunpack.c.l.b16 %v10658
  %v12803 = vunpack.c.l.b16 %v10659
  %v12804 = vunpack.c.l.b16 %v10660
  %v12805 = vunpack.c.l.b16 %v10661
  %v12806 = vunpack.c.l.b16 %v10662
  %v12807 = vunpack.c.l.b16 %v10663
  %v12808 = vunpack.c.l.b16 %v10664
  %v12809 = vunpack.c.l.b16 %v10665
  %v12810 = vunpack.c.l.b16 %v10666
  %v12811 = vunpack.c.l.b16 %v10667
  %v12812 = vunpack.c.l.b16 %v10668
  %v12813 = vunpack.c.l.b16 %v10669
  %v12814 = vunpack.c.l.b16 %v10670
  %v12815 = vunpack.c.l.b16 %v10671
  %v12816 = vunpack.c.l.b16 %v10672
  %v12817 = vunpack.c.l.b16 %v10673
  %v12818 = vunpack.c.l.b16 %v10674
  %v12819 = vunpack.c.l.b16 %v10675
  %v12820 = vunpack.c.l.b16 %v10676
  %v12821 = vunpack.c.l.b16 %v10677
  %v12822 = vunpack.c.l.b16 %v10678
  %v12823 = vunpack.c.l.b16 %v10679
  %v12824 = vunpack.c.l.b16 %v10680
  %v12825 = vunpack.c.l.b16 %v10681
  %v12826 = vunpack.c.l.b16 %v10682
  %v12827 = vunpack.c.l.b16 %v10683
  %v12828 = vunpack.c.l.b16 %v10684
  %v12829 = vunpack.c.l.b16 %v10685
  %v12830 = vunpack.c.l.b16 %v10686
  %v12831 = vunpack.c.l.b16 %v10687
  %v12832 = vunpack.c.l.b16 %v10688
  %v12833 = vunpack.c.l.b16 %v10689
  %v12834 = vunpack.c.l.b16 %v10690
  %v12835 = vunpack.c.l.b16 %v10691
  %v12836 = vunpack.c.l.b16 %v10692
  %v12837 = vunpack.c.l.b16 %v10693
  %v12838 = vunpack.c.l.b16 %v10694
  %v12839 = vunpack.c.l.b16 %v10695
  %v12840 = vunpack.c.l.b16 %v10696
  %v12841 = vunpack.c.l.b16 %v10697
  %v12842 = vunpack.c.l.b16 %v10698
  %v12843 = vunpack.c.l.b16 %v10699
  %v12844 = vunpack.c.l.b16 %v10700
  %v12845 = vunpack.c.l.b16 %v10701
  %v12846 = vunpack.c.l.b16 %v10702
  %v12847 = vpack.c.b16 %v12784, %v12783
  %v12848 = vpack.c.b16 %v12786, %v12785
  %v12849 = vpack.c.b16 %v12788, %v12787
  %v12850 = vpack.c.b16 %v12790, %v12789
  %v12851 = vpack.c.b16 %v12792, %v12791
  %v12852 = vpack.c.b16 %v12794, %v12793
  %v12853 = vpack.c.b16 %v12796, %v12795
  %v12854 = vpack.c.b16 %v12798, %v12797
  %v12855 = vpack.c.b16 %v12800, %v12799
  %v12856 = vpack.c.b16 %v12802, %v12801
  %v12857 = vpack.c.b16 %v12804, %v12803
  %v12858 = vpack.c.b16 %v12806, %v12805
  %v12859 = vpack.c.b16 %v12808, %v12807
  %v12860 = vpack.c.b16 %v12810, %v12809
  %v12861 = vpack.c.b16 %v12812, %v12811
  %v12862 = vpack.c.b16 %v12814, %v12813
  %v12863 = vpack.c.b16 %v12816, %v12815
  %v12864 = vpack.c.b16 %v12818, %v12817
  %v12865 = vpack.c.b16 %v12820, %v12819
  %v12866 = vpack.c.b16 %v12822, %v12821
  %v12867 = vpack.c.b16 %v12824, %v12823
  %v12868 = vpack.c.b16 %v12826, %v12825
  %v12869 = vpack.c.b16 %v12828, %v12827
  %v12870 = vpack.c.b16 %v12830, %v12829
  %v12871 = vpack.c.b16 %v12832, %v12831
  %v12872 = vpack.c.b16 %v12834, %v12833
  %v12873 = vpack.c.b16 %v12836, %v12835
  %v12874 = vpack.c.b16 %v12838, %v12837
  %v12875 = vpack.c.b16 %v12840, %v12839
  %v12876 = vpack.c.b16 %v12842, %v12841
  %v12877 = vpack.c.b16 %v12844, %v12843
  %v12878 = vpack.c.b16 %v12846, %v12845
  %12879 = vrot.lane.b32.xlu0 %v12847, 64
  %v12880 = vpop.permute.xlu0 %12879
  %12881 = vrot.lane.b32.xlu0 %v12848, 64
  %v12882 = vpop.permute.xlu0 %12881
  %12883 = vrot.lane.b32.xlu0 %v12849, 64
  %v12884 = vpop.permute.xlu0 %12883
  %12885 = vrot.lane.b32.xlu0 %v12850, 64
  %v12886 = vpop.permute.xlu0 %12885
  %12887 = vrot.lane.b32.xlu0 %v12851, 64
  %v12888 = vpop.permute.xlu0 %12887
  %12889 = vrot.lane.b32.xlu0 %v12852, 64
  %v12890 = vpop.permute.xlu0 %12889
  %12891 = vrot.lane.b32.xlu0 %v12853, 64
  %v12892 = vpop.permute.xlu0 %12891
  %12893 = vrot.lane.b32.xlu0 %v12854, 64
  %v12894 = vpop.permute.xlu0 %12893
  %12895 = vrot.lane.b32.xlu0 %v12855, 64
  %v12896 = vpop.permute.xlu0 %12895
  %12897 = vrot.lane.b32.xlu0 %v12856, 64
  %v12898 = vpop.permute.xlu0 %12897
  %12899 = vrot.lane.b32.xlu0 %v12857, 64
  %v12900 = vpop.permute.xlu0 %12899
  %12901 = vrot.lane.b32.xlu0 %v12858, 64
  %v12902 = vpop.permute.xlu0 %12901
  %12903 = vrot.lane.b32.xlu0 %v12859, 64
  %v12904 = vpop.permute.xlu0 %12903
  %12905 = vrot.lane.b32.xlu0 %v12860, 64
  %v12906 = vpop.permute.xlu0 %12905
  %12907 = vrot.lane.b32.xlu0 %v12861, 64
  %v12908 = vpop.permute.xlu0 %12907
  %12909 = vrot.lane.b32.xlu0 %v12862, 64
  %v12910 = vpop.permute.xlu0 %12909
  %12911 = vrot.lane.b32.xlu0 %v12863, 64
  %v12912 = vpop.permute.xlu0 %12911
  %12913 = vrot.lane.b32.xlu0 %v12864, 64
  %v12914 = vpop.permute.xlu0 %12913
  %12915 = vrot.lane.b32.xlu0 %v12865, 64
  %v12916 = vpop.permute.xlu0 %12915
  %12917 = vrot.lane.b32.xlu0 %v12866, 64
  %v12918 = vpop.permute.xlu0 %12917
  %12919 = vrot.lane.b32.xlu0 %v12867, 64
  %v12920 = vpop.permute.xlu0 %12919
  %12921 = vrot.lane.b32.xlu0 %v12868, 64
  %v12922 = vpop.permute.xlu0 %12921
  %12923 = vrot.lane.b32.xlu0 %v12869, 64
  %v12924 = vpop.permute.xlu0 %12923
  %12925 = vrot.lane.b32.xlu0 %v12870, 64
  %v12926 = vpop.permute.xlu0 %12925
  %12927 = vrot.lane.b32.xlu0 %v12871, 64
  %v12928 = vpop.permute.xlu0 %12927
  %12929 = vrot.lane.b32.xlu0 %v12872, 64
  %v12930 = vpop.permute.xlu0 %12929
  %12931 = vrot.lane.b32.xlu0 %v12873, 64
  %v12932 = vpop.permute.xlu0 %12931
  %12933 = vrot.lane.b32.xlu0 %v12874, 64
  %v12934 = vpop.permute.xlu0 %12933
  %12935 = vrot.lane.b32.xlu0 %v12875, 64
  %v12936 = vpop.permute.xlu0 %12935
  %12937 = vrot.lane.b32.xlu0 %v12876, 64
  %v12938 = vpop.permute.xlu0 %12937
  %12939 = vrot.lane.b32.xlu0 %v12877, 64
  %v12940 = vpop.permute.xlu0 %12939
  %12941 = vrot.lane.b32.xlu0 %v12878, 64
  %v12942 = vpop.permute.xlu0 %12941
  %v12943 = vunpack.c.l.b16 %v10748
  %v12944 = vunpack.c.l.b16 %v10758
  %v12945 = vunpack.c.l.b16 %v10772
  %v12946 = vunpack.c.l.b16 %v10782
  %v12947 = vunpack.c.l.b16 %v10796
  %v12948 = vunpack.c.l.b16 %v10806
  %v12949 = vunpack.c.l.b16 %v10820
  %v12950 = vunpack.c.l.b16 %v10830
  %v12951 = vunpack.c.l.b16 %v10844
  %v12952 = vunpack.c.l.b16 %v10854
  %v12953 = vunpack.c.l.b16 %v10868
  %v12954 = vunpack.c.l.b16 %v10878
  %v12955 = vunpack.c.l.b16 %v10892
  %v12956 = vunpack.c.l.b16 %v10902
  %v12957 = vunpack.c.l.b16 %v10916
  %v12958 = vunpack.c.l.b16 %v10926
  %v12959 = vunpack.c.l.b16 %v10940
  %v12960 = vunpack.c.l.b16 %v10950
  %v12961 = vunpack.c.l.b16 %v10964
  %v12962 = vunpack.c.l.b16 %v10974
  %v12963 = vunpack.c.l.b16 %v10988
  %v12964 = vunpack.c.l.b16 %v10998
  %v12965 = vunpack.c.l.b16 %v11012
  %v12966 = vunpack.c.l.b16 %v11022
  %v12967 = vunpack.c.l.b16 %v11036
  %v12968 = vunpack.c.l.b16 %v11046
  %v12969 = vunpack.c.l.b16 %v11060
  %v12970 = vunpack.c.l.b16 %v11070
  %v12971 = vunpack.c.l.b16 %v11084
  %v12972 = vunpack.c.l.b16 %v11094
  %v12973 = vunpack.c.l.b16 %v11108
  %v12974 = vunpack.c.l.b16 %v11118
  %v12975 = vunpack.c.l.b16 %v11132
  %v12976 = vunpack.c.l.b16 %v11142
  %v12977 = vunpack.c.l.b16 %v11156
  %v12978 = vunpack.c.l.b16 %v11166
  %v12979 = vunpack.c.l.b16 %v11180
  %v12980 = vunpack.c.l.b16 %v11190
  %v12981 = vunpack.c.l.b16 %v11204
  %v12982 = vunpack.c.l.b16 %v11214
  %v12983 = vunpack.c.l.b16 %v11228
  %v12984 = vunpack.c.l.b16 %v11238
  %v12985 = vunpack.c.l.b16 %v11252
  %v12986 = vunpack.c.l.b16 %v11262
  %v12987 = vunpack.c.l.b16 %v11276
  %v12988 = vunpack.c.l.b16 %v11286
  %v12989 = vunpack.c.l.b16 %v11300
  %v12990 = vunpack.c.l.b16 %v11310
  %v12991 = vunpack.c.l.b16 %v11324
  %v12992 = vunpack.c.l.b16 %v11334
  %v12993 = vunpack.c.l.b16 %v11348
  %v12994 = vunpack.c.l.b16 %v11358
  %v12995 = vunpack.c.l.b16 %v11372
  %v12996 = vunpack.c.l.b16 %v11382
  %v12997 = vunpack.c.l.b16 %v11396
  %v12998 = vunpack.c.l.b16 %v11406
  %v12999 = vunpack.c.l.b16 %v11420
  %v13000 = vunpack.c.l.b16 %v11430
  %v13001 = vunpack.c.l.b16 %v11444
  %v13002 = vunpack.c.l.b16 %v11454
  %v13003 = vunpack.c.l.b16 %v11468
  %v13004 = vunpack.c.l.b16 %v11478
  %v13005 = vunpack.c.l.b16 %v11492
  %v13006 = vunpack.c.l.b16 %v11502
  %v13007 = vpack.c.b16 %v12944, %v12943
  %v13008 = vpack.c.b16 %v12946, %v12945
  %v13009 = vpack.c.b16 %v12948, %v12947
  %v13010 = vpack.c.b16 %v12950, %v12949
  %v13011 = vpack.c.b16 %v12952, %v12951
  %v13012 = vpack.c.b16 %v12954, %v12953
  %v13013 = vpack.c.b16 %v12956, %v12955
  %v13014 = vpack.c.b16 %v12958, %v12957
  %v13015 = vpack.c.b16 %v12960, %v12959
  %v13016 = vpack.c.b16 %v12962, %v12961
  %v13017 = vpack.c.b16 %v12964, %v12963
  %v13018 = vpack.c.b16 %v12966, %v12965
  %v13019 = vpack.c.b16 %v12968, %v12967
  %v13020 = vpack.c.b16 %v12970, %v12969
  %v13021 = vpack.c.b16 %v12972, %v12971
  %v13022 = vpack.c.b16 %v12974, %v12973
  %v13023 = vpack.c.b16 %v12976, %v12975
  %v13024 = vpack.c.b16 %v12978, %v12977
  %v13025 = vpack.c.b16 %v12980, %v12979
  %v13026 = vpack.c.b16 %v12982, %v12981
  %v13027 = vpack.c.b16 %v12984, %v12983
  %v13028 = vpack.c.b16 %v12986, %v12985
  %v13029 = vpack.c.b16 %v12988, %v12987
  %v13030 = vpack.c.b16 %v12990, %v12989
  %v13031 = vpack.c.b16 %v12992, %v12991
  %v13032 = vpack.c.b16 %v12994, %v12993
  %v13033 = vpack.c.b16 %v12996, %v12995
  %v13034 = vpack.c.b16 %v12998, %v12997
  %v13035 = vpack.c.b16 %v13000, %v12999
  %v13036 = vpack.c.b16 %v13002, %v13001
  %v13037 = vpack.c.b16 %v13004, %v13003
  %v13038 = vpack.c.b16 %v13006, %v13005
  %13039 = vrot.lane.b32.xlu0 %v13007, 96
  %v13040 = vpop.permute.xlu0 %13039
  %13041 = vrot.lane.b32.xlu0 %v13008, 96
  %v13042 = vpop.permute.xlu0 %13041
  %13043 = vrot.lane.b32.xlu0 %v13009, 96
  %v13044 = vpop.permute.xlu0 %13043
  %13045 = vrot.lane.b32.xlu0 %v13010, 96
  %v13046 = vpop.permute.xlu0 %13045
  %13047 = vrot.lane.b32.xlu0 %v13011, 96
  %v13048 = vpop.permute.xlu0 %13047
  %13049 = vrot.lane.b32.xlu0 %v13012, 96
  %v13050 = vpop.permute.xlu0 %13049
  %13051 = vrot.lane.b32.xlu0 %v13013, 96
  %v13052 = vpop.permute.xlu0 %13051
  %13053 = vrot.lane.b32.xlu0 %v13014, 96
  %v13054 = vpop.permute.xlu0 %13053
  %13055 = vrot.lane.b32.xlu0 %v13015, 96
  %v13056 = vpop.permute.xlu0 %13055
  %13057 = vrot.lane.b32.xlu0 %v13016, 96
  %v13058 = vpop.permute.xlu0 %13057
  %13059 = vrot.lane.b32.xlu0 %v13017, 96
  %v13060 = vpop.permute.xlu0 %13059
  %13061 = vrot.lane.b32.xlu0 %v13018, 96
  %v13062 = vpop.permute.xlu0 %13061
  %13063 = vrot.lane.b32.xlu0 %v13019, 96
  %v13064 = vpop.permute.xlu0 %13063
  %13065 = vrot.lane.b32.xlu0 %v13020, 96
  %v13066 = vpop.permute.xlu0 %13065
  %13067 = vrot.lane.b32.xlu0 %v13021, 96
  %v13068 = vpop.permute.xlu0 %13067
  %13069 = vrot.lane.b32.xlu0 %v13022, 96
  %v13070 = vpop.permute.xlu0 %13069
  %13071 = vrot.lane.b32.xlu0 %v13023, 96
  %v13072 = vpop.permute.xlu0 %13071
  %13073 = vrot.lane.b32.xlu0 %v13024, 96
  %v13074 = vpop.permute.xlu0 %13073
  %13075 = vrot.lane.b32.xlu0 %v13025, 96
  %v13076 = vpop.permute.xlu0 %13075
  %13077 = vrot.lane.b32.xlu0 %v13026, 96
  %v13078 = vpop.permute.xlu0 %13077
  %13079 = vrot.lane.b32.xlu0 %v13027, 96
  %v13080 = vpop.permute.xlu0 %13079
  %13081 = vrot.lane.b32.xlu0 %v13028, 96
  %v13082 = vpop.permute.xlu0 %13081
  %13083 = vrot.lane.b32.xlu0 %v13029, 96
  %v13084 = vpop.permute.xlu0 %13083
  %13085 = vrot.lane.b32.xlu0 %v13030, 96
  %v13086 = vpop.permute.xlu0 %13085
  %13087 = vrot.lane.b32.xlu0 %v13031, 96
  %v13088 = vpop.permute.xlu0 %13087
  %13089 = vrot.lane.b32.xlu0 %v13032, 96
  %v13090 = vpop.permute.xlu0 %13089
  %13091 = vrot.lane.b32.xlu0 %v13033, 96
  %v13092 = vpop.permute.xlu0 %13091
  %13093 = vrot.lane.b32.xlu0 %v13034, 96
  %v13094 = vpop.permute.xlu0 %13093
  %13095 = vrot.lane.b32.xlu0 %v13035, 96
  %v13096 = vpop.permute.xlu0 %13095
  %13097 = vrot.lane.b32.xlu0 %v13036, 96
  %v13098 = vpop.permute.xlu0 %13097
  %13099 = vrot.lane.b32.xlu0 %v13037, 96
  %v13100 = vpop.permute.xlu0 %13099
  %13101 = vrot.lane.b32.xlu0 %v13038, 96
  %v13102 = vpop.permute.xlu0 %13101
  %v13103 = vunpack.c.l.b16 %v11634
  %v13104 = vunpack.c.l.b16 %v11637
  %v13105 = vunpack.c.l.b16 %v11641
  %v13106 = vunpack.c.l.b16 %v11644
  %v13107 = vunpack.c.l.b16 %v11648
  %v13108 = vunpack.c.l.b16 %v11651
  %v13109 = vunpack.c.l.b16 %v11655
  %v13110 = vunpack.c.l.b16 %v11658
  %v13111 = vunpack.c.l.b16 %v11662
  %v13112 = vunpack.c.l.b16 %v11665
  %v13113 = vunpack.c.l.b16 %v11669
  %v13114 = vunpack.c.l.b16 %v11672
  %v13115 = vunpack.c.l.b16 %v11676
  %v13116 = vunpack.c.l.b16 %v11679
  %v13117 = vunpack.c.l.b16 %v11683
  %v13118 = vunpack.c.l.b16 %v11686
  %v13119 = vunpack.c.l.b16 %v11690
  %v13120 = vunpack.c.l.b16 %v11693
  %v13121 = vunpack.c.l.b16 %v11697
  %v13122 = vunpack.c.l.b16 %v11700
  %v13123 = vunpack.c.l.b16 %v11704
  %v13124 = vunpack.c.l.b16 %v11707
  %v13125 = vunpack.c.l.b16 %v11711
  %v13126 = vunpack.c.l.b16 %v11714
  %v13127 = vunpack.c.l.b16 %v11718
  %v13128 = vunpack.c.l.b16 %v11721
  %v13129 = vunpack.c.l.b16 %v11725
  %v13130 = vunpack.c.l.b16 %v11728
  %v13131 = vunpack.c.l.b16 %v11732
  %v13132 = vunpack.c.l.b16 %v11735
  %v13133 = vunpack.c.l.b16 %v11739
  %v13134 = vunpack.c.l.b16 %v11742
  %v13135 = vunpack.c.l.b16 %v11746
  %v13136 = vunpack.c.l.b16 %v11749
  %v13137 = vunpack.c.l.b16 %v11753
  %v13138 = vunpack.c.l.b16 %v11756
  %v13139 = vunpack.c.l.b16 %v11760
  %v13140 = vunpack.c.l.b16 %v11763
  %v13141 = vunpack.c.l.b16 %v11767
  %v13142 = vunpack.c.l.b16 %v11770
  %v13143 = vunpack.c.l.b16 %v11774
  %v13144 = vunpack.c.l.b16 %v11777
  %v13145 = vunpack.c.l.b16 %v11781
  %v13146 = vunpack.c.l.b16 %v11784
  %v13147 = vunpack.c.l.b16 %v11788
  %v13148 = vunpack.c.l.b16 %v11791
  %v13149 = vunpack.c.l.b16 %v11795
  %v13150 = vunpack.c.l.b16 %v11798
  %v13151 = vunpack.c.l.b16 %v11802
  %v13152 = vunpack.c.l.b16 %v11805
  %v13153 = vunpack.c.l.b16 %v11809
  %v13154 = vunpack.c.l.b16 %v11812
  %v13155 = vunpack.c.l.b16 %v11816
  %v13156 = vunpack.c.l.b16 %v11819
  %v13157 = vunpack.c.l.b16 %v11823
  %v13158 = vunpack.c.l.b16 %v11826
  %v13159 = vunpack.c.l.b16 %v11830
  %v13160 = vunpack.c.l.b16 %v11833
  %v13161 = vunpack.c.l.b16 %v11837
  %v13162 = vunpack.c.l.b16 %v11840
  %v13163 = vunpack.c.l.b16 %v11844
  %v13164 = vunpack.c.l.b16 %v11847
  %v13165 = vunpack.c.l.b16 %v11851
  %v13166 = vunpack.c.l.b16 %v11854
  %v13167 = vpack.c.b16 %v13104, %v13103
  %v13168 = vpack.c.b16 %v13106, %v13105
  %v13169 = vpack.c.b16 %v13108, %v13107
  %v13170 = vpack.c.b16 %v13110, %v13109
  %v13171 = vpack.c.b16 %v13112, %v13111
  %v13172 = vpack.c.b16 %v13114, %v13113
  %v13173 = vpack.c.b16 %v13116, %v13115
  %v13174 = vpack.c.b16 %v13118, %v13117
  %v13175 = vpack.c.b16 %v13120, %v13119
  %v13176 = vpack.c.b16 %v13122, %v13121
  %v13177 = vpack.c.b16 %v13124, %v13123
  %v13178 = vpack.c.b16 %v13126, %v13125
  %v13179 = vpack.c.b16 %v13128, %v13127
  %v13180 = vpack.c.b16 %v13130, %v13129
  %v13181 = vpack.c.b16 %v13132, %v13131
  %v13182 = vpack.c.b16 %v13134, %v13133
  %v13183 = vpack.c.b16 %v13136, %v13135
  %v13184 = vpack.c.b16 %v13138, %v13137
  %v13185 = vpack.c.b16 %v13140, %v13139
  %v13186 = vpack.c.b16 %v13142, %v13141
  %v13187 = vpack.c.b16 %v13144, %v13143
  %v13188 = vpack.c.b16 %v13146, %v13145
  %v13189 = vpack.c.b16 %v13148, %v13147
  %v13190 = vpack.c.b16 %v13150, %v13149
  %v13191 = vpack.c.b16 %v13152, %v13151
  %v13192 = vpack.c.b16 %v13154, %v13153
  %v13193 = vpack.c.b16 %v13156, %v13155
  %v13194 = vpack.c.b16 %v13158, %v13157
  %v13195 = vpack.c.b16 %v13160, %v13159
  %v13196 = vpack.c.b16 %v13162, %v13161
  %v13197 = vpack.c.b16 %v13164, %v13163
  %v13198 = vpack.c.b16 %v13166, %v13165
  %v13201 = vsel %vm5030, %v11951, %v12080
  %v13204 = vsel %vm5030, %v11952, %v12082
  %v13207 = vsel %vm5030, %v11953, %v12084
  %v13210 = vsel %vm5030, %v11954, %v12086
  %v13213 = vsel %vm5030, %v11955, %v12088
  %v13216 = vsel %vm5030, %v11956, %v12090
  %v13219 = vsel %vm5030, %v11957, %v12092
  %v13222 = vsel %vm5030, %v11958, %v12094
  %v13225 = vsel %vm5030, %v11959, %v12096
  %v13228 = vsel %vm5030, %v11960, %v12098
  %v13231 = vsel %vm5030, %v11961, %v12100
  %v13234 = vsel %vm5030, %v11962, %v12102
  %v13237 = vsel %vm5030, %v11963, %v12104
  %v13240 = vsel %vm5030, %v11964, %v12106
  %v13243 = vsel %vm5030, %v11965, %v12108
  %v13246 = vsel %vm5030, %v11966, %v12110
  %v13249 = vsel %vm5030, %v11967, %v12112
  %v13252 = vsel %vm5030, %v11968, %v12114
  %v13255 = vsel %vm5030, %v11969, %v12116
  %v13258 = vsel %vm5030, %v11970, %v12118
  %v13261 = vsel %vm5030, %v11971, %v12120
  %v13264 = vsel %vm5030, %v11972, %v12122
  %v13267 = vsel %vm5030, %v11973, %v12124
  %v13270 = vsel %vm5030, %v11974, %v12126
  %v13273 = vsel %vm5030, %v11975, %v12128
  %v13276 = vsel %vm5030, %v11976, %v12130
  %v13279 = vsel %vm5030, %v11977, %v12132
  %v13282 = vsel %vm5030, %v11978, %v12134
  %v13285 = vsel %vm5030, %v11979, %v12136
  %v13288 = vsel %vm5030, %v11980, %v12138
  %v13291 = vsel %vm5030, %v11981, %v12140
  %v13294 = vsel %vm5030, %v11982, %v12142
  %v13296 = vsel %vm5127, %v13201, %v12240
  %v13298 = vsel %vm5127, %v13204, %v12242
  %v13300 = vsel %vm5127, %v13207, %v12244
  %v13302 = vsel %vm5127, %v13210, %v12246
  %v13304 = vsel %vm5127, %v13213, %v12248
  %v13306 = vsel %vm5127, %v13216, %v12250
  %v13308 = vsel %vm5127, %v13219, %v12252
  %v13310 = vsel %vm5127, %v13222, %v12254
  %v13312 = vsel %vm5127, %v13225, %v12256
  %v13314 = vsel %vm5127, %v13228, %v12258
  %v13316 = vsel %vm5127, %v13231, %v12260
  %v13318 = vsel %vm5127, %v13234, %v12262
  %v13320 = vsel %vm5127, %v13237, %v12264
  %v13322 = vsel %vm5127, %v13240, %v12266
  %v13324 = vsel %vm5127, %v13243, %v12268
  %v13326 = vsel %vm5127, %v13246, %v12270
  %v13328 = vsel %vm5127, %v13249, %v12272
  %v13330 = vsel %vm5127, %v13252, %v12274
  %v13332 = vsel %vm5127, %v13255, %v12276
  %v13334 = vsel %vm5127, %v13258, %v12278
  %v13336 = vsel %vm5127, %v13261, %v12280
  %v13338 = vsel %vm5127, %v13264, %v12282
  %v13340 = vsel %vm5127, %v13267, %v12284
  %v13342 = vsel %vm5127, %v13270, %v12286
  %v13344 = vsel %vm5127, %v13273, %v12288
  %v13346 = vsel %vm5127, %v13276, %v12290
  %v13348 = vsel %vm5127, %v13279, %v12292
  %v13350 = vsel %vm5127, %v13282, %v12294
  %v13352 = vsel %vm5127, %v13285, %v12296
  %v13354 = vsel %vm5127, %v13288, %v12298
  %v13356 = vsel %vm5127, %v13291, %v12300
  %v13358 = vsel %vm5127, %v13294, %v12302
  %v13360 = vsel %vm5192, %v13296, %v12432
  %v13363 = vsel %vm5192, %v13298, %v12434
  %v13366 = vsel %vm5192, %v13300, %v12436
  %v13369 = vsel %vm5192, %v13302, %v12438
  %v13372 = vsel %vm5192, %v13304, %v12440
  %v13375 = vsel %vm5192, %v13306, %v12442
  %v13378 = vsel %vm5192, %v13308, %v12444
  %v13381 = vsel %vm5192, %v13310, %v12446
  %v13384 = vsel %vm5192, %v13312, %v12448
  %v13387 = vsel %vm5192, %v13314, %v12450
  %v13390 = vsel %vm5192, %v13316, %v12452
  %v13393 = vsel %vm5192, %v13318, %v12454
  %v13396 = vsel %vm5192, %v13320, %v12456
  %v13399 = vsel %vm5192, %v13322, %v12458
  %v13402 = vsel %vm5192, %v13324, %v12460
  %v13405 = vsel %vm5192, %v13326, %v12462
  %v13408 = vsel %vm5192, %v13328, %v12464
  %v13411 = vsel %vm5192, %v13330, %v12466
  %v13414 = vsel %vm5192, %v13332, %v12468
  %v13417 = vsel %vm5192, %v13334, %v12470
  %v13420 = vsel %vm5192, %v13336, %v12472
  %v13423 = vsel %vm5192, %v13338, %v12474
  %v13426 = vsel %vm5192, %v13340, %v12476
  %v13429 = vsel %vm5192, %v13342, %v12478
  %v13432 = vsel %vm5192, %v13344, %v12480
  %v13435 = vsel %vm5192, %v13346, %v12482
  %v13438 = vsel %vm5192, %v13348, %v12484
  %v13441 = vsel %vm5192, %v13350, %v12486
  %v13444 = vsel %vm5192, %v13352, %v12488
  %v13447 = vsel %vm5192, %v13354, %v12490
  %v13450 = vsel %vm5192, %v13356, %v12492
  %v13453 = vsel %vm5192, %v13358, %v12494
  %v13457 = vsel %vm5030, %v12559, %v12688
  %v13460 = vsel %vm5030, %v12560, %v12690
  %v13463 = vsel %vm5030, %v12561, %v12692
  %v13466 = vsel %vm5030, %v12562, %v12694
  %v13469 = vsel %vm5030, %v12563, %v12696
  %v13472 = vsel %vm5030, %v12564, %v12698
  %v13475 = vsel %vm5030, %v12565, %v12700
  %v13478 = vsel %vm5030, %v12566, %v12702
  %v13481 = vsel %vm5030, %v12567, %v12704
  %v13484 = vsel %vm5030, %v12568, %v12706
  %v13487 = vsel %vm5030, %v12569, %v12708
  %v13490 = vsel %vm5030, %v12570, %v12710
  %v13493 = vsel %vm5030, %v12571, %v12712
  %v13496 = vsel %vm5030, %v12572, %v12714
  %v13499 = vsel %vm5030, %v12573, %v12716
  %v13502 = vsel %vm5030, %v12574, %v12718
  %v13505 = vsel %vm5030, %v12575, %v12720
  %v13508 = vsel %vm5030, %v12576, %v12722
  %v13511 = vsel %vm5030, %v12577, %v12724
  %v13514 = vsel %vm5030, %v12578, %v12726
  %v13517 = vsel %vm5030, %v12579, %v12728
  %v13520 = vsel %vm5030, %v12580, %v12730
  %v13523 = vsel %vm5030, %v12581, %v12732
  %v13526 = vsel %vm5030, %v12582, %v12734
  %v13529 = vsel %vm5030, %v12583, %v12736
  %v13532 = vsel %vm5030, %v12584, %v12738
  %v13535 = vsel %vm5030, %v12585, %v12740
  %v13538 = vsel %vm5030, %v12586, %v12742
  %v13541 = vsel %vm5030, %v12587, %v12744
  %v13544 = vsel %vm5030, %v12588, %v12746
  %v13547 = vsel %vm5030, %v12589, %v12748
  %v13550 = vsel %vm5030, %v12590, %v12750
  %v13552 = vsel %vm5127, %v13457, %v12880
  %v13554 = vsel %vm5127, %v13460, %v12882
  %v13556 = vsel %vm5127, %v13463, %v12884
  %v13558 = vsel %vm5127, %v13466, %v12886
  %v13560 = vsel %vm5127, %v13469, %v12888
  %v13562 = vsel %vm5127, %v13472, %v12890
  %v13564 = vsel %vm5127, %v13475, %v12892
  %v13566 = vsel %vm5127, %v13478, %v12894
  %v13568 = vsel %vm5127, %v13481, %v12896
  %v13570 = vsel %vm5127, %v13484, %v12898
  %v13572 = vsel %vm5127, %v13487, %v12900
  %v13574 = vsel %vm5127, %v13490, %v12902
  %v13576 = vsel %vm5127, %v13493, %v12904
  %v13578 = vsel %vm5127, %v13496, %v12906
  %v13580 = vsel %vm5127, %v13499, %v12908
  %v13582 = vsel %vm5127, %v13502, %v12910
  %v13584 = vsel %vm5127, %v13505, %v12912
  %v13586 = vsel %vm5127, %v13508, %v12914
  %v13588 = vsel %vm5127, %v13511, %v12916
  %v13590 = vsel %vm5127, %v13514, %v12918
  %v13592 = vsel %vm5127, %v13517, %v12920
  %v13594 = vsel %vm5127, %v13520, %v12922
  %v13596 = vsel %vm5127, %v13523, %v12924
  %v13598 = vsel %vm5127, %v13526, %v12926
  %v13600 = vsel %vm5127, %v13529, %v12928
  %v13602 = vsel %vm5127, %v13532, %v12930
  %v13604 = vsel %vm5127, %v13535, %v12932
  %v13606 = vsel %vm5127, %v13538, %v12934
  %v13608 = vsel %vm5127, %v13541, %v12936
  %v13610 = vsel %vm5127, %v13544, %v12938
  %v13612 = vsel %vm5127, %v13547, %v12940
  %v13614 = vsel %vm5127, %v13550, %v12942
  %v13616 = vsel %vm5192, %v13552, %v13040
  %v13619 = vsel %vm5192, %v13554, %v13042
  %v13622 = vsel %vm5192, %v13556, %v13044
  %v13625 = vsel %vm5192, %v13558, %v13046
  %v13628 = vsel %vm5192, %v13560, %v13048
  %v13631 = vsel %vm5192, %v13562, %v13050
  %v13634 = vsel %vm5192, %v13564, %v13052
  %v13637 = vsel %vm5192, %v13566, %v13054
  %v13640 = vsel %vm5192, %v13568, %v13056
  %v13643 = vsel %vm5192, %v13570, %v13058
  %v13646 = vsel %vm5192, %v13572, %v13060
  %v13649 = vsel %vm5192, %v13574, %v13062
  %v13652 = vsel %vm5192, %v13576, %v13064
  %v13655 = vsel %vm5192, %v13578, %v13066
  %v13658 = vsel %vm5192, %v13580, %v13068
  %v13661 = vsel %vm5192, %v13582, %v13070
  %v13664 = vsel %vm5192, %v13584, %v13072
  %v13667 = vsel %vm5192, %v13586, %v13074
  %v13670 = vsel %vm5192, %v13588, %v13076
  %v13673 = vsel %vm5192, %v13590, %v13078
  %v13676 = vsel %vm5192, %v13592, %v13080
  %v13679 = vsel %vm5192, %v13594, %v13082
  %v13682 = vsel %vm5192, %v13596, %v13084
  %v13685 = vsel %vm5192, %v13598, %v13086
  %v13688 = vsel %vm5192, %v13600, %v13088
  %v13691 = vsel %vm5192, %v13602, %v13090
  %v13694 = vsel %vm5192, %v13604, %v13092
  %v13697 = vsel %vm5192, %v13606, %v13094
  %v13700 = vsel %vm5192, %v13608, %v13096
  %v13703 = vsel %vm5192, %v13610, %v13098
  %v13706 = vsel %vm5192, %v13612, %v13100
  %v13709 = vsel %vm5192, %v13614, %v13102
  %v13711 = vld [vmem:[%s3] sm:$0xf]
  %v13712 = vld [vmem:[%s3 + $0x4] sm:$0xf]
  %v13713 = vld [vmem:[%s3 + $0x8] sm:$0xf]
  %v13714 = vld [vmem:[%s3 + $0xc] sm:$0xf]
  %v13715 = vld [vmem:[%s3 + $0x10] sm:$0xf]
  %v13716 = vld [vmem:[%s3 + $0x14] sm:$0xf]
  %v13717 = vld [vmem:[%s3 + $0x18] sm:$0xf]
  %v13718 = vld [vmem:[%s3 + $0x1c] sm:$0xf]
  %v13719 = vld [vmem:[%s3 + $0x20] sm:$0xf]
  %v13720 = vld [vmem:[%s3 + $0x24] sm:$0xf]
  %v13721 = vld [vmem:[%s3 + $0x28] sm:$0xf]
  %v13722 = vld [vmem:[%s3 + $0x2c] sm:$0xf]
  %v13723 = vld [vmem:[%s3 + $0x30] sm:$0xf]
  %v13724 = vld [vmem:[%s3 + $0x34] sm:$0xf]
  %v13725 = vld [vmem:[%s3 + $0x38] sm:$0xf]
  %v13726 = vld [vmem:[%s3 + $0x3c] sm:$0xf]
  %v13727 = vld [vmem:[%s3 + $0x40] sm:$0xf]
  %v13728 = vld [vmem:[%s3 + $0x44] sm:$0xf]
  %v13729 = vld [vmem:[%s3 + $0x48] sm:$0xf]
  %v13730 = vld [vmem:[%s3 + $0x4c] sm:$0xf]
  %v13731 = vld [vmem:[%s3 + $0x50] sm:$0xf]
  %v13732 = vld [vmem:[%s3 + $0x54] sm:$0xf]
  %v13733 = vld [vmem:[%s3 + $0x58] sm:$0xf]
  %v13734 = vld [vmem:[%s3 + $0x5c] sm:$0xf]
  %v13735 = vld [vmem:[%s3 + $0x60] sm:$0xf]
  %v13736 = vld [vmem:[%s3 + $0x64] sm:$0xf]
  %v13737 = vld [vmem:[%s3 + $0x68] sm:$0xf]
  %v13738 = vld [vmem:[%s3 + $0x6c] sm:$0xf]
  %v13739 = vld [vmem:[%s3 + $0x70] sm:$0xf]
  %v13740 = vld [vmem:[%s3 + $0x74] sm:$0xf]
  %v13741 = vld [vmem:[%s3 + $0x78] sm:$0xf]
  %v13742 = vld [vmem:[%s3 + $0x7c] sm:$0xf]
  %v13743 = vld [vmem:[%s3 + $0x80] sm:$0xf]
  %v13744 = vld [vmem:[%s3 + $0x84] sm:$0xf]
  %v13745 = vld [vmem:[%s3 + $0x88] sm:$0xf]
  %v13746 = vld [vmem:[%s3 + $0x8c] sm:$0xf]
  %v13783 = vunpack.c.l.b16 %v13711
  %v13784 = vunpack.c.l.b16 %v13712
  %v13785 = vunpack.c.l.b16 %v13713
  %v13786 = vunpack.c.l.b16 %v13714
  %v13787 = vunpack.c.l.b16 %v13715
  %v13788 = vunpack.c.l.b16 %v13716
  %v13789 = vunpack.c.l.b16 %v13717
  %v13790 = vunpack.c.l.b16 %v13718
  %v13791 = vunpack.c.l.b16 %v13719
  %v13792 = vunpack.c.l.b16 %v13720
  %v13793 = vunpack.c.l.b16 %v13721
  %v13794 = vunpack.c.l.b16 %v13722
  %v13795 = vunpack.c.l.b16 %v13723
  %v13796 = vunpack.c.l.b16 %v13724
  %v13797 = vunpack.c.l.b16 %v13725
  %v13798 = vunpack.c.l.b16 %v13726
  %v13799 = vunpack.c.l.b16 %v13727
  %v13800 = vunpack.c.l.b16 %v13728
  %v13801 = vunpack.c.l.b16 %v13729
  %v13802 = vunpack.c.l.b16 %v13730
  %v13803 = vunpack.c.l.b16 %v13731
  %v13804 = vunpack.c.l.b16 %v13732
  %v13805 = vunpack.c.l.b16 %v13733
  %v13806 = vunpack.c.l.b16 %v13734
  %v13807 = vunpack.c.l.b16 %v13735
  %v13808 = vunpack.c.l.b16 %v13736
  %v13809 = vunpack.c.l.b16 %v13737
  %v13810 = vunpack.c.l.b16 %v13738
  %v13811 = vunpack.c.l.b16 %v13739
  %v13812 = vunpack.c.l.b16 %v13740
  %v13813 = vunpack.c.l.b16 %v13741
  %v13814 = vunpack.c.l.b16 %v13742
  %v13815 = vunpack.c.l.b16 %v13743
  %v13816 = vunpack.c.l.b16 %v13744
  %v13817 = vunpack.c.l.b16 %v13745
  %v13818 = vunpack.c.l.b16 %v13746
  %v13819 = vpack.c.b16 %v13784, %v13783
  %v13820 = vpack.c.b16 %v13786, %v13785
  %v13821 = vpack.c.b16 %v13788, %v13787
  %v13822 = vpack.c.b16 %v13790, %v13789
  %v13823 = vpack.c.b16 %v13792, %v13791
  %v13824 = vpack.c.b16 %v13794, %v13793
  %v13825 = vpack.c.b16 %v13796, %v13795
  %v13826 = vpack.c.b16 %v13798, %v13797
  %v13827 = vpack.c.b16 %v13800, %v13799
  %v13828 = vpack.c.b16 %v13802, %v13801
  %v13829 = vpack.c.b16 %v13804, %v13803
  %v13830 = vpack.c.b16 %v13806, %v13805
  %v13831 = vpack.c.b16 %v13808, %v13807
  %v13832 = vpack.c.b16 %v13810, %v13809
  %v13833 = vpack.c.b16 %v13812, %v13811
  %v13834 = vpack.c.b16 %v13814, %v13813
  %v13835 = vpack.c.b16 %v13816, %v13815
  %v13836 = vpack.c.b16 %v13818, %v13817
  %v13856 = vsel %vm5030, %v13167, 0
  %v13859 = vsel %vm5030, %v13168, 0
  %v13862 = vsel %vm5030, %v13169, 0
  %v13865 = vsel %vm5030, %v13170, 0
  %v13868 = vsel %vm5030, %v13171, 0
  %v13871 = vsel %vm5030, %v13172, 0
  %v13874 = vsel %vm5030, %v13173, 0
  %v13877 = vsel %vm5030, %v13174, 0
  %v13880 = vsel %vm5030, %v13175, 0
  %v13883 = vsel %vm5030, %v13176, 0
  %v13886 = vsel %vm5030, %v13177, 0
  %v13889 = vsel %vm5030, %v13178, 0
  %v13892 = vsel %vm5030, %v13179, 0
  %v13895 = vsel %vm5030, %v13180, 0
  %v13898 = vsel %vm5030, %v13181, 0
  %v13901 = vsel %vm5030, %v13182, 0
  %v13904 = vsel %vm5030, %v13183, 0
  %v13907 = vsel %vm5030, %v13184, 0
  %v13910 = vsel %vm5030, %v13185, 0
  %v13913 = vsel %vm5030, %v13186, 0
  %v13916 = vsel %vm5030, %v13187, 0
  %v13919 = vsel %vm5030, %v13188, 0
  %v13922 = vsel %vm5030, %v13189, 0
  %v13925 = vsel %vm5030, %v13190, 0
  %v13928 = vsel %vm5030, %v13191, 0
  %v13931 = vsel %vm5030, %v13192, 0
  %v13934 = vsel %vm5030, %v13193, 0
  %v13937 = vsel %vm5030, %v13194, 0
  %v13940 = vsel %vm5030, %v13195, 0
  %v13943 = vsel %vm5030, %v13196, 0
  %v13946 = vsel %vm5030, %v13197, 0
  %v13949 = vsel %vm5030, %v13198, 0
  %13951 = vmatprep.subr.bf16.mxu0 0
  %13952 = vmatpush1.bf16.msra.mxu0 %v13819
  %13953 = vmatprep.subr.bf16.mxu0 0
  %13954 = vmatpush1.bf16.msra.mxu0 %v13820
  %13955 = vmatprep.subr.bf16.mxu0 0
  %13956 = vmatpush1.bf16.msra.mxu0 %v13821
  %13957 = vmatprep.subr.bf16.mxu0 0
  %13958 = vmatpush1.bf16.msra.mxu0 %v13822
  %13959 = vmatprep.subr.bf16.mxu0 0
  %13960 = vmatpush1.bf16.msra.mxu0 %v13823
  %13961 = vmatprep.subr.bf16.mxu0 0
  %13962 = vmatpush1.bf16.msra.mxu0 %v13824
  %13963 = vmatprep.subr.bf16.mxu0 0
  %13964 = vmatpush1.bf16.msra.mxu0 %v13825
  %13965 = vmatprep.subr.bf16.mxu0 0
  %13966 = vmatpush1.bf16.msra.mxu0 %v13826
  %13967 = vmatprep.subr.bf16.mxu0 0
  %13968 = vmatpush1.bf16.msra.mxu0 %v13827
  %13969 = vmatprep.subr.bf16.mxu0 0
  %13970 = vmatpush1.bf16.msra.mxu0 %v13828
  %13971 = vmatprep.subr.bf16.mxu0 0
  %13972 = vmatpush1.bf16.msra.mxu0 %v13829
  %13973 = vmatprep.subr.bf16.mxu0 0
  %13974 = vmatpush1.bf16.msra.mxu0 %v13830
  %13975 = vmatprep.subr.bf16.mxu0 0
  %13976 = vmatpush1.bf16.msra.mxu0 %v13831
  %13977 = vmatprep.subr.bf16.mxu0 0
  %13978 = vmatpush1.bf16.msra.mxu0 %v13832
  %13979 = vmatprep.subr.bf16.mxu0 0
  %13980 = vmatpush1.bf16.msra.mxu0 %v13833
  %13981 = vmatprep.subr.bf16.mxu0 0
  %13982 = vmatpush1.bf16.msra.mxu0 %v13834
  %13983 = vmatprep.mubr.bf16.mxu0 %v13616
  %13984 = vmatmul.mubr.bf16.gmra.mrb[0].mxu0 %v13360
  %v13985 = vpop.f32.mrb[0].mxu0
  %v13986 = vadd.f32 0.0, %v13985
  %v13987 = vpop.f32.mrb[0].mxu0
  %v13988 = vpop.f32.mrb[0].mxu0
  %v13989 = vadd.f32 0.0, %v13988
  %v13990 = vpop.f32.mrb[0].mxu0
  %13991 = vmatprep.mubr.bf16.mxu0 %v13619
  %13992 = vmatmul.mubr.bf16.gmra.mrb[0].mxu0 %v13363
  %v13993 = vpop.f32.mrb[0].mxu0
  %v13994 = vadd.f32 0.0, %v13993
  %v13995 = vpop.f32.mrb[0].mxu0
  %v13996 = vpop.f32.mrb[0].mxu0
  %v13997 = vadd.f32 0.0, %v13996
  %v13998 = vpop.f32.mrb[0].mxu0
  %13999 = vmatprep.mubr.bf16.mxu0 %v13622
  %14000 = vmatmul.mubr.bf16.gmra.mrb[0].mxu0 %v13366
  %v14001 = vpop.f32.mrb[0].mxu0
  %v14002 = vadd.f32 0.0, %v14001
  %v14003 = vpop.f32.mrb[0].mxu0
  %v14004 = vpop.f32.mrb[0].mxu0
  %v14005 = vadd.f32 0.0, %v14004
  %v14006 = vpop.f32.mrb[0].mxu0
  %14007 = vmatprep.mubr.bf16.mxu0 %v13625
  %14008 = vmatmul.mubr.bf16.gmra.mrb[0].mxu0 %v13369
  %v14009 = vpop.f32.mrb[0].mxu0
  %v14010 = vadd.f32 0.0, %v14009
  %v14011 = vpop.f32.mrb[0].mxu0
  %v14012 = vpop.f32.mrb[0].mxu0
  %v14013 = vadd.f32 0.0, %v14012
  %v14014 = vpop.f32.mrb[0].mxu0
  %14015 = vmatprep.mubr.bf16.mxu0 %v13628
  %14016 = vmatmul.mubr.bf16.gmra.mrb[0].mxu0 %v13372
  %v14017 = vpop.f32.mrb[0].mxu0
  %v14018 = vadd.f32 0.0, %v14017
  %v14019 = vpop.f32.mrb[0].mxu0
  %v14020 = vpop.f32.mrb[0].mxu0
  %v14021 = vadd.f32 0.0, %v14020
  %v14022 = vpop.f32.mrb[0].mxu0
  %14023 = vmatprep.mubr.bf16.mxu0 %v13631
  %14024 = vmatmul.mubr.bf16.gmra.mrb[0].mxu0 %v13375
  %v14025 = vpop.f32.mrb[0].mxu0
  %v14026 = vadd.f32 0.0, %v14025
  %v14027 = vpop.f32.mrb[0].mxu0
  %v14028 = vpop.f32.mrb[0].mxu0
  %v14029 = vadd.f32 0.0, %v14028
  %v14030 = vpop.f32.mrb[0].mxu0
  %14031 = vmatprep.mubr.bf16.mxu0 %v13634
  %14032 = vmatmul.mubr.bf16.gmra.mrb[0].mxu0 %v13378
  %v14033 = vpop.f32.mrb[0].mxu0
  %v14034 = vadd.f32 0.0, %v14033
  %v14035 = vpop.f32.mrb[0].mxu0
  %v14036 = vpop.f32.mrb[0].mxu0
  %v14037 = vadd.f32 0.0, %v14036
  %v14038 = vpop.f32.mrb[0].mxu0
  %14039 = vmatprep.mubr.bf16.mxu0 %v13637
  %14040 = vmatmul.mubr.bf16.gmra.mrb[0].mxu0 %v13381
  %v14041 = vpop.f32.mrb[0].mxu0
  %v14042 = vadd.f32 0.0, %v14041
  %v14043 = vpop.f32.mrb[0].mxu0
  %v14044 = vpop.f32.mrb[0].mxu0
  %v14045 = vadd.f32 0.0, %v14044
  %v14046 = vpop.f32.mrb[0].mxu0
  %14047 = vmatprep.mubr.bf16.mxu0 %v13640
  %14048 = vmatmul.mubr.bf16.gmra.mrb[0].mxu0 %v13384
  %v14049 = vpop.f32.mrb[0].mxu0
  %v14050 = vadd.f32 0.0, %v14049
  %v14051 = vpop.f32.mrb[0].mxu0
  %v14052 = vpop.f32.mrb[0].mxu0
  %v14053 = vadd.f32 0.0, %v14052
  %v14054 = vpop.f32.mrb[0].mxu0
  %14055 = vmatprep.mubr.bf16.mxu0 %v13643
  %14056 = vmatmul.mubr.bf16.gmra.mrb[0].mxu0 %v13387
  %v14057 = vpop.f32.mrb[0].mxu0
  %v14058 = vadd.f32 0.0, %v14057
  %v14059 = vpop.f32.mrb[0].mxu0
  %v14060 = vpop.f32.mrb[0].mxu0
  %v14061 = vadd.f32 0.0, %v14060
  %v14062 = vpop.f32.mrb[0].mxu0
  %14063 = vmatprep.mubr.bf16.mxu0 %v13646
  %14064 = vmatmul.mubr.bf16.gmra.mrb[0].mxu0 %v13390
  %v14065 = vpop.f32.mrb[0].mxu0
  %v14066 = vadd.f32 0.0, %v14065
  %v14067 = vpop.f32.mrb[0].mxu0
  %v14068 = vpop.f32.mrb[0].mxu0
  %v14069 = vadd.f32 0.0, %v14068
  %v14070 = vpop.f32.mrb[0].mxu0
  %14071 = vmatprep.mubr.bf16.mxu0 %v13649
  %14072 = vmatmul.mubr.bf16.gmra.mrb[0].mxu0 %v13393
  %v14073 = vpop.f32.mrb[0].mxu0
  %v14074 = vadd.f32 0.0, %v14073
  %v14075 = vpop.f32.mrb[0].mxu0
  %v14076 = vpop.f32.mrb[0].mxu0
  %v14077 = vadd.f32 0.0, %v14076
  %v14078 = vpop.f32.mrb[0].mxu0
  %14079 = vmatprep.mubr.bf16.mxu0 %v13652
  %14080 = vmatmul.mubr.bf16.gmra.mrb[0].mxu0 %v13396
  %v14081 = vpop.f32.mrb[0].mxu0
  %v14082 = vadd.f32 0.0, %v14081
  %v14083 = vpop.f32.mrb[0].mxu0
  %v14084 = vpop.f32.mrb[0].mxu0
  %v14085 = vadd.f32 0.0, %v14084
  %v14086 = vpop.f32.mrb[0].mxu0
  %14087 = vmatprep.mubr.bf16.mxu0 %v13655
  %14088 = vmatmul.mubr.bf16.gmra.mrb[0].mxu0 %v13399
  %v14089 = vpop.f32.mrb[0].mxu0
  %v14090 = vadd.f32 0.0, %v14089
  %v14091 = vpop.f32.mrb[0].mxu0
  %v14092 = vpop.f32.mrb[0].mxu0
  %v14093 = vadd.f32 0.0, %v14092
  %v14094 = vpop.f32.mrb[0].mxu0
  %14095 = vmatprep.mubr.bf16.mxu0 %v13658
  %14096 = vmatmul.mubr.bf16.gmra.mrb[0].mxu0 %v13402
  %v14097 = vpop.f32.mrb[0].mxu0
  %v14098 = vadd.f32 0.0, %v14097
  %v14099 = vpop.f32.mrb[0].mxu0
  %v14100 = vpop.f32.mrb[0].mxu0
  %v14101 = vadd.f32 0.0, %v14100
  %v14102 = vpop.f32.mrb[0].mxu0
  %14103 = vmatprep.mubr.bf16.mxu0 %v13661
  %14104 = vmatmul.mubr.bf16.gmra.mrb[0].mxu0 %v13405
  %v14105 = vpop.f32.mrb[0].mxu0
  %v14106 = vadd.f32 0.0, %v14105
  %v14107 = vpop.f32.mrb[0].mxu0
  %v14108 = vpop.f32.mrb[0].mxu0
  %v14109 = vadd.f32 0.0, %v14108
  %v14110 = vpop.f32.mrb[0].mxu0
  %14111 = vmatprep.mubr.bf16.mxu0 %v13664
  %14112 = vmatmul.mubr.bf16.gmra.mrb[0].mxu0 %v13408
  %v14113 = vpop.f32.mrb[0].mxu0
  %v14114 = vadd.f32 0.0, %v14113
  %v14115 = vpop.f32.mrb[0].mxu0
  %v14116 = vpop.f32.mrb[0].mxu0
  %v14117 = vadd.f32 0.0, %v14116
  %v14118 = vpop.f32.mrb[0].mxu0
  %14119 = vmatprep.mubr.bf16.mxu0 %v13667
  %14120 = vmatmul.mubr.bf16.gmra.mrb[0].mxu0 %v13411
  %v14121 = vpop.f32.mrb[0].mxu0
  %v14122 = vadd.f32 0.0, %v14121
  %v14123 = vpop.f32.mrb[0].mxu0
  %v14124 = vpop.f32.mrb[0].mxu0
  %v14125 = vadd.f32 0.0, %v14124
  %v14126 = vpop.f32.mrb[0].mxu0
  %14127 = vmatprep.mubr.bf16.mxu0 %v13670
  %14128 = vmatmul.mubr.bf16.gmra.mrb[0].mxu0 %v13414
  %v14129 = vpop.f32.mrb[0].mxu0
  %v14130 = vadd.f32 0.0, %v14129
  %v14131 = vpop.f32.mrb[0].mxu0
  %v14132 = vpop.f32.mrb[0].mxu0
  %v14133 = vadd.f32 0.0, %v14132
  %v14134 = vpop.f32.mrb[0].mxu0
  %14135 = vmatprep.mubr.bf16.mxu0 %v13673
  %14136 = vmatmul.mubr.bf16.gmra.mrb[0].mxu0 %v13417
  %v14137 = vpop.f32.mrb[0].mxu0
  %v14138 = vadd.f32 0.0, %v14137
  %v14139 = vpop.f32.mrb[0].mxu0
  %v14140 = vpop.f32.mrb[0].mxu0
  %v14141 = vadd.f32 0.0, %v14140
  %v14142 = vpop.f32.mrb[0].mxu0
  %14143 = vmatprep.mubr.bf16.mxu0 %v13676
  %14144 = vmatmul.mubr.bf16.gmra.mrb[0].mxu0 %v13420
  %v14145 = vpop.f32.mrb[0].mxu0
  %v14146 = vadd.f32 0.0, %v14145
  %v14147 = vpop.f32.mrb[0].mxu0
  %v14148 = vpop.f32.mrb[0].mxu0
  %v14149 = vadd.f32 0.0, %v14148
  %v14150 = vpop.f32.mrb[0].mxu0
  %14151 = vmatprep.mubr.bf16.mxu0 %v13679
  %14152 = vmatmul.mubr.bf16.gmra.mrb[0].mxu0 %v13423
  %v14153 = vpop.f32.mrb[0].mxu0
  %v14154 = vadd.f32 0.0, %v14153
  %v14155 = vpop.f32.mrb[0].mxu0
  %v14156 = vpop.f32.mrb[0].mxu0
  %v14157 = vadd.f32 0.0, %v14156
  %v14158 = vpop.f32.mrb[0].mxu0
  %14159 = vmatprep.mubr.bf16.mxu0 %v13682
  %14160 = vmatmul.mubr.bf16.gmra.mrb[0].mxu0 %v13426
  %v14161 = vpop.f32.mrb[0].mxu0
  %v14162 = vadd.f32 0.0, %v14161
  %v14163 = vpop.f32.mrb[0].mxu0
  %v14164 = vpop.f32.mrb[0].mxu0
  %v14165 = vadd.f32 0.0, %v14164
  %v14166 = vpop.f32.mrb[0].mxu0
  %14167 = vmatprep.mubr.bf16.mxu0 %v13685
  %14168 = vmatmul.mubr.bf16.gmra.mrb[0].mxu0 %v13429
  %v14169 = vpop.f32.mrb[0].mxu0
  %v14170 = vadd.f32 0.0, %v14169
  %v14171 = vpop.f32.mrb[0].mxu0
  %v14172 = vpop.f32.mrb[0].mxu0
  %v14173 = vadd.f32 0.0, %v14172
  %v14174 = vpop.f32.mrb[0].mxu0
  %14175 = vmatprep.mubr.bf16.mxu0 %v13688
  %14176 = vmatmul.mubr.bf16.gmra.mrb[0].mxu0 %v13432
  %v14177 = vpop.f32.mrb[0].mxu0
  %v14178 = vadd.f32 0.0, %v14177
  %v14179 = vpop.f32.mrb[0].mxu0
  %v14180 = vpop.f32.mrb[0].mxu0
  %v14181 = vadd.f32 0.0, %v14180
  %v14182 = vpop.f32.mrb[0].mxu0
  %14183 = vmatprep.mubr.bf16.mxu0 %v13691
  %14184 = vmatmul.mubr.bf16.gmra.mrb[0].mxu0 %v13435
  %v14185 = vpop.f32.mrb[0].mxu0
  %v14186 = vadd.f32 0.0, %v14185
  %v14187 = vpop.f32.mrb[0].mxu0
  %v14188 = vpop.f32.mrb[0].mxu0
  %v14189 = vadd.f32 0.0, %v14188
  %v14190 = vpop.f32.mrb[0].mxu0
  %14191 = vmatprep.mubr.bf16.mxu0 %v13694
  %14192 = vmatmul.mubr.bf16.gmra.mrb[0].mxu0 %v13438
  %v14193 = vpop.f32.mrb[0].mxu0
  %v14194 = vadd.f32 0.0, %v14193
  %v14195 = vpop.f32.mrb[0].mxu0
  %v14196 = vpop.f32.mrb[0].mxu0
  %v14197 = vadd.f32 0.0, %v14196
  %v14198 = vpop.f32.mrb[0].mxu0
  %14199 = vmatprep.mubr.bf16.mxu0 %v13697
  %14200 = vmatmul.mubr.bf16.gmra.mrb[0].mxu0 %v13441
  %v14201 = vpop.f32.mrb[0].mxu0
  %v14202 = vadd.f32 0.0, %v14201
  %v14203 = vpop.f32.mrb[0].mxu0
  %v14204 = vpop.f32.mrb[0].mxu0
  %v14205 = vadd.f32 0.0, %v14204
  %v14206 = vpop.f32.mrb[0].mxu0
  %14207 = vmatprep.mubr.bf16.mxu0 %v13700
  %14208 = vmatmul.mubr.bf16.gmra.mrb[0].mxu0 %v13444
  %v14209 = vpop.f32.mrb[0].mxu0
  %v14210 = vadd.f32 0.0, %v14209
  %v14211 = vpop.f32.mrb[0].mxu0
  %v14212 = vpop.f32.mrb[0].mxu0
  %v14213 = vadd.f32 0.0, %v14212
  %v14214 = vpop.f32.mrb[0].mxu0
  %14215 = vmatprep.mubr.bf16.mxu0 %v13703
  %14216 = vmatmul.mubr.bf16.gmra.mrb[0].mxu0 %v13447
  %v14217 = vpop.f32.mrb[0].mxu0
  %v14218 = vadd.f32 0.0, %v14217
  %v14219 = vpop.f32.mrb[0].mxu0
  %v14220 = vpop.f32.mrb[0].mxu0
  %v14221 = vadd.f32 0.0, %v14220
  %v14222 = vpop.f32.mrb[0].mxu0
  %14223 = vmatprep.mubr.bf16.mxu0 %v13706
  %14224 = vmatmul.mubr.bf16.gmra.mrb[0].mxu0 %v13450
  %v14225 = vpop.f32.mrb[0].mxu0
  %v14226 = vadd.f32 0.0, %v14225
  %v14227 = vpop.f32.mrb[0].mxu0
  %v14228 = vpop.f32.mrb[0].mxu0
  %v14229 = vadd.f32 0.0, %v14228
  %v14230 = vpop.f32.mrb[0].mxu0
  %14231 = vmatprep.mubr.bf16.mxu0 %v13709
  %14232 = vmatmul.mubr.bf16.gmra.mrb[0].mxu0 %v13453
  %v14233 = vpop.f32.mrb[0].mxu0
  %v14234 = vadd.f32 0.0, %v14233
  %v14235 = vpop.f32.mrb[0].mxu0
  %v14236 = vpop.f32.mrb[0].mxu0
  %v14237 = vadd.f32 0.0, %v14236
  %v14238 = vpop.f32.mrb[0].mxu0
  %14239 = vdwg.mxu0
  %14240 = vmatprep.subr.bf16.mxu0 0
  %14241 = vmatpush1.bf16.msra.mxu0 %v13835
  %14242 = vmatprep.subr.bf16.mxu0 0
  %14243 = vmatpush1.bf16.msra.mxu0 %v13836
  %14244 = vmatprep.subr.bf16.mxu0 0
  %14245 = vmatpush1.bf16.msra.mxu0 0
  %14246 = vmatprep.subr.bf16.mxu0 0
  %14247 = vmatpush1.bf16.msra.mxu0 0
  %14248 = vmatprep.subr.bf16.mxu0 0
  %14249 = vmatpush1.bf16.msra.mxu0 0
  %14250 = vmatprep.subr.bf16.mxu0 0
  %14251 = vmatpush1.bf16.msra.mxu0 0
  %14252 = vmatprep.subr.bf16.mxu0 0
  %14253 = vmatpush1.bf16.msra.mxu0 0
  %14254 = vmatprep.subr.bf16.mxu0 0
  %14255 = vmatpush1.bf16.msra.mxu0 0
  %14256 = vmatprep.subr.bf16.mxu0 0
  %14257 = vmatpush1.bf16.msra.mxu0 0
  %14258 = vmatprep.subr.bf16.mxu0 0
  %14259 = vmatpush1.bf16.msra.mxu0 0
  %14260 = vmatprep.subr.bf16.mxu0 0
  %14261 = vmatpush1.bf16.msra.mxu0 0
  %14262 = vmatprep.subr.bf16.mxu0 0
  %14263 = vmatpush1.bf16.msra.mxu0 0
  %14264 = vmatprep.subr.bf16.mxu0 0
  %14265 = vmatpush1.bf16.msra.mxu0 0
  %14266 = vmatprep.subr.bf16.mxu0 0
  %14267 = vmatpush1.bf16.msra.mxu0 0
  %14268 = vmatprep.subr.bf16.mxu0 0
  %14269 = vmatpush1.bf16.msra.mxu0 0
  %14270 = vmatprep.subr.bf16.mxu0 0
  %14271 = vmatpush1.bf16.msra.mxu0 0
  %14272 = vmatprep.mubr.bf16.mxu0 0
  %14273 = vmatmul.mubr.bf16.gmra.mrb[0].mxu0 %v13856
  %v14274 = vpop.f32.mrb[0].mxu0
  %v14275 = vadd.f32 %v13986, %v14274
  %v14276 = vpop.f32.mrb[0].mxu0
  %v14277 = vpop.f32.mrb[0].mxu0
  %v14278 = vadd.f32 %v13989, %v14277
  %v14279 = vpop.f32.mrb[0].mxu0
  %14280 = vmatprep.mubr.bf16.mxu0 0
  %14281 = vmatmul.mubr.bf16.gmra.mrb[0].mxu0 %v13859
  %v14282 = vpop.f32.mrb[0].mxu0
  %v14283 = vadd.f32 %v13994, %v14282
  %v14284 = vpop.f32.mrb[0].mxu0
  %v14285 = vpop.f32.mrb[0].mxu0
  %v14286 = vadd.f32 %v13997, %v14285
  %v14287 = vpop.f32.mrb[0].mxu0
  %14288 = vmatprep.mubr.bf16.mxu0 0
  %14289 = vmatmul.mubr.bf16.gmra.mrb[0].mxu0 %v13862
  %v14290 = vpop.f32.mrb[0].mxu0
  %v14291 = vadd.f32 %v14002, %v14290
  %v14292 = vpop.f32.mrb[0].mxu0
  %v14293 = vpop.f32.mrb[0].mxu0
  %v14294 = vadd.f32 %v14005, %v14293
  %v14295 = vpop.f32.mrb[0].mxu0
  %14296 = vmatprep.mubr.bf16.mxu0 0
  %14297 = vmatmul.mubr.bf16.gmra.mrb[0].mxu0 %v13865
  %v14298 = vpop.f32.mrb[0].mxu0
  %v14299 = vadd.f32 %v14010, %v14298
  %v14300 = vpop.f32.mrb[0].mxu0
  %v14301 = vpop.f32.mrb[0].mxu0
  %v14302 = vadd.f32 %v14013, %v14301
  %v14303 = vpop.f32.mrb[0].mxu0
  %14304 = vmatprep.mubr.bf16.mxu0 0
  %14305 = vmatmul.mubr.bf16.gmra.mrb[0].mxu0 %v13868
  %v14306 = vpop.f32.mrb[0].mxu0
  %v14307 = vadd.f32 %v14018, %v14306
  %v14308 = vpop.f32.mrb[0].mxu0
  %v14309 = vpop.f32.mrb[0].mxu0
  %v14310 = vadd.f32 %v14021, %v14309
  %v14311 = vpop.f32.mrb[0].mxu0
  %14312 = vmatprep.mubr.bf16.mxu0 0
  %14313 = vmatmul.mubr.bf16.gmra.mrb[0].mxu0 %v13871
  %v14314 = vpop.f32.mrb[0].mxu0
  %v14315 = vadd.f32 %v14026, %v14314
  %v14316 = vpop.f32.mrb[0].mxu0
  %v14317 = vpop.f32.mrb[0].mxu0
  %v14318 = vadd.f32 %v14029, %v14317
  %v14319 = vpop.f32.mrb[0].mxu0
  %14320 = vmatprep.mubr.bf16.mxu0 0
  %14321 = vmatmul.mubr.bf16.gmra.mrb[0].mxu0 %v13874
  %v14322 = vpop.f32.mrb[0].mxu0
  %v14323 = vadd.f32 %v14034, %v14322
  %v14324 = vpop.f32.mrb[0].mxu0
  %v14325 = vpop.f32.mrb[0].mxu0
  %v14326 = vadd.f32 %v14037, %v14325
  %v14327 = vpop.f32.mrb[0].mxu0
  %14328 = vmatprep.mubr.bf16.mxu0 0
  %14329 = vmatmul.mubr.bf16.gmra.mrb[0].mxu0 %v13877
  %v14330 = vpop.f32.mrb[0].mxu0
  %v14331 = vadd.f32 %v14042, %v14330
  %v14332 = vpop.f32.mrb[0].mxu0
  %v14333 = vpop.f32.mrb[0].mxu0
  %v14334 = vadd.f32 %v14045, %v14333
  %v14335 = vpop.f32.mrb[0].mxu0
  %14336 = vmatprep.mubr.bf16.mxu0 0
  %14337 = vmatmul.mubr.bf16.gmra.mrb[0].mxu0 %v13880
  %v14338 = vpop.f32.mrb[0].mxu0
  %v14339 = vadd.f32 %v14050, %v14338
  %v14340 = vpop.f32.mrb[0].mxu0
  %v14341 = vpop.f32.mrb[0].mxu0
  %v14342 = vadd.f32 %v14053, %v14341
  %v14343 = vpop.f32.mrb[0].mxu0
  %14344 = vmatprep.mubr.bf16.mxu0 0
  %14345 = vmatmul.mubr.bf16.gmra.mrb[0].mxu0 %v13883
  %v14346 = vpop.f32.mrb[0].mxu0
  %v14347 = vadd.f32 %v14058, %v14346
  %v14348 = vpop.f32.mrb[0].mxu0
  %v14349 = vpop.f32.mrb[0].mxu0
  %v14350 = vadd.f32 %v14061, %v14349
  %v14351 = vpop.f32.mrb[0].mxu0
  %14352 = vmatprep.mubr.bf16.mxu0 0
  %14353 = vmatmul.mubr.bf16.gmra.mrb[0].mxu0 %v13886
  %v14354 = vpop.f32.mrb[0].mxu0
  %v14355 = vadd.f32 %v14066, %v14354
  %v14356 = vpop.f32.mrb[0].mxu0
  %v14357 = vpop.f32.mrb[0].mxu0
  %v14358 = vadd.f32 %v14069, %v14357
  %v14359 = vpop.f32.mrb[0].mxu0
  %14360 = vmatprep.mubr.bf16.mxu0 0
  %14361 = vmatmul.mubr.bf16.gmra.mrb[0].mxu0 %v13889
  %v14362 = vpop.f32.mrb[0].mxu0
  %v14363 = vadd.f32 %v14074, %v14362
  %v14364 = vpop.f32.mrb[0].mxu0
  %v14365 = vpop.f32.mrb[0].mxu0
  %v14366 = vadd.f32 %v14077, %v14365
  %v14367 = vpop.f32.mrb[0].mxu0
  %14368 = vmatprep.mubr.bf16.mxu0 0
  %14369 = vmatmul.mubr.bf16.gmra.mrb[0].mxu0 %v13892
  %v14370 = vpop.f32.mrb[0].mxu0
  %v14371 = vadd.f32 %v14082, %v14370
  %v14372 = vpop.f32.mrb[0].mxu0
  %v14373 = vpop.f32.mrb[0].mxu0
  %v14374 = vadd.f32 %v14085, %v14373
  %v14375 = vpop.f32.mrb[0].mxu0
  %14376 = vmatprep.mubr.bf16.mxu0 0
  %14377 = vmatmul.mubr.bf16.gmra.mrb[0].mxu0 %v13895
  %v14378 = vpop.f32.mrb[0].mxu0
  %v14379 = vadd.f32 %v14090, %v14378
  %v14380 = vpop.f32.mrb[0].mxu0
  %v14381 = vpop.f32.mrb[0].mxu0
  %v14382 = vadd.f32 %v14093, %v14381
  %v14383 = vpop.f32.mrb[0].mxu0
  %14384 = vmatprep.mubr.bf16.mxu0 0
  %14385 = vmatmul.mubr.bf16.gmra.mrb[0].mxu0 %v13898
  %v14386 = vpop.f32.mrb[0].mxu0
  %v14387 = vadd.f32 %v14098, %v14386
  %v14388 = vpop.f32.mrb[0].mxu0
  %v14389 = vpop.f32.mrb[0].mxu0
  %v14390 = vadd.f32 %v14101, %v14389
  %v14391 = vpop.f32.mrb[0].mxu0
  %14392 = vmatprep.mubr.bf16.mxu0 0
  %14393 = vmatmul.mubr.bf16.gmra.mrb[0].mxu0 %v13901
  %v14394 = vpop.f32.mrb[0].mxu0
  %v14395 = vadd.f32 %v14106, %v14394
  %v14396 = vpop.f32.mrb[0].mxu0
  %v14397 = vpop.f32.mrb[0].mxu0
  %v14398 = vadd.f32 %v14109, %v14397
  %v14399 = vpop.f32.mrb[0].mxu0
  %14400 = vmatprep.mubr.bf16.mxu0 0
  %14401 = vmatmul.mubr.bf16.gmra.mrb[0].mxu0 %v13904
  %v14402 = vpop.f32.mrb[0].mxu0
  %v14403 = vadd.f32 %v14114, %v14402
  %v14404 = vpop.f32.mrb[0].mxu0
  %v14405 = vpop.f32.mrb[0].mxu0
  %v14406 = vadd.f32 %v14117, %v14405
  %v14407 = vpop.f32.mrb[0].mxu0
  %14408 = vmatprep.mubr.bf16.mxu0 0
  %14409 = vmatmul.mubr.bf16.gmra.mrb[0].mxu0 %v13907
  %v14410 = vpop.f32.mrb[0].mxu0
  %v14411 = vadd.f32 %v14122, %v14410
  %v14412 = vpop.f32.mrb[0].mxu0
  %v14413 = vpop.f32.mrb[0].mxu0
  %v14414 = vadd.f32 %v14125, %v14413
  %v14415 = vpop.f32.mrb[0].mxu0
  %14416 = vmatprep.mubr.bf16.mxu0 0
  %14417 = vmatmul.mubr.bf16.gmra.mrb[0].mxu0 %v13910
  %v14418 = vpop.f32.mrb[0].mxu0
  %v14419 = vadd.f32 %v14130, %v14418
  %v14420 = vpop.f32.mrb[0].mxu0
  %v14421 = vpop.f32.mrb[0].mxu0
  %v14422 = vadd.f32 %v14133, %v14421
  %v14423 = vpop.f32.mrb[0].mxu0
  %14424 = vmatprep.mubr.bf16.mxu0 0
  %14425 = vmatmul.mubr.bf16.gmra.mrb[0].mxu0 %v13913
  %v14426 = vpop.f32.mrb[0].mxu0
  %v14427 = vadd.f32 %v14138, %v14426
  %v14428 = vpop.f32.mrb[0].mxu0
  %v14429 = vpop.f32.mrb[0].mxu0
  %v14430 = vadd.f32 %v14141, %v14429
  %v14431 = vpop.f32.mrb[0].mxu0
  %14432 = vmatprep.mubr.bf16.mxu0 0
  %14433 = vmatmul.mubr.bf16.gmra.mrb[0].mxu0 %v13916
  %v14434 = vpop.f32.mrb[0].mxu0
  %v14435 = vadd.f32 %v14146, %v14434
  %v14436 = vpop.f32.mrb[0].mxu0
  %v14437 = vpop.f32.mrb[0].mxu0
  %v14438 = vadd.f32 %v14149, %v14437
  %v14439 = vpop.f32.mrb[0].mxu0
  %14440 = vmatprep.mubr.bf16.mxu0 0
  %14441 = vmatmul.mubr.bf16.gmra.mrb[0].mxu0 %v13919
  %v14442 = vpop.f32.mrb[0].mxu0
  %v14443 = vadd.f32 %v14154, %v14442
  %v14444 = vpop.f32.mrb[0].mxu0
  %v14445 = vpop.f32.mrb[0].mxu0
  %v14446 = vadd.f32 %v14157, %v14445
  %v14447 = vpop.f32.mrb[0].mxu0
  %14448 = vmatprep.mubr.bf16.mxu0 0
  %14449 = vmatmul.mubr.bf16.gmra.mrb[0].mxu0 %v13922
  %v14450 = vpop.f32.mrb[0].mxu0
  %v14451 = vadd.f32 %v14162, %v14450
  %v14452 = vpop.f32.mrb[0].mxu0
  %v14453 = vpop.f32.mrb[0].mxu0
  %v14454 = vadd.f32 %v14165, %v14453
  %v14455 = vpop.f32.mrb[0].mxu0
  %14456 = vmatprep.mubr.bf16.mxu0 0
  %14457 = vmatmul.mubr.bf16.gmra.mrb[0].mxu0 %v13925
  %v14458 = vpop.f32.mrb[0].mxu0
  %v14459 = vadd.f32 %v14170, %v14458
  %v14460 = vpop.f32.mrb[0].mxu0
  %v14461 = vpop.f32.mrb[0].mxu0
  %v14462 = vadd.f32 %v14173, %v14461
  %v14463 = vpop.f32.mrb[0].mxu0
  %14464 = vmatprep.mubr.bf16.mxu0 0
  %14465 = vmatmul.mubr.bf16.gmra.mrb[0].mxu0 %v13928
  %v14466 = vpop.f32.mrb[0].mxu0
  %v14467 = vadd.f32 %v14178, %v14466
  %v14468 = vpop.f32.mrb[0].mxu0
  %v14469 = vpop.f32.mrb[0].mxu0
  %v14470 = vadd.f32 %v14181, %v14469
  %v14471 = vpop.f32.mrb[0].mxu0
  %14472 = vmatprep.mubr.bf16.mxu0 0
  %14473 = vmatmul.mubr.bf16.gmra.mrb[0].mxu0 %v13931
  %v14474 = vpop.f32.mrb[0].mxu0
  %v14475 = vadd.f32 %v14186, %v14474
  %v14476 = vpop.f32.mrb[0].mxu0
  %v14477 = vpop.f32.mrb[0].mxu0
  %v14478 = vadd.f32 %v14189, %v14477
  %v14479 = vpop.f32.mrb[0].mxu0
  %14480 = vmatprep.mubr.bf16.mxu0 0
  %14481 = vmatmul.mubr.bf16.gmra.mrb[0].mxu0 %v13934
  %v14482 = vpop.f32.mrb[0].mxu0
  %v14483 = vadd.f32 %v14194, %v14482
  %v14484 = vpop.f32.mrb[0].mxu0
  %v14485 = vpop.f32.mrb[0].mxu0
  %v14486 = vadd.f32 %v14197, %v14485
  %v14487 = vpop.f32.mrb[0].mxu0
  %14488 = vmatprep.mubr.bf16.mxu0 0
  %14489 = vmatmul.mubr.bf16.gmra.mrb[0].mxu0 %v13937
  %v14490 = vpop.f32.mrb[0].mxu0
  %v14491 = vadd.f32 %v14202, %v14490
  %v14492 = vpop.f32.mrb[0].mxu0
  %v14493 = vpop.f32.mrb[0].mxu0
  %v14494 = vadd.f32 %v14205, %v14493
  %v14495 = vpop.f32.mrb[0].mxu0
  %14496 = vmatprep.mubr.bf16.mxu0 0
  %14497 = vmatmul.mubr.bf16.gmra.mrb[0].mxu0 %v13940
  %v14498 = vpop.f32.mrb[0].mxu0
  %v14499 = vadd.f32 %v14210, %v14498
  %v14500 = vpop.f32.mrb[0].mxu0
  %v14501 = vpop.f32.mrb[0].mxu0
  %v14502 = vadd.f32 %v14213, %v14501
  %v14503 = vpop.f32.mrb[0].mxu0
  %14504 = vmatprep.mubr.bf16.mxu0 0
  %14505 = vmatmul.mubr.bf16.gmra.mrb[0].mxu0 %v13943
  %v14506 = vpop.f32.mrb[0].mxu0
  %v14507 = vadd.f32 %v14218, %v14506
  %v14508 = vpop.f32.mrb[0].mxu0
  %v14509 = vpop.f32.mrb[0].mxu0
  %v14510 = vadd.f32 %v14221, %v14509
  %v14511 = vpop.f32.mrb[0].mxu0
  %14512 = vmatprep.mubr.bf16.mxu0 0
  %14513 = vmatmul.mubr.bf16.gmra.mrb[0].mxu0 %v13946
  %v14514 = vpop.f32.mrb[0].mxu0
  %v14515 = vadd.f32 %v14226, %v14514
  %v14516 = vpop.f32.mrb[0].mxu0
  %v14517 = vpop.f32.mrb[0].mxu0
  %v14518 = vadd.f32 %v14229, %v14517
  %v14519 = vpop.f32.mrb[0].mxu0
  %14520 = vmatprep.mubr.bf16.mxu0 0
  %14521 = vmatmul.mubr.bf16.gmra.mrb[0].mxu0 %v13949
  %v14522 = vpop.f32.mrb[0].mxu0
  %v14523 = vadd.f32 %v14234, %v14522
  %v14524 = vpop.f32.mrb[0].mxu0
  %v14525 = vpop.f32.mrb[0].mxu0
  %v14526 = vadd.f32 %v14237, %v14525
  %v14527 = vpop.f32.mrb[0].mxu0
  %14528 = vdwg.mxu0
  %v14529 = vsel %vm5030, %v14275, 0.0
  %v14530 = vsel %vm5030, %v14278, 0.0
  %v14531 = vadd.f32 %v14529, %v14530
  %v14532 = vsel %vm5030, %v14283, 0.0
  %v14533 = vadd.f32 %v14531, %v14532
  %v14534 = vsel %vm5030, %v14286, 0.0
  %v14535 = vadd.f32 %v14533, %v14534
  %v14536 = vsel %vm5030, %v14291, 0.0
  %v14537 = vadd.f32 %v14535, %v14536
  %v14538 = vsel %vm5030, %v14294, 0.0
  %v14539 = vadd.f32 %v14537, %v14538
  %v14540 = vsel %vm5030, %v14299, 0.0
  %v14541 = vadd.f32 %v14539, %v14540
  %v14542 = vsel %vm5030, %v14302, 0.0
  %v14543 = vadd.f32 %v14541, %v14542
  %v14544 = vsel %vm5030, %v14307, 0.0
  %v14545 = vadd.f32 %v14543, %v14544
  %v14546 = vsel %vm5030, %v14310, 0.0
  %v14547 = vadd.f32 %v14545, %v14546
  %v14548 = vsel %vm5030, %v14315, 0.0
  %v14549 = vadd.f32 %v14547, %v14548
  %v14550 = vsel %vm5030, %v14318, 0.0
  %v14551 = vadd.f32 %v14549, %v14550
  %v14552 = vsel %vm5030, %v14323, 0.0
  %v14553 = vadd.f32 %v14551, %v14552
  %v14554 = vsel %vm5030, %v14326, 0.0
  %v14555 = vadd.f32 %v14553, %v14554
  %v14556 = vsel %vm5030, %v14331, 0.0
  %v14557 = vadd.f32 %v14555, %v14556
  %v14558 = vsel %vm5030, %v14334, 0.0
  %v14559 = vadd.f32 %v14557, %v14558
  %v14560 = vsel %vm5030, %v14339, 0.0
  %v14561 = vadd.f32 %v14559, %v14560
  %v14562 = vsel %vm5030, %v14342, 0.0
  %v14563 = vadd.f32 %v14561, %v14562
  %v14564 = vsel %vm5030, %v14347, 0.0
  %v14565 = vadd.f32 %v14563, %v14564
  %v14566 = vsel %vm5030, %v14350, 0.0
  %v14567 = vadd.f32 %v14565, %v14566
  %v14568 = vsel %vm5030, %v14355, 0.0
  %v14569 = vadd.f32 %v14567, %v14568
  %v14570 = vsel %vm5030, %v14358, 0.0
  %v14571 = vadd.f32 %v14569, %v14570
  %v14572 = vsel %vm5030, %v14363, 0.0
  %v14573 = vadd.f32 %v14571, %v14572
  %v14574 = vsel %vm5030, %v14366, 0.0
  %v14575 = vadd.f32 %v14573, %v14574
  %v14576 = vsel %vm5030, %v14371, 0.0
  %v14577 = vadd.f32 %v14575, %v14576
  %v14578 = vsel %vm5030, %v14374, 0.0
  %v14579 = vadd.f32 %v14577, %v14578
  %v14580 = vsel %vm5030, %v14379, 0.0
  %v14581 = vadd.f32 %v14579, %v14580
  %v14582 = vsel %vm5030, %v14382, 0.0
  %v14583 = vadd.f32 %v14581, %v14582
  %v14584 = vsel %vm5030, %v14387, 0.0
  %v14585 = vadd.f32 %v14583, %v14584
  %v14586 = vsel %vm5030, %v14390, 0.0
  %v14587 = vadd.f32 %v14585, %v14586
  %v14588 = vsel %vm5030, %v14395, 0.0
  %v14589 = vadd.f32 %v14587, %v14588
  %v14590 = vsel %vm5030, %v14398, 0.0
  %v14591 = vadd.f32 %v14589, %v14590
  %v14592 = vsel %vm5030, %v14403, 0.0
  %v14593 = vadd.f32 %v14591, %v14592
  %v14594 = vsel %vm5030, %v14406, 0.0
  %v14595 = vadd.f32 %v14593, %v14594
  %v14596 = vsel %vm5030, %v14411, 0.0
  %v14597 = vadd.f32 %v14595, %v14596
  %v14598 = vsel %vm5030, %v14414, 0.0
  %v14599 = vadd.f32 %v14597, %v14598
  %v14600 = vsel %vm5030, %v14419, 0.0
  %v14601 = vadd.f32 %v14599, %v14600
  %v14602 = vsel %vm5030, %v14422, 0.0
  %v14603 = vadd.f32 %v14601, %v14602
  %v14604 = vsel %vm5030, %v14427, 0.0
  %v14605 = vadd.f32 %v14603, %v14604
  %v14606 = vsel %vm5030, %v14430, 0.0
  %v14607 = vadd.f32 %v14605, %v14606
  %v14608 = vsel %vm5030, %v14435, 0.0
  %v14609 = vadd.f32 %v14607, %v14608
  %v14610 = vsel %vm5030, %v14438, 0.0
  %v14611 = vadd.f32 %v14609, %v14610
  %v14612 = vsel %vm5030, %v14443, 0.0
  %v14613 = vadd.f32 %v14611, %v14612
  %v14614 = vsel %vm5030, %v14446, 0.0
  %v14615 = vadd.f32 %v14613, %v14614
  %v14616 = vsel %vm5030, %v14451, 0.0
  %v14617 = vadd.f32 %v14615, %v14616
  %v14618 = vsel %vm5030, %v14454, 0.0
  %v14619 = vadd.f32 %v14617, %v14618
  %v14620 = vsel %vm5030, %v14459, 0.0
  %v14621 = vadd.f32 %v14619, %v14620
  %v14622 = vsel %vm5030, %v14462, 0.0
  %v14623 = vadd.f32 %v14621, %v14622
  %v14624 = vsel %vm5030, %v14467, 0.0
  %v14625 = vadd.f32 %v14623, %v14624
  %v14626 = vsel %vm5030, %v14470, 0.0
  %v14627 = vadd.f32 %v14625, %v14626
  %v14628 = vsel %vm5030, %v14475, 0.0
  %v14629 = vadd.f32 %v14627, %v14628
  %v14630 = vsel %vm5030, %v14478, 0.0
  %v14631 = vadd.f32 %v14629, %v14630
  %v14632 = vsel %vm5030, %v14483, 0.0
  %v14633 = vadd.f32 %v14631, %v14632
  %v14634 = vsel %vm5030, %v14486, 0.0
  %v14635 = vadd.f32 %v14633, %v14634
  %v14636 = vsel %vm5030, %v14491, 0.0
  %v14637 = vadd.f32 %v14635, %v14636
  %v14638 = vsel %vm5030, %v14494, 0.0
  %v14639 = vadd.f32 %v14637, %v14638
  %v14640 = vsel %vm5030, %v14499, 0.0
  %v14641 = vadd.f32 %v14639, %v14640
  %v14642 = vsel %vm5030, %v14502, 0.0
  %v14643 = vadd.f32 %v14641, %v14642
  %v14644 = vsel %vm5030, %v14507, 0.0
  %v14645 = vadd.f32 %v14643, %v14644
  %v14646 = vsel %vm5030, %v14510, 0.0
  %v14647 = vadd.f32 %v14645, %v14646
  %v14648 = vsel %vm5030, %v14515, 0.0
  %v14649 = vadd.f32 %v14647, %v14648
  %v14650 = vsel %vm5030, %v14518, 0.0
  %v14651 = vadd.f32 %v14649, %v14650
  %v14652 = vsel %vm5030, %v14523, 0.0
  %v14653 = vadd.f32 %v14651, %v14652
  %v14654 = vsel %vm5030, %v14526, 0.0
  %v14655 = vadd.f32 %v14653, %v14654
  %v14656 = vrot.slane %v14655, 4
  %v14657 = vadd.f32 %v14655, %v14656
  %v14658 = vrot.slane %v14657, 2
  %v14659 = vadd.f32 %v14657, %v14658
  %v14660 = vrot.slane %v14659, 1
  %v14661 = vadd.f32 %v14659, %v14660
  %v14662 = vmul.f32 %v14661, 0.001953125
  %v14663 = vmul.f32 %v14275, %v14275
  %v14664 = vmul.f32 %v14278, %v14278
  %v14665 = vmul.f32 %v14283, %v14283
  %v14666 = vmul.f32 %v14286, %v14286
  %v14667 = vmul.f32 %v14291, %v14291
  %v14668 = vmul.f32 %v14294, %v14294
  %v14669 = vmul.f32 %v14299, %v14299
  %v14670 = vmul.f32 %v14302, %v14302
  %v14671 = vmul.f32 %v14307, %v14307
  %v14672 = vmul.f32 %v14310, %v14310
  %v14673 = vmul.f32 %v14315, %v14315
  %v14674 = vmul.f32 %v14318, %v14318
  %v14675 = vmul.f32 %v14323, %v14323
  %v14676 = vmul.f32 %v14326, %v14326
  %v14677 = vmul.f32 %v14331, %v14331
  %v14678 = vmul.f32 %v14334, %v14334
  %v14679 = vmul.f32 %v14339, %v14339
  %v14680 = vmul.f32 %v14342, %v14342
  %v14681 = vmul.f32 %v14347, %v14347
  %v14682 = vmul.f32 %v14350, %v14350
  %v14683 = vmul.f32 %v14355, %v14355
  %v14684 = vmul.f32 %v14358, %v14358
  %v14685 = vmul.f32 %v14363, %v14363
  %v14686 = vmul.f32 %v14366, %v14366
  %v14687 = vmul.f32 %v14371, %v14371
  %v14688 = vmul.f32 %v14374, %v14374
  %v14689 = vmul.f32 %v14379, %v14379
  %v14690 = vmul.f32 %v14382, %v14382
  %v14691 = vmul.f32 %v14387, %v14387
  %v14692 = vmul.f32 %v14390, %v14390
  %v14693 = vmul.f32 %v14395, %v14395
  %v14694 = vmul.f32 %v14398, %v14398
  %v14695 = vmul.f32 %v14403, %v14403
  %v14696 = vmul.f32 %v14406, %v14406
  %v14697 = vmul.f32 %v14411, %v14411
  %v14698 = vmul.f32 %v14414, %v14414
  %v14699 = vmul.f32 %v14419, %v14419
  %v14700 = vmul.f32 %v14422, %v14422
  %v14701 = vmul.f32 %v14427, %v14427
  %v14702 = vmul.f32 %v14430, %v14430
  %v14703 = vmul.f32 %v14435, %v14435
  %v14704 = vmul.f32 %v14438, %v14438
  %v14705 = vmul.f32 %v14443, %v14443
  %v14706 = vmul.f32 %v14446, %v14446
  %v14707 = vmul.f32 %v14451, %v14451
  %v14708 = vmul.f32 %v14454, %v14454
  %v14709 = vmul.f32 %v14459, %v14459
  %v14710 = vmul.f32 %v14462, %v14462
  %v14711 = vmul.f32 %v14467, %v14467
  %v14712 = vmul.f32 %v14470, %v14470
  %v14713 = vmul.f32 %v14475, %v14475
  %v14714 = vmul.f32 %v14478, %v14478
  %v14715 = vmul.f32 %v14483, %v14483
  %v14716 = vmul.f32 %v14486, %v14486
  %v14717 = vmul.f32 %v14491, %v14491
  %v14718 = vmul.f32 %v14494, %v14494
  %v14719 = vmul.f32 %v14499, %v14499
  %v14720 = vmul.f32 %v14502, %v14502
  %v14721 = vmul.f32 %v14507, %v14507
  %v14722 = vmul.f32 %v14510, %v14510
  %v14723 = vmul.f32 %v14515, %v14515
  %v14724 = vmul.f32 %v14518, %v14518
  %v14725 = vmul.f32 %v14523, %v14523
  %v14726 = vmul.f32 %v14526, %v14526
  %v14727 = vsel %vm5030, %v14663, 0.0
  %v14728 = vsel %vm5030, %v14664, 0.0
  %v14729 = vadd.f32 %v14727, %v14728
  %v14730 = vsel %vm5030, %v14665, 0.0
  %v14731 = vadd.f32 %v14729, %v14730
  %v14732 = vsel %vm5030, %v14666, 0.0
  %v14733 = vadd.f32 %v14731, %v14732
  %v14734 = vsel %vm5030, %v14667, 0.0
  %v14735 = vadd.f32 %v14733, %v14734
  %v14736 = vsel %vm5030, %v14668, 0.0
  %v14737 = vadd.f32 %v14735, %v14736
  %v14738 = vsel %vm5030, %v14669, 0.0
  %v14739 = vadd.f32 %v14737, %v14738
  %v14740 = vsel %vm5030, %v14670, 0.0
  %v14741 = vadd.f32 %v14739, %v14740
  %v14742 = vsel %vm5030, %v14671, 0.0
  %v14743 = vadd.f32 %v14741, %v14742
  %v14744 = vsel %vm5030, %v14672, 0.0
  %v14745 = vadd.f32 %v14743, %v14744
  %v14746 = vsel %vm5030, %v14673, 0.0
  %v14747 = vadd.f32 %v14745, %v14746
  %v14748 = vsel %vm5030, %v14674, 0.0
  %v14749 = vadd.f32 %v14747, %v14748
  %v14750 = vsel %vm5030, %v14675, 0.0
  %v14751 = vadd.f32 %v14749, %v14750
  %v14752 = vsel %vm5030, %v14676, 0.0
  %v14753 = vadd.f32 %v14751, %v14752
  %v14754 = vsel %vm5030, %v14677, 0.0
  %v14755 = vadd.f32 %v14753, %v14754
  %v14756 = vsel %vm5030, %v14678, 0.0
  %v14757 = vadd.f32 %v14755, %v14756
  %v14758 = vsel %vm5030, %v14679, 0.0
  %v14759 = vadd.f32 %v14757, %v14758
  %v14760 = vsel %vm5030, %v14680, 0.0
  %v14761 = vadd.f32 %v14759, %v14760
  %v14762 = vsel %vm5030, %v14681, 0.0
  %v14763 = vadd.f32 %v14761, %v14762
  %v14764 = vsel %vm5030, %v14682, 0.0
  %v14765 = vadd.f32 %v14763, %v14764
  %v14766 = vsel %vm5030, %v14683, 0.0
  %v14767 = vadd.f32 %v14765, %v14766
  %v14768 = vsel %vm5030, %v14684, 0.0
  %v14769 = vadd.f32 %v14767, %v14768
  %v14770 = vsel %vm5030, %v14685, 0.0
  %v14771 = vadd.f32 %v14769, %v14770
  %v14772 = vsel %vm5030, %v14686, 0.0
  %v14773 = vadd.f32 %v14771, %v14772
  %v14774 = vsel %vm5030, %v14687, 0.0
  %v14775 = vadd.f32 %v14773, %v14774
  %v14776 = vsel %vm5030, %v14688, 0.0
  %v14777 = vadd.f32 %v14775, %v14776
  %v14778 = vsel %vm5030, %v14689, 0.0
  %v14779 = vadd.f32 %v14777, %v14778
  %v14780 = vsel %vm5030, %v14690, 0.0
  %v14781 = vadd.f32 %v14779, %v14780
  %v14782 = vsel %vm5030, %v14691, 0.0
  %v14783 = vadd.f32 %v14781, %v14782
  %v14784 = vsel %vm5030, %v14692, 0.0
  %v14785 = vadd.f32 %v14783, %v14784
  %v14786 = vsel %vm5030, %v14693, 0.0
  %v14787 = vadd.f32 %v14785, %v14786
  %v14788 = vsel %vm5030, %v14694, 0.0
  %v14789 = vadd.f32 %v14787, %v14788
  %v14790 = vsel %vm5030, %v14695, 0.0
  %v14791 = vadd.f32 %v14789, %v14790
  %v14792 = vsel %vm5030, %v14696, 0.0
  %v14793 = vadd.f32 %v14791, %v14792
  %v14794 = vsel %vm5030, %v14697, 0.0
  %v14795 = vadd.f32 %v14793, %v14794
  %v14796 = vsel %vm5030, %v14698, 0.0
  %v14797 = vadd.f32 %v14795, %v14796
  %v14798 = vsel %vm5030, %v14699, 0.0
  %v14799 = vadd.f32 %v14797, %v14798
  %v14800 = vsel %vm5030, %v14700, 0.0
  %v14801 = vadd.f32 %v14799, %v14800
  %v14802 = vsel %vm5030, %v14701, 0.0
  %v14803 = vadd.f32 %v14801, %v14802
  %v14804 = vsel %vm5030, %v14702, 0.0
  %v14805 = vadd.f32 %v14803, %v14804
  %v14806 = vsel %vm5030, %v14703, 0.0
  %v14807 = vadd.f32 %v14805, %v14806
  %v14808 = vsel %vm5030, %v14704, 0.0
  %v14809 = vadd.f32 %v14807, %v14808
  %v14810 = vsel %vm5030, %v14705, 0.0
  %v14811 = vadd.f32 %v14809, %v14810
  %v14812 = vsel %vm5030, %v14706, 0.0
  %v14813 = vadd.f32 %v14811, %v14812
  %v14814 = vsel %vm5030, %v14707, 0.0
  %v14815 = vadd.f32 %v14813, %v14814
  %v14816 = vsel %vm5030, %v14708, 0.0
  %v14817 = vadd.f32 %v14815, %v14816
  %v14818 = vsel %vm5030, %v14709, 0.0
  %v14819 = vadd.f32 %v14817, %v14818
  %v14820 = vsel %vm5030, %v14710, 0.0
  %v14821 = vadd.f32 %v14819, %v14820
  %v14822 = vsel %vm5030, %v14711, 0.0
  %v14823 = vadd.f32 %v14821, %v14822
  %v14824 = vsel %vm5030, %v14712, 0.0
  %v14825 = vadd.f32 %v14823, %v14824
  %v14826 = vsel %vm5030, %v14713, 0.0
  %v14827 = vadd.f32 %v14825, %v14826
  %v14828 = vsel %vm5030, %v14714, 0.0
  %v14829 = vadd.f32 %v14827, %v14828
  %v14830 = vsel %vm5030, %v14715, 0.0
  %v14831 = vadd.f32 %v14829, %v14830
  %v14832 = vsel %vm5030, %v14716, 0.0
  %v14833 = vadd.f32 %v14831, %v14832
  %v14834 = vsel %vm5030, %v14717, 0.0
  %v14835 = vadd.f32 %v14833, %v14834
  %v14836 = vsel %vm5030, %v14718, 0.0
  %v14837 = vadd.f32 %v14835, %v14836
  %v14838 = vsel %vm5030, %v14719, 0.0
  %v14839 = vadd.f32 %v14837, %v14838
  %v14840 = vsel %vm5030, %v14720, 0.0
  %v14841 = vadd.f32 %v14839, %v14840
  %v14842 = vsel %vm5030, %v14721, 0.0
  %v14843 = vadd.f32 %v14841, %v14842
  %v14844 = vsel %vm5030, %v14722, 0.0
  %v14845 = vadd.f32 %v14843, %v14844
  %v14846 = vsel %vm5030, %v14723, 0.0
  %v14847 = vadd.f32 %v14845, %v14846
  %v14848 = vsel %vm5030, %v14724, 0.0
  %v14849 = vadd.f32 %v14847, %v14848
  %v14850 = vsel %vm5030, %v14725, 0.0
  %v14851 = vadd.f32 %v14849, %v14850
  %v14852 = vsel %vm5030, %v14726, 0.0
  %v14853 = vadd.f32 %v14851, %v14852
  %v14854 = vrot.slane %v14853, 4
  %v14855 = vadd.f32 %v14853, %v14854
  %v14856 = vrot.slane %v14855, 2
  %v14857 = vadd.f32 %v14855, %v14856
  %v14858 = vrot.slane %v14857, 1
  %v14859 = vadd.f32 %v14857, %v14858
  %v14860 = vmul.f32 %v14859, 0.001953125
  %v14861 = vmul.f32 %v14662, %v14662
  %v14862 = vsub.f32 %v14860, %v14861
  %v14863 = vmax.f32 %v14862, 0.0
  %v14864 = vadd.f32 %v14863, 1e-05
  %v14865 = vrsqrt.pop %v14864
  %v14866 = vld [vmem:[%s6] sm:$0x1]
  %v14867 = vmul.f32 %v14866, %v14865
  %v14868 = vld [vmem:[%s7] sm:$0x1]
  %v14869 = vmul.f32 %v14662, %v14867
  %v14870 = vsub.f32 %v14868, %v14869
  %v14872 = vlaneseq
  %v14873 = vshrl.u32 %v14872, 7
  %v14874 = vsub.s32 0, %v14873
  %v14875 = vrot.slane %v14867, %v14874
  %v14877 = vmul.f32 %v14275, %v14875
  %v14878 = vmul.f32 %v14278, %v14875
  %v14879 = vmul.f32 %v14283, %v14875
  %v14880 = vmul.f32 %v14286, %v14875
  %v14881 = vmul.f32 %v14291, %v14875
  %v14882 = vmul.f32 %v14294, %v14875
  %v14883 = vmul.f32 %v14299, %v14875
  %v14884 = vmul.f32 %v14302, %v14875
  %v14885 = vmul.f32 %v14307, %v14875
  %v14886 = vmul.f32 %v14310, %v14875
  %v14887 = vmul.f32 %v14315, %v14875
  %v14888 = vmul.f32 %v14318, %v14875
  %v14889 = vmul.f32 %v14323, %v14875
  %v14890 = vmul.f32 %v14326, %v14875
  %v14891 = vmul.f32 %v14331, %v14875
  %v14892 = vmul.f32 %v14334, %v14875
  %v14893 = vmul.f32 %v14339, %v14875
  %v14894 = vmul.f32 %v14342, %v14875
  %v14895 = vmul.f32 %v14347, %v14875
  %v14896 = vmul.f32 %v14350, %v14875
  %v14897 = vmul.f32 %v14355, %v14875
  %v14898 = vmul.f32 %v14358, %v14875
  %v14899 = vmul.f32 %v14363, %v14875
  %v14900 = vmul.f32 %v14366, %v14875
  %v14901 = vmul.f32 %v14371, %v14875
  %v14902 = vmul.f32 %v14374, %v14875
  %v14903 = vmul.f32 %v14379, %v14875
  %v14904 = vmul.f32 %v14382, %v14875
  %v14905 = vmul.f32 %v14387, %v14875
  %v14906 = vmul.f32 %v14390, %v14875
  %v14907 = vmul.f32 %v14395, %v14875
  %v14908 = vmul.f32 %v14398, %v14875
  %v14909 = vmul.f32 %v14403, %v14875
  %v14910 = vmul.f32 %v14406, %v14875
  %v14911 = vmul.f32 %v14411, %v14875
  %v14912 = vmul.f32 %v14414, %v14875
  %v14913 = vmul.f32 %v14419, %v14875
  %v14914 = vmul.f32 %v14422, %v14875
  %v14915 = vmul.f32 %v14427, %v14875
  %v14916 = vmul.f32 %v14430, %v14875
  %v14917 = vmul.f32 %v14435, %v14875
  %v14918 = vmul.f32 %v14438, %v14875
  %v14919 = vmul.f32 %v14443, %v14875
  %v14920 = vmul.f32 %v14446, %v14875
  %v14921 = vmul.f32 %v14451, %v14875
  %v14922 = vmul.f32 %v14454, %v14875
  %v14923 = vmul.f32 %v14459, %v14875
  %v14924 = vmul.f32 %v14462, %v14875
  %v14925 = vmul.f32 %v14467, %v14875
  %v14926 = vmul.f32 %v14470, %v14875
  %v14927 = vmul.f32 %v14475, %v14875
  %v14928 = vmul.f32 %v14478, %v14875
  %v14929 = vmul.f32 %v14483, %v14875
  %v14930 = vmul.f32 %v14486, %v14875
  %v14931 = vmul.f32 %v14491, %v14875
  %v14932 = vmul.f32 %v14494, %v14875
  %v14933 = vmul.f32 %v14499, %v14875
  %v14934 = vmul.f32 %v14502, %v14875
  %v14935 = vmul.f32 %v14507, %v14875
  %v14936 = vmul.f32 %v14510, %v14875
  %v14937 = vmul.f32 %v14515, %v14875
  %v14938 = vmul.f32 %v14518, %v14875
  %v14939 = vmul.f32 %v14523, %v14875
  %v14940 = vmul.f32 %v14526, %v14875
  %v14942 = vlaneseq
  %v14943 = vshrl.u32 %v14942, 7
  %v14944 = vsub.s32 0, %v14943
  %v14945 = vrot.slane %v14870, %v14944
  %v14947 = vadd.f32 %v14877, %v14945
  %v14948 = vadd.f32 %v14878, %v14945
  %v14949 = vadd.f32 %v14879, %v14945
  %v14950 = vadd.f32 %v14880, %v14945
  %v14951 = vadd.f32 %v14881, %v14945
  %v14952 = vadd.f32 %v14882, %v14945
  %v14953 = vadd.f32 %v14883, %v14945
  %v14954 = vadd.f32 %v14884, %v14945
  %v14955 = vadd.f32 %v14885, %v14945
  %v14956 = vadd.f32 %v14886, %v14945
  %v14957 = vadd.f32 %v14887, %v14945
  %v14958 = vadd.f32 %v14888, %v14945
  %v14959 = vadd.f32 %v14889, %v14945
  %v14960 = vadd.f32 %v14890, %v14945
  %v14961 = vadd.f32 %v14891, %v14945
  %v14962 = vadd.f32 %v14892, %v14945
  %v14963 = vadd.f32 %v14893, %v14945
  %v14964 = vadd.f32 %v14894, %v14945
  %v14965 = vadd.f32 %v14895, %v14945
  %v14966 = vadd.f32 %v14896, %v14945
  %v14967 = vadd.f32 %v14897, %v14945
  %v14968 = vadd.f32 %v14898, %v14945
  %v14969 = vadd.f32 %v14899, %v14945
  %v14970 = vadd.f32 %v14900, %v14945
  %v14971 = vadd.f32 %v14901, %v14945
  %v14972 = vadd.f32 %v14902, %v14945
  %v14973 = vadd.f32 %v14903, %v14945
  %v14974 = vadd.f32 %v14904, %v14945
  %v14975 = vadd.f32 %v14905, %v14945
  %v14976 = vadd.f32 %v14906, %v14945
  %v14977 = vadd.f32 %v14907, %v14945
  %v14978 = vadd.f32 %v14908, %v14945
  %v14979 = vadd.f32 %v14909, %v14945
  %v14980 = vadd.f32 %v14910, %v14945
  %v14981 = vadd.f32 %v14911, %v14945
  %v14982 = vadd.f32 %v14912, %v14945
  %v14983 = vadd.f32 %v14913, %v14945
  %v14984 = vadd.f32 %v14914, %v14945
  %v14985 = vadd.f32 %v14915, %v14945
  %v14986 = vadd.f32 %v14916, %v14945
  %v14987 = vadd.f32 %v14917, %v14945
  %v14988 = vadd.f32 %v14918, %v14945
  %v14989 = vadd.f32 %v14919, %v14945
  %v14990 = vadd.f32 %v14920, %v14945
  %v14991 = vadd.f32 %v14921, %v14945
  %v14992 = vadd.f32 %v14922, %v14945
  %v14993 = vadd.f32 %v14923, %v14945
  %v14994 = vadd.f32 %v14924, %v14945
  %v14995 = vadd.f32 %v14925, %v14945
  %v14996 = vadd.f32 %v14926, %v14945
  %v14997 = vadd.f32 %v14927, %v14945
  %v14998 = vadd.f32 %v14928, %v14945
  %v14999 = vadd.f32 %v14929, %v14945
  %v15000 = vadd.f32 %v14930, %v14945
  %v15001 = vadd.f32 %v14931, %v14945
  %v15002 = vadd.f32 %v14932, %v14945
  %v15003 = vadd.f32 %v14933, %v14945
  %v15004 = vadd.f32 %v14934, %v14945
  %v15005 = vadd.f32 %v14935, %v14945
  %v15006 = vadd.f32 %v14936, %v14945
  %v15007 = vadd.f32 %v14937, %v14945
  %v15008 = vadd.f32 %v14938, %v14945
  %v15009 = vadd.f32 %v14939, %v14945
  %v15010 = vadd.f32 %v14940, %v14945
  %v15011 = vld [vmem:[%s1] sm:$0xff]
  %v15012 = vld [vmem:[%s1 + $0x8] sm:$0xff]
  %v15013 = vld [vmem:[%s1 + $0x10] sm:$0xff]
  %v15014 = vld [vmem:[%s1 + $0x18] sm:$0xff]
  %v15015 = vld [vmem:[%s1 + $0x20] sm:$0xff]
  %v15016 = vld [vmem:[%s1 + $0x28] sm:$0xff]
  %v15017 = vld [vmem:[%s1 + $0x30] sm:$0xff]
  %v15018 = vld [vmem:[%s1 + $0x38] sm:$0xff]
  %v15019 = vld [vmem:[%s1 + $0x40] sm:$0xff]
  %v15020 = vld [vmem:[%s1 + $0x48] sm:$0xff]
  %v15021 = vld [vmem:[%s1 + $0x50] sm:$0xff]
  %v15022 = vld [vmem:[%s1 + $0x58] sm:$0xff]
  %v15023 = vld [vmem:[%s1 + $0x60] sm:$0xff]
  %v15024 = vld [vmem:[%s1 + $0x68] sm:$0xff]
  %v15025 = vld [vmem:[%s1 + $0x70] sm:$0xff]
  %v15026 = vld [vmem:[%s1 + $0x78] sm:$0xff]
  %v15027 = vld [vmem:[%s1 + $0x80] sm:$0xff]
  %v15028 = vld [vmem:[%s1 + $0x88] sm:$0xff]
  %v15029 = vld [vmem:[%s1 + $0x90] sm:$0xff]
  %v15030 = vld [vmem:[%s1 + $0x98] sm:$0xff]
  %v15031 = vld [vmem:[%s1 + $0xa0] sm:$0xff]
  %v15032 = vld [vmem:[%s1 + $0xa8] sm:$0xff]
  %v15033 = vld [vmem:[%s1 + $0xb0] sm:$0xff]
  %v15034 = vld [vmem:[%s1 + $0xb8] sm:$0xff]
  %v15035 = vld [vmem:[%s1 + $0xc0] sm:$0xff]
  %v15036 = vld [vmem:[%s1 + $0xc8] sm:$0xff]
  %v15037 = vld [vmem:[%s1 + $0xd0] sm:$0xff]
  %v15038 = vld [vmem:[%s1 + $0xd8] sm:$0xff]
  %v15039 = vld [vmem:[%s1 + $0xe0] sm:$0xff]
  %v15040 = vld [vmem:[%s1 + $0xe8] sm:$0xff]
  %v15041 = vld [vmem:[%s1 + $0xf0] sm:$0xff]
  %v15042 = vld [vmem:[%s1 + $0xf8] sm:$0xff]
  %v15043 = vld [vmem:[%s1 + $0x100] sm:$0xff]
  %v15044 = vld [vmem:[%s1 + $0x108] sm:$0xff]
  %v15045 = vld [vmem:[%s1 + $0x110] sm:$0xff]
  %v15046 = vld [vmem:[%s1 + $0x118] sm:$0xff]
  %v15047 = vld [vmem:[%s1 + $0x120] sm:$0xff]
  %v15048 = vld [vmem:[%s1 + $0x128] sm:$0xff]
  %v15049 = vld [vmem:[%s1 + $0x130] sm:$0xff]
  %v15050 = vld [vmem:[%s1 + $0x138] sm:$0xff]
  %v15051 = vld [vmem:[%s1 + $0x140] sm:$0xff]
  %v15052 = vld [vmem:[%s1 + $0x148] sm:$0xff]
  %v15053 = vld [vmem:[%s1 + $0x150] sm:$0xff]
  %v15054 = vld [vmem:[%s1 + $0x158] sm:$0xff]
  %v15055 = vld [vmem:[%s1 + $0x160] sm:$0xff]
  %v15056 = vld [vmem:[%s1 + $0x168] sm:$0xff]
  %v15057 = vld [vmem:[%s1 + $0x170] sm:$0xff]
  %v15058 = vld [vmem:[%s1 + $0x178] sm:$0xff]
  %v15059 = vld [vmem:[%s1 + $0x180] sm:$0xff]
  %v15060 = vld [vmem:[%s1 + $0x188] sm:$0xff]
  %v15061 = vld [vmem:[%s1 + $0x190] sm:$0xff]
  %v15062 = vld [vmem:[%s1 + $0x198] sm:$0xff]
  %v15063 = vld [vmem:[%s1 + $0x1a0] sm:$0xff]
  %v15064 = vld [vmem:[%s1 + $0x1a8] sm:$0xff]
  %v15065 = vld [vmem:[%s1 + $0x1b0] sm:$0xff]
  %v15066 = vld [vmem:[%s1 + $0x1b8] sm:$0xff]
  %v15067 = vld [vmem:[%s1 + $0x1c0] sm:$0xff]
  %v15068 = vld [vmem:[%s1 + $0x1c8] sm:$0xff]
  %v15069 = vld [vmem:[%s1 + $0x1d0] sm:$0xff]
  %v15070 = vld [vmem:[%s1 + $0x1d8] sm:$0xff]
  %v15071 = vld [vmem:[%s1 + $0x1e0] sm:$0xff]
  %v15072 = vld [vmem:[%s1 + $0x1e8] sm:$0xff]
  %v15073 = vld [vmem:[%s1 + $0x1f0] sm:$0xff]
  %v15074 = vld [vmem:[%s1 + $0x1f8] sm:$0xff]
  %v15075 = vadd.f32 %v14947, %v15011
  %v15076 = vadd.f32 %v14948, %v15012
  %v15077 = vadd.f32 %v14949, %v15013
  %v15078 = vadd.f32 %v14950, %v15014
  %v15079 = vadd.f32 %v14951, %v15015
  %v15080 = vadd.f32 %v14952, %v15016
  %v15081 = vadd.f32 %v14953, %v15017
  %v15082 = vadd.f32 %v14954, %v15018
  %v15083 = vadd.f32 %v14955, %v15019
  %v15084 = vadd.f32 %v14956, %v15020
  %v15085 = vadd.f32 %v14957, %v15021
  %v15086 = vadd.f32 %v14958, %v15022
  %v15087 = vadd.f32 %v14959, %v15023
  %v15088 = vadd.f32 %v14960, %v15024
  %v15089 = vadd.f32 %v14961, %v15025
  %v15090 = vadd.f32 %v14962, %v15026
  %v15091 = vadd.f32 %v14963, %v15027
  %v15092 = vadd.f32 %v14964, %v15028
  %v15093 = vadd.f32 %v14965, %v15029
  %v15094 = vadd.f32 %v14966, %v15030
  %v15095 = vadd.f32 %v14967, %v15031
  %v15096 = vadd.f32 %v14968, %v15032
  %v15097 = vadd.f32 %v14969, %v15033
  %v15098 = vadd.f32 %v14970, %v15034
  %v15099 = vadd.f32 %v14971, %v15035
  %v15100 = vadd.f32 %v14972, %v15036
  %v15101 = vadd.f32 %v14973, %v15037
  %v15102 = vadd.f32 %v14974, %v15038
  %v15103 = vadd.f32 %v14975, %v15039
  %v15104 = vadd.f32 %v14976, %v15040
  %v15105 = vadd.f32 %v14977, %v15041
  %v15106 = vadd.f32 %v14978, %v15042
  %v15107 = vadd.f32 %v14979, %v15043
  %v15108 = vadd.f32 %v14980, %v15044
  %v15109 = vadd.f32 %v14981, %v15045
  %v15110 = vadd.f32 %v14982, %v15046
  %v15111 = vadd.f32 %v14983, %v15047
  %v15112 = vadd.f32 %v14984, %v15048
  %v15113 = vadd.f32 %v14985, %v15049
  %v15114 = vadd.f32 %v14986, %v15050
  %v15115 = vadd.f32 %v14987, %v15051
  %v15116 = vadd.f32 %v14988, %v15052
  %v15117 = vadd.f32 %v14989, %v15053
  %v15118 = vadd.f32 %v14990, %v15054
  %v15119 = vadd.f32 %v14991, %v15055
  %v15120 = vadd.f32 %v14992, %v15056
  %v15121 = vadd.f32 %v14993, %v15057
  %v15122 = vadd.f32 %v14994, %v15058
  %v15123 = vadd.f32 %v14995, %v15059
  %v15124 = vadd.f32 %v14996, %v15060
  %v15125 = vadd.f32 %v14997, %v15061
  %v15126 = vadd.f32 %v14998, %v15062
  %v15127 = vadd.f32 %v14999, %v15063
  %v15128 = vadd.f32 %v15000, %v15064
  %v15129 = vadd.f32 %v15001, %v15065
  %v15130 = vadd.f32 %v15002, %v15066
  %v15131 = vadd.f32 %v15003, %v15067
  %v15132 = vadd.f32 %v15004, %v15068
  %v15133 = vadd.f32 %v15005, %v15069
  %v15134 = vadd.f32 %v15006, %v15070
  %v15135 = vadd.f32 %v15007, %v15071
  %v15136 = vadd.f32 %v15008, %v15072
  %v15137 = vadd.f32 %v15009, %v15073
  %v15138 = vadd.f32 %v15010, %v15074
  %v15139 = vmax.f32 %v15075, 0.0
  %v15140 = vmax.f32 %v15076, 0.0
  %v15141 = vmax.f32 %v15077, 0.0
  %v15142 = vmax.f32 %v15078, 0.0
  %v15143 = vmax.f32 %v15079, 0.0
  %v15144 = vmax.f32 %v15080, 0.0
  %v15145 = vmax.f32 %v15081, 0.0
  %v15146 = vmax.f32 %v15082, 0.0
  %v15147 = vmax.f32 %v15083, 0.0
  %v15148 = vmax.f32 %v15084, 0.0
  %v15149 = vmax.f32 %v15085, 0.0
  %v15150 = vmax.f32 %v15086, 0.0
  %v15151 = vmax.f32 %v15087, 0.0
  %v15152 = vmax.f32 %v15088, 0.0
  %v15153 = vmax.f32 %v15089, 0.0
  %v15154 = vmax.f32 %v15090, 0.0
  %v15155 = vmax.f32 %v15091, 0.0
  %v15156 = vmax.f32 %v15092, 0.0
  %v15157 = vmax.f32 %v15093, 0.0
  %v15158 = vmax.f32 %v15094, 0.0
  %v15159 = vmax.f32 %v15095, 0.0
  %v15160 = vmax.f32 %v15096, 0.0
  %v15161 = vmax.f32 %v15097, 0.0
  %v15162 = vmax.f32 %v15098, 0.0
  %v15163 = vmax.f32 %v15099, 0.0
  %v15164 = vmax.f32 %v15100, 0.0
  %v15165 = vmax.f32 %v15101, 0.0
  %v15166 = vmax.f32 %v15102, 0.0
  %v15167 = vmax.f32 %v15103, 0.0
  %v15168 = vmax.f32 %v15104, 0.0
  %v15169 = vmax.f32 %v15105, 0.0
  %v15170 = vmax.f32 %v15106, 0.0
  %v15171 = vmax.f32 %v15107, 0.0
  %v15172 = vmax.f32 %v15108, 0.0
  %v15173 = vmax.f32 %v15109, 0.0
  %v15174 = vmax.f32 %v15110, 0.0
  %v15175 = vmax.f32 %v15111, 0.0
  %v15176 = vmax.f32 %v15112, 0.0
  %v15177 = vmax.f32 %v15113, 0.0
  %v15178 = vmax.f32 %v15114, 0.0
  %v15179 = vmax.f32 %v15115, 0.0
  %v15180 = vmax.f32 %v15116, 0.0
  %v15181 = vmax.f32 %v15117, 0.0
  %v15182 = vmax.f32 %v15118, 0.0
  %v15183 = vmax.f32 %v15119, 0.0
  %v15184 = vmax.f32 %v15120, 0.0
  %v15185 = vmax.f32 %v15121, 0.0
  %v15186 = vmax.f32 %v15122, 0.0
  %v15187 = vmax.f32 %v15123, 0.0
  %v15188 = vmax.f32 %v15124, 0.0
  %v15189 = vmax.f32 %v15125, 0.0
  %v15190 = vmax.f32 %v15126, 0.0
  %v15191 = vmax.f32 %v15127, 0.0
  %v15192 = vmax.f32 %v15128, 0.0
  %v15193 = vmax.f32 %v15129, 0.0
  %v15194 = vmax.f32 %v15130, 0.0
  %v15195 = vmax.f32 %v15131, 0.0
  %v15196 = vmax.f32 %v15132, 0.0
  %v15197 = vmax.f32 %v15133, 0.0
  %v15198 = vmax.f32 %v15134, 0.0
  %v15199 = vmax.f32 %v15135, 0.0
  %v15200 = vmax.f32 %v15136, 0.0
  %v15201 = vmax.f32 %v15137, 0.0
  %v15202 = vmax.f32 %v15138, 0.0
  %15203 = vst.msk [vmem:[%s8] sm:$0xff] %vm5030, %v15139
  %15204 = vst.msk [vmem:[%s8 + $0x8] sm:$0xff] %vm5030, %v15140
  %15205 = vst.msk [vmem:[%s8 + $0x10] sm:$0xff] %vm5030, %v15141
  %15206 = vst.msk [vmem:[%s8 + $0x18] sm:$0xff] %vm5030, %v15142
  %15207 = vst.msk [vmem:[%s8 + $0x20] sm:$0xff] %vm5030, %v15143
  %15208 = vst.msk [vmem:[%s8 + $0x28] sm:$0xff] %vm5030, %v15144
  %15209 = vst.msk [vmem:[%s8 + $0x30] sm:$0xff] %vm5030, %v15145
  %15210 = vst.msk [vmem:[%s8 + $0x38] sm:$0xff] %vm5030, %v15146
  %15211 = vst.msk [vmem:[%s8 + $0x40] sm:$0xff] %vm5030, %v15147
  %15212 = vst.msk [vmem:[%s8 + $0x48] sm:$0xff] %vm5030, %v15148
  %15213 = vst.msk [vmem:[%s8 + $0x50] sm:$0xff] %vm5030, %v15149
  %15214 = vst.msk [vmem:[%s8 + $0x58] sm:$0xff] %vm5030, %v15150
  %15215 = vst.msk [vmem:[%s8 + $0x60] sm:$0xff] %vm5030, %v15151
  %15216 = vst.msk [vmem:[%s8 + $0x68] sm:$0xff] %vm5030, %v15152
  %15217 = vst.msk [vmem:[%s8 + $0x70] sm:$0xff] %vm5030, %v15153
  %15218 = vst.msk [vmem:[%s8 + $0x78] sm:$0xff] %vm5030, %v15154
  %15219 = vst.msk [vmem:[%s8 + $0x80] sm:$0xff] %vm5030, %v15155
  %15220 = vst.msk [vmem:[%s8 + $0x88] sm:$0xff] %vm5030, %v15156
  %15221 = vst.msk [vmem:[%s8 + $0x90] sm:$0xff] %vm5030, %v15157
  %15222 = vst.msk [vmem:[%s8 + $0x98] sm:$0xff] %vm5030, %v15158
  %15223 = vst.msk [vmem:[%s8 + $0xa0] sm:$0xff] %vm5030, %v15159
  %15224 = vst.msk [vmem:[%s8 + $0xa8] sm:$0xff] %vm5030, %v15160
  %15225 = vst.msk [vmem:[%s8 + $0xb0] sm:$0xff] %vm5030, %v15161
  %15226 = vst.msk [vmem:[%s8 + $0xb8] sm:$0xff] %vm5030, %v15162
  %15227 = vst.msk [vmem:[%s8 + $0xc0] sm:$0xff] %vm5030, %v15163
  %15228 = vst.msk [vmem:[%s8 + $0xc8] sm:$0xff] %vm5030, %v15164
  %15229 = vst.msk [vmem:[%s8 + $0xd0] sm:$0xff] %vm5030, %v15165
  %15230 = vst.msk [vmem:[%s8 + $0xd8] sm:$0xff] %vm5030, %v15166
  %15231 = vst.msk [vmem:[%s8 + $0xe0] sm:$0xff] %vm5030, %v15167
  %15232 = vst.msk [vmem:[%s8 + $0xe8] sm:$0xff] %vm5030, %v15168
  %15233 = vst.msk [vmem:[%s8 + $0xf0] sm:$0xff] %vm5030, %v15169
  %15234 = vst.msk [vmem:[%s8 + $0xf8] sm:$0xff] %vm5030, %v15170
  %15235 = vst.msk [vmem:[%s8 + $0x100] sm:$0xff] %vm5030, %v15171
  %15236 = vst.msk [vmem:[%s8 + $0x108] sm:$0xff] %vm5030, %v15172
  %15237 = vst.msk [vmem:[%s8 + $0x110] sm:$0xff] %vm5030, %v15173
  %15238 = vst.msk [vmem:[%s8 + $0x118] sm:$0xff] %vm5030, %v15174
  %15239 = vst.msk [vmem:[%s8 + $0x120] sm:$0xff] %vm5030, %v15175
  %15240 = vst.msk [vmem:[%s8 + $0x128] sm:$0xff] %vm5030, %v15176
  %15241 = vst.msk [vmem:[%s8 + $0x130] sm:$0xff] %vm5030, %v15177
  %15242 = vst.msk [vmem:[%s8 + $0x138] sm:$0xff] %vm5030, %v15178
  %15243 = vst.msk [vmem:[%s8 + $0x140] sm:$0xff] %vm5030, %v15179
  %15244 = vst.msk [vmem:[%s8 + $0x148] sm:$0xff] %vm5030, %v15180
  %15245 = vst.msk [vmem:[%s8 + $0x150] sm:$0xff] %vm5030, %v15181
  %15246 = vst.msk [vmem:[%s8 + $0x158] sm:$0xff] %vm5030, %v15182
  %15247 = vst.msk [vmem:[%s8 + $0x160] sm:$0xff] %vm5030, %v15183
  %15248 = vst.msk [vmem:[%s8 + $0x168] sm:$0xff] %vm5030, %v15184
  %15249 = vst.msk [vmem:[%s8 + $0x170] sm:$0xff] %vm5030, %v15185
  %15250 = vst.msk [vmem:[%s8 + $0x178] sm:$0xff] %vm5030, %v15186
  %15251 = vst.msk [vmem:[%s8 + $0x180] sm:$0xff] %vm5030, %v15187
  %15252 = vst.msk [vmem:[%s8 + $0x188] sm:$0xff] %vm5030, %v15188
  %15253 = vst.msk [vmem:[%s8 + $0x190] sm:$0xff] %vm5030, %v15189
  %15254 = vst.msk [vmem:[%s8 + $0x198] sm:$0xff] %vm5030, %v15190
  %15255 = vst.msk [vmem:[%s8 + $0x1a0] sm:$0xff] %vm5030, %v15191
  %15256 = vst.msk [vmem:[%s8 + $0x1a8] sm:$0xff] %vm5030, %v15192
  %15257 = vst.msk [vmem:[%s8 + $0x1b0] sm:$0xff] %vm5030, %v15193
  %15258 = vst.msk [vmem:[%s8 + $0x1b8] sm:$0xff] %vm5030, %v15194
  %15259 = vst.msk [vmem:[%s8 + $0x1c0] sm:$0xff] %vm5030, %v15195
  %15260 = vst.msk [vmem:[%s8 + $0x1c8] sm:$0xff] %vm5030, %v15196
  %15261 = vst.msk [vmem:[%s8 + $0x1d0] sm:$0xff] %vm5030, %v15197
  %15262 = vst.msk [vmem:[%s8 + $0x1d8] sm:$0xff] %vm5030, %v15198
  %15263 = vst.msk [vmem:[%s8 + $0x1e0] sm:$0xff] %vm5030, %v15199
  %15264 = vst.msk [vmem:[%s8 + $0x1e8] sm:$0xff] %vm5030, %v15200
  %15265 = vst.msk [vmem:[%s8 + $0x1f0] sm:$0xff] %vm5030, %v15201
  %15266 = vst.msk [vmem:[%s8 + $0x1f8] sm:$0xff] %vm5030, %v15202
  // Predicated region
  $region34: #{tpu_custom_call.1} parent=0 // pred_check
    _
  $region35: #{tpu_custom_call.1} parent=0 // pred_check_branch
    %15268 = sbr.rel (0) target = $region37
  $region36: #{tpu_custom_call.1} parent=0 // pred_region
    _
  $region37: #{tpu_custom_call.1} parent=0 // pred_fallthru
    _
  // Predicated region
  $region38: #{tpu_custom_call.1} parent=0 // pred_check
    _
  $region39: #{tpu_custom_call.1} parent=0 // pred_check_branch
    %15270 = sbr.rel (0) target = $region41
  $region40: #{tpu_custom_call.1} parent=0 // pred_region
    _
  $region41: #{tpu_custom_call.1} parent=0 // pred_fallthru
    _

</llo_original>
